<compile_context>
chip_gen: v6e
topology: v6e:2x2x1
jax: 0.10.0
libtpu: 0.0.40
codegen_flags: <defaults>
</compile_context>

<pallas_src>
import math

import jax
import jax.numpy as jnp
from jax import lax
from jax.experimental import pallas as pl
from jax.experimental.pallas import tpu as pltpu


# ----------------------------------------------------------------------------
# VMEM budget + tiling helpers
# ----------------------------------------------------------------------------
_SUBLANE = 8
_LANE = 128
_TIME_BLOCK_CAP = 16     # time steps per grid iteration (amortizes ~0.35us/step)
_GATE_TILE_CAP = 512     # gate (4H) columns per projection tile (multiple of 128)


def _vmem_limits():
    try:
        cap = int(pltpu.get_tpu_info().vmem_capacity_bytes)
    except Exception:
        cap = 64 * 1024 * 1024          # conservative (v7x per-core VMEM)
    cap = min(max(cap, 32 * 1024 * 1024), 256 * 1024 * 1024)
    limit = int(cap * 0.75)             # scoped limit handed to Mosaic
    budget = int(limit * 0.60)          # what we plan tiles against (headroom)
    return limit, budget


_VMEM_LIMIT, _VMEM_BUDGET = _vmem_limits()


def _round_up(n, m):
    return ((n + m - 1) // m) * m


def _divisor_tile(n, cap, step):
    """Largest divisor of n that is <= cap and a multiple of `step`, else n."""
    if n <= cap:
        return n
    cand = (cap // step) * step
    while cand >= step:
        if n % cand == 0:
            return cand
        cand -= step
    return n


def _row_tile(m, cap):
    """Row tile (multiple of 8 unless full) and padded row count."""
    cap = max(_SUBLANE, (int(cap) // _SUBLANE) * _SUBLANE)
    if m <= cap:
        return m, m
    t = _divisor_tile(m, cap, _SUBLANE)
    if t <= cap:
        return t, m
    return cap, _round_up(m, cap)      # no divisor: pad rows instead


def _batch_tile(b, cap):
    """Batch tile (multiple of 8 or full) and padded batch count."""
    cap = max(_SUBLANE, int(cap))
    if b <= cap:
        return b, b
    step_cap = max(_SUBLANE, (cap // _SUBLANE) * _SUBLANE)
    t = _divisor_tile(b, step_cap, _SUBLANE)
    if t <= step_cap:
        return t, b
    return step_cap, _round_up(b, step_cap)


def _proj_row_cap(budget, k, tn, n_in):
    """Rows per projection tile that fit the VMEM budget (double-buffered)."""
    w_bytes = 2 * n_in * k * tn * 2 * 2            # bf16 weight blocks, dbuf
    per_row = n_in * k * 4 * 2 + 2 * tn * 2 * 2    # f32 inputs + bf16 outs, dbuf
    avail = max(budget - w_bytes, per_row * _SUBLANE)
    return int(min(max(_SUBLANE, avail // per_row), 4096))


def _rec_batch_cap(budget, t_blk, hdim, gdim, mean_output):
    """Batch rows per recurrence tile that fit the VMEM budget."""
    w_bytes = 2 * hdim * gdim * 2 * 2              # W_hh fwd+bwd bf16, dbuf
    per_b = 2 * t_blk * gdim * 2 * 2               # gx fwd+bwd bf16, dbuf
    per_b += 4 * hdim * 4                          # h/c scratch (2 dirs) f32
    per_b += 2 * gdim * 4                          # live per-step f32 gates
    if mean_output:
        per_b += 2 * hdim * 4                      # running sums
        per_b += 2 * hdim * 4 * 2                  # (b, 2H) f32 out, dbuf
    else:
        per_b += 2 * t_blk * hdim * 4 * 2          # two seq outputs, dbuf (f32 worst)
    avail = max(budget - w_bytes, per_b * _SUBLANE)
    return int(min(max(_SUBLANE, avail // per_b), 1024))


def _head_batch_cap(budget, s_count, h2):
    w_bytes = (3 * h2 * h2 + 4 * h2 + 1) * 4 * 2
    per_b = s_count * h2 * 4 * 3 + s_count * 4 * 2 + 4 * h2 * 4
    avail = max(budget - w_bytes, per_b * _SUBLANE)
    return int(max(_SUBLANE, avail // per_b))


def _lstm_cell(gates, c_prev, h):
    """PyTorch gate order i, f, g, o.  gates: (B, 4H) f32."""
    i = jax.nn.sigmoid(gates[:, 0:h])
    f = jax.nn.sigmoid(gates[:, h:2 * h])
    g = jnp.tanh(gates[:, 2 * h:3 * h])
    o = jax.nn.sigmoid(gates[:, 3 * h:4 * h])
    c = f * c_prev + i * g
    return o * jnp.tanh(c), c


# ----------------------------------------------------------------------------
# Hoisted input projection: rows x gate-columns tiled, bf16 MXU, bf16 outputs.
# ----------------------------------------------------------------------------
def _proj_single_kernel(x_ref, wf_ref, wb_ref, bf_ref, bb_ref, gf_ref, gb_ref):
    x = x_ref[...].astype(jnp.bfloat16)
    gf = jnp.dot(x, wf_ref[...], preferred_element_type=jnp.float32) + bf_ref[...]
    gb = jnp.dot(x, wb_ref[...], preferred_element_type=jnp.float32) + bb_ref[...]
    gf_ref[...] = gf.astype(gf_ref.dtype)
    gb_ref[...] = gb.astype(gb_ref.dtype)


def _proj_pair_kernel(hf_ref, hb_ref, wf_top_ref, wf_bot_ref,
                      wb_top_ref, wb_bot_ref, bf_ref, bb_ref, gf_ref, gb_ref):
    # Equivalent to concat(hf, hb, -1) @ W_ih + b without materializing the concat.
    hf = hf_ref[...].astype(jnp.bfloat16)
    hb = hb_ref[...].astype(jnp.bfloat16)
    gf = (jnp.dot(hf, wf_top_ref[...], preferred_element_type=jnp.float32)
          + jnp.dot(hb, wf_bot_ref[...], preferred_element_type=jnp.float32)
          + bf_ref[...])
    gb = (jnp.dot(hf, wb_top_ref[...], preferred_element_type=jnp.float32)
          + jnp.dot(hb, wb_bot_ref[...], preferred_element_type=jnp.float32)
          + bb_ref[...])
    gf_ref[...] = gf.astype(gf_ref.dtype)
    gb_ref[...] = gb.astype(gb_ref.dtype)


def _input_projection(row_inputs, fwd_w_parts, fwd_b, bwd_w_parts, bwd_b):
    """row_inputs: list of (m, k) arrays.  Weights are bf16 (k, G) parts.
    Returns (gxf, gxb) each (m, G) bf16."""
    m, k = row_inputs[0].shape
    g = fwd_w_parts[0].shape[1]
    n_in = len(row_inputs)

    tn = _divisor_tile(g, _GATE_TILE_CAP, _LANE)
    tm, m_pad = _row_tile(m, _proj_row_cap(_VMEM_BUDGET, k, tn, n_in))
    if m_pad != m:
        row_inputs = [jnp.pad(a, ((0, m_pad - m), (0, 0))) for a in row_inputs]

    row_spec = pl.BlockSpec((tm, k), lambda j, i: (i, 0))
    w_spec = pl.BlockSpec((k, tn), lambda j, i: (0, j))
    b_spec = pl.BlockSpec((1, tn), lambda j, i: (0, j))
    out_spec = pl.BlockSpec((tm, tn), lambda j, i: (i, j))

    kernel = _proj_single_kernel if n_in == 1 else _proj_pair_kernel
    weights = list(fwd_w_parts) + list(bwd_w_parts)

    gf, gb = pl.pallas_call(
        kernel,
        out_shape=(jax.ShapeDtypeStruct((m_pad, g), jnp.bfloat16),
                   jax.ShapeDtypeStruct((m_pad, g), jnp.bfloat16)),
        grid_spec=pltpu.PrefetchScalarGridSpec(
            num_scalar_prefetch=0,
            grid=(g // tn, m_pad // tm),
            in_specs=[row_spec] * n_in + [w_spec] * len(weights) + [b_spec, b_spec],
            out_specs=(out_spec, out_spec)),
        compiler_params=pltpu.CompilerParams(
            dimension_semantics=("parallel", "parallel"),
            vmem_limit_bytes=_VMEM_LIMIT),
    )(*row_inputs, *weights, fwd_b, bwd_b)
    if m_pad != m:
        gf = gf[:m]
        gb = gb[:m]
    return gf, gb


# ----------------------------------------------------------------------------
# Fused bidirectional LSTM recurrence.  Grid = (batch_blocks, time_blocks).
# Backward direction: time reversal via index_map (nt-1-j) + local (t_blk-1-k).
# ----------------------------------------------------------------------------
def _bilstm_seq_kernel(gxf_ref, gxb_ref, whhf_ref, whhb_ref,
                       outf_ref, outb_ref, h_scr, c_scr):
    j = pl.program_id(1)

    @pl.when(j == 0)
    def _():
        h_scr[...] = jnp.zeros_like(h_scr)
        c_scr[...] = jnp.zeros_like(c_scr)

    t_blk = gxf_ref.shape[0]
    hdim = whhf_ref.shape[0]
    whh_f = whhf_ref[...]                     # bf16
    whh_b = whhb_ref[...]

    def step(k, carry):
        hf, cf, hb, cb = carry
        gf = (gxf_ref[k].astype(jnp.float32)
              + jnp.dot(hf.astype(jnp.bfloat16), whh_f,
                        preferred_element_type=jnp.float32))
        gb = (gxb_ref[t_blk - 1 - k].astype(jnp.float32)
              + jnp.dot(hb.astype(jnp.bfloat16), whh_b,
                        preferred_element_type=jnp.float32))
        hf, cf = _lstm_cell(gf, cf, hdim)
        hb, cb = _lstm_cell(gb, cb, hdim)
        outf_ref[k] = hf.astype(outf_ref.dtype)
        outb_ref[t_blk - 1 - k] = hb.astype(outb_ref.dtype)
        return hf, cf, hb, cb

    carry0 = (h_scr[0], c_scr[0], h_scr[1], c_scr[1])
    hf, cf, hb, cb = lax.fori_loop(0, t_blk, step, carry0, unroll=t_blk <= 8)
    h_scr[0] = hf
    c_scr[0] = cf
    h_scr[1] = hb
    c_scr[1] = cb


def _make_bilstm_mean_kernel(inv_t):
    """Last encoder layer: accumulate the token-mean instead of storing the
    sequence (mean is order-invariant, so the reversed processing order of the
    backward direction is fine)."""
    def kernel(gxf_ref, gxb_ref, whhf_ref, whhb_ref,
               mean_ref, h_scr, c_scr, sum_scr):
        j = pl.program_id(1)

        @pl.when(j == 0)
        def _():
            h_scr[...] = jnp.zeros_like(h_scr)
            c_scr[...] = jnp.zeros_like(c_scr)
            sum_scr[...] = jnp.zeros_like(sum_scr)

        t_blk = gxf_ref.shape[0]
        hdim = whhf_ref.shape[0]
        whh_f = whhf_ref[...]
        whh_b = whhb_ref[...]

        def step(k, carry):
            hf, cf, hb, cb, sf, sb = carry
            gf = (gxf_ref[k].astype(jnp.float32)
                  + jnp.dot(hf.astype(jnp.bfloat16), whh_f,
                            preferred_element_type=jnp.float32))
            gb = (gxb_ref[t_blk - 1 - k].astype(jnp.float32)
                  + jnp.dot(hb.astype(jnp.bfloat16), whh_b,
                            preferred_element_type=jnp.float32))
            hf, cf = _lstm_cell(gf, cf, hdim)
            hb, cb = _lstm_cell(gb, cb, hdim)
            return hf, cf, hb, cb, sf + hf, sb + hb

        carry0 = (h_scr[0], c_scr[0], h_scr[1], c_scr[1], sum_scr[0], sum_scr[1])
        hf, cf, hb, cb, sf, sb = lax.fori_loop(0, t_blk, step, carry0,
                                               unroll=t_blk <= 8)
        h_scr[0] = hf
        c_scr[0] = cf
        h_scr[1] = hb
        c_scr[1] = cb
        sum_scr[0] = sf
        sum_scr[1] = sb

        @pl.when(j == pl.num_programs(1) - 1)
        def _():
            mean_ref[:, 0:hdim] = sf * inv_t
            mean_ref[:, hdim:2 * hdim] = sb * inv_t

    return kernel


def _bilstm_recurrence(gxf, gxb, whh_f, whh_b, t_blk, b_blk, *,
                       mean_output, out_dtype=jnp.float32):
    """gxf/gxb: (T, B, 4H) bf16 pre-projected gates.  whh_*: (H, 4H) bf16."""
    T, B, G = gxf.shape
    H = whh_f.shape[0]
    nt = T // t_blk
    nb = B // b_blk

    gx_fwd_spec = pl.BlockSpec((t_blk, b_blk, G), lambda b, j: (j, b, 0))
    gx_bwd_spec = pl.BlockSpec((t_blk, b_blk, G), lambda b, j: (nt - 1 - j, b, 0))
    w_spec = pl.BlockSpec((H, G), lambda b, j: (0, 0))
    scratch = [pltpu.VMEM((2, b_blk, H), jnp.float32),   # h state (fwd, bwd)
               pltpu.VMEM((2, b_blk, H), jnp.float32)]   # c state (fwd, bwd)

    if mean_output:
        kernel = _make_bilstm_mean_kernel(1.0 / T)
        out_shape = jax.ShapeDtypeStruct((B, 2 * H), jnp.float32)
        out_specs = pl.BlockSpec((b_blk, 2 * H), lambda b, j: (b, 0))
        scratch.append(pltpu.VMEM((2, b_blk, H), jnp.float32))   # running sums
    else:
        kernel = _bilstm_seq_kernel
        out_shape = (jax.ShapeDtypeStruct((T, B, H), out_dtype),
                     jax.ShapeDtypeStruct((T, B, H), out_dtype))
        out_specs = (pl.BlockSpec((t_blk, b_blk, H), lambda b, j: (j, b, 0)),
                     pl.BlockSpec((t_blk, b_blk, H), lambda b, j: (nt - 1 - j, b, 0)))

    return pl.pallas_call(
        kernel,
        out_shape=out_shape,
        grid_spec=pltpu.PrefetchScalarGridSpec(
            num_scalar_prefetch=0,
            grid=(nb, nt),
            in_specs=[gx_fwd_spec, gx_bwd_spec, w_spec, w_spec],
            out_specs=out_specs,
            scratch_shapes=scratch),
        compiler_params=pltpu.CompilerParams(
            dimension_semantics=("parallel", "arbitrary"),
            vmem_limit_bytes=_VMEM_LIMIT),
    )(gxf, gxb, whh_f, whh_b)


def run_bilstm_stack(x, layers, *, mean_output):
    """Stacked bidirectional LSTM.  x: (T, B, F) time-major.
    Returns (out_fwd, out_bwd) each (T, B, H), or the (B, 2H) time-mean."""
    T, B, _ = x.shape
    n = len(layers)
    H = layers[0][0][1].shape[0]         # W_hh is (H, 4H)
    G = 4 * H

    t_blk = _divisor_tile(T, _TIME_BLOCK_CAP, 1)
    caps = []
    if (n > 1) or (not mean_output):
        caps.append(_rec_batch_cap(_VMEM_BUDGET, t_blk, H, G, False))
    if mean_output:
        caps.append(_rec_batch_cap(_VMEM_BUDGET, t_blk, H, G, True))
    b_blk, B_pad = _batch_tile(B, min(caps))
    if B_pad != B:
        x = jnp.pad(x, ((0, 0), (0, B_pad - B), (0, 0)))

    hf = hb = None
    single = x
    for li, (pf, pb) in enumerate(layers):
        wihf_parts, whh_f, bias_f = pf
        wihb_parts, whh_b, bias_b = pb
        if single is not None:
            rows = [single.reshape(T * B_pad, -1)]
        else:
            rows = [hf.reshape(T * B_pad, -1), hb.reshape(T * B_pad, -1)]
        gxf, gxb = _input_projection(rows, wihf_parts, bias_f, wihb_parts, bias_b)
        gxf = gxf.reshape(T, B_pad, G)
        gxb = gxb.reshape(T, B_pad, G)

        last = li == n - 1
        if last and mean_output:
            mean = _bilstm_recurrence(gxf, gxb, whh_f, whh_b, t_blk, b_blk,
                                      mean_output=True)
            return mean[:B] if B_pad != B else mean
        out_dtype = jnp.float32 if last else jnp.bfloat16
        hf, hb = _bilstm_recurrence(gxf, gxb, whh_f, whh_b, t_blk, b_blk,
                                    mean_output=False, out_dtype=out_dtype)
        single = None

    if B_pad != B:
        hf = hf[:, :B]
        hb = hb[:, :B]
    return hf, hb


# ----------------------------------------------------------------------------
# Tagger head: document embedding + content + salience + novelty loop.
# Batch-tiled (parallel axis); inputs kept time-major (S, B, H2).
# ----------------------------------------------------------------------------
def _tagger_head_kernel(outs_ref, wd_ref, bd_ref, wc_ref, bc_ref,
                        ws_ref, bs_ref, wn_ref, bn_ref, o_ref):
    outs = outs_ref[...]                                     # (S, bh, H2) f32
    s_count, b_count, h2 = outs.shape

    # document_embedding = tanh(Linear(mean over sentences))
    doc_mean = jnp.mean(outs, axis=0)                        # (bh, H2)
    doc_emb = jnp.tanh(
        jnp.dot(doc_mean, wd_ref[...], preferred_element_type=jnp.float32)
        + bd_ref[...])

    wc_row = wc_ref[...]                                     # (1, H2)
    bc = bc_ref[...]                                         # (1, 1)
    content = jnp.sum(outs * wc_row[None, :, :], axis=-1) + bc           # (S, bh)

    sal_vec = (jnp.dot(doc_emb, ws_ref[...], preferred_element_type=jnp.float32)
               + bs_ref[...])                                # (bh, H2)
    salience = jnp.sum(outs * sal_vec[None, :, :], axis=-1)              # (S, bh)

    wn = wn_ref[...]
    bn = bn_ref[...]

    # Greedy summary accumulation.  Per step only the column for sentence s is
    # needed (O(S*B*H2)); the PyTorch loop's returned novelty is the one
    # computed from the summary accumulated over sentences 0..S-2.
    def step(s, summary):
        nov_vec = (jnp.dot(jnp.tanh(summary), wn, preferred_element_type=jnp.float32)
                   + bn)                                     # (bh, H2)
        o_s = outs_ref[s]                                    # (bh, H2)
        nov_s = jnp.sum(o_s * nov_vec, axis=-1, keepdims=True)
        c_s = jnp.sum(o_s * wc_row, axis=-1, keepdims=True) + bc
        sal_s = jnp.sum(o_s * sal_vec, axis=-1, keepdims=True)
        prob = jax.nn.sigmoid(c_s + sal_s - nov_s)
        return summary + prob * o_s

    summary0 = jnp.zeros((b_count, h2), jnp.float32)
    summary = lax.fori_loop(0, s_count - 1, step, summary0, unroll=s_count <= 8)

    nov_vec = (jnp.dot(jnp.tanh(summary), wn, preferred_element_type=jnp.float32) + bn)
    novelty = jnp.sum(outs * nov_vec[None, :, :], axis=-1)   # (S, bh)

    o_ref[...] = content + salience - novelty                # (S, bh)


def tagger_head(outputs_sb, head_params):
    s_count, b_count, h2 = outputs_sb.shape
    bh, b_pad = _batch_tile(b_count, _head_batch_cap(_VMEM_BUDGET, s_count, h2))
    if b_pad != b_count:
        outputs_sb = jnp.pad(outputs_sb, ((0, 0), (0, b_pad - b_count), (0, 0)))

    scores = pl.pallas_call(
        _tagger_head_kernel,
        out_shape=jax.ShapeDtypeStruct((s_count, b_pad), jnp.float32),
        grid_spec=pltpu.PrefetchScalarGridSpec(
            num_scalar_prefetch=0,
            grid=(b_pad // bh,),
            in_specs=[pl.BlockSpec((s_count, bh, h2), lambda i: (0, i, 0))]
                     + [pl.BlockSpec(p.shape, lambda i: (0, 0)) for p in head_params],
            out_specs=pl.BlockSpec((s_count, bh), lambda i: (0, i))),
        compiler_params=pltpu.CompilerParams(
            dimension_semantics=("parallel",),
            vmem_limit_bytes=_VMEM_LIMIT),
    )(outputs_sb, *head_params)
    return scores[:, :b_count] if b_pad != b_count else scores


# ----------------------------------------------------------------------------
# Parameter initialization (PyTorch-like uniform(-1/sqrt(H), 1/sqrt(H))).
# Matmul weights stored bf16 (MXU-native); biases / head weights stay f32.
# ----------------------------------------------------------------------------
def _uniform(key, shape, scale):
    return jax.random.uniform(key, shape, jnp.float32, -scale, scale)


def init_lstm_direction(key, in_dim, hidden, *, split_input):
    k = 1.0 / math.sqrt(hidden)
    k1, k2, k3, k4 = jax.random.split(key, 4)
    w_ih = _uniform(k1, (in_dim, 4 * hidden), k).astype(jnp.bfloat16)   # transposed vs torch
    w_hh = _uniform(k2, (hidden, 4 * hidden), k).astype(jnp.bfloat16)
    b = _uniform(k3, (1, 4 * hidden), k) + _uniform(k4, (1, 4 * hidden), k)  # b_ih + b_hh
    if split_input:
        half = in_dim // 2
        w_parts = (w_ih[:half], w_ih[half:])     # pre-split fwd/bwd input halves
    else:
        w_parts = (w_ih,)
    return (w_parts, w_hh, b)


def init_bilstm_stack(key, in_dim, hidden, n_layers):
    layers = []
    for l in range(n_layers):
        key, kf, kb = jax.random.split(key, 3)
        d_in = in_dim if l == 0 else 2 * hidden
        layers.append((init_lstm_direction(kf, d_in, hidden, split_input=l > 0),
                       init_lstm_direction(kb, d_in, hidden, split_input=l > 0)))
    return layers


def init_linear(key, in_dim, out_dim):
    k = 1.0 / math.sqrt(in_dim)
    k1, k2 = jax.random.split(key)
    w = _uniform(k1, (in_dim, out_dim), k)                   # transposed vs torch
    b = _uniform(k2, (1, out_dim), k)
    return w, b


def init_params(key, vocab, token_emb_dim, enc_hidden, doc_hidden,
                enc_layers, doc_layers):
    keys = jax.random.split(key, 8)
    enc_h_dir = enc_hidden // 2
    doc_h_dir = doc_hidden // 2
    h2 = 2 * doc_h_dir

    embedding = (jax.random.normal(keys[0], (vocab, token_emb_dim), jnp.float32)
                 * 0.1).astype(jnp.bfloat16)
    enc_stack = init_bilstm_stack(keys[1], token_emb_dim, enc_h_dir, enc_layers)
    doc_stack = init_bilstm_stack(keys[2], 2 * enc_h_dir, doc_h_dir, doc_layers)

    wd, bd = init_linear(keys[3], h2, h2)      # document_linear_layer
    wc, bc = init_linear(keys[4], h2, 1)       # content_linear_layer
    ws, bs = init_linear(keys[5], h2, h2)      # salience_linear_layer
    wn, bn = init_linear(keys[6], h2, h2)      # novelty_linear_layer
    head = (wd, bd, wc.T, bc, ws, bs, wn, bn)  # content weight passed lane-major (1, H2)

    return {"embedding": embedding, "enc_layers": enc_stack,
            "doc_layers": doc_stack, "head": head}


# ----------------------------------------------------------------------------
# Full forward pass.
# ----------------------------------------------------------------------------
def sentence_tagger_forward(token_ids, params):
    """token_ids: (B, S, T_tok) int32 -> scores (B, S) float32."""
    B, S, Tk = token_ids.shape

    # --- SentenceEncoderRNN (dropouts identity in eval mode) ---
    tok_tm = token_ids.reshape(B * S, Tk).T                  # (Tk, B*S) time-major ids
    emb = jnp.take(params["embedding"], tok_tm, axis=0)      # (Tk, B*S, E) gather (glue)
    sent_emb = run_bilstm_stack(emb, params["enc_layers"], mean_output=True)  # (B*S, 2Henc)
    sent_seq = sent_emb.reshape(B, S, -1)

    # --- document-level bidirectional LSTM ---
    y = jnp.transpose(sent_seq, (1, 0, 2))                   # (S, B, 2Henc) time-major
    hf, hb = run_bilstm_stack(y, params["doc_layers"], mean_output=False)
    outputs_sb = jnp.concatenate([hf, hb], axis=-1)          # (S, B, 2Hdoc) (small concat)

    # --- tagger head (content + salience - novelty) ---
    scores_sb = tagger_head(outputs_sb, params["head"])      # (S, B)
    return scores_sb.T                                       # (B, S)


if __name__ == "__main__":
    # Small shapes consistent with the module.
    B, S, Tk = 2, 4, 8
    VOCAB = 50
    TOKEN_EMB = 16
    ENC_HIDDEN = 32     # bidirectional -> 16 per direction
    DOC_HIDDEN = 32     # bidirectional -> 16 per direction
    ENC_LAYERS = 2
    DOC_LAYERS = 2

    key = jax.random.PRNGKey(0)
    k_tok, k_par = jax.random.split(key)
    token_ids = jax.random.randint(k_tok, (B, S, Tk), 0, VOCAB, dtype=jnp.int32)
    params = init_params(k_par, VOCAB, TOKEN_EMB, ENC_HIDDEN, DOC_HIDDEN,
                         ENC_LAYERS, DOC_LAYERS)

    out = jax.jit(sentence_tagger_forward)(token_ids, params)
    out = jax.block_until_ready(out)
    assert out.shape == (B, S) and out.dtype == jnp.float32
    assert bool(jnp.all(jnp.isfinite(out)))
    print("KERNEL_OK")
</pallas_src>

<mosaic_0001>
module attributes {stable_mosaic.version = 11 : i64} {
  func.func @_proj_single_kernel(%arg0: i32, %arg1: i32, %arg2: memref<64x16xbf16, #tpu.memory_space<vmem>>, %arg3: memref<16x64xbf16, #tpu.memory_space<vmem>>, %arg4: memref<16x64xbf16, #tpu.memory_space<vmem>>, %arg5: memref<1x64xf32, #tpu.memory_space<vmem>>, %arg6: memref<1x64xf32, #tpu.memory_space<vmem>>, %arg7: memref<64x64xbf16, #tpu.memory_space<vmem>>, %arg8: memref<64x64xbf16, #tpu.memory_space<vmem>>) attributes {dimension_semantics = [#tpu.dimension_semantics<parallel>, #tpu.dimension_semantics<parallel>], iteration_bounds = array<i64: 1, 1>, scalar_prefetch = 0 : i64, scratch_operands = 0 : i64, tpu.core_type = #tpu.core_type<tc>, window_params = [{transform_indices = @transform_0, window_bounds = array<i64: 64, 16>}, {transform_indices = @transform_1, window_bounds = array<i64: 16, 64>}, {transform_indices = @transform_2, window_bounds = array<i64: 16, 64>}, {transform_indices = @transform_3, window_bounds = array<i64: 1, 64>}, {transform_indices = @transform_4, window_bounds = array<i64: 1, 64>}, {transform_indices = @transform_5, window_bounds = array<i64: 64, 64>}, {transform_indices = @transform_6, window_bounds = array<i64: 64, 64>}]} {
    %c0 = arith.constant 0 : index
    %c0_0 = arith.constant 0 : index
    %0 = vector.load %arg2[%c0, %c0_0] : memref<64x16xbf16, #tpu.memory_space<vmem>>, vector<64x16xbf16>
    %c0_1 = arith.constant 0 : index
    %c0_2 = arith.constant 0 : index
    %1 = vector.load %arg3[%c0_1, %c0_2] : memref<16x64xbf16, #tpu.memory_space<vmem>>, vector<16x64xbf16>
    %cst = arith.constant dense<0.000000e+00> : vector<64x64xf32>
    %2 = tpu.matmul %0, %1, %cst {dimension_numbers = #tpu.dot_dimension_numbers<[1], [0], [0], [1], [0, 0, 1, 1], [], []>} : vector<64x16xbf16>, vector<16x64xbf16>, vector<64x64xf32> -> vector<64x64xf32>
    %c0_3 = arith.constant 0 : index
    %c0_4 = arith.constant 0 : index
    %3 = vector.load %arg5[%c0_3, %c0_4] : memref<1x64xf32, #tpu.memory_space<vmem>>, vector<1x64xf32>
    %4 = vector.broadcast %3 : vector<1x64xf32> to vector<64x64xf32>
    %5 = arith.addf %2, %4 : vector<64x64xf32>
    %c0_5 = arith.constant 0 : index
    %c0_6 = arith.constant 0 : index
    %6 = vector.load %arg4[%c0_5, %c0_6] : memref<16x64xbf16, #tpu.memory_space<vmem>>, vector<16x64xbf16>
    %cst_7 = arith.constant dense<0.000000e+00> : vector<64x64xf32>
    %7 = tpu.matmul %0, %6, %cst_7 {dimension_numbers = #tpu.dot_dimension_numbers<[1], [0], [0], [1], [0, 0, 1, 1], [], []>} : vector<64x16xbf16>, vector<16x64xbf16>, vector<64x64xf32> -> vector<64x64xf32>
    %c0_8 = arith.constant 0 : index
    %c0_9 = arith.constant 0 : index
    %8 = vector.load %arg6[%c0_8, %c0_9] : memref<1x64xf32, #tpu.memory_space<vmem>>, vector<1x64xf32>
    %9 = vector.broadcast %8 : vector<1x64xf32> to vector<64x64xf32>
    %10 = arith.addf %7, %9 : vector<64x64xf32>
    %11 = arith.truncf %5 : vector<64x64xf32> to vector<64x64xbf16>
    %c0_10 = arith.constant 0 : index
    %c0_11 = arith.constant 0 : index
    %12 = vector.load %arg7[%c0_10, %c0_11] : memref<64x64xbf16, #tpu.memory_space<vmem>>, vector<64x64xbf16>
    tpu.vector_store %arg7[%c0_10, %c0_11], %11 {strides = array<i32>} : memref<64x64xbf16, #tpu.memory_space<vmem>>, vector<64x64xbf16>,
    %13 = arith.truncf %10 : vector<64x64xf32> to vector<64x64xbf16>
    %c0_12 = arith.constant 0 : index
    %c0_13 = arith.constant 0 : index
    %14 = vector.load %arg8[%c0_12, %c0_13] : memref<64x64xbf16, #tpu.memory_space<vmem>>, vector<64x64xbf16>
    tpu.vector_store %arg8[%c0_12, %c0_13], %13 {strides = array<i32>} : memref<64x64xbf16, #tpu.memory_space<vmem>>, vector<64x64xbf16>,
    return
  }
  func.func @transform_0(%arg0: i32, %arg1: i32) -> (i32, i32) {
    %c0_i32 = arith.constant 0 : i32
    %c0_i32_0 = arith.constant 0 : i32
    return %arg1, %c0_i32 : i32, i32
  }
  func.func @transform_1(%arg0: i32, %arg1: i32) -> (i32, i32) {
    %c0_i32 = arith.constant 0 : i32
    %c0_i32_0 = arith.constant 0 : i32
    return %c0_i32, %arg0 : i32, i32
  }
  func.func @transform_2(%arg0: i32, %arg1: i32) -> (i32, i32) {
    %c0_i32 = arith.constant 0 : i32
    %c0_i32_0 = arith.constant 0 : i32
    return %c0_i32, %arg0 : i32, i32
  }
  func.func @transform_3(%arg0: i32, %arg1: i32) -> (i32, i32) {
    %c0_i32 = arith.constant 0 : i32
    %c0_i32_0 = arith.constant 0 : i32
    return %c0_i32, %arg0 : i32, i32
  }
  func.func @transform_4(%arg0: i32, %arg1: i32) -> (i32, i32) {
    %c0_i32 = arith.constant 0 : i32
    %c0_i32_0 = arith.constant 0 : i32
    return %c0_i32, %arg0 : i32, i32
  }
  func.func @transform_5(%arg0: i32, %arg1: i32) -> (i32, i32) {
    %c0_i32 = arith.constant 0 : i32
    return %arg1, %arg0 : i32, i32
  }
  func.func @transform_6(%arg0: i32, %arg1: i32) -> (i32, i32) {
    %c0_i32 = arith.constant 0 : i32
    return %arg1, %arg0 : i32, i32
  }
}

module attributes {stable_mosaic.version = 11 : i64} {
  func.func @_proj_pair_kernel(%arg0: i32, %arg1: i32, %arg2: memref<64x16xbf16, #tpu.memory_space<vmem>>, %arg3: memref<64x16xbf16, #tpu.memory_space<vmem>>, %arg4: memref<16x64xbf16, #tpu.memory_space<vmem>>, %arg5: memref<16x64xbf16, #tpu.memory_space<vmem>>, %arg6: memref<16x64xbf16, #tpu.memory_space<vmem>>, %arg7: memref<16x64xbf16, #tpu.memory_space<vmem>>, %arg8: memref<1x64xf32, #tpu.memory_space<vmem>>, %arg9: memref<1x64xf32, #tpu.memory_space<vmem>>, %arg10: memref<64x64xbf16, #tpu.memory_space<vmem>>, %arg11: memref<64x64xbf16, #tpu.memory_space<vmem>>) attributes {dimension_semantics = [#tpu.dimension_semantics<parallel>, #tpu.dimension_semantics<parallel>], iteration_bounds = array<i64: 1, 1>, scalar_prefetch = 0 : i64, scratch_operands = 0 : i64, tpu.core_type = #tpu.core_type<tc>, window_params = [{transform_indices = @transform_0, window_bounds = array<i64: 64, 16>}, {transform_indices = @transform_1, window_bounds = array<i64: 64, 16>}, {transform_indices = @transform_2, window_bounds = array<i64: 16, 64>}, {transform_indices = @transform_3, window_bounds = array<i64: 16, 64>}, {transform_indices = @transform_4, window_bounds = array<i64: 16, 64>}, {transform_indices = @transform_5, window_bounds = array<i64: 16, 64>}, {transform_indices = @transform_6, window_bounds = array<i64: 1, 64>}, {transform_indices = @transform_7, window_bounds = array<i64: 1, 64>}, {transform_indices = @transform_8, window_bounds = array<i64: 64, 64>}, {transform_indices = @transform_9, window_bounds = array<i64: 64, 64>}]} {
    %c0 = arith.constant 0 : index
    %c0_0 = arith.constant 0 : index
    %0 = vector.load %arg2[%c0, %c0_0] : memref<64x16xbf16, #tpu.memory_space<vmem>>, vector<64x16xbf16>
    %c0_1 = arith.constant 0 : index
    %c0_2 = arith.constant 0 : index
    %1 = vector.load %arg3[%c0_1, %c0_2] : memref<64x16xbf16, #tpu.memory_space<vmem>>, vector<64x16xbf16>
    %c0_3 = arith.constant 0 : index
    %c0_4 = arith.constant 0 : index
    %2 = vector.load %arg4[%c0_3, %c0_4] : memref<16x64xbf16, #tpu.memory_space<vmem>>, vector<16x64xbf16>
    %cst = arith.constant dense<0.000000e+00> : vector<64x64xf32>
    %3 = tpu.matmul %0, %2, %cst {dimension_numbers = #tpu.dot_dimension_numbers<[1], [0], [0], [1], [0, 0, 1, 1], [], []>} : vector<64x16xbf16>, vector<16x64xbf16>, vector<64x64xf32> -> vector<64x64xf32>
    %c0_5 = arith.constant 0 : index
    %c0_6 = arith.constant 0 : index
    %4 = vector.load %arg5[%c0_5, %c0_6] : memref<16x64xbf16, #tpu.memory_space<vmem>>, vector<16x64xbf16>
    %cst_7 = arith.constant dense<0.000000e+00> : vector<64x64xf32>
    %5 = tpu.matmul %1, %4, %cst_7 {dimension_numbers = #tpu.dot_dimension_numbers<[1], [0], [0], [1], [0, 0, 1, 1], [], []>} : vector<64x16xbf16>, vector<16x64xbf16>, vector<64x64xf32> -> vector<64x64xf32>
    %6 = arith.addf %3, %5 : vector<64x64xf32>
    %c0_8 = arith.constant 0 : index
    %c0_9 = arith.constant 0 : index
    %7 = vector.load %arg8[%c0_8, %c0_9] : memref<1x64xf32, #tpu.memory_space<vmem>>, vector<1x64xf32>
    %8 = vector.broadcast %7 : vector<1x64xf32> to vector<64x64xf32>
    %9 = arith.addf %6, %8 : vector<64x64xf32>
    %c0_10 = arith.constant 0 : index
    %c0_11 = arith.constant 0 : index
    %10 = vector.load %arg6[%c0_10, %c0_11] : memref<16x64xbf16, #tpu.memory_space<vmem>>, vector<16x64xbf16>
    %cst_12 = arith.constant dense<0.000000e+00> : vector<64x64xf32>
    %11 = tpu.matmul %0, %10, %cst_12 {dimension_numbers = #tpu.dot_dimension_numbers<[1], [0], [0], [1], [0, 0, 1, 1], [], []>} : vector<64x16xbf16>, vector<16x64xbf16>, vector<64x64xf32> -> vector<64x64xf32>
    %c0_13 = arith.constant 0 : index
    %c0_14 = arith.constant 0 : index
    %12 = vector.load %arg7[%c0_13, %c0_14] : memref<16x64xbf16, #tpu.memory_space<vmem>>, vector<16x64xbf16>
    %cst_15 = arith.constant dense<0.000000e+00> : vector<64x64xf32>
    %13 = tpu.matmul %1, %12, %cst_15 {dimension_numbers = #tpu.dot_dimension_numbers<[1], [0], [0], [1], [0, 0, 1, 1], [], []>} : vector<64x16xbf16>, vector<16x64xbf16>, vector<64x64xf32> -> vector<64x64xf32>
    %14 = arith.addf %11, %13 : vector<64x64xf32>
    %c0_16 = arith.constant 0 : index
    %c0_17 = arith.constant 0 : index
    %15 = vector.load %arg9[%c0_16, %c0_17] : memref<1x64xf32, #tpu.memory_space<vmem>>, vector<1x64xf32>
    %16 = vector.broadcast %15 : vector<1x64xf32> to vector<64x64xf32>
    %17 = arith.addf %14, %16 : vector<64x64xf32>
    %18 = arith.truncf %9 : vector<64x64xf32> to vector<64x64xbf16>
    %c0_18 = arith.constant 0 : index
    %c0_19 = arith.constant 0 : index
    %19 = vector.load %arg10[%c0_18, %c0_19] : memref<64x64xbf16, #tpu.memory_space<vmem>>, vector<64x64xbf16>
    tpu.vector_store %arg10[%c0_18, %c0_19], %18 {strides = array<i32>} : memref<64x64xbf16, #tpu.memory_space<vmem>>, vector<64x64xbf16>,
    %20 = arith.truncf %17 : vector<64x64xf32> to vector<64x64xbf16>
    %c0_20 = arith.constant 0 : index
    %c0_21 = arith.constant 0 : index
    %21 = vector.load %arg11[%c0_20, %c0_21] : memref<64x64xbf16, #tpu.memory_space<vmem>>, vector<64x64xbf16>
    tpu.vector_store %arg11[%c0_20, %c0_21], %20 {strides = array<i32>} : memref<64x64xbf16, #tpu.memory_space<vmem>>, vector<64x64xbf16>,
    return
  }
  func.func @transform_0(%arg0: i32, %arg1: i32) -> (i32, i32) {
    %c0_i32 = arith.constant 0 : i32
    %c0_i32_0 = arith.constant 0 : i32
    return %arg1, %c0_i32 : i32, i32
  }
  func.func @transform_1(%arg0: i32, %arg1: i32) -> (i32, i32) {
    %c0_i32 = arith.constant 0 : i32
    %c0_i32_0 = arith.constant 0 : i32
    return %arg1, %c0_i32 : i32, i32
  }
  func.func @transform_2(%arg0: i32, %arg1: i32) -> (i32, i32) {
    %c0_i32 = arith.constant 0 : i32
    %c0_i32_0 = arith.constant 0 : i32
    return %c0_i32, %arg0 : i32, i32
  }
  func.func @transform_3(%arg0: i32, %arg1: i32) -> (i32, i32) {
    %c0_i32 = arith.constant 0 : i32
    %c0_i32_0 = arith.constant 0 : i32
    return %c0_i32, %arg0 : i32, i32
  }
  func.func @transform_4(%arg0: i32, %arg1: i32) -> (i32, i32) {
    %c0_i32 = arith.constant 0 : i32
    %c0_i32_0 = arith.constant 0 : i32
    return %c0_i32, %arg0 : i32, i32
  }
  func.func @transform_5(%arg0: i32, %arg1: i32) -> (i32, i32) {
    %c0_i32 = arith.constant 0 : i32
    %c0_i32_0 = arith.constant 0 : i32
    return %c0_i32, %arg0 : i32, i32
  }
  func.func @transform_6(%arg0: i32, %arg1: i32) -> (i32, i32) {
    %c0_i32 = arith.constant 0 : i32
    %c0_i32_0 = arith.constant 0 : i32
    return %c0_i32, %arg0 : i32, i32
  }
  func.func @transform_7(%arg0: i32, %arg1: i32) -> (i32, i32) {
    %c0_i32 = arith.constant 0 : i32
    %c0_i32_0 = arith.constant 0 : i32
    return %c0_i32, %arg0 : i32, i32
  }
  func.func @transform_8(%arg0: i32, %arg1: i32) -> (i32, i32) {
    %c0_i32 = arith.constant 0 : i32
    return %arg1, %arg0 : i32, i32
  }
  func.func @transform_9(%arg0: i32, %arg1: i32) -> (i32, i32) {
    %c0_i32 = arith.constant 0 : i32
    return %arg1, %arg0 : i32, i32
  }
}

module attributes {stable_mosaic.version = 11 : i64} {
  func.func @_bilstm_seq_kernel(%arg0: i32, %arg1: i32, %arg2: memref<8x8x64xbf16, #tpu.memory_space<vmem>>, %arg3: memref<8x8x64xbf16, #tpu.memory_space<vmem>>, %arg4: memref<16x64xbf16, #tpu.memory_space<vmem>>, %arg5: memref<16x64xbf16, #tpu.memory_space<vmem>>, %arg6: memref<8x8x16xbf16, #tpu.memory_space<vmem>>, %arg7: memref<8x8x16xbf16, #tpu.memory_space<vmem>>, %arg8: memref<2x8x16xf32, #tpu.memory_space<vmem>>, %arg9: memref<2x8x16xf32, #tpu.memory_space<vmem>>) attributes {dimension_semantics = [#tpu.dimension_semantics<parallel>, #tpu.dimension_semantics<arbitrary>], iteration_bounds = array<i64: 1, 1>, scalar_prefetch = 0 : i64, scratch_operands = 2 : i64, tpu.core_type = #tpu.core_type<tc>, window_params = [{transform_indices = @transform_0, window_bounds = array<i64: 8, 8, 64>}, {transform_indices = @transform_1, window_bounds = array<i64: 8, 8, 64>}, {pipeline_mode = #tpu.pipeline_mode<synchronous>, transform_indices = @transform_2, window_bounds = array<i64: 16, 64>}, {pipeline_mode = #tpu.pipeline_mode<synchronous>, transform_indices = @transform_3, window_bounds = array<i64: 16, 64>}, {transform_indices = @transform_4, window_bounds = array<i64: 8, 8, 16>}, {transform_indices = @transform_5, window_bounds = array<i64: 8, 8, 16>}]} {
    %c0_i32 = arith.constant 0 : i32
    %0 = arith.cmpi eq, %arg1, %c0_i32 : i32
    %1 = arith.extui %0 : i1 to i32
    %c0_i32_0 = arith.constant 0 : i32
    %2 = arith.cmpi ne, %1, %c0_i32_0 : i32
    scf.if %2 {
      %cst_171 = arith.constant 0.000000e+00 : f32
      %633 = vector.broadcast %cst_171 : f32 to vector<2x8x16xf32>
      %c0_172 = arith.constant 0 : index
      %c0_173 = arith.constant 0 : index
      %c0_174 = arith.constant 0 : index
      %634 = vector.load %arg8[%c0_172, %c0_173, %c0_174] : memref<2x8x16xf32, #tpu.memory_space<vmem>>, vector<2x8x16xf32>
      tpu.vector_store %arg8[%c0_172, %c0_173, %c0_174], %633 {strides = array<i32>} : memref<2x8x16xf32, #tpu.memory_space<vmem>>, vector<2x8x16xf32>,
      %cst_175 = arith.constant 0.000000e+00 : f32
      %635 = vector.broadcast %cst_175 : f32 to vector<2x8x16xf32>
      %c0_176 = arith.constant 0 : index
      %c0_177 = arith.constant 0 : index
      %c0_178 = arith.constant 0 : index
      %636 = vector.load %arg9[%c0_176, %c0_177, %c0_178] : memref<2x8x16xf32, #tpu.memory_space<vmem>>, vector<2x8x16xf32>
      tpu.vector_store %arg9[%c0_176, %c0_177, %c0_178], %635 {strides = array<i32>} : memref<2x8x16xf32, #tpu.memory_space<vmem>>, vector<2x8x16xf32>,
    } else {
    }
    %c0 = arith.constant 0 : index
    %c0_1 = arith.constant 0 : index
    %3 = vector.load %arg4[%c0, %c0_1] : memref<16x64xbf16, #tpu.memory_space<vmem>>, vector<16x64xbf16>
    %c0_2 = arith.constant 0 : index
    %c0_3 = arith.constant 0 : index
    %4 = vector.load %arg5[%c0_2, %c0_3] : memref<16x64xbf16, #tpu.memory_space<vmem>>, vector<16x64xbf16>
    %c0_4 = arith.constant 0 : index
    %c0_5 = arith.constant 0 : index
    %c0_6 = arith.constant 0 : index
    %5 = vector.load %arg8[%c0_4, %c0_5, %c0_6] : memref<2x8x16xf32, #tpu.memory_space<vmem>>, vector<1x8x16xf32>
    %6 = vector.shape_cast %5 : vector<1x8x16xf32> to vector<8x16xf32>
    %c0_7 = arith.constant 0 : index
    %c0_8 = arith.constant 0 : index
    %c0_9 = arith.constant 0 : index
    %7 = vector.load %arg9[%c0_7, %c0_8, %c0_9] : memref<2x8x16xf32, #tpu.memory_space<vmem>>, vector<1x8x16xf32>
    %8 = vector.shape_cast %7 : vector<1x8x16xf32> to vector<8x16xf32>
    %c1 = arith.constant 1 : index
    %c0_10 = arith.constant 0 : index
    %c0_11 = arith.constant 0 : index
    %9 = vector.load %arg8[%c1, %c0_10, %c0_11] : memref<2x8x16xf32, #tpu.memory_space<vmem>>, vector<1x8x16xf32>
    %10 = vector.shape_cast %9 : vector<1x8x16xf32> to vector<8x16xf32>
    %c1_12 = arith.constant 1 : index
    %c0_13 = arith.constant 0 : index
    %c0_14 = arith.constant 0 : index
    %11 = vector.load %arg9[%c1_12, %c0_13, %c0_14] : memref<2x8x16xf32, #tpu.memory_space<vmem>>, vector<1x8x16xf32>
    %12 = vector.shape_cast %11 : vector<1x8x16xf32> to vector<8x16xf32>
    %c0_i32_15 = arith.constant 0 : i32
    %13 = arith.index_cast %c0_i32_15 : i32 to index
    %c0_16 = arith.constant 0 : index
    %c0_17 = arith.constant 0 : index
    %14 = vector.load %arg2[%13, %c0_16, %c0_17] : memref<8x8x64xbf16, #tpu.memory_space<vmem>>, vector<1x8x64xbf16>
    %15 = vector.shape_cast %14 : vector<1x8x64xbf16> to vector<8x64xbf16>
    %16 = arith.extf %15 : vector<8x64xbf16> to vector<8x64xf32>
    %17 = arith.truncf %6 : vector<8x16xf32> to vector<8x16xbf16>
    %cst = arith.constant dense<0.000000e+00> : vector<8x64xf32>
    %18 = tpu.matmul %17, %3, %cst {dimension_numbers = #tpu.dot_dimension_numbers<[1], [0], [0], [1], [0, 0, 1, 1], [], []>} : vector<8x16xbf16>, vector<16x64xbf16>, vector<8x64xf32> -> vector<8x64xf32>
    %19 = arith.addf %16, %18 : vector<8x64xf32>
    %c7_i32 = arith.constant 7 : i32
    %20 = arith.subi %c7_i32, %c0_i32_15 : i32
    %21 = arith.index_cast %20 : i32 to index
    %c0_18 = arith.constant 0 : index
    %c0_19 = arith.constant 0 : index
    %22 = vector.load %arg3[%21, %c0_18, %c0_19] : memref<8x8x64xbf16, #tpu.memory_space<vmem>>, vector<1x8x64xbf16>
    %23 = vector.shape_cast %22 : vector<1x8x64xbf16> to vector<8x64xbf16>
    %24 = arith.extf %23 : vector<8x64xbf16> to vector<8x64xf32>
    %25 = arith.truncf %10 : vector<8x16xf32> to vector<8x16xbf16>
    %cst_20 = arith.constant dense<0.000000e+00> : vector<8x64xf32>
    %26 = tpu.matmul %25, %4, %cst_20 {dimension_numbers = #tpu.dot_dimension_numbers<[1], [0], [0], [1], [0, 0, 1, 1], [], []>} : vector<8x16xbf16>, vector<16x64xbf16>, vector<8x64xf32> -> vector<8x64xf32>
    %27 = arith.addf %24, %26 : vector<8x64xf32>
    %28 = vector.extract_strided_slice %19 {offsets = [0, 0], sizes = [8, 16], strides = [1, 1]} : vector<8x64xf32> to vector<8x16xf32>
    %29 = arith.negf %28 : vector<8x16xf32>
    %30 = math.exp %29 : vector<8x16xf32>
    %cst_21 = arith.constant 1.000000e+00 : f32
    %31 = vector.broadcast %cst_21 : f32 to vector<8x16xf32>
    %32 = arith.addf %31, %30 : vector<8x16xf32>
    %33 = arith.divf %31, %32 : vector<8x16xf32>
    %34 = vector.extract_strided_slice %19 {offsets = [0, 16], sizes = [8, 16], strides = [1, 1]} : vector<8x64xf32> to vector<8x16xf32>
    %35 = arith.negf %34 : vector<8x16xf32>
    %36 = math.exp %35 : vector<8x16xf32>
    %cst_22 = arith.constant 1.000000e+00 : f32
    %37 = vector.broadcast %cst_22 : f32 to vector<8x16xf32>
    %38 = arith.addf %37, %36 : vector<8x16xf32>
    %39 = arith.divf %37, %38 : vector<8x16xf32>
    %40 = vector.extract_strided_slice %19 {offsets = [0, 32], sizes = [8, 16], strides = [1, 1]} : vector<8x64xf32> to vector<8x16xf32>
    %41 = math.tanh %40 : vector<8x16xf32>
    %42 = vector.extract_strided_slice %19 {offsets = [0, 48], sizes = [8, 16], strides = [1, 1]} : vector<8x64xf32> to vector<8x16xf32>
    %43 = arith.negf %42 : vector<8x16xf32>
    %44 = math.exp %43 : vector<8x16xf32>
    %cst_23 = arith.constant 1.000000e+00 : f32
    %45 = vector.broadcast %cst_23 : f32 to vector<8x16xf32>
    %46 = arith.addf %45, %44 : vector<8x16xf32>
    %47 = arith.divf %45, %46 : vector<8x16xf32>
    %48 = arith.mulf %39, %8 : vector<8x16xf32>
    %49 = arith.mulf %33, %41 : vector<8x16xf32>
    %50 = arith.addf %48, %49 : vector<8x16xf32>
    %51 = math.tanh %50 : vector<8x16xf32>
    %52 = arith.mulf %47, %51 : vector<8x16xf32>
    %53 = vector.extract_strided_slice %27 {offsets = [0, 0], sizes = [8, 16], strides = [1, 1]} : vector<8x64xf32> to vector<8x16xf32>
    %54 = arith.negf %53 : vector<8x16xf32>
    %55 = math.exp %54 : vector<8x16xf32>
    %cst_24 = arith.constant 1.000000e+00 : f32
    %56 = vector.broadcast %cst_24 : f32 to vector<8x16xf32>
    %57 = arith.addf %56, %55 : vector<8x16xf32>
    %58 = arith.divf %56, %57 : vector<8x16xf32>
    %59 = vector.extract_strided_slice %27 {offsets = [0, 16], sizes = [8, 16], strides = [1, 1]} : vector<8x64xf32> to vector<8x16xf32>
    %60 = arith.negf %59 : vector<8x16xf32>
    %61 = math.exp %60 : vector<8x16xf32>
    %cst_25 = arith.constant 1.000000e+00 : f32
    %62 = vector.broadcast %cst_25 : f32 to vector<8x16xf32>
    %63 = arith.addf %62, %61 : vector<8x16xf32>
    %64 = arith.divf %62, %63 : vector<8x16xf32>
    %65 = vector.extract_strided_slice %27 {offsets = [0, 32], sizes = [8, 16], strides = [1, 1]} : vector<8x64xf32> to vector<8x16xf32>
    %66 = math.tanh %65 : vector<8x16xf32>
    %67 = vector.extract_strided_slice %27 {offsets = [0, 48], sizes = [8, 16], strides = [1, 1]} : vector<8x64xf32> to vector<8x16xf32>
    %68 = arith.negf %67 : vector<8x16xf32>
    %69 = math.exp %68 : vector<8x16xf32>
    %cst_26 = arith.constant 1.000000e+00 : f32
    %70 = vector.broadcast %cst_26 : f32 to vector<8x16xf32>
    %71 = arith.addf %70, %69 : vector<8x16xf32>
    %72 = arith.divf %70, %71 : vector<8x16xf32>
    %73 = arith.mulf %64, %12 : vector<8x16xf32>
    %74 = arith.mulf %58, %66 : vector<8x16xf32>
    %75 = arith.addf %73, %74 : vector<8x16xf32>
    %76 = math.tanh %75 : vector<8x16xf32>
    %77 = arith.mulf %72, %76 : vector<8x16xf32>
    %78 = arith.truncf %52 : vector<8x16xf32> to vector<8x16xbf16>
    %79 = arith.index_cast %c0_i32_15 : i32 to index
    %c0_27 = arith.constant 0 : index
    %c0_28 = arith.constant 0 : index
    %80 = vector.load %arg6[%79, %c0_27, %c0_28] : memref<8x8x16xbf16, #tpu.memory_space<vmem>>, vector<1x8x16xbf16>
    %81 = vector.shape_cast %80 : vector<1x8x16xbf16> to vector<8x16xbf16>
    %82 = vector.shape_cast %78 : vector<8x16xbf16> to vector<1x8x16xbf16>
    tpu.vector_store %arg6[%79, %c0_27, %c0_28], %82 {strides = array<i32>} : memref<8x8x16xbf16, #tpu.memory_space<vmem>>, vector<1x8x16xbf16>,
    %83 = arith.truncf %77 : vector<8x16xf32> to vector<8x16xbf16>
    %c7_i32_29 = arith.constant 7 : i32
    %84 = arith.subi %c7_i32_29, %c0_i32_15 : i32
    %85 = arith.index_cast %84 : i32 to index
    %c0_30 = arith.constant 0 : index
    %c0_31 = arith.constant 0 : index
    %86 = vector.load %arg7[%85, %c0_30, %c0_31] : memref<8x8x16xbf16, #tpu.memory_space<vmem>>, vector<1x8x16xbf16>
    %87 = vector.shape_cast %86 : vector<1x8x16xbf16> to vector<8x16xbf16>
    %88 = vector.shape_cast %83 : vector<8x16xbf16> to vector<1x8x16xbf16>
    tpu.vector_store %arg7[%85, %c0_30, %c0_31], %88 {strides = array<i32>} : memref<8x8x16xbf16, #tpu.memory_space<vmem>>, vector<1x8x16xbf16>,
    %c1_i32 = arith.constant 1 : i32
    %89 = arith.index_cast %c1_i32 : i32 to index
    %c0_32 = arith.constant 0 : index
    %c0_33 = arith.constant 0 : index
    %90 = vector.load %arg2[%89, %c0_32, %c0_33] : memref<8x8x64xbf16, #tpu.memory_space<vmem>>, vector<1x8x64xbf16>
    %91 = vector.shape_cast %90 : vector<1x8x64xbf16> to vector<8x64xbf16>
    %92 = arith.extf %91 : vector<8x64xbf16> to vector<8x64xf32>
    %93 = arith.truncf %52 : vector<8x16xf32> to vector<8x16xbf16>
    %cst_34 = arith.constant dense<0.000000e+00> : vector<8x64xf32>
    %94 = tpu.matmul %93, %3, %cst_34 {dimension_numbers = #tpu.dot_dimension_numbers<[1], [0], [0], [1], [0, 0, 1, 1], [], []>} : vector<8x16xbf16>, vector<16x64xbf16>, vector<8x64xf32> -> vector<8x64xf32>
    %95 = arith.addf %92, %94 : vector<8x64xf32>
    %c7_i32_35 = arith.constant 7 : i32
    %96 = arith.subi %c7_i32_35, %c1_i32 : i32
    %97 = arith.index_cast %96 : i32 to index
    %c0_36 = arith.constant 0 : index
    %c0_37 = arith.constant 0 : index
    %98 = vector.load %arg3[%97, %c0_36, %c0_37] : memref<8x8x64xbf16, #tpu.memory_space<vmem>>, vector<1x8x64xbf16>
    %99 = vector.shape_cast %98 : vector<1x8x64xbf16> to vector<8x64xbf16>
    %100 = arith.extf %99 : vector<8x64xbf16> to vector<8x64xf32>
    %101 = arith.truncf %77 : vector<8x16xf32> to vector<8x16xbf16>
    %cst_38 = arith.constant dense<0.000000e+00> : vector<8x64xf32>
    %102 = tpu.matmul %101, %4, %cst_38 {dimension_numbers = #tpu.dot_dimension_numbers<[1], [0], [0], [1], [0, 0, 1, 1], [], []>} : vector<8x16xbf16>, vector<16x64xbf16>, vector<8x64xf32> -> vector<8x64xf32>
    %103 = arith.addf %100, %102 : vector<8x64xf32>
    %104 = vector.extract_strided_slice %95 {offsets = [0, 0], sizes = [8, 16], strides = [1, 1]} : vector<8x64xf32> to vector<8x16xf32>
    %105 = arith.negf %104 : vector<8x16xf32>
    %106 = math.exp %105 : vector<8x16xf32>
    %cst_39 = arith.constant 1.000000e+00 : f32
    %107 = vector.broadcast %cst_39 : f32 to vector<8x16xf32>
    %108 = arith.addf %107, %106 : vector<8x16xf32>
    %109 = arith.divf %107, %108 : vector<8x16xf32>
    %110 = vector.extract_strided_slice %95 {offsets = [0, 16], sizes = [8, 16], strides = [1, 1]} : vector<8x64xf32> to vector<8x16xf32>
    %111 = arith.negf %110 : vector<8x16xf32>
    %112 = math.exp %111 : vector<8x16xf32>
    %cst_40 = arith.constant 1.000000e+00 : f32
    %113 = vector.broadcast %cst_40 : f32 to vector<8x16xf32>
    %114 = arith.addf %113, %112 : vector<8x16xf32>
    %115 = arith.divf %113, %114 : vector<8x16xf32>
    %116 = vector.extract_strided_slice %95 {offsets = [0, 32], sizes = [8, 16], strides = [1, 1]} : vector<8x64xf32> to vector<8x16xf32>
    %117 = math.tanh %116 : vector<8x16xf32>
    %118 = vector.extract_strided_slice %95 {offsets = [0, 48], sizes = [8, 16], strides = [1, 1]} : vector<8x64xf32> to vector<8x16xf32>
    %119 = arith.negf %118 : vector<8x16xf32>
    %120 = math.exp %119 : vector<8x16xf32>
    %cst_41 = arith.constant 1.000000e+00 : f32
    %121 = vector.broadcast %cst_41 : f32 to vector<8x16xf32>
    %122 = arith.addf %121, %120 : vector<8x16xf32>
    %123 = arith.divf %121, %122 : vector<8x16xf32>
    %124 = arith.mulf %115, %50 : vector<8x16xf32>
    %125 = arith.mulf %109, %117 : vector<8x16xf32>
    %126 = arith.addf %124, %125 : vector<8x16xf32>
    %127 = math.tanh %126 : vector<8x16xf32>
    %128 = arith.mulf %123, %127 : vector<8x16xf32>
    %129 = vector.extract_strided_slice %103 {offsets = [0, 0], sizes = [8, 16], strides = [1, 1]} : vector<8x64xf32> to vector<8x16xf32>
    %130 = arith.negf %129 : vector<8x16xf32>
    %131 = math.exp %130 : vector<8x16xf32>
    %cst_42 = arith.constant 1.000000e+00 : f32
    %132 = vector.broadcast %cst_42 : f32 to vector<8x16xf32>
    %133 = arith.addf %132, %131 : vector<8x16xf32>
    %134 = arith.divf %132, %133 : vector<8x16xf32>
    %135 = vector.extract_strided_slice %103 {offsets = [0, 16], sizes = [8, 16], strides = [1, 1]} : vector<8x64xf32> to vector<8x16xf32>
    %136 = arith.negf %135 : vector<8x16xf32>
    %137 = math.exp %136 : vector<8x16xf32>
    %cst_43 = arith.constant 1.000000e+00 : f32
    %138 = vector.broadcast %cst_43 : f32 to vector<8x16xf32>
    %139 = arith.addf %138, %137 : vector<8x16xf32>
    %140 = arith.divf %138, %139 : vector<8x16xf32>
    %141 = vector.extract_strided_slice %103 {offsets = [0, 32], sizes = [8, 16], strides = [1, 1]} : vector<8x64xf32> to vector<8x16xf32>
    %142 = math.tanh %141 : vector<8x16xf32>
    %143 = vector.extract_strided_slice %103 {offsets = [0, 48], sizes = [8, 16], strides = [1, 1]} : vector<8x64xf32> to vector<8x16xf32>
    %144 = arith.negf %143 : vector<8x16xf32>
    %145 = math.exp %144 : vector<8x16xf32>
    %cst_44 = arith.constant 1.000000e+00 : f32
    %146 = vector.broadcast %cst_44 : f32 to vector<8x16xf32>
    %147 = arith.addf %146, %145 : vector<8x16xf32>
    %148 = arith.divf %146, %147 : vector<8x16xf32>
    %149 = arith.mulf %140, %75 : vector<8x16xf32>
    %150 = arith.mulf %134, %142 : vector<8x16xf32>
    %151 = arith.addf %149, %150 : vector<8x16xf32>
    %152 = math.tanh %151 : vector<8x16xf32>
    %153 = arith.mulf %148, %152 : vector<8x16xf32>
    %154 = arith.truncf %128 : vector<8x16xf32> to vector<8x16xbf16>
    %155 = arith.index_cast %c1_i32 : i32 to index
    %c0_45 = arith.constant 0 : index
    %c0_46 = arith.constant 0 : index
    %156 = vector.load %arg6[%155, %c0_45, %c0_46] : memref<8x8x16xbf16, #tpu.memory_space<vmem>>, vector<1x8x16xbf16>
    %157 = vector.shape_cast %156 : vector<1x8x16xbf16> to vector<8x16xbf16>
    %158 = vector.shape_cast %154 : vector<8x16xbf16> to vector<1x8x16xbf16>
    tpu.vector_store %arg6[%155, %c0_45, %c0_46], %158 {strides = array<i32>} : memref<8x8x16xbf16, #tpu.memory_space<vmem>>, vector<1x8x16xbf16>,
    %159 = arith.truncf %153 : vector<8x16xf32> to vector<8x16xbf16>
    %c7_i32_47 = arith.constant 7 : i32
    %160 = arith.subi %c7_i32_47, %c1_i32 : i32
    %161 = arith.index_cast %160 : i32 to index
    %c0_48 = arith.constant 0 : index
    %c0_49 = arith.constant 0 : index
    %162 = vector.load %arg7[%161, %c0_48, %c0_49] : memref<8x8x16xbf16, #tpu.memory_space<vmem>>, vector<1x8x16xbf16>
    %163 = vector.shape_cast %162 : vector<1x8x16xbf16> to vector<8x16xbf16>
    %164 = vector.shape_cast %159 : vector<8x16xbf16> to vector<1x8x16xbf16>
    tpu.vector_store %arg7[%161, %c0_48, %c0_49], %164 {strides = array<i32>} : memref<8x8x16xbf16, #tpu.memory_space<vmem>>, vector<1x8x16xbf16>,
    %c2_i32 = arith.constant 2 : i32
    %165 = arith.index_cast %c2_i32 : i32 to index
    %c0_50 = arith.constant 0 : index
    %c0_51 = arith.constant 0 : index
    %166 = vector.load %arg2[%165, %c0_50, %c0_51] : memref<8x8x64xbf16, #tpu.memory_space<vmem>>, vector<1x8x64xbf16>
    %167 = vector.shape_cast %166 : vector<1x8x64xbf16> to vector<8x64xbf16>
    %168 = arith.extf %167 : vector<8x64xbf16> to vector<8x64xf32>
    %169 = arith.truncf %128 : vector<8x16xf32> to vector<8x16xbf16>
    %cst_52 = arith.constant dense<0.000000e+00> : vector<8x64xf32>
    %170 = tpu.matmul %169, %3, %cst_52 {dimension_numbers = #tpu.dot_dimension_numbers<[1], [0], [0], [1], [0, 0, 1, 1], [], []>} : vector<8x16xbf16>, vector<16x64xbf16>, vector<8x64xf32> -> vector<8x64xf32>
    %171 = arith.addf %168, %170 : vector<8x64xf32>
    %c7_i32_53 = arith.constant 7 : i32
    %172 = arith.subi %c7_i32_53, %c2_i32 : i32
    %173 = arith.index_cast %172 : i32 to index
    %c0_54 = arith.constant 0 : index
    %c0_55 = arith.constant 0 : index
    %174 = vector.load %arg3[%173, %c0_54, %c0_55] : memref<8x8x64xbf16, #tpu.memory_space<vmem>>, vector<1x8x64xbf16>
    %175 = vector.shape_cast %174 : vector<1x8x64xbf16> to vector<8x64xbf16>
    %176 = arith.extf %175 : vector<8x64xbf16> to vector<8x64xf32>
    %177 = arith.truncf %153 : vector<8x16xf32> to vector<8x16xbf16>
    %cst_56 = arith.constant dense<0.000000e+00> : vector<8x64xf32>
    %178 = tpu.matmul %177, %4, %cst_56 {dimension_numbers = #tpu.dot_dimension_numbers<[1], [0], [0], [1], [0, 0, 1, 1], [], []>} : vector<8x16xbf16>, vector<16x64xbf16>, vector<8x64xf32> -> vector<8x64xf32>
    %179 = arith.addf %176, %178 : vector<8x64xf32>
    %180 = vector.extract_strided_slice %171 {offsets = [0, 0], sizes = [8, 16], strides = [1, 1]} : vector<8x64xf32> to vector<8x16xf32>
    %181 = arith.negf %180 : vector<8x16xf32>
    %182 = math.exp %181 : vector<8x16xf32>
    %cst_57 = arith.constant 1.000000e+00 : f32
    %183 = vector.broadcast %cst_57 : f32 to vector<8x16xf32>
    %184 = arith.addf %183, %182 : vector<8x16xf32>
    %185 = arith.divf %183, %184 : vector<8x16xf32>
    %186 = vector.extract_strided_slice %171 {offsets = [0, 16], sizes = [8, 16], strides = [1, 1]} : vector<8x64xf32> to vector<8x16xf32>
    %187 = arith.negf %186 : vector<8x16xf32>
    %188 = math.exp %187 : vector<8x16xf32>
    %cst_58 = arith.constant 1.000000e+00 : f32
    %189 = vector.broadcast %cst_58 : f32 to vector<8x16xf32>
    %190 = arith.addf %189, %188 : vector<8x16xf32>
    %191 = arith.divf %189, %190 : vector<8x16xf32>
    %192 = vector.extract_strided_slice %171 {offsets = [0, 32], sizes = [8, 16], strides = [1, 1]} : vector<8x64xf32> to vector<8x16xf32>
    %193 = math.tanh %192 : vector<8x16xf32>
    %194 = vector.extract_strided_slice %171 {offsets = [0, 48], sizes = [8, 16], strides = [1, 1]} : vector<8x64xf32> to vector<8x16xf32>
    %195 = arith.negf %194 : vector<8x16xf32>
    %196 = math.exp %195 : vector<8x16xf32>
    %cst_59 = arith.constant 1.000000e+00 : f32
    %197 = vector.broadcast %cst_59 : f32 to vector<8x16xf32>
    %198 = arith.addf %197, %196 : vector<8x16xf32>
    %199 = arith.divf %197, %198 : vector<8x16xf32>
    %200 = arith.mulf %191, %126 : vector<8x16xf32>
    %201 = arith.mulf %185, %193 : vector<8x16xf32>
    %202 = arith.addf %200, %201 : vector<8x16xf32>
    %203 = math.tanh %202 : vector<8x16xf32>
    %204 = arith.mulf %199, %203 : vector<8x16xf32>
    %205 = vector.extract_strided_slice %179 {offsets = [0, 0], sizes = [8, 16], strides = [1, 1]} : vector<8x64xf32> to vector<8x16xf32>
    %206 = arith.negf %205 : vector<8x16xf32>
    %207 = math.exp %206 : vector<8x16xf32>
    %cst_60 = arith.constant 1.000000e+00 : f32
    %208 = vector.broadcast %cst_60 : f32 to vector<8x16xf32>
    %209 = arith.addf %208, %207 : vector<8x16xf32>
    %210 = arith.divf %208, %209 : vector<8x16xf32>
    %211 = vector.extract_strided_slice %179 {offsets = [0, 16], sizes = [8, 16], strides = [1, 1]} : vector<8x64xf32> to vector<8x16xf32>
    %212 = arith.negf %211 : vector<8x16xf32>
    %213 = math.exp %212 : vector<8x16xf32>
    %cst_61 = arith.constant 1.000000e+00 : f32
    %214 = vector.broadcast %cst_61 : f32 to vector<8x16xf32>
    %215 = arith.addf %214, %213 : vector<8x16xf32>
    %216 = arith.divf %214, %215 : vector<8x16xf32>
    %217 = vector.extract_strided_slice %179 {offsets = [0, 32], sizes = [8, 16], strides = [1, 1]} : vector<8x64xf32> to vector<8x16xf32>
    %218 = math.tanh %217 : vector<8x16xf32>
    %219 = vector.extract_strided_slice %179 {offsets = [0, 48], sizes = [8, 16], strides = [1, 1]} : vector<8x64xf32> to vector<8x16xf32>
    %220 = arith.negf %219 : vector<8x16xf32>
    %221 = math.exp %220 : vector<8x16xf32>
    %cst_62 = arith.constant 1.000000e+00 : f32
    %222 = vector.broadcast %cst_62 : f32 to vector<8x16xf32>
    %223 = arith.addf %222, %221 : vector<8x16xf32>
    %224 = arith.divf %222, %223 : vector<8x16xf32>
    %225 = arith.mulf %216, %151 : vector<8x16xf32>
    %226 = arith.mulf %210, %218 : vector<8x16xf32>
    %227 = arith.addf %225, %226 : vector<8x16xf32>
    %228 = math.tanh %227 : vector<8x16xf32>
    %229 = arith.mulf %224, %228 : vector<8x16xf32>
    %230 = arith.truncf %204 : vector<8x16xf32> to vector<8x16xbf16>
    %231 = arith.index_cast %c2_i32 : i32 to index
    %c0_63 = arith.constant 0 : index
    %c0_64 = arith.constant 0 : index
    %232 = vector.load %arg6[%231, %c0_63, %c0_64] : memref<8x8x16xbf16, #tpu.memory_space<vmem>>, vector<1x8x16xbf16>
    %233 = vector.shape_cast %232 : vector<1x8x16xbf16> to vector<8x16xbf16>
    %234 = vector.shape_cast %230 : vector<8x16xbf16> to vector<1x8x16xbf16>
    tpu.vector_store %arg6[%231, %c0_63, %c0_64], %234 {strides = array<i32>} : memref<8x8x16xbf16, #tpu.memory_space<vmem>>, vector<1x8x16xbf16>,
    %235 = arith.truncf %229 : vector<8x16xf32> to vector<8x16xbf16>
    %c7_i32_65 = arith.constant 7 : i32
    %236 = arith.subi %c7_i32_65, %c2_i32 : i32
    %237 = arith.index_cast %236 : i32 to index
    %c0_66 = arith.constant 0 : index
    %c0_67 = arith.constant 0 : index
    %238 = vector.load %arg7[%237, %c0_66, %c0_67] : memref<8x8x16xbf16, #tpu.memory_space<vmem>>, vector<1x8x16xbf16>
    %239 = vector.shape_cast %238 : vector<1x8x16xbf16> to vector<8x16xbf16>
    %240 = vector.shape_cast %235 : vector<8x16xbf16> to vector<1x8x16xbf16>
    tpu.vector_store %arg7[%237, %c0_66, %c0_67], %240 {strides = array<i32>} : memref<8x8x16xbf16, #tpu.memory_space<vmem>>, vector<1x8x16xbf16>,
    %c3_i32 = arith.constant 3 : i32
    %241 = arith.index_cast %c3_i32 : i32 to index
    %c0_68 = arith.constant 0 : index
    %c0_69 = arith.constant 0 : index
    %242 = vector.load %arg2[%241, %c0_68, %c0_69] : memref<8x8x64xbf16, #tpu.memory_space<vmem>>, vector<1x8x64xbf16>
    %243 = vector.shape_cast %242 : vector<1x8x64xbf16> to vector<8x64xbf16>
    %244 = arith.extf %243 : vector<8x64xbf16> to vector<8x64xf32>
    %245 = arith.truncf %204 : vector<8x16xf32> to vector<8x16xbf16>
    %cst_70 = arith.constant dense<0.000000e+00> : vector<8x64xf32>
    %246 = tpu.matmul %245, %3, %cst_70 {dimension_numbers = #tpu.dot_dimension_numbers<[1], [0], [0], [1], [0, 0, 1, 1], [], []>} : vector<8x16xbf16>, vector<16x64xbf16>, vector<8x64xf32> -> vector<8x64xf32>
    %247 = arith.addf %244, %246 : vector<8x64xf32>
    %c7_i32_71 = arith.constant 7 : i32
    %248 = arith.subi %c7_i32_71, %c3_i32 : i32
    %249 = arith.index_cast %248 : i32 to index
    %c0_72 = arith.constant 0 : index
    %c0_73 = arith.constant 0 : index
    %250 = vector.load %arg3[%249, %c0_72, %c0_73] : memref<8x8x64xbf16, #tpu.memory_space<vmem>>, vector<1x8x64xbf16>
    %251 = vector.shape_cast %250 : vector<1x8x64xbf16> to vector<8x64xbf16>
    %252 = arith.extf %251 : vector<8x64xbf16> to vector<8x64xf32>
    %253 = arith.truncf %229 : vector<8x16xf32> to vector<8x16xbf16>
    %cst_74 = arith.constant dense<0.000000e+00> : vector<8x64xf32>
    %254 = tpu.matmul %253, %4, %cst_74 {dimension_numbers = #tpu.dot_dimension_numbers<[1], [0], [0], [1], [0, 0, 1, 1], [], []>} : vector<8x16xbf16>, vector<16x64xbf16>, vector<8x64xf32> -> vector<8x64xf32>
    %255 = arith.addf %252, %254 : vector<8x64xf32>
    %256 = vector.extract_strided_slice %247 {offsets = [0, 0], sizes = [8, 16], strides = [1, 1]} : vector<8x64xf32> to vector<8x16xf32>
    %257 = arith.negf %256 : vector<8x16xf32>
    %258 = math.exp %257 : vector<8x16xf32>
    %cst_75 = arith.constant 1.000000e+00 : f32
    %259 = vector.broadcast %cst_75 : f32 to vector<8x16xf32>
    %260 = arith.addf %259, %258 : vector<8x16xf32>
    %261 = arith.divf %259, %260 : vector<8x16xf32>
    %262 = vector.extract_strided_slice %247 {offsets = [0, 16], sizes = [8, 16], strides = [1, 1]} : vector<8x64xf32> to vector<8x16xf32>
    %263 = arith.negf %262 : vector<8x16xf32>
    %264 = math.exp %263 : vector<8x16xf32>
    %cst_76 = arith.constant 1.000000e+00 : f32
    %265 = vector.broadcast %cst_76 : f32 to vector<8x16xf32>
    %266 = arith.addf %265, %264 : vector<8x16xf32>
    %267 = arith.divf %265, %266 : vector<8x16xf32>
    %268 = vector.extract_strided_slice %247 {offsets = [0, 32], sizes = [8, 16], strides = [1, 1]} : vector<8x64xf32> to vector<8x16xf32>
    %269 = math.tanh %268 : vector<8x16xf32>
    %270 = vector.extract_strided_slice %247 {offsets = [0, 48], sizes = [8, 16], strides = [1, 1]} : vector<8x64xf32> to vector<8x16xf32>
    %271 = arith.negf %270 : vector<8x16xf32>
    %272 = math.exp %271 : vector<8x16xf32>
    %cst_77 = arith.constant 1.000000e+00 : f32
    %273 = vector.broadcast %cst_77 : f32 to vector<8x16xf32>
    %274 = arith.addf %273, %272 : vector<8x16xf32>
    %275 = arith.divf %273, %274 : vector<8x16xf32>
    %276 = arith.mulf %267, %202 : vector<8x16xf32>
    %277 = arith.mulf %261, %269 : vector<8x16xf32>
    %278 = arith.addf %276, %277 : vector<8x16xf32>
    %279 = math.tanh %278 : vector<8x16xf32>
    %280 = arith.mulf %275, %279 : vector<8x16xf32>
    %281 = vector.extract_strided_slice %255 {offsets = [0, 0], sizes = [8, 16], strides = [1, 1]} : vector<8x64xf32> to vector<8x16xf32>
    %282 = arith.negf %281 : vector<8x16xf32>
    %283 = math.exp %282 : vector<8x16xf32>
    %cst_78 = arith.constant 1.000000e+00 : f32
    %284 = vector.broadcast %cst_78 : f32 to vector<8x16xf32>
    %285 = arith.addf %284, %283 : vector<8x16xf32>
    %286 = arith.divf %284, %285 : vector<8x16xf32>
    %287 = vector.extract_strided_slice %255 {offsets = [0, 16], sizes = [8, 16], strides = [1, 1]} : vector<8x64xf32> to vector<8x16xf32>
    %288 = arith.negf %287 : vector<8x16xf32>
    %289 = math.exp %288 : vector<8x16xf32>
    %cst_79 = arith.constant 1.000000e+00 : f32
    %290 = vector.broadcast %cst_79 : f32 to vector<8x16xf32>
    %291 = arith.addf %290, %289 : vector<8x16xf32>
    %292 = arith.divf %290, %291 : vector<8x16xf32>
    %293 = vector.extract_strided_slice %255 {offsets = [0, 32], sizes = [8, 16], strides = [1, 1]} : vector<8x64xf32> to vector<8x16xf32>
    %294 = math.tanh %293 : vector<8x16xf32>
    %295 = vector.extract_strided_slice %255 {offsets = [0, 48], sizes = [8, 16], strides = [1, 1]} : vector<8x64xf32> to vector<8x16xf32>
    %296 = arith.negf %295 : vector<8x16xf32>
    %297 = math.exp %296 : vector<8x16xf32>
    %cst_80 = arith.constant 1.000000e+00 : f32
    %298 = vector.broadcast %cst_80 : f32 to vector<8x16xf32>
    %299 = arith.addf %298, %297 : vector<8x16xf32>
    %300 = arith.divf %298, %299 : vector<8x16xf32>
    %301 = arith.mulf %292, %227 : vector<8x16xf32>
    %302 = arith.mulf %286, %294 : vector<8x16xf32>
    %303 = arith.addf %301, %302 : vector<8x16xf32>
    %304 = math.tanh %303 : vector<8x16xf32>
    %305 = arith.mulf %300, %304 : vector<8x16xf32>
    %306 = arith.truncf %280 : vector<8x16xf32> to vector<8x16xbf16>
    %307 = arith.index_cast %c3_i32 : i32 to index
    %c0_81 = arith.constant 0 : index
    %c0_82 = arith.constant 0 : index
    %308 = vector.load %arg6[%307, %c0_81, %c0_82] : memref<8x8x16xbf16, #tpu.memory_space<vmem>>, vector<1x8x16xbf16>
    %309 = vector.shape_cast %308 : vector<1x8x16xbf16> to vector<8x16xbf16>
    %310 = vector.shape_cast %306 : vector<8x16xbf16> to vector<1x8x16xbf16>
    tpu.vector_store %arg6[%307, %c0_81, %c0_82], %310 {strides = array<i32>} : memref<8x8x16xbf16, #tpu.memory_space<vmem>>, vector<1x8x16xbf16>,
    %311 = arith.truncf %305 : vector<8x16xf32> to vector<8x16xbf16>
    %c7_i32_83 = arith.constant 7 : i32
    %312 = arith.subi %c7_i32_83, %c3_i32 : i32
    %313 = arith.index_cast %312 : i32 to index
    %c0_84 = arith.constant 0 : index
    %c0_85 = arith.constant 0 : index
    %314 = vector.load %arg7[%313, %c0_84, %c0_85] : memref<8x8x16xbf16, #tpu.memory_space<vmem>>, vector<1x8x16xbf16>
    %315 = vector.shape_cast %314 : vector<1x8x16xbf16> to vector<8x16xbf16>
    %316 = vector.shape_cast %311 : vector<8x16xbf16> to vector<1x8x16xbf16>
    tpu.vector_store %arg7[%313, %c0_84, %c0_85], %316 {strides = array<i32>} : memref<8x8x16xbf16, #tpu.memory_space<vmem>>, vector<1x8x16xbf16>,
    %c4_i32 = arith.constant 4 : i32
    %317 = arith.index_cast %c4_i32 : i32 to index
    %c0_86 = arith.constant 0 : index
    %c0_87 = arith.constant 0 : index
    %318 = vector.load %arg2[%317, %c0_86, %c0_87] : memref<8x8x64xbf16, #tpu.memory_space<vmem>>, vector<1x8x64xbf16>
    %319 = vector.shape_cast %318 : vector<1x8x64xbf16> to vector<8x64xbf16>
    %320 = arith.extf %319 : vector<8x64xbf16> to vector<8x64xf32>
    %321 = arith.truncf %280 : vector<8x16xf32> to vector<8x16xbf16>
    %cst_88 = arith.constant dense<0.000000e+00> : vector<8x64xf32>
    %322 = tpu.matmul %321, %3, %cst_88 {dimension_numbers = #tpu.dot_dimension_numbers<[1], [0], [0], [1], [0, 0, 1, 1], [], []>} : vector<8x16xbf16>, vector<16x64xbf16>, vector<8x64xf32> -> vector<8x64xf32>
    %323 = arith.addf %320, %322 : vector<8x64xf32>
    %c7_i32_89 = arith.constant 7 : i32
    %324 = arith.subi %c7_i32_89, %c4_i32 : i32
    %325 = arith.index_cast %324 : i32 to index
    %c0_90 = arith.constant 0 : index
    %c0_91 = arith.constant 0 : index
    %326 = vector.load %arg3[%325, %c0_90, %c0_91] : memref<8x8x64xbf16, #tpu.memory_space<vmem>>, vector<1x8x64xbf16>
    %327 = vector.shape_cast %326 : vector<1x8x64xbf16> to vector<8x64xbf16>
    %328 = arith.extf %327 : vector<8x64xbf16> to vector<8x64xf32>
    %329 = arith.truncf %305 : vector<8x16xf32> to vector<8x16xbf16>
    %cst_92 = arith.constant dense<0.000000e+00> : vector<8x64xf32>
    %330 = tpu.matmul %329, %4, %cst_92 {dimension_numbers = #tpu.dot_dimension_numbers<[1], [0], [0], [1], [0, 0, 1, 1], [], []>} : vector<8x16xbf16>, vector<16x64xbf16>, vector<8x64xf32> -> vector<8x64xf32>
    %331 = arith.addf %328, %330 : vector<8x64xf32>
    %332 = vector.extract_strided_slice %323 {offsets = [0, 0], sizes = [8, 16], strides = [1, 1]} : vector<8x64xf32> to vector<8x16xf32>
    %333 = arith.negf %332 : vector<8x16xf32>
    %334 = math.exp %333 : vector<8x16xf32>
    %cst_93 = arith.constant 1.000000e+00 : f32
    %335 = vector.broadcast %cst_93 : f32 to vector<8x16xf32>
    %336 = arith.addf %335, %334 : vector<8x16xf32>
    %337 = arith.divf %335, %336 : vector<8x16xf32>
    %338 = vector.extract_strided_slice %323 {offsets = [0, 16], sizes = [8, 16], strides = [1, 1]} : vector<8x64xf32> to vector<8x16xf32>
    %339 = arith.negf %338 : vector<8x16xf32>
    %340 = math.exp %339 : vector<8x16xf32>
    %cst_94 = arith.constant 1.000000e+00 : f32
    %341 = vector.broadcast %cst_94 : f32 to vector<8x16xf32>
    %342 = arith.addf %341, %340 : vector<8x16xf32>
    %343 = arith.divf %341, %342 : vector<8x16xf32>
    %344 = vector.extract_strided_slice %323 {offsets = [0, 32], sizes = [8, 16], strides = [1, 1]} : vector<8x64xf32> to vector<8x16xf32>
    %345 = math.tanh %344 : vector<8x16xf32>
    %346 = vector.extract_strided_slice %323 {offsets = [0, 48], sizes = [8, 16], strides = [1, 1]} : vector<8x64xf32> to vector<8x16xf32>
    %347 = arith.negf %346 : vector<8x16xf32>
    %348 = math.exp %347 : vector<8x16xf32>
    %cst_95 = arith.constant 1.000000e+00 : f32
    %349 = vector.broadcast %cst_95 : f32 to vector<8x16xf32>
    %350 = arith.addf %349, %348 : vector<8x16xf32>
    %351 = arith.divf %349, %350 : vector<8x16xf32>
    %352 = arith.mulf %343, %278 : vector<8x16xf32>
    %353 = arith.mulf %337, %345 : vector<8x16xf32>
    %354 = arith.addf %352, %353 : vector<8x16xf32>
    %355 = math.tanh %354 : vector<8x16xf32>
    %356 = arith.mulf %351, %355 : vector<8x16xf32>
    %357 = vector.extract_strided_slice %331 {offsets = [0, 0], sizes = [8, 16], strides = [1, 1]} : vector<8x64xf32> to vector<8x16xf32>
    %358 = arith.negf %357 : vector<8x16xf32>
    %359 = math.exp %358 : vector<8x16xf32>
    %cst_96 = arith.constant 1.000000e+00 : f32
    %360 = vector.broadcast %cst_96 : f32 to vector<8x16xf32>
    %361 = arith.addf %360, %359 : vector<8x16xf32>
    %362 = arith.divf %360, %361 : vector<8x16xf32>
    %363 = vector.extract_strided_slice %331 {offsets = [0, 16], sizes = [8, 16], strides = [1, 1]} : vector<8x64xf32> to vector<8x16xf32>
    %364 = arith.negf %363 : vector<8x16xf32>
    %365 = math.exp %364 : vector<8x16xf32>
    %cst_97 = arith.constant 1.000000e+00 : f32
    %366 = vector.broadcast %cst_97 : f32 to vector<8x16xf32>
    %367 = arith.addf %366, %365 : vector<8x16xf32>
    %368 = arith.divf %366, %367 : vector<8x16xf32>
    %369 = vector.extract_strided_slice %331 {offsets = [0, 32], sizes = [8, 16], strides = [1, 1]} : vector<8x64xf32> to vector<8x16xf32>
    %370 = math.tanh %369 : vector<8x16xf32>
    %371 = vector.extract_strided_slice %331 {offsets = [0, 48], sizes = [8, 16], strides = [1, 1]} : vector<8x64xf32> to vector<8x16xf32>
    %372 = arith.negf %371 : vector<8x16xf32>
    %373 = math.exp %372 : vector<8x16xf32>
    %cst_98 = arith.constant 1.000000e+00 : f32
    %374 = vector.broadcast %cst_98 : f32 to vector<8x16xf32>
    %375 = arith.addf %374, %373 : vector<8x16xf32>
    %376 = arith.divf %374, %375 : vector<8x16xf32>
    %377 = arith.mulf %368, %303 : vector<8x16xf32>
    %378 = arith.mulf %362, %370 : vector<8x16xf32>
    %379 = arith.addf %377, %378 : vector<8x16xf32>
    %380 = math.tanh %379 : vector<8x16xf32>
    %381 = arith.mulf %376, %380 : vector<8x16xf32>
    %382 = arith.truncf %356 : vector<8x16xf32> to vector<8x16xbf16>
    %383 = arith.index_cast %c4_i32 : i32 to index
    %c0_99 = arith.constant 0 : index
    %c0_100 = arith.constant 0 : index
    %384 = vector.load %arg6[%383, %c0_99, %c0_100] : memref<8x8x16xbf16, #tpu.memory_space<vmem>>, vector<1x8x16xbf16>
    %385 = vector.shape_cast %384 : vector<1x8x16xbf16> to vector<8x16xbf16>
    %386 = vector.shape_cast %382 : vector<8x16xbf16> to vector<1x8x16xbf16>
    tpu.vector_store %arg6[%383, %c0_99, %c0_100], %386 {strides = array<i32>} : memref<8x8x16xbf16, #tpu.memory_space<vmem>>, vector<1x8x16xbf16>,
    %387 = arith.truncf %381 : vector<8x16xf32> to vector<8x16xbf16>
    %c7_i32_101 = arith.constant 7 : i32
    %388 = arith.subi %c7_i32_101, %c4_i32 : i32
    %389 = arith.index_cast %388 : i32 to index
    %c0_102 = arith.constant 0 : index
    %c0_103 = arith.constant 0 : index
    %390 = vector.load %arg7[%389, %c0_102, %c0_103] : memref<8x8x16xbf16, #tpu.memory_space<vmem>>, vector<1x8x16xbf16>
    %391 = vector.shape_cast %390 : vector<1x8x16xbf16> to vector<8x16xbf16>
    %392 = vector.shape_cast %387 : vector<8x16xbf16> to vector<1x8x16xbf16>
    tpu.vector_store %arg7[%389, %c0_102, %c0_103], %392 {strides = array<i32>} : memref<8x8x16xbf16, #tpu.memory_space<vmem>>, vector<1x8x16xbf16>,
    %c5_i32 = arith.constant 5 : i32
    %393 = arith.index_cast %c5_i32 : i32 to index
    %c0_104 = arith.constant 0 : index
    %c0_105 = arith.constant 0 : index
    %394 = vector.load %arg2[%393, %c0_104, %c0_105] : memref<8x8x64xbf16, #tpu.memory_space<vmem>>, vector<1x8x64xbf16>
    %395 = vector.shape_cast %394 : vector<1x8x64xbf16> to vector<8x64xbf16>
    %396 = arith.extf %395 : vector<8x64xbf16> to vector<8x64xf32>
    %397 = arith.truncf %356 : vector<8x16xf32> to vector<8x16xbf16>
    %cst_106 = arith.constant dense<0.000000e+00> : vector<8x64xf32>
    %398 = tpu.matmul %397, %3, %cst_106 {dimension_numbers = #tpu.dot_dimension_numbers<[1], [0], [0], [1], [0, 0, 1, 1], [], []>} : vector<8x16xbf16>, vector<16x64xbf16>, vector<8x64xf32> -> vector<8x64xf32>
    %399 = arith.addf %396, %398 : vector<8x64xf32>
    %c7_i32_107 = arith.constant 7 : i32
    %400 = arith.subi %c7_i32_107, %c5_i32 : i32
    %401 = arith.index_cast %400 : i32 to index
    %c0_108 = arith.constant 0 : index
    %c0_109 = arith.constant 0 : index
    %402 = vector.load %arg3[%401, %c0_108, %c0_109] : memref<8x8x64xbf16, #tpu.memory_space<vmem>>, vector<1x8x64xbf16>
    %403 = vector.shape_cast %402 : vector<1x8x64xbf16> to vector<8x64xbf16>
    %404 = arith.extf %403 : vector<8x64xbf16> to vector<8x64xf32>
    %405 = arith.truncf %381 : vector<8x16xf32> to vector<8x16xbf16>
    %cst_110 = arith.constant dense<0.000000e+00> : vector<8x64xf32>
    %406 = tpu.matmul %405, %4, %cst_110 {dimension_numbers = #tpu.dot_dimension_numbers<[1], [0], [0], [1], [0, 0, 1, 1], [], []>} : vector<8x16xbf16>, vector<16x64xbf16>, vector<8x64xf32> -> vector<8x64xf32>
    %407 = arith.addf %404, %406 : vector<8x64xf32>
    %408 = vector.extract_strided_slice %399 {offsets = [0, 0], sizes = [8, 16], strides = [1, 1]} : vector<8x64xf32> to vector<8x16xf32>
    %409 = arith.negf %408 : vector<8x16xf32>
    %410 = math.exp %409 : vector<8x16xf32>
    %cst_111 = arith.constant 1.000000e+00 : f32
    %411 = vector.broadcast %cst_111 : f32 to vector<8x16xf32>
    %412 = arith.addf %411, %410 : vector<8x16xf32>
    %413 = arith.divf %411, %412 : vector<8x16xf32>
    %414 = vector.extract_strided_slice %399 {offsets = [0, 16], sizes = [8, 16], strides = [1, 1]} : vector<8x64xf32> to vector<8x16xf32>
    %415 = arith.negf %414 : vector<8x16xf32>
    %416 = math.exp %415 : vector<8x16xf32>
    %cst_112 = arith.constant 1.000000e+00 : f32
    %417 = vector.broadcast %cst_112 : f32 to vector<8x16xf32>
    %418 = arith.addf %417, %416 : vector<8x16xf32>
    %419 = arith.divf %417, %418 : vector<8x16xf32>
    %420 = vector.extract_strided_slice %399 {offsets = [0, 32], sizes = [8, 16], strides = [1, 1]} : vector<8x64xf32> to vector<8x16xf32>
    %421 = math.tanh %420 : vector<8x16xf32>
    %422 = vector.extract_strided_slice %399 {offsets = [0, 48], sizes = [8, 16], strides = [1, 1]} : vector<8x64xf32> to vector<8x16xf32>
    %423 = arith.negf %422 : vector<8x16xf32>
    %424 = math.exp %423 : vector<8x16xf32>
    %cst_113 = arith.constant 1.000000e+00 : f32
    %425 = vector.broadcast %cst_113 : f32 to vector<8x16xf32>
    %426 = arith.addf %425, %424 : vector<8x16xf32>
    %427 = arith.divf %425, %426 : vector<8x16xf32>
    %428 = arith.mulf %419, %354 : vector<8x16xf32>
    %429 = arith.mulf %413, %421 : vector<8x16xf32>
    %430 = arith.addf %428, %429 : vector<8x16xf32>
    %431 = math.tanh %430 : vector<8x16xf32>
    %432 = arith.mulf %427, %431 : vector<8x16xf32>
    %433 = vector.extract_strided_slice %407 {offsets = [0, 0], sizes = [8, 16], strides = [1, 1]} : vector<8x64xf32> to vector<8x16xf32>
    %434 = arith.negf %433 : vector<8x16xf32>
    %435 = math.exp %434 : vector<8x16xf32>
    %cst_114 = arith.constant 1.000000e+00 : f32
    %436 = vector.broadcast %cst_114 : f32 to vector<8x16xf32>
    %437 = arith.addf %436, %435 : vector<8x16xf32>
    %438 = arith.divf %436, %437 : vector<8x16xf32>
    %439 = vector.extract_strided_slice %407 {offsets = [0, 16], sizes = [8, 16], strides = [1, 1]} : vector<8x64xf32> to vector<8x16xf32>
    %440 = arith.negf %439 : vector<8x16xf32>
    %441 = math.exp %440 : vector<8x16xf32>
    %cst_115 = arith.constant 1.000000e+00 : f32
    %442 = vector.broadcast %cst_115 : f32 to vector<8x16xf32>
    %443 = arith.addf %442, %441 : vector<8x16xf32>
    %444 = arith.divf %442, %443 : vector<8x16xf32>
    %445 = vector.extract_strided_slice %407 {offsets = [0, 32], sizes = [8, 16], strides = [1, 1]} : vector<8x64xf32> to vector<8x16xf32>
    %446 = math.tanh %445 : vector<8x16xf32>
    %447 = vector.extract_strided_slice %407 {offsets = [0, 48], sizes = [8, 16], strides = [1, 1]} : vector<8x64xf32> to vector<8x16xf32>
    %448 = arith.negf %447 : vector<8x16xf32>
    %449 = math.exp %448 : vector<8x16xf32>
    %cst_116 = arith.constant 1.000000e+00 : f32
    %450 = vector.broadcast %cst_116 : f32 to vector<8x16xf32>
    %451 = arith.addf %450, %449 : vector<8x16xf32>
    %452 = arith.divf %450, %451 : vector<8x16xf32>
    %453 = arith.mulf %444, %379 : vector<8x16xf32>
    %454 = arith.mulf %438, %446 : vector<8x16xf32>
    %455 = arith.addf %453, %454 : vector<8x16xf32>
    %456 = math.tanh %455 : vector<8x16xf32>
    %457 = arith.mulf %452, %456 : vector<8x16xf32>
    %458 = arith.truncf %432 : vector<8x16xf32> to vector<8x16xbf16>
    %459 = arith.index_cast %c5_i32 : i32 to index
    %c0_117 = arith.constant 0 : index
    %c0_118 = arith.constant 0 : index
    %460 = vector.load %arg6[%459, %c0_117, %c0_118] : memref<8x8x16xbf16, #tpu.memory_space<vmem>>, vector<1x8x16xbf16>
    %461 = vector.shape_cast %460 : vector<1x8x16xbf16> to vector<8x16xbf16>
    %462 = vector.shape_cast %458 : vector<8x16xbf16> to vector<1x8x16xbf16>
    tpu.vector_store %arg6[%459, %c0_117, %c0_118], %462 {strides = array<i32>} : memref<8x8x16xbf16, #tpu.memory_space<vmem>>, vector<1x8x16xbf16>,
    %463 = arith.truncf %457 : vector<8x16xf32> to vector<8x16xbf16>
    %c7_i32_119 = arith.constant 7 : i32
    %464 = arith.subi %c7_i32_119, %c5_i32 : i32
    %465 = arith.index_cast %464 : i32 to index
    %c0_120 = arith.constant 0 : index
    %c0_121 = arith.constant 0 : index
    %466 = vector.load %arg7[%465, %c0_120, %c0_121] : memref<8x8x16xbf16, #tpu.memory_space<vmem>>, vector<1x8x16xbf16>
    %467 = vector.shape_cast %466 : vector<1x8x16xbf16> to vector<8x16xbf16>
    %468 = vector.shape_cast %463 : vector<8x16xbf16> to vector<1x8x16xbf16>
    tpu.vector_store %arg7[%465, %c0_120, %c0_121], %468 {strides = array<i32>} : memref<8x8x16xbf16, #tpu.memory_space<vmem>>, vector<1x8x16xbf16>,
    %c6_i32 = arith.constant 6 : i32
    %469 = arith.index_cast %c6_i32 : i32 to index
    %c0_122 = arith.constant 0 : index
    %c0_123 = arith.constant 0 : index
    %470 = vector.load %arg2[%469, %c0_122, %c0_123] : memref<8x8x64xbf16, #tpu.memory_space<vmem>>, vector<1x8x64xbf16>
    %471 = vector.shape_cast %470 : vector<1x8x64xbf16> to vector<8x64xbf16>
    %472 = arith.extf %471 : vector<8x64xbf16> to vector<8x64xf32>
    %473 = arith.truncf %432 : vector<8x16xf32> to vector<8x16xbf16>
    %cst_124 = arith.constant dense<0.000000e+00> : vector<8x64xf32>
    %474 = tpu.matmul %473, %3, %cst_124 {dimension_numbers = #tpu.dot_dimension_numbers<[1], [0], [0], [1], [0, 0, 1, 1], [], []>} : vector<8x16xbf16>, vector<16x64xbf16>, vector<8x64xf32> -> vector<8x64xf32>
    %475 = arith.addf %472, %474 : vector<8x64xf32>
    %c7_i32_125 = arith.constant 7 : i32
    %476 = arith.subi %c7_i32_125, %c6_i32 : i32
    %477 = arith.index_cast %476 : i32 to index
    %c0_126 = arith.constant 0 : index
    %c0_127 = arith.constant 0 : index
    %478 = vector.load %arg3[%477, %c0_126, %c0_127] : memref<8x8x64xbf16, #tpu.memory_space<vmem>>, vector<1x8x64xbf16>
    %479 = vector.shape_cast %478 : vector<1x8x64xbf16> to vector<8x64xbf16>
    %480 = arith.extf %479 : vector<8x64xbf16> to vector<8x64xf32>
    %481 = arith.truncf %457 : vector<8x16xf32> to vector<8x16xbf16>
    %cst_128 = arith.constant dense<0.000000e+00> : vector<8x64xf32>
    %482 = tpu.matmul %481, %4, %cst_128 {dimension_numbers = #tpu.dot_dimension_numbers<[1], [0], [0], [1], [0, 0, 1, 1], [], []>} : vector<8x16xbf16>, vector<16x64xbf16>, vector<8x64xf32> -> vector<8x64xf32>
    %483 = arith.addf %480, %482 : vector<8x64xf32>
    %484 = vector.extract_strided_slice %475 {offsets = [0, 0], sizes = [8, 16], strides = [1, 1]} : vector<8x64xf32> to vector<8x16xf32>
    %485 = arith.negf %484 : vector<8x16xf32>
    %486 = math.exp %485 : vector<8x16xf32>
    %cst_129 = arith.constant 1.000000e+00 : f32
    %487 = vector.broadcast %cst_129 : f32 to vector<8x16xf32>
    %488 = arith.addf %487, %486 : vector<8x16xf32>
    %489 = arith.divf %487, %488 : vector<8x16xf32>
    %490 = vector.extract_strided_slice %475 {offsets = [0, 16], sizes = [8, 16], strides = [1, 1]} : vector<8x64xf32> to vector<8x16xf32>
    %491 = arith.negf %490 : vector<8x16xf32>
    %492 = math.exp %491 : vector<8x16xf32>
    %cst_130 = arith.constant 1.000000e+00 : f32
    %493 = vector.broadcast %cst_130 : f32 to vector<8x16xf32>
    %494 = arith.addf %493, %492 : vector<8x16xf32>
    %495 = arith.divf %493, %494 : vector<8x16xf32>
    %496 = vector.extract_strided_slice %475 {offsets = [0, 32], sizes = [8, 16], strides = [1, 1]} : vector<8x64xf32> to vector<8x16xf32>
    %497 = math.tanh %496 : vector<8x16xf32>
    %498 = vector.extract_strided_slice %475 {offsets = [0, 48], sizes = [8, 16], strides = [1, 1]} : vector<8x64xf32> to vector<8x16xf32>
    %499 = arith.negf %498 : vector<8x16xf32>
    %500 = math.exp %499 : vector<8x16xf32>
    %cst_131 = arith.constant 1.000000e+00 : f32
    %501 = vector.broadcast %cst_131 : f32 to vector<8x16xf32>
    %502 = arith.addf %501, %500 : vector<8x16xf32>
    %503 = arith.divf %501, %502 : vector<8x16xf32>
    %504 = arith.mulf %495, %430 : vector<8x16xf32>
    %505 = arith.mulf %489, %497 : vector<8x16xf32>
    %506 = arith.addf %504, %505 : vector<8x16xf32>
    %507 = math.tanh %506 : vector<8x16xf32>
    %508 = arith.mulf %503, %507 : vector<8x16xf32>
    %509 = vector.extract_strided_slice %483 {offsets = [0, 0], sizes = [8, 16], strides = [1, 1]} : vector<8x64xf32> to vector<8x16xf32>
    %510 = arith.negf %509 : vector<8x16xf32>
    %511 = math.exp %510 : vector<8x16xf32>
    %cst_132 = arith.constant 1.000000e+00 : f32
    %512 = vector.broadcast %cst_132 : f32 to vector<8x16xf32>
    %513 = arith.addf %512, %511 : vector<8x16xf32>
    %514 = arith.divf %512, %513 : vector<8x16xf32>
    %515 = vector.extract_strided_slice %483 {offsets = [0, 16], sizes = [8, 16], strides = [1, 1]} : vector<8x64xf32> to vector<8x16xf32>
    %516 = arith.negf %515 : vector<8x16xf32>
    %517 = math.exp %516 : vector<8x16xf32>
    %cst_133 = arith.constant 1.000000e+00 : f32
    %518 = vector.broadcast %cst_133 : f32 to vector<8x16xf32>
    %519 = arith.addf %518, %517 : vector<8x16xf32>
    %520 = arith.divf %518, %519 : vector<8x16xf32>
    %521 = vector.extract_strided_slice %483 {offsets = [0, 32], sizes = [8, 16], strides = [1, 1]} : vector<8x64xf32> to vector<8x16xf32>
    %522 = math.tanh %521 : vector<8x16xf32>
    %523 = vector.extract_strided_slice %483 {offsets = [0, 48], sizes = [8, 16], strides = [1, 1]} : vector<8x64xf32> to vector<8x16xf32>
    %524 = arith.negf %523 : vector<8x16xf32>
    %525 = math.exp %524 : vector<8x16xf32>
    %cst_134 = arith.constant 1.000000e+00 : f32
    %526 = vector.broadcast %cst_134 : f32 to vector<8x16xf32>
    %527 = arith.addf %526, %525 : vector<8x16xf32>
    %528 = arith.divf %526, %527 : vector<8x16xf32>
    %529 = arith.mulf %520, %455 : vector<8x16xf32>
    %530 = arith.mulf %514, %522 : vector<8x16xf32>
    %531 = arith.addf %529, %530 : vector<8x16xf32>
    %532 = math.tanh %531 : vector<8x16xf32>
    %533 = arith.mulf %528, %532 : vector<8x16xf32>
    %534 = arith.truncf %508 : vector<8x16xf32> to vector<8x16xbf16>
    %535 = arith.index_cast %c6_i32 : i32 to index
    %c0_135 = arith.constant 0 : index
    %c0_136 = arith.constant 0 : index
    %536 = vector.load %arg6[%535, %c0_135, %c0_136] : memref<8x8x16xbf16, #tpu.memory_space<vmem>>, vector<1x8x16xbf16>
    %537 = vector.shape_cast %536 : vector<1x8x16xbf16> to vector<8x16xbf16>
    %538 = vector.shape_cast %534 : vector<8x16xbf16> to vector<1x8x16xbf16>
    tpu.vector_store %arg6[%535, %c0_135, %c0_136], %538 {strides = array<i32>} : memref<8x8x16xbf16, #tpu.memory_space<vmem>>, vector<1x8x16xbf16>,
    %539 = arith.truncf %533 : vector<8x16xf32> to vector<8x16xbf16>
    %c7_i32_137 = arith.constant 7 : i32
    %540 = arith.subi %c7_i32_137, %c6_i32 : i32
    %541 = arith.index_cast %540 : i32 to index
    %c0_138 = arith.constant 0 : index
    %c0_139 = arith.constant 0 : index
    %542 = vector.load %arg7[%541, %c0_138, %c0_139] : memref<8x8x16xbf16, #tpu.memory_space<vmem>>, vector<1x8x16xbf16>
    %543 = vector.shape_cast %542 : vector<1x8x16xbf16> to vector<8x16xbf16>
    %544 = vector.shape_cast %539 : vector<8x16xbf16> to vector<1x8x16xbf16>
    tpu.vector_store %arg7[%541, %c0_138, %c0_139], %544 {strides = array<i32>} : memref<8x8x16xbf16, #tpu.memory_space<vmem>>, vector<1x8x16xbf16>,
    %c7_i32_140 = arith.constant 7 : i32
    %545 = arith.index_cast %c7_i32_140 : i32 to index
    %c0_141 = arith.constant 0 : index
    %c0_142 = arith.constant 0 : index
    %546 = vector.load %arg2[%545, %c0_141, %c0_142] : memref<8x8x64xbf16, #tpu.memory_space<vmem>>, vector<1x8x64xbf16>
    %547 = vector.shape_cast %546 : vector<1x8x64xbf16> to vector<8x64xbf16>
    %548 = arith.extf %547 : vector<8x64xbf16> to vector<8x64xf32>
    %549 = arith.truncf %508 : vector<8x16xf32> to vector<8x16xbf16>
    %cst_143 = arith.constant dense<0.000000e+00> : vector<8x64xf32>
    %550 = tpu.matmul %549, %3, %cst_143 {dimension_numbers = #tpu.dot_dimension_numbers<[1], [0], [0], [1], [0, 0, 1, 1], [], []>} : vector<8x16xbf16>, vector<16x64xbf16>, vector<8x64xf32> -> vector<8x64xf32>
    %551 = arith.addf %548, %550 : vector<8x64xf32>
    %c7_i32_144 = arith.constant 7 : i32
    %552 = arith.subi %c7_i32_144, %c7_i32_140 : i32
    %553 = arith.index_cast %552 : i32 to index
    %c0_145 = arith.constant 0 : index
    %c0_146 = arith.constant 0 : index
    %554 = vector.load %arg3[%553, %c0_145, %c0_146] : memref<8x8x64xbf16, #tpu.memory_space<vmem>>, vector<1x8x64xbf16>
    %555 = vector.shape_cast %554 : vector<1x8x64xbf16> to vector<8x64xbf16>
    %556 = arith.extf %555 : vector<8x64xbf16> to vector<8x64xf32>
    %557 = arith.truncf %533 : vector<8x16xf32> to vector<8x16xbf16>
    %cst_147 = arith.constant dense<0.000000e+00> : vector<8x64xf32>
    %558 = tpu.matmul %557, %4, %cst_147 {dimension_numbers = #tpu.dot_dimension_numbers<[1], [0], [0], [1], [0, 0, 1, 1], [], []>} : vector<8x16xbf16>, vector<16x64xbf16>, vector<8x64xf32> -> vector<8x64xf32>
    %559 = arith.addf %556, %558 : vector<8x64xf32>
    %560 = vector.extract_strided_slice %551 {offsets = [0, 0], sizes = [8, 16], strides = [1, 1]} : vector<8x64xf32> to vector<8x16xf32>
    %561 = arith.negf %560 : vector<8x16xf32>
    %562 = math.exp %561 : vector<8x16xf32>
    %cst_148 = arith.constant 1.000000e+00 : f32
    %563 = vector.broadcast %cst_148 : f32 to vector<8x16xf32>
    %564 = arith.addf %563, %562 : vector<8x16xf32>
    %565 = arith.divf %563, %564 : vector<8x16xf32>
    %566 = vector.extract_strided_slice %551 {offsets = [0, 16], sizes = [8, 16], strides = [1, 1]} : vector<8x64xf32> to vector<8x16xf32>
    %567 = arith.negf %566 : vector<8x16xf32>
    %568 = math.exp %567 : vector<8x16xf32>
    %cst_149 = arith.constant 1.000000e+00 : f32
    %569 = vector.broadcast %cst_149 : f32 to vector<8x16xf32>
    %570 = arith.addf %569, %568 : vector<8x16xf32>
    %571 = arith.divf %569, %570 : vector<8x16xf32>
    %572 = vector.extract_strided_slice %551 {offsets = [0, 32], sizes = [8, 16], strides = [1, 1]} : vector<8x64xf32> to vector<8x16xf32>
    %573 = math.tanh %572 : vector<8x16xf32>
    %574 = vector.extract_strided_slice %551 {offsets = [0, 48], sizes = [8, 16], strides = [1, 1]} : vector<8x64xf32> to vector<8x16xf32>
    %575 = arith.negf %574 : vector<8x16xf32>
    %576 = math.exp %575 : vector<8x16xf32>
    %cst_150 = arith.constant 1.000000e+00 : f32
    %577 = vector.broadcast %cst_150 : f32 to vector<8x16xf32>
    %578 = arith.addf %577, %576 : vector<8x16xf32>
    %579 = arith.divf %577, %578 : vector<8x16xf32>
    %580 = arith.mulf %571, %506 : vector<8x16xf32>
    %581 = arith.mulf %565, %573 : vector<8x16xf32>
    %582 = arith.addf %580, %581 : vector<8x16xf32>
    %583 = math.tanh %582 : vector<8x16xf32>
    %584 = arith.mulf %579, %583 : vector<8x16xf32>
    %585 = vector.extract_strided_slice %559 {offsets = [0, 0], sizes = [8, 16], strides = [1, 1]} : vector<8x64xf32> to vector<8x16xf32>
    %586 = arith.negf %585 : vector<8x16xf32>
    %587 = math.exp %586 : vector<8x16xf32>
    %cst_151 = arith.constant 1.000000e+00 : f32
    %588 = vector.broadcast %cst_151 : f32 to vector<8x16xf32>
    %589 = arith.addf %588, %587 : vector<8x16xf32>
    %590 = arith.divf %588, %589 : vector<8x16xf32>
    %591 = vector.extract_strided_slice %559 {offsets = [0, 16], sizes = [8, 16], strides = [1, 1]} : vector<8x64xf32> to vector<8x16xf32>
    %592 = arith.negf %591 : vector<8x16xf32>
    %593 = math.exp %592 : vector<8x16xf32>
    %cst_152 = arith.constant 1.000000e+00 : f32
    %594 = vector.broadcast %cst_152 : f32 to vector<8x16xf32>
    %595 = arith.addf %594, %593 : vector<8x16xf32>
    %596 = arith.divf %594, %595 : vector<8x16xf32>
    %597 = vector.extract_strided_slice %559 {offsets = [0, 32], sizes = [8, 16], strides = [1, 1]} : vector<8x64xf32> to vector<8x16xf32>
    %598 = math.tanh %597 : vector<8x16xf32>
    %599 = vector.extract_strided_slice %559 {offsets = [0, 48], sizes = [8, 16], strides = [1, 1]} : vector<8x64xf32> to vector<8x16xf32>
    %600 = arith.negf %599 : vector<8x16xf32>
    %601 = math.exp %600 : vector<8x16xf32>
    %cst_153 = arith.constant 1.000000e+00 : f32
    %602 = vector.broadcast %cst_153 : f32 to vector<8x16xf32>
    %603 = arith.addf %602, %601 : vector<8x16xf32>
    %604 = arith.divf %602, %603 : vector<8x16xf32>
    %605 = arith.mulf %596, %531 : vector<8x16xf32>
    %606 = arith.mulf %590, %598 : vector<8x16xf32>
    %607 = arith.addf %605, %606 : vector<8x16xf32>
    %608 = math.tanh %607 : vector<8x16xf32>
    %609 = arith.mulf %604, %608 : vector<8x16xf32>
    %610 = arith.truncf %584 : vector<8x16xf32> to vector<8x16xbf16>
    %611 = arith.index_cast %c7_i32_140 : i32 to index
    %c0_154 = arith.constant 0 : index
    %c0_155 = arith.constant 0 : index
    %612 = vector.load %arg6[%611, %c0_154, %c0_155] : memref<8x8x16xbf16, #tpu.memory_space<vmem>>, vector<1x8x16xbf16>
    %613 = vector.shape_cast %612 : vector<1x8x16xbf16> to vector<8x16xbf16>
    %614 = vector.shape_cast %610 : vector<8x16xbf16> to vector<1x8x16xbf16>
    tpu.vector_store %arg6[%611, %c0_154, %c0_155], %614 {strides = array<i32>} : memref<8x8x16xbf16, #tpu.memory_space<vmem>>, vector<1x8x16xbf16>,
    %615 = arith.truncf %609 : vector<8x16xf32> to vector<8x16xbf16>
    %c7_i32_156 = arith.constant 7 : i32
    %616 = arith.subi %c7_i32_156, %c7_i32_140 : i32
    %617 = arith.index_cast %616 : i32 to index
    %c0_157 = arith.constant 0 : index
    %c0_158 = arith.constant 0 : index
    %618 = vector.load %arg7[%617, %c0_157, %c0_158] : memref<8x8x16xbf16, #tpu.memory_space<vmem>>, vector<1x8x16xbf16>
    %619 = vector.shape_cast %618 : vector<1x8x16xbf16> to vector<8x16xbf16>
    %620 = vector.shape_cast %615 : vector<8x16xbf16> to vector<1x8x16xbf16>
    tpu.vector_store %arg7[%617, %c0_157, %c0_158], %620 {strides = array<i32>} : memref<8x8x16xbf16, #tpu.memory_space<vmem>>, vector<1x8x16xbf16>,
    %c8_i32 = arith.constant 8 : i32
    %c0_159 = arith.constant 0 : index
    %c0_160 = arith.constant 0 : index
    %c0_161 = arith.constant 0 : index
    %621 = vector.load %arg8[%c0_159, %c0_160, %c0_161] : memref<2x8x16xf32, #tpu.memory_space<vmem>>, vector<1x8x16xf32>
    %622 = vector.shape_cast %621 : vector<1x8x16xf32> to vector<8x16xf32>
    %623 = vector.shape_cast %584 : vector<8x16xf32> to vector<1x8x16xf32>
    tpu.vector_store %arg8[%c0_159, %c0_160, %c0_161], %623 {strides = array<i32>} : memref<2x8x16xf32, #tpu.memory_space<vmem>>, vector<1x8x16xf32>,
    %c0_162 = arith.constant 0 : index
    %c0_163 = arith.constant 0 : index
    %c0_164 = arith.constant 0 : index
    %624 = vector.load %arg9[%c0_162, %c0_163, %c0_164] : memref<2x8x16xf32, #tpu.memory_space<vmem>>, vector<1x8x16xf32>
    %625 = vector.shape_cast %624 : vector<1x8x16xf32> to vector<8x16xf32>
    %626 = vector.shape_cast %582 : vector<8x16xf32> to vector<1x8x16xf32>
    tpu.vector_store %arg9[%c0_162, %c0_163, %c0_164], %626 {strides = array<i32>} : memref<2x8x16xf32, #tpu.memory_space<vmem>>, vector<1x8x16xf32>,
    %c1_165 = arith.constant 1 : index
    %c0_166 = arith.constant 0 : index
    %c0_167 = arith.constant 0 : index
    %627 = vector.load %arg8[%c1_165, %c0_166, %c0_167] : memref<2x8x16xf32, #tpu.memory_space<vmem>>, vector<1x8x16xf32>
    %628 = vector.shape_cast %627 : vector<1x8x16xf32> to vector<8x16xf32>
    %629 = vector.shape_cast %609 : vector<8x16xf32> to vector<1x8x16xf32>
    tpu.vector_store %arg8[%c1_165, %c0_166, %c0_167], %629 {strides = array<i32>} : memref<2x8x16xf32, #tpu.memory_space<vmem>>, vector<1x8x16xf32>,
    %c1_168 = arith.constant 1 : index
    %c0_169 = arith.constant 0 : index
    %c0_170 = arith.constant 0 : index
    %630 = vector.load %arg9[%c1_168, %c0_169, %c0_170] : memref<2x8x16xf32, #tpu.memory_space<vmem>>, vector<1x8x16xf32>
    %631 = vector.shape_cast %630 : vector<1x8x16xf32> to vector<8x16xf32>
    %632 = vector.shape_cast %607 : vector<8x16xf32> to vector<1x8x16xf32>
    tpu.vector_store %arg9[%c1_168, %c0_169, %c0_170], %632 {strides = array<i32>} : memref<2x8x16xf32, #tpu.memory_space<vmem>>, vector<1x8x16xf32>,
    return
  }
  func.func @transform_0(%arg0: i32, %arg1: i32) -> (i32, i32, i32) {
    %c0_i32 = arith.constant 0 : i32
    %c0_i32_0 = arith.constant 0 : i32
    return %arg1, %arg0, %c0_i32 : i32, i32, i32
  }
  func.func @transform_1(%arg0: i32, %arg1: i32) -> (i32, i32, i32) {
    %c0_i32 = arith.constant 0 : i32
    %0 = arith.subi %c0_i32, %arg1 : i32
    %c0_i32_0 = arith.constant 0 : i32
    %c0_i32_1 = arith.constant 0 : i32
    return %0, %arg0, %c0_i32_0 : i32, i32, i32
  }
  func.func @transform_2(%arg0: i32, %arg1: i32) -> (i32, i32) {
    %c0_i32 = arith.constant 0 : i32
    %c0_i32_0 = arith.constant 0 : i32
    %c0_i32_1 = arith.constant 0 : i32
    return %c0_i32, %c0_i32_0 : i32, i32
  }
  func.func @transform_3(%arg0: i32, %arg1: i32) -> (i32, i32) {
    %c0_i32 = arith.constant 0 : i32
    %c0_i32_0 = arith.constant 0 : i32
    %c0_i32_1 = arith.constant 0 : i32
    return %c0_i32, %c0_i32_0 : i32, i32
  }
  func.func @transform_4(%arg0: i32, %arg1: i32) -> (i32, i32, i32) {
    %c0_i32 = arith.constant 0 : i32
    %c0_i32_0 = arith.constant 0 : i32
    return %arg1, %arg0, %c0_i32 : i32, i32, i32
  }
  func.func @transform_5(%arg0: i32, %arg1: i32) -> (i32, i32, i32) {
    %c0_i32 = arith.constant 0 : i32
    %0 = arith.subi %c0_i32, %arg1 : i32
    %c0_i32_0 = arith.constant 0 : i32
    %c0_i32_1 = arith.constant 0 : i32
    return %0, %arg0, %c0_i32_0 : i32, i32, i32
  }
}

module attributes {stable_mosaic.version = 11 : i64} {
  func.func @kernel(%arg0: i32, %arg1: i32, %arg2: memref<8x8x64xbf16, #tpu.memory_space<vmem>>, %arg3: memref<8x8x64xbf16, #tpu.memory_space<vmem>>, %arg4: memref<16x64xbf16, #tpu.memory_space<vmem>>, %arg5: memref<16x64xbf16, #tpu.memory_space<vmem>>, %arg6: memref<8x32xf32, #tpu.memory_space<vmem>>, %arg7: memref<2x8x16xf32, #tpu.memory_space<vmem>>, %arg8: memref<2x8x16xf32, #tpu.memory_space<vmem>>, %arg9: memref<2x8x16xf32, #tpu.memory_space<vmem>>) attributes {dimension_semantics = [#tpu.dimension_semantics<parallel>, #tpu.dimension_semantics<arbitrary>], iteration_bounds = array<i64: 1, 1>, scalar_prefetch = 0 : i64, scratch_operands = 3 : i64, tpu.core_type = #tpu.core_type<tc>, window_params = [{transform_indices = @transform_0, window_bounds = array<i64: 8, 8, 64>}, {transform_indices = @transform_1, window_bounds = array<i64: 8, 8, 64>}, {pipeline_mode = #tpu.pipeline_mode<synchronous>, transform_indices = @transform_2, window_bounds = array<i64: 16, 64>}, {pipeline_mode = #tpu.pipeline_mode<synchronous>, transform_indices = @transform_3, window_bounds = array<i64: 16, 64>}, {transform_indices = @transform_4, window_bounds = array<i64: 8, 32>}]} {
    %c0_i32 = arith.constant 0 : i32
    %0 = arith.cmpi eq, %arg1, %c0_i32 : i32
    %1 = arith.extui %0 : i1 to i32
    %c0_i32_0 = arith.constant 0 : i32
    %2 = arith.cmpi ne, %1, %c0_i32_0 : i32
    scf.if %2 {
      %cst_145 = arith.constant 0.000000e+00 : f32
      %574 = vector.broadcast %cst_145 : f32 to vector<2x8x16xf32>
      %c0_146 = arith.constant 0 : index
      %c0_147 = arith.constant 0 : index
      %c0_148 = arith.constant 0 : index
      %575 = vector.load %arg7[%c0_146, %c0_147, %c0_148] : memref<2x8x16xf32, #tpu.memory_space<vmem>>, vector<2x8x16xf32>
      tpu.vector_store %arg7[%c0_146, %c0_147, %c0_148], %574 {strides = array<i32>} : memref<2x8x16xf32, #tpu.memory_space<vmem>>, vector<2x8x16xf32>,
      %cst_149 = arith.constant 0.000000e+00 : f32
      %576 = vector.broadcast %cst_149 : f32 to vector<2x8x16xf32>
      %c0_150 = arith.constant 0 : index
      %c0_151 = arith.constant 0 : index
      %c0_152 = arith.constant 0 : index
      %577 = vector.load %arg8[%c0_150, %c0_151, %c0_152] : memref<2x8x16xf32, #tpu.memory_space<vmem>>, vector<2x8x16xf32>
      tpu.vector_store %arg8[%c0_150, %c0_151, %c0_152], %576 {strides = array<i32>} : memref<2x8x16xf32, #tpu.memory_space<vmem>>, vector<2x8x16xf32>,
      %cst_153 = arith.constant 0.000000e+00 : f32
      %578 = vector.broadcast %cst_153 : f32 to vector<2x8x16xf32>
      %c0_154 = arith.constant 0 : index
      %c0_155 = arith.constant 0 : index
      %c0_156 = arith.constant 0 : index
      %579 = vector.load %arg9[%c0_154, %c0_155, %c0_156] : memref<2x8x16xf32, #tpu.memory_space<vmem>>, vector<2x8x16xf32>
      tpu.vector_store %arg9[%c0_154, %c0_155, %c0_156], %578 {strides = array<i32>} : memref<2x8x16xf32, #tpu.memory_space<vmem>>, vector<2x8x16xf32>,
    } else {
    }
    %c0 = arith.constant 0 : index
    %c0_1 = arith.constant 0 : index
    %3 = vector.load %arg4[%c0, %c0_1] : memref<16x64xbf16, #tpu.memory_space<vmem>>, vector<16x64xbf16>
    %c0_2 = arith.constant 0 : index
    %c0_3 = arith.constant 0 : index
    %4 = vector.load %arg5[%c0_2, %c0_3] : memref<16x64xbf16, #tpu.memory_space<vmem>>, vector<16x64xbf16>
    %c0_4 = arith.constant 0 : index
    %c0_5 = arith.constant 0 : index
    %c0_6 = arith.constant 0 : index
    %5 = vector.load %arg7[%c0_4, %c0_5, %c0_6] : memref<2x8x16xf32, #tpu.memory_space<vmem>>, vector<1x8x16xf32>
    %6 = vector.shape_cast %5 : vector<1x8x16xf32> to vector<8x16xf32>
    %c0_7 = arith.constant 0 : index
    %c0_8 = arith.constant 0 : index
    %c0_9 = arith.constant 0 : index
    %7 = vector.load %arg8[%c0_7, %c0_8, %c0_9] : memref<2x8x16xf32, #tpu.memory_space<vmem>>, vector<1x8x16xf32>
    %8 = vector.shape_cast %7 : vector<1x8x16xf32> to vector<8x16xf32>
    %c1 = arith.constant 1 : index
    %c0_10 = arith.constant 0 : index
    %c0_11 = arith.constant 0 : index
    %9 = vector.load %arg7[%c1, %c0_10, %c0_11] : memref<2x8x16xf32, #tpu.memory_space<vmem>>, vector<1x8x16xf32>
    %10 = vector.shape_cast %9 : vector<1x8x16xf32> to vector<8x16xf32>
    %c1_12 = arith.constant 1 : index
    %c0_13 = arith.constant 0 : index
    %c0_14 = arith.constant 0 : index
    %11 = vector.load %arg8[%c1_12, %c0_13, %c0_14] : memref<2x8x16xf32, #tpu.memory_space<vmem>>, vector<1x8x16xf32>
    %12 = vector.shape_cast %11 : vector<1x8x16xf32> to vector<8x16xf32>
    %c0_15 = arith.constant 0 : index
    %c0_16 = arith.constant 0 : index
    %c0_17 = arith.constant 0 : index
    %13 = vector.load %arg9[%c0_15, %c0_16, %c0_17] : memref<2x8x16xf32, #tpu.memory_space<vmem>>, vector<1x8x16xf32>
    %14 = vector.shape_cast %13 : vector<1x8x16xf32> to vector<8x16xf32>
    %c1_18 = arith.constant 1 : index
    %c0_19 = arith.constant 0 : index
    %c0_20 = arith.constant 0 : index
    %15 = vector.load %arg9[%c1_18, %c0_19, %c0_20] : memref<2x8x16xf32, #tpu.memory_space<vmem>>, vector<1x8x16xf32>
    %16 = vector.shape_cast %15 : vector<1x8x16xf32> to vector<8x16xf32>
    %c0_i32_21 = arith.constant 0 : i32
    %17 = arith.index_cast %c0_i32_21 : i32 to index
    %c0_22 = arith.constant 0 : index
    %c0_23 = arith.constant 0 : index
    %18 = vector.load %arg2[%17, %c0_22, %c0_23] : memref<8x8x64xbf16, #tpu.memory_space<vmem>>, vector<1x8x64xbf16>
    %19 = vector.shape_cast %18 : vector<1x8x64xbf16> to vector<8x64xbf16>
    %20 = arith.extf %19 : vector<8x64xbf16> to vector<8x64xf32>
    %21 = arith.truncf %6 : vector<8x16xf32> to vector<8x16xbf16>
    %cst = arith.constant dense<0.000000e+00> : vector<8x64xf32>
    %22 = tpu.matmul %21, %3, %cst {dimension_numbers = #tpu.dot_dimension_numbers<[1], [0], [0], [1], [0, 0, 1, 1], [], []>} : vector<8x16xbf16>, vector<16x64xbf16>, vector<8x64xf32> -> vector<8x64xf32>
    %23 = arith.addf %20, %22 : vector<8x64xf32>
    %c7_i32 = arith.constant 7 : i32
    %24 = arith.subi %c7_i32, %c0_i32_21 : i32
    %25 = arith.index_cast %24 : i32 to index
    %c0_24 = arith.constant 0 : index
    %c0_25 = arith.constant 0 : index
    %26 = vector.load %arg3[%25, %c0_24, %c0_25] : memref<8x8x64xbf16, #tpu.memory_space<vmem>>, vector<1x8x64xbf16>
    %27 = vector.shape_cast %26 : vector<1x8x64xbf16> to vector<8x64xbf16>
    %28 = arith.extf %27 : vector<8x64xbf16> to vector<8x64xf32>
    %29 = arith.truncf %10 : vector<8x16xf32> to vector<8x16xbf16>
    %cst_26 = arith.constant dense<0.000000e+00> : vector<8x64xf32>
    %30 = tpu.matmul %29, %4, %cst_26 {dimension_numbers = #tpu.dot_dimension_numbers<[1], [0], [0], [1], [0, 0, 1, 1], [], []>} : vector<8x16xbf16>, vector<16x64xbf16>, vector<8x64xf32> -> vector<8x64xf32>
    %31 = arith.addf %28, %30 : vector<8x64xf32>
    %32 = vector.extract_strided_slice %23 {offsets = [0, 0], sizes = [8, 16], strides = [1, 1]} : vector<8x64xf32> to vector<8x16xf32>
    %33 = arith.negf %32 : vector<8x16xf32>
    %34 = math.exp %33 : vector<8x16xf32>
    %cst_27 = arith.constant 1.000000e+00 : f32
    %35 = vector.broadcast %cst_27 : f32 to vector<8x16xf32>
    %36 = arith.addf %35, %34 : vector<8x16xf32>
    %37 = arith.divf %35, %36 : vector<8x16xf32>
    %38 = vector.extract_strided_slice %23 {offsets = [0, 16], sizes = [8, 16], strides = [1, 1]} : vector<8x64xf32> to vector<8x16xf32>
    %39 = arith.negf %38 : vector<8x16xf32>
    %40 = math.exp %39 : vector<8x16xf32>
    %cst_28 = arith.constant 1.000000e+00 : f32
    %41 = vector.broadcast %cst_28 : f32 to vector<8x16xf32>
    %42 = arith.addf %41, %40 : vector<8x16xf32>
    %43 = arith.divf %41, %42 : vector<8x16xf32>
    %44 = vector.extract_strided_slice %23 {offsets = [0, 32], sizes = [8, 16], strides = [1, 1]} : vector<8x64xf32> to vector<8x16xf32>
    %45 = math.tanh %44 : vector<8x16xf32>
    %46 = vector.extract_strided_slice %23 {offsets = [0, 48], sizes = [8, 16], strides = [1, 1]} : vector<8x64xf32> to vector<8x16xf32>
    %47 = arith.negf %46 : vector<8x16xf32>
    %48 = math.exp %47 : vector<8x16xf32>
    %cst_29 = arith.constant 1.000000e+00 : f32
    %49 = vector.broadcast %cst_29 : f32 to vector<8x16xf32>
    %50 = arith.addf %49, %48 : vector<8x16xf32>
    %51 = arith.divf %49, %50 : vector<8x16xf32>
    %52 = arith.mulf %43, %8 : vector<8x16xf32>
    %53 = arith.mulf %37, %45 : vector<8x16xf32>
    %54 = arith.addf %52, %53 : vector<8x16xf32>
    %55 = math.tanh %54 : vector<8x16xf32>
    %56 = arith.mulf %51, %55 : vector<8x16xf32>
    %57 = vector.extract_strided_slice %31 {offsets = [0, 0], sizes = [8, 16], strides = [1, 1]} : vector<8x64xf32> to vector<8x16xf32>
    %58 = arith.negf %57 : vector<8x16xf32>
    %59 = math.exp %58 : vector<8x16xf32>
    %cst_30 = arith.constant 1.000000e+00 : f32
    %60 = vector.broadcast %cst_30 : f32 to vector<8x16xf32>
    %61 = arith.addf %60, %59 : vector<8x16xf32>
    %62 = arith.divf %60, %61 : vector<8x16xf32>
    %63 = vector.extract_strided_slice %31 {offsets = [0, 16], sizes = [8, 16], strides = [1, 1]} : vector<8x64xf32> to vector<8x16xf32>
    %64 = arith.negf %63 : vector<8x16xf32>
    %65 = math.exp %64 : vector<8x16xf32>
    %cst_31 = arith.constant 1.000000e+00 : f32
    %66 = vector.broadcast %cst_31 : f32 to vector<8x16xf32>
    %67 = arith.addf %66, %65 : vector<8x16xf32>
    %68 = arith.divf %66, %67 : vector<8x16xf32>
    %69 = vector.extract_strided_slice %31 {offsets = [0, 32], sizes = [8, 16], strides = [1, 1]} : vector<8x64xf32> to vector<8x16xf32>
    %70 = math.tanh %69 : vector<8x16xf32>
    %71 = vector.extract_strided_slice %31 {offsets = [0, 48], sizes = [8, 16], strides = [1, 1]} : vector<8x64xf32> to vector<8x16xf32>
    %72 = arith.negf %71 : vector<8x16xf32>
    %73 = math.exp %72 : vector<8x16xf32>
    %cst_32 = arith.constant 1.000000e+00 : f32
    %74 = vector.broadcast %cst_32 : f32 to vector<8x16xf32>
    %75 = arith.addf %74, %73 : vector<8x16xf32>
    %76 = arith.divf %74, %75 : vector<8x16xf32>
    %77 = arith.mulf %68, %12 : vector<8x16xf32>
    %78 = arith.mulf %62, %70 : vector<8x16xf32>
    %79 = arith.addf %77, %78 : vector<8x16xf32>
    %80 = math.tanh %79 : vector<8x16xf32>
    %81 = arith.mulf %76, %80 : vector<8x16xf32>
    %82 = arith.addf %14, %56 : vector<8x16xf32>
    %83 = arith.addf %16, %81 : vector<8x16xf32>
    %c1_i32 = arith.constant 1 : i32
    %84 = arith.index_cast %c1_i32 : i32 to index
    %c0_33 = arith.constant 0 : index
    %c0_34 = arith.constant 0 : index
    %85 = vector.load %arg2[%84, %c0_33, %c0_34] : memref<8x8x64xbf16, #tpu.memory_space<vmem>>, vector<1x8x64xbf16>
    %86 = vector.shape_cast %85 : vector<1x8x64xbf16> to vector<8x64xbf16>
    %87 = arith.extf %86 : vector<8x64xbf16> to vector<8x64xf32>
    %88 = arith.truncf %56 : vector<8x16xf32> to vector<8x16xbf16>
    %cst_35 = arith.constant dense<0.000000e+00> : vector<8x64xf32>
    %89 = tpu.matmul %88, %3, %cst_35 {dimension_numbers = #tpu.dot_dimension_numbers<[1], [0], [0], [1], [0, 0, 1, 1], [], []>} : vector<8x16xbf16>, vector<16x64xbf16>, vector<8x64xf32> -> vector<8x64xf32>
    %90 = arith.addf %87, %89 : vector<8x64xf32>
    %c7_i32_36 = arith.constant 7 : i32
    %91 = arith.subi %c7_i32_36, %c1_i32 : i32
    %92 = arith.index_cast %91 : i32 to index
    %c0_37 = arith.constant 0 : index
    %c0_38 = arith.constant 0 : index
    %93 = vector.load %arg3[%92, %c0_37, %c0_38] : memref<8x8x64xbf16, #tpu.memory_space<vmem>>, vector<1x8x64xbf16>
    %94 = vector.shape_cast %93 : vector<1x8x64xbf16> to vector<8x64xbf16>
    %95 = arith.extf %94 : vector<8x64xbf16> to vector<8x64xf32>
    %96 = arith.truncf %81 : vector<8x16xf32> to vector<8x16xbf16>
    %cst_39 = arith.constant dense<0.000000e+00> : vector<8x64xf32>
    %97 = tpu.matmul %96, %4, %cst_39 {dimension_numbers = #tpu.dot_dimension_numbers<[1], [0], [0], [1], [0, 0, 1, 1], [], []>} : vector<8x16xbf16>, vector<16x64xbf16>, vector<8x64xf32> -> vector<8x64xf32>
    %98 = arith.addf %95, %97 : vector<8x64xf32>
    %99 = vector.extract_strided_slice %90 {offsets = [0, 0], sizes = [8, 16], strides = [1, 1]} : vector<8x64xf32> to vector<8x16xf32>
    %100 = arith.negf %99 : vector<8x16xf32>
    %101 = math.exp %100 : vector<8x16xf32>
    %cst_40 = arith.constant 1.000000e+00 : f32
    %102 = vector.broadcast %cst_40 : f32 to vector<8x16xf32>
    %103 = arith.addf %102, %101 : vector<8x16xf32>
    %104 = arith.divf %102, %103 : vector<8x16xf32>
    %105 = vector.extract_strided_slice %90 {offsets = [0, 16], sizes = [8, 16], strides = [1, 1]} : vector<8x64xf32> to vector<8x16xf32>
    %106 = arith.negf %105 : vector<8x16xf32>
    %107 = math.exp %106 : vector<8x16xf32>
    %cst_41 = arith.constant 1.000000e+00 : f32
    %108 = vector.broadcast %cst_41 : f32 to vector<8x16xf32>
    %109 = arith.addf %108, %107 : vector<8x16xf32>
    %110 = arith.divf %108, %109 : vector<8x16xf32>
    %111 = vector.extract_strided_slice %90 {offsets = [0, 32], sizes = [8, 16], strides = [1, 1]} : vector<8x64xf32> to vector<8x16xf32>
    %112 = math.tanh %111 : vector<8x16xf32>
    %113 = vector.extract_strided_slice %90 {offsets = [0, 48], sizes = [8, 16], strides = [1, 1]} : vector<8x64xf32> to vector<8x16xf32>
    %114 = arith.negf %113 : vector<8x16xf32>
    %115 = math.exp %114 : vector<8x16xf32>
    %cst_42 = arith.constant 1.000000e+00 : f32
    %116 = vector.broadcast %cst_42 : f32 to vector<8x16xf32>
    %117 = arith.addf %116, %115 : vector<8x16xf32>
    %118 = arith.divf %116, %117 : vector<8x16xf32>
    %119 = arith.mulf %110, %54 : vector<8x16xf32>
    %120 = arith.mulf %104, %112 : vector<8x16xf32>
    %121 = arith.addf %119, %120 : vector<8x16xf32>
    %122 = math.tanh %121 : vector<8x16xf32>
    %123 = arith.mulf %118, %122 : vector<8x16xf32>
    %124 = vector.extract_strided_slice %98 {offsets = [0, 0], sizes = [8, 16], strides = [1, 1]} : vector<8x64xf32> to vector<8x16xf32>
    %125 = arith.negf %124 : vector<8x16xf32>
    %126 = math.exp %125 : vector<8x16xf32>
    %cst_43 = arith.constant 1.000000e+00 : f32
    %127 = vector.broadcast %cst_43 : f32 to vector<8x16xf32>
    %128 = arith.addf %127, %126 : vector<8x16xf32>
    %129 = arith.divf %127, %128 : vector<8x16xf32>
    %130 = vector.extract_strided_slice %98 {offsets = [0, 16], sizes = [8, 16], strides = [1, 1]} : vector<8x64xf32> to vector<8x16xf32>
    %131 = arith.negf %130 : vector<8x16xf32>
    %132 = math.exp %131 : vector<8x16xf32>
    %cst_44 = arith.constant 1.000000e+00 : f32
    %133 = vector.broadcast %cst_44 : f32 to vector<8x16xf32>
    %134 = arith.addf %133, %132 : vector<8x16xf32>
    %135 = arith.divf %133, %134 : vector<8x16xf32>
    %136 = vector.extract_strided_slice %98 {offsets = [0, 32], sizes = [8, 16], strides = [1, 1]} : vector<8x64xf32> to vector<8x16xf32>
    %137 = math.tanh %136 : vector<8x16xf32>
    %138 = vector.extract_strided_slice %98 {offsets = [0, 48], sizes = [8, 16], strides = [1, 1]} : vector<8x64xf32> to vector<8x16xf32>
    %139 = arith.negf %138 : vector<8x16xf32>
    %140 = math.exp %139 : vector<8x16xf32>
    %cst_45 = arith.constant 1.000000e+00 : f32
    %141 = vector.broadcast %cst_45 : f32 to vector<8x16xf32>
    %142 = arith.addf %141, %140 : vector<8x16xf32>
    %143 = arith.divf %141, %142 : vector<8x16xf32>
    %144 = arith.mulf %135, %79 : vector<8x16xf32>
    %145 = arith.mulf %129, %137 : vector<8x16xf32>
    %146 = arith.addf %144, %145 : vector<8x16xf32>
    %147 = math.tanh %146 : vector<8x16xf32>
    %148 = arith.mulf %143, %147 : vector<8x16xf32>
    %149 = arith.addf %82, %123 : vector<8x16xf32>
    %150 = arith.addf %83, %148 : vector<8x16xf32>
    %c2_i32 = arith.constant 2 : i32
    %151 = arith.index_cast %c2_i32 : i32 to index
    %c0_46 = arith.constant 0 : index
    %c0_47 = arith.constant 0 : index
    %152 = vector.load %arg2[%151, %c0_46, %c0_47] : memref<8x8x64xbf16, #tpu.memory_space<vmem>>, vector<1x8x64xbf16>
    %153 = vector.shape_cast %152 : vector<1x8x64xbf16> to vector<8x64xbf16>
    %154 = arith.extf %153 : vector<8x64xbf16> to vector<8x64xf32>
    %155 = arith.truncf %123 : vector<8x16xf32> to vector<8x16xbf16>
    %cst_48 = arith.constant dense<0.000000e+00> : vector<8x64xf32>
    %156 = tpu.matmul %155, %3, %cst_48 {dimension_numbers = #tpu.dot_dimension_numbers<[1], [0], [0], [1], [0, 0, 1, 1], [], []>} : vector<8x16xbf16>, vector<16x64xbf16>, vector<8x64xf32> -> vector<8x64xf32>
    %157 = arith.addf %154, %156 : vector<8x64xf32>
    %c7_i32_49 = arith.constant 7 : i32
    %158 = arith.subi %c7_i32_49, %c2_i32 : i32
    %159 = arith.index_cast %158 : i32 to index
    %c0_50 = arith.constant 0 : index
    %c0_51 = arith.constant 0 : index
    %160 = vector.load %arg3[%159, %c0_50, %c0_51] : memref<8x8x64xbf16, #tpu.memory_space<vmem>>, vector<1x8x64xbf16>
    %161 = vector.shape_cast %160 : vector<1x8x64xbf16> to vector<8x64xbf16>
    %162 = arith.extf %161 : vector<8x64xbf16> to vector<8x64xf32>
    %163 = arith.truncf %148 : vector<8x16xf32> to vector<8x16xbf16>
    %cst_52 = arith.constant dense<0.000000e+00> : vector<8x64xf32>
    %164 = tpu.matmul %163, %4, %cst_52 {dimension_numbers = #tpu.dot_dimension_numbers<[1], [0], [0], [1], [0, 0, 1, 1], [], []>} : vector<8x16xbf16>, vector<16x64xbf16>, vector<8x64xf32> -> vector<8x64xf32>
    %165 = arith.addf %162, %164 : vector<8x64xf32>
    %166 = vector.extract_strided_slice %157 {offsets = [0, 0], sizes = [8, 16], strides = [1, 1]} : vector<8x64xf32> to vector<8x16xf32>
    %167 = arith.negf %166 : vector<8x16xf32>
    %168 = math.exp %167 : vector<8x16xf32>
    %cst_53 = arith.constant 1.000000e+00 : f32
    %169 = vector.broadcast %cst_53 : f32 to vector<8x16xf32>
    %170 = arith.addf %169, %168 : vector<8x16xf32>
    %171 = arith.divf %169, %170 : vector<8x16xf32>
    %172 = vector.extract_strided_slice %157 {offsets = [0, 16], sizes = [8, 16], strides = [1, 1]} : vector<8x64xf32> to vector<8x16xf32>
    %173 = arith.negf %172 : vector<8x16xf32>
    %174 = math.exp %173 : vector<8x16xf32>
    %cst_54 = arith.constant 1.000000e+00 : f32
    %175 = vector.broadcast %cst_54 : f32 to vector<8x16xf32>
    %176 = arith.addf %175, %174 : vector<8x16xf32>
    %177 = arith.divf %175, %176 : vector<8x16xf32>
    %178 = vector.extract_strided_slice %157 {offsets = [0, 32], sizes = [8, 16], strides = [1, 1]} : vector<8x64xf32> to vector<8x16xf32>
    %179 = math.tanh %178 : vector<8x16xf32>
    %180 = vector.extract_strided_slice %157 {offsets = [0, 48], sizes = [8, 16], strides = [1, 1]} : vector<8x64xf32> to vector<8x16xf32>
    %181 = arith.negf %180 : vector<8x16xf32>
    %182 = math.exp %181 : vector<8x16xf32>
    %cst_55 = arith.constant 1.000000e+00 : f32
    %183 = vector.broadcast %cst_55 : f32 to vector<8x16xf32>
    %184 = arith.addf %183, %182 : vector<8x16xf32>
    %185 = arith.divf %183, %184 : vector<8x16xf32>
    %186 = arith.mulf %177, %121 : vector<8x16xf32>
    %187 = arith.mulf %171, %179 : vector<8x16xf32>
    %188 = arith.addf %186, %187 : vector<8x16xf32>
    %189 = math.tanh %188 : vector<8x16xf32>
    %190 = arith.mulf %185, %189 : vector<8x16xf32>
    %191 = vector.extract_strided_slice %165 {offsets = [0, 0], sizes = [8, 16], strides = [1, 1]} : vector<8x64xf32> to vector<8x16xf32>
    %192 = arith.negf %191 : vector<8x16xf32>
    %193 = math.exp %192 : vector<8x16xf32>
    %cst_56 = arith.constant 1.000000e+00 : f32
    %194 = vector.broadcast %cst_56 : f32 to vector<8x16xf32>
    %195 = arith.addf %194, %193 : vector<8x16xf32>
    %196 = arith.divf %194, %195 : vector<8x16xf32>
    %197 = vector.extract_strided_slice %165 {offsets = [0, 16], sizes = [8, 16], strides = [1, 1]} : vector<8x64xf32> to vector<8x16xf32>
    %198 = arith.negf %197 : vector<8x16xf32>
    %199 = math.exp %198 : vector<8x16xf32>
    %cst_57 = arith.constant 1.000000e+00 : f32
    %200 = vector.broadcast %cst_57 : f32 to vector<8x16xf32>
    %201 = arith.addf %200, %199 : vector<8x16xf32>
    %202 = arith.divf %200, %201 : vector<8x16xf32>
    %203 = vector.extract_strided_slice %165 {offsets = [0, 32], sizes = [8, 16], strides = [1, 1]} : vector<8x64xf32> to vector<8x16xf32>
    %204 = math.tanh %203 : vector<8x16xf32>
    %205 = vector.extract_strided_slice %165 {offsets = [0, 48], sizes = [8, 16], strides = [1, 1]} : vector<8x64xf32> to vector<8x16xf32>
    %206 = arith.negf %205 : vector<8x16xf32>
    %207 = math.exp %206 : vector<8x16xf32>
    %cst_58 = arith.constant 1.000000e+00 : f32
    %208 = vector.broadcast %cst_58 : f32 to vector<8x16xf32>
    %209 = arith.addf %208, %207 : vector<8x16xf32>
    %210 = arith.divf %208, %209 : vector<8x16xf32>
    %211 = arith.mulf %202, %146 : vector<8x16xf32>
    %212 = arith.mulf %196, %204 : vector<8x16xf32>
    %213 = arith.addf %211, %212 : vector<8x16xf32>
    %214 = math.tanh %213 : vector<8x16xf32>
    %215 = arith.mulf %210, %214 : vector<8x16xf32>
    %216 = arith.addf %149, %190 : vector<8x16xf32>
    %217 = arith.addf %150, %215 : vector<8x16xf32>
    %c3_i32 = arith.constant 3 : i32
    %218 = arith.index_cast %c3_i32 : i32 to index
    %c0_59 = arith.constant 0 : index
    %c0_60 = arith.constant 0 : index
    %219 = vector.load %arg2[%218, %c0_59, %c0_60] : memref<8x8x64xbf16, #tpu.memory_space<vmem>>, vector<1x8x64xbf16>
    %220 = vector.shape_cast %219 : vector<1x8x64xbf16> to vector<8x64xbf16>
    %221 = arith.extf %220 : vector<8x64xbf16> to vector<8x64xf32>
    %222 = arith.truncf %190 : vector<8x16xf32> to vector<8x16xbf16>
    %cst_61 = arith.constant dense<0.000000e+00> : vector<8x64xf32>
    %223 = tpu.matmul %222, %3, %cst_61 {dimension_numbers = #tpu.dot_dimension_numbers<[1], [0], [0], [1], [0, 0, 1, 1], [], []>} : vector<8x16xbf16>, vector<16x64xbf16>, vector<8x64xf32> -> vector<8x64xf32>
    %224 = arith.addf %221, %223 : vector<8x64xf32>
    %c7_i32_62 = arith.constant 7 : i32
    %225 = arith.subi %c7_i32_62, %c3_i32 : i32
    %226 = arith.index_cast %225 : i32 to index
    %c0_63 = arith.constant 0 : index
    %c0_64 = arith.constant 0 : index
    %227 = vector.load %arg3[%226, %c0_63, %c0_64] : memref<8x8x64xbf16, #tpu.memory_space<vmem>>, vector<1x8x64xbf16>
    %228 = vector.shape_cast %227 : vector<1x8x64xbf16> to vector<8x64xbf16>
    %229 = arith.extf %228 : vector<8x64xbf16> to vector<8x64xf32>
    %230 = arith.truncf %215 : vector<8x16xf32> to vector<8x16xbf16>
    %cst_65 = arith.constant dense<0.000000e+00> : vector<8x64xf32>
    %231 = tpu.matmul %230, %4, %cst_65 {dimension_numbers = #tpu.dot_dimension_numbers<[1], [0], [0], [1], [0, 0, 1, 1], [], []>} : vector<8x16xbf16>, vector<16x64xbf16>, vector<8x64xf32> -> vector<8x64xf32>
    %232 = arith.addf %229, %231 : vector<8x64xf32>
    %233 = vector.extract_strided_slice %224 {offsets = [0, 0], sizes = [8, 16], strides = [1, 1]} : vector<8x64xf32> to vector<8x16xf32>
    %234 = arith.negf %233 : vector<8x16xf32>
    %235 = math.exp %234 : vector<8x16xf32>
    %cst_66 = arith.constant 1.000000e+00 : f32
    %236 = vector.broadcast %cst_66 : f32 to vector<8x16xf32>
    %237 = arith.addf %236, %235 : vector<8x16xf32>
    %238 = arith.divf %236, %237 : vector<8x16xf32>
    %239 = vector.extract_strided_slice %224 {offsets = [0, 16], sizes = [8, 16], strides = [1, 1]} : vector<8x64xf32> to vector<8x16xf32>
    %240 = arith.negf %239 : vector<8x16xf32>
    %241 = math.exp %240 : vector<8x16xf32>
    %cst_67 = arith.constant 1.000000e+00 : f32
    %242 = vector.broadcast %cst_67 : f32 to vector<8x16xf32>
    %243 = arith.addf %242, %241 : vector<8x16xf32>
    %244 = arith.divf %242, %243 : vector<8x16xf32>
    %245 = vector.extract_strided_slice %224 {offsets = [0, 32], sizes = [8, 16], strides = [1, 1]} : vector<8x64xf32> to vector<8x16xf32>
    %246 = math.tanh %245 : vector<8x16xf32>
    %247 = vector.extract_strided_slice %224 {offsets = [0, 48], sizes = [8, 16], strides = [1, 1]} : vector<8x64xf32> to vector<8x16xf32>
    %248 = arith.negf %247 : vector<8x16xf32>
    %249 = math.exp %248 : vector<8x16xf32>
    %cst_68 = arith.constant 1.000000e+00 : f32
    %250 = vector.broadcast %cst_68 : f32 to vector<8x16xf32>
    %251 = arith.addf %250, %249 : vector<8x16xf32>
    %252 = arith.divf %250, %251 : vector<8x16xf32>
    %253 = arith.mulf %244, %188 : vector<8x16xf32>
    %254 = arith.mulf %238, %246 : vector<8x16xf32>
    %255 = arith.addf %253, %254 : vector<8x16xf32>
    %256 = math.tanh %255 : vector<8x16xf32>
    %257 = arith.mulf %252, %256 : vector<8x16xf32>
    %258 = vector.extract_strided_slice %232 {offsets = [0, 0], sizes = [8, 16], strides = [1, 1]} : vector<8x64xf32> to vector<8x16xf32>
    %259 = arith.negf %258 : vector<8x16xf32>
    %260 = math.exp %259 : vector<8x16xf32>
    %cst_69 = arith.constant 1.000000e+00 : f32
    %261 = vector.broadcast %cst_69 : f32 to vector<8x16xf32>
    %262 = arith.addf %261, %260 : vector<8x16xf32>
    %263 = arith.divf %261, %262 : vector<8x16xf32>
    %264 = vector.extract_strided_slice %232 {offsets = [0, 16], sizes = [8, 16], strides = [1, 1]} : vector<8x64xf32> to vector<8x16xf32>
    %265 = arith.negf %264 : vector<8x16xf32>
    %266 = math.exp %265 : vector<8x16xf32>
    %cst_70 = arith.constant 1.000000e+00 : f32
    %267 = vector.broadcast %cst_70 : f32 to vector<8x16xf32>
    %268 = arith.addf %267, %266 : vector<8x16xf32>
    %269 = arith.divf %267, %268 : vector<8x16xf32>
    %270 = vector.extract_strided_slice %232 {offsets = [0, 32], sizes = [8, 16], strides = [1, 1]} : vector<8x64xf32> to vector<8x16xf32>
    %271 = math.tanh %270 : vector<8x16xf32>
    %272 = vector.extract_strided_slice %232 {offsets = [0, 48], sizes = [8, 16], strides = [1, 1]} : vector<8x64xf32> to vector<8x16xf32>
    %273 = arith.negf %272 : vector<8x16xf32>
    %274 = math.exp %273 : vector<8x16xf32>
    %cst_71 = arith.constant 1.000000e+00 : f32
    %275 = vector.broadcast %cst_71 : f32 to vector<8x16xf32>
    %276 = arith.addf %275, %274 : vector<8x16xf32>
    %277 = arith.divf %275, %276 : vector<8x16xf32>
    %278 = arith.mulf %269, %213 : vector<8x16xf32>
    %279 = arith.mulf %263, %271 : vector<8x16xf32>
    %280 = arith.addf %278, %279 : vector<8x16xf32>
    %281 = math.tanh %280 : vector<8x16xf32>
    %282 = arith.mulf %277, %281 : vector<8x16xf32>
    %283 = arith.addf %216, %257 : vector<8x16xf32>
    %284 = arith.addf %217, %282 : vector<8x16xf32>
    %c4_i32 = arith.constant 4 : i32
    %285 = arith.index_cast %c4_i32 : i32 to index
    %c0_72 = arith.constant 0 : index
    %c0_73 = arith.constant 0 : index
    %286 = vector.load %arg2[%285, %c0_72, %c0_73] : memref<8x8x64xbf16, #tpu.memory_space<vmem>>, vector<1x8x64xbf16>
    %287 = vector.shape_cast %286 : vector<1x8x64xbf16> to vector<8x64xbf16>
    %288 = arith.extf %287 : vector<8x64xbf16> to vector<8x64xf32>
    %289 = arith.truncf %257 : vector<8x16xf32> to vector<8x16xbf16>
    %cst_74 = arith.constant dense<0.000000e+00> : vector<8x64xf32>
    %290 = tpu.matmul %289, %3, %cst_74 {dimension_numbers = #tpu.dot_dimension_numbers<[1], [0], [0], [1], [0, 0, 1, 1], [], []>} : vector<8x16xbf16>, vector<16x64xbf16>, vector<8x64xf32> -> vector<8x64xf32>
    %291 = arith.addf %288, %290 : vector<8x64xf32>
    %c7_i32_75 = arith.constant 7 : i32
    %292 = arith.subi %c7_i32_75, %c4_i32 : i32
    %293 = arith.index_cast %292 : i32 to index
    %c0_76 = arith.constant 0 : index
    %c0_77 = arith.constant 0 : index
    %294 = vector.load %arg3[%293, %c0_76, %c0_77] : memref<8x8x64xbf16, #tpu.memory_space<vmem>>, vector<1x8x64xbf16>
    %295 = vector.shape_cast %294 : vector<1x8x64xbf16> to vector<8x64xbf16>
    %296 = arith.extf %295 : vector<8x64xbf16> to vector<8x64xf32>
    %297 = arith.truncf %282 : vector<8x16xf32> to vector<8x16xbf16>
    %cst_78 = arith.constant dense<0.000000e+00> : vector<8x64xf32>
    %298 = tpu.matmul %297, %4, %cst_78 {dimension_numbers = #tpu.dot_dimension_numbers<[1], [0], [0], [1], [0, 0, 1, 1], [], []>} : vector<8x16xbf16>, vector<16x64xbf16>, vector<8x64xf32> -> vector<8x64xf32>
    %299 = arith.addf %296, %298 : vector<8x64xf32>
    %300 = vector.extract_strided_slice %291 {offsets = [0, 0], sizes = [8, 16], strides = [1, 1]} : vector<8x64xf32> to vector<8x16xf32>
    %301 = arith.negf %300 : vector<8x16xf32>
    %302 = math.exp %301 : vector<8x16xf32>
    %cst_79 = arith.constant 1.000000e+00 : f32
    %303 = vector.broadcast %cst_79 : f32 to vector<8x16xf32>
    %304 = arith.addf %303, %302 : vector<8x16xf32>
    %305 = arith.divf %303, %304 : vector<8x16xf32>
    %306 = vector.extract_strided_slice %291 {offsets = [0, 16], sizes = [8, 16], strides = [1, 1]} : vector<8x64xf32> to vector<8x16xf32>
    %307 = arith.negf %306 : vector<8x16xf32>
    %308 = math.exp %307 : vector<8x16xf32>
    %cst_80 = arith.constant 1.000000e+00 : f32
    %309 = vector.broadcast %cst_80 : f32 to vector<8x16xf32>
    %310 = arith.addf %309, %308 : vector<8x16xf32>
    %311 = arith.divf %309, %310 : vector<8x16xf32>
    %312 = vector.extract_strided_slice %291 {offsets = [0, 32], sizes = [8, 16], strides = [1, 1]} : vector<8x64xf32> to vector<8x16xf32>
    %313 = math.tanh %312 : vector<8x16xf32>
    %314 = vector.extract_strided_slice %291 {offsets = [0, 48], sizes = [8, 16], strides = [1, 1]} : vector<8x64xf32> to vector<8x16xf32>
    %315 = arith.negf %314 : vector<8x16xf32>
    %316 = math.exp %315 : vector<8x16xf32>
    %cst_81 = arith.constant 1.000000e+00 : f32
    %317 = vector.broadcast %cst_81 : f32 to vector<8x16xf32>
    %318 = arith.addf %317, %316 : vector<8x16xf32>
    %319 = arith.divf %317, %318 : vector<8x16xf32>
    %320 = arith.mulf %311, %255 : vector<8x16xf32>
    %321 = arith.mulf %305, %313 : vector<8x16xf32>
    %322 = arith.addf %320, %321 : vector<8x16xf32>
    %323 = math.tanh %322 : vector<8x16xf32>
    %324 = arith.mulf %319, %323 : vector<8x16xf32>
    %325 = vector.extract_strided_slice %299 {offsets = [0, 0], sizes = [8, 16], strides = [1, 1]} : vector<8x64xf32> to vector<8x16xf32>
    %326 = arith.negf %325 : vector<8x16xf32>
    %327 = math.exp %326 : vector<8x16xf32>
    %cst_82 = arith.constant 1.000000e+00 : f32
    %328 = vector.broadcast %cst_82 : f32 to vector<8x16xf32>
    %329 = arith.addf %328, %327 : vector<8x16xf32>
    %330 = arith.divf %328, %329 : vector<8x16xf32>
    %331 = vector.extract_strided_slice %299 {offsets = [0, 16], sizes = [8, 16], strides = [1, 1]} : vector<8x64xf32> to vector<8x16xf32>
    %332 = arith.negf %331 : vector<8x16xf32>
    %333 = math.exp %332 : vector<8x16xf32>
    %cst_83 = arith.constant 1.000000e+00 : f32
    %334 = vector.broadcast %cst_83 : f32 to vector<8x16xf32>
    %335 = arith.addf %334, %333 : vector<8x16xf32>
    %336 = arith.divf %334, %335 : vector<8x16xf32>
    %337 = vector.extract_strided_slice %299 {offsets = [0, 32], sizes = [8, 16], strides = [1, 1]} : vector<8x64xf32> to vector<8x16xf32>
    %338 = math.tanh %337 : vector<8x16xf32>
    %339 = vector.extract_strided_slice %299 {offsets = [0, 48], sizes = [8, 16], strides = [1, 1]} : vector<8x64xf32> to vector<8x16xf32>
    %340 = arith.negf %339 : vector<8x16xf32>
    %341 = math.exp %340 : vector<8x16xf32>
    %cst_84 = arith.constant 1.000000e+00 : f32
    %342 = vector.broadcast %cst_84 : f32 to vector<8x16xf32>
    %343 = arith.addf %342, %341 : vector<8x16xf32>
    %344 = arith.divf %342, %343 : vector<8x16xf32>
    %345 = arith.mulf %336, %280 : vector<8x16xf32>
    %346 = arith.mulf %330, %338 : vector<8x16xf32>
    %347 = arith.addf %345, %346 : vector<8x16xf32>
    %348 = math.tanh %347 : vector<8x16xf32>
    %349 = arith.mulf %344, %348 : vector<8x16xf32>
    %350 = arith.addf %283, %324 : vector<8x16xf32>
    %351 = arith.addf %284, %349 : vector<8x16xf32>
    %c5_i32 = arith.constant 5 : i32
    %352 = arith.index_cast %c5_i32 : i32 to index
    %c0_85 = arith.constant 0 : index
    %c0_86 = arith.constant 0 : index
    %353 = vector.load %arg2[%352, %c0_85, %c0_86] : memref<8x8x64xbf16, #tpu.memory_space<vmem>>, vector<1x8x64xbf16>
    %354 = vector.shape_cast %353 : vector<1x8x64xbf16> to vector<8x64xbf16>
    %355 = arith.extf %354 : vector<8x64xbf16> to vector<8x64xf32>
    %356 = arith.truncf %324 : vector<8x16xf32> to vector<8x16xbf16>
    %cst_87 = arith.constant dense<0.000000e+00> : vector<8x64xf32>
    %357 = tpu.matmul %356, %3, %cst_87 {dimension_numbers = #tpu.dot_dimension_numbers<[1], [0], [0], [1], [0, 0, 1, 1], [], []>} : vector<8x16xbf16>, vector<16x64xbf16>, vector<8x64xf32> -> vector<8x64xf32>
    %358 = arith.addf %355, %357 : vector<8x64xf32>
    %c7_i32_88 = arith.constant 7 : i32
    %359 = arith.subi %c7_i32_88, %c5_i32 : i32
    %360 = arith.index_cast %359 : i32 to index
    %c0_89 = arith.constant 0 : index
    %c0_90 = arith.constant 0 : index
    %361 = vector.load %arg3[%360, %c0_89, %c0_90] : memref<8x8x64xbf16, #tpu.memory_space<vmem>>, vector<1x8x64xbf16>
    %362 = vector.shape_cast %361 : vector<1x8x64xbf16> to vector<8x64xbf16>
    %363 = arith.extf %362 : vector<8x64xbf16> to vector<8x64xf32>
    %364 = arith.truncf %349 : vector<8x16xf32> to vector<8x16xbf16>
    %cst_91 = arith.constant dense<0.000000e+00> : vector<8x64xf32>
    %365 = tpu.matmul %364, %4, %cst_91 {dimension_numbers = #tpu.dot_dimension_numbers<[1], [0], [0], [1], [0, 0, 1, 1], [], []>} : vector<8x16xbf16>, vector<16x64xbf16>, vector<8x64xf32> -> vector<8x64xf32>
    %366 = arith.addf %363, %365 : vector<8x64xf32>
    %367 = vector.extract_strided_slice %358 {offsets = [0, 0], sizes = [8, 16], strides = [1, 1]} : vector<8x64xf32> to vector<8x16xf32>
    %368 = arith.negf %367 : vector<8x16xf32>
    %369 = math.exp %368 : vector<8x16xf32>
    %cst_92 = arith.constant 1.000000e+00 : f32
    %370 = vector.broadcast %cst_92 : f32 to vector<8x16xf32>
    %371 = arith.addf %370, %369 : vector<8x16xf32>
    %372 = arith.divf %370, %371 : vector<8x16xf32>
    %373 = vector.extract_strided_slice %358 {offsets = [0, 16], sizes = [8, 16], strides = [1, 1]} : vector<8x64xf32> to vector<8x16xf32>
    %374 = arith.negf %373 : vector<8x16xf32>
    %375 = math.exp %374 : vector<8x16xf32>
    %cst_93 = arith.constant 1.000000e+00 : f32
    %376 = vector.broadcast %cst_93 : f32 to vector<8x16xf32>
    %377 = arith.addf %376, %375 : vector<8x16xf32>
    %378 = arith.divf %376, %377 : vector<8x16xf32>
    %379 = vector.extract_strided_slice %358 {offsets = [0, 32], sizes = [8, 16], strides = [1, 1]} : vector<8x64xf32> to vector<8x16xf32>
    %380 = math.tanh %379 : vector<8x16xf32>
    %381 = vector.extract_strided_slice %358 {offsets = [0, 48], sizes = [8, 16], strides = [1, 1]} : vector<8x64xf32> to vector<8x16xf32>
    %382 = arith.negf %381 : vector<8x16xf32>
    %383 = math.exp %382 : vector<8x16xf32>
    %cst_94 = arith.constant 1.000000e+00 : f32
    %384 = vector.broadcast %cst_94 : f32 to vector<8x16xf32>
    %385 = arith.addf %384, %383 : vector<8x16xf32>
    %386 = arith.divf %384, %385 : vector<8x16xf32>
    %387 = arith.mulf %378, %322 : vector<8x16xf32>
    %388 = arith.mulf %372, %380 : vector<8x16xf32>
    %389 = arith.addf %387, %388 : vector<8x16xf32>
    %390 = math.tanh %389 : vector<8x16xf32>
    %391 = arith.mulf %386, %390 : vector<8x16xf32>
    %392 = vector.extract_strided_slice %366 {offsets = [0, 0], sizes = [8, 16], strides = [1, 1]} : vector<8x64xf32> to vector<8x16xf32>
    %393 = arith.negf %392 : vector<8x16xf32>
    %394 = math.exp %393 : vector<8x16xf32>
    %cst_95 = arith.constant 1.000000e+00 : f32
    %395 = vector.broadcast %cst_95 : f32 to vector<8x16xf32>
    %396 = arith.addf %395, %394 : vector<8x16xf32>
    %397 = arith.divf %395, %396 : vector<8x16xf32>
    %398 = vector.extract_strided_slice %366 {offsets = [0, 16], sizes = [8, 16], strides = [1, 1]} : vector<8x64xf32> to vector<8x16xf32>
    %399 = arith.negf %398 : vector<8x16xf32>
    %400 = math.exp %399 : vector<8x16xf32>
    %cst_96 = arith.constant 1.000000e+00 : f32
    %401 = vector.broadcast %cst_96 : f32 to vector<8x16xf32>
    %402 = arith.addf %401, %400 : vector<8x16xf32>
    %403 = arith.divf %401, %402 : vector<8x16xf32>
    %404 = vector.extract_strided_slice %366 {offsets = [0, 32], sizes = [8, 16], strides = [1, 1]} : vector<8x64xf32> to vector<8x16xf32>
    %405 = math.tanh %404 : vector<8x16xf32>
    %406 = vector.extract_strided_slice %366 {offsets = [0, 48], sizes = [8, 16], strides = [1, 1]} : vector<8x64xf32> to vector<8x16xf32>
    %407 = arith.negf %406 : vector<8x16xf32>
    %408 = math.exp %407 : vector<8x16xf32>
    %cst_97 = arith.constant 1.000000e+00 : f32
    %409 = vector.broadcast %cst_97 : f32 to vector<8x16xf32>
    %410 = arith.addf %409, %408 : vector<8x16xf32>
    %411 = arith.divf %409, %410 : vector<8x16xf32>
    %412 = arith.mulf %403, %347 : vector<8x16xf32>
    %413 = arith.mulf %397, %405 : vector<8x16xf32>
    %414 = arith.addf %412, %413 : vector<8x16xf32>
    %415 = math.tanh %414 : vector<8x16xf32>
    %416 = arith.mulf %411, %415 : vector<8x16xf32>
    %417 = arith.addf %350, %391 : vector<8x16xf32>
    %418 = arith.addf %351, %416 : vector<8x16xf32>
    %c6_i32 = arith.constant 6 : i32
    %419 = arith.index_cast %c6_i32 : i32 to index
    %c0_98 = arith.constant 0 : index
    %c0_99 = arith.constant 0 : index
    %420 = vector.load %arg2[%419, %c0_98, %c0_99] : memref<8x8x64xbf16, #tpu.memory_space<vmem>>, vector<1x8x64xbf16>
    %421 = vector.shape_cast %420 : vector<1x8x64xbf16> to vector<8x64xbf16>
    %422 = arith.extf %421 : vector<8x64xbf16> to vector<8x64xf32>
    %423 = arith.truncf %391 : vector<8x16xf32> to vector<8x16xbf16>
    %cst_100 = arith.constant dense<0.000000e+00> : vector<8x64xf32>
    %424 = tpu.matmul %423, %3, %cst_100 {dimension_numbers = #tpu.dot_dimension_numbers<[1], [0], [0], [1], [0, 0, 1, 1], [], []>} : vector<8x16xbf16>, vector<16x64xbf16>, vector<8x64xf32> -> vector<8x64xf32>
    %425 = arith.addf %422, %424 : vector<8x64xf32>
    %c7_i32_101 = arith.constant 7 : i32
    %426 = arith.subi %c7_i32_101, %c6_i32 : i32
    %427 = arith.index_cast %426 : i32 to index
    %c0_102 = arith.constant 0 : index
    %c0_103 = arith.constant 0 : index
    %428 = vector.load %arg3[%427, %c0_102, %c0_103] : memref<8x8x64xbf16, #tpu.memory_space<vmem>>, vector<1x8x64xbf16>
    %429 = vector.shape_cast %428 : vector<1x8x64xbf16> to vector<8x64xbf16>
    %430 = arith.extf %429 : vector<8x64xbf16> to vector<8x64xf32>
    %431 = arith.truncf %416 : vector<8x16xf32> to vector<8x16xbf16>
    %cst_104 = arith.constant dense<0.000000e+00> : vector<8x64xf32>
    %432 = tpu.matmul %431, %4, %cst_104 {dimension_numbers = #tpu.dot_dimension_numbers<[1], [0], [0], [1], [0, 0, 1, 1], [], []>} : vector<8x16xbf16>, vector<16x64xbf16>, vector<8x64xf32> -> vector<8x64xf32>
    %433 = arith.addf %430, %432 : vector<8x64xf32>
    %434 = vector.extract_strided_slice %425 {offsets = [0, 0], sizes = [8, 16], strides = [1, 1]} : vector<8x64xf32> to vector<8x16xf32>
    %435 = arith.negf %434 : vector<8x16xf32>
    %436 = math.exp %435 : vector<8x16xf32>
    %cst_105 = arith.constant 1.000000e+00 : f32
    %437 = vector.broadcast %cst_105 : f32 to vector<8x16xf32>
    %438 = arith.addf %437, %436 : vector<8x16xf32>
    %439 = arith.divf %437, %438 : vector<8x16xf32>
    %440 = vector.extract_strided_slice %425 {offsets = [0, 16], sizes = [8, 16], strides = [1, 1]} : vector<8x64xf32> to vector<8x16xf32>
    %441 = arith.negf %440 : vector<8x16xf32>
    %442 = math.exp %441 : vector<8x16xf32>
    %cst_106 = arith.constant 1.000000e+00 : f32
    %443 = vector.broadcast %cst_106 : f32 to vector<8x16xf32>
    %444 = arith.addf %443, %442 : vector<8x16xf32>
    %445 = arith.divf %443, %444 : vector<8x16xf32>
    %446 = vector.extract_strided_slice %425 {offsets = [0, 32], sizes = [8, 16], strides = [1, 1]} : vector<8x64xf32> to vector<8x16xf32>
    %447 = math.tanh %446 : vector<8x16xf32>
    %448 = vector.extract_strided_slice %425 {offsets = [0, 48], sizes = [8, 16], strides = [1, 1]} : vector<8x64xf32> to vector<8x16xf32>
    %449 = arith.negf %448 : vector<8x16xf32>
    %450 = math.exp %449 : vector<8x16xf32>
    %cst_107 = arith.constant 1.000000e+00 : f32
    %451 = vector.broadcast %cst_107 : f32 to vector<8x16xf32>
    %452 = arith.addf %451, %450 : vector<8x16xf32>
    %453 = arith.divf %451, %452 : vector<8x16xf32>
    %454 = arith.mulf %445, %389 : vector<8x16xf32>
    %455 = arith.mulf %439, %447 : vector<8x16xf32>
    %456 = arith.addf %454, %455 : vector<8x16xf32>
    %457 = math.tanh %456 : vector<8x16xf32>
    %458 = arith.mulf %453, %457 : vector<8x16xf32>
    %459 = vector.extract_strided_slice %433 {offsets = [0, 0], sizes = [8, 16], strides = [1, 1]} : vector<8x64xf32> to vector<8x16xf32>
    %460 = arith.negf %459 : vector<8x16xf32>
    %461 = math.exp %460 : vector<8x16xf32>
    %cst_108 = arith.constant 1.000000e+00 : f32
    %462 = vector.broadcast %cst_108 : f32 to vector<8x16xf32>
    %463 = arith.addf %462, %461 : vector<8x16xf32>
    %464 = arith.divf %462, %463 : vector<8x16xf32>
    %465 = vector.extract_strided_slice %433 {offsets = [0, 16], sizes = [8, 16], strides = [1, 1]} : vector<8x64xf32> to vector<8x16xf32>
    %466 = arith.negf %465 : vector<8x16xf32>
    %467 = math.exp %466 : vector<8x16xf32>
    %cst_109 = arith.constant 1.000000e+00 : f32
    %468 = vector.broadcast %cst_109 : f32 to vector<8x16xf32>
    %469 = arith.addf %468, %467 : vector<8x16xf32>
    %470 = arith.divf %468, %469 : vector<8x16xf32>
    %471 = vector.extract_strided_slice %433 {offsets = [0, 32], sizes = [8, 16], strides = [1, 1]} : vector<8x64xf32> to vector<8x16xf32>
    %472 = math.tanh %471 : vector<8x16xf32>
    %473 = vector.extract_strided_slice %433 {offsets = [0, 48], sizes = [8, 16], strides = [1, 1]} : vector<8x64xf32> to vector<8x16xf32>
    %474 = arith.negf %473 : vector<8x16xf32>
    %475 = math.exp %474 : vector<8x16xf32>
    %cst_110 = arith.constant 1.000000e+00 : f32
    %476 = vector.broadcast %cst_110 : f32 to vector<8x16xf32>
    %477 = arith.addf %476, %475 : vector<8x16xf32>
    %478 = arith.divf %476, %477 : vector<8x16xf32>
    %479 = arith.mulf %470, %414 : vector<8x16xf32>
    %480 = arith.mulf %464, %472 : vector<8x16xf32>
    %481 = arith.addf %479, %480 : vector<8x16xf32>
    %482 = math.tanh %481 : vector<8x16xf32>
    %483 = arith.mulf %478, %482 : vector<8x16xf32>
    %484 = arith.addf %417, %458 : vector<8x16xf32>
    %485 = arith.addf %418, %483 : vector<8x16xf32>
    %c7_i32_111 = arith.constant 7 : i32
    %486 = arith.index_cast %c7_i32_111 : i32 to index
    %c0_112 = arith.constant 0 : index
    %c0_113 = arith.constant 0 : index
    %487 = vector.load %arg2[%486, %c0_112, %c0_113] : memref<8x8x64xbf16, #tpu.memory_space<vmem>>, vector<1x8x64xbf16>
    %488 = vector.shape_cast %487 : vector<1x8x64xbf16> to vector<8x64xbf16>
    %489 = arith.extf %488 : vector<8x64xbf16> to vector<8x64xf32>
    %490 = arith.truncf %458 : vector<8x16xf32> to vector<8x16xbf16>
    %cst_114 = arith.constant dense<0.000000e+00> : vector<8x64xf32>
    %491 = tpu.matmul %490, %3, %cst_114 {dimension_numbers = #tpu.dot_dimension_numbers<[1], [0], [0], [1], [0, 0, 1, 1], [], []>} : vector<8x16xbf16>, vector<16x64xbf16>, vector<8x64xf32> -> vector<8x64xf32>
    %492 = arith.addf %489, %491 : vector<8x64xf32>
    %c7_i32_115 = arith.constant 7 : i32
    %493 = arith.subi %c7_i32_115, %c7_i32_111 : i32
    %494 = arith.index_cast %493 : i32 to index
    %c0_116 = arith.constant 0 : index
    %c0_117 = arith.constant 0 : index
    %495 = vector.load %arg3[%494, %c0_116, %c0_117] : memref<8x8x64xbf16, #tpu.memory_space<vmem>>, vector<1x8x64xbf16>
    %496 = vector.shape_cast %495 : vector<1x8x64xbf16> to vector<8x64xbf16>
    %497 = arith.extf %496 : vector<8x64xbf16> to vector<8x64xf32>
    %498 = arith.truncf %483 : vector<8x16xf32> to vector<8x16xbf16>
    %cst_118 = arith.constant dense<0.000000e+00> : vector<8x64xf32>
    %499 = tpu.matmul %498, %4, %cst_118 {dimension_numbers = #tpu.dot_dimension_numbers<[1], [0], [0], [1], [0, 0, 1, 1], [], []>} : vector<8x16xbf16>, vector<16x64xbf16>, vector<8x64xf32> -> vector<8x64xf32>
    %500 = arith.addf %497, %499 : vector<8x64xf32>
    %501 = vector.extract_strided_slice %492 {offsets = [0, 0], sizes = [8, 16], strides = [1, 1]} : vector<8x64xf32> to vector<8x16xf32>
    %502 = arith.negf %501 : vector<8x16xf32>
    %503 = math.exp %502 : vector<8x16xf32>
    %cst_119 = arith.constant 1.000000e+00 : f32
    %504 = vector.broadcast %cst_119 : f32 to vector<8x16xf32>
    %505 = arith.addf %504, %503 : vector<8x16xf32>
    %506 = arith.divf %504, %505 : vector<8x16xf32>
    %507 = vector.extract_strided_slice %492 {offsets = [0, 16], sizes = [8, 16], strides = [1, 1]} : vector<8x64xf32> to vector<8x16xf32>
    %508 = arith.negf %507 : vector<8x16xf32>
    %509 = math.exp %508 : vector<8x16xf32>
    %cst_120 = arith.constant 1.000000e+00 : f32
    %510 = vector.broadcast %cst_120 : f32 to vector<8x16xf32>
    %511 = arith.addf %510, %509 : vector<8x16xf32>
    %512 = arith.divf %510, %511 : vector<8x16xf32>
    %513 = vector.extract_strided_slice %492 {offsets = [0, 32], sizes = [8, 16], strides = [1, 1]} : vector<8x64xf32> to vector<8x16xf32>
    %514 = math.tanh %513 : vector<8x16xf32>
    %515 = vector.extract_strided_slice %492 {offsets = [0, 48], sizes = [8, 16], strides = [1, 1]} : vector<8x64xf32> to vector<8x16xf32>
    %516 = arith.negf %515 : vector<8x16xf32>
    %517 = math.exp %516 : vector<8x16xf32>
    %cst_121 = arith.constant 1.000000e+00 : f32
    %518 = vector.broadcast %cst_121 : f32 to vector<8x16xf32>
    %519 = arith.addf %518, %517 : vector<8x16xf32>
    %520 = arith.divf %518, %519 : vector<8x16xf32>
    %521 = arith.mulf %512, %456 : vector<8x16xf32>
    %522 = arith.mulf %506, %514 : vector<8x16xf32>
    %523 = arith.addf %521, %522 : vector<8x16xf32>
    %524 = math.tanh %523 : vector<8x16xf32>
    %525 = arith.mulf %520, %524 : vector<8x16xf32>
    %526 = vector.extract_strided_slice %500 {offsets = [0, 0], sizes = [8, 16], strides = [1, 1]} : vector<8x64xf32> to vector<8x16xf32>
    %527 = arith.negf %526 : vector<8x16xf32>
    %528 = math.exp %527 : vector<8x16xf32>
    %cst_122 = arith.constant 1.000000e+00 : f32
    %529 = vector.broadcast %cst_122 : f32 to vector<8x16xf32>
    %530 = arith.addf %529, %528 : vector<8x16xf32>
    %531 = arith.divf %529, %530 : vector<8x16xf32>
    %532 = vector.extract_strided_slice %500 {offsets = [0, 16], sizes = [8, 16], strides = [1, 1]} : vector<8x64xf32> to vector<8x16xf32>
    %533 = arith.negf %532 : vector<8x16xf32>
    %534 = math.exp %533 : vector<8x16xf32>
    %cst_123 = arith.constant 1.000000e+00 : f32
    %535 = vector.broadcast %cst_123 : f32 to vector<8x16xf32>
    %536 = arith.addf %535, %534 : vector<8x16xf32>
    %537 = arith.divf %535, %536 : vector<8x16xf32>
    %538 = vector.extract_strided_slice %500 {offsets = [0, 32], sizes = [8, 16], strides = [1, 1]} : vector<8x64xf32> to vector<8x16xf32>
    %539 = math.tanh %538 : vector<8x16xf32>
    %540 = vector.extract_strided_slice %500 {offsets = [0, 48], sizes = [8, 16], strides = [1, 1]} : vector<8x64xf32> to vector<8x16xf32>
    %541 = arith.negf %540 : vector<8x16xf32>
    %542 = math.exp %541 : vector<8x16xf32>
    %cst_124 = arith.constant 1.000000e+00 : f32
    %543 = vector.broadcast %cst_124 : f32 to vector<8x16xf32>
    %544 = arith.addf %543, %542 : vector<8x16xf32>
    %545 = arith.divf %543, %544 : vector<8x16xf32>
    %546 = arith.mulf %537, %481 : vector<8x16xf32>
    %547 = arith.mulf %531, %539 : vector<8x16xf32>
    %548 = arith.addf %546, %547 : vector<8x16xf32>
    %549 = math.tanh %548 : vector<8x16xf32>
    %550 = arith.mulf %545, %549 : vector<8x16xf32>
    %551 = arith.addf %484, %525 : vector<8x16xf32>
    %552 = arith.addf %485, %550 : vector<8x16xf32>
    %c8_i32 = arith.constant 8 : i32
    %c0_125 = arith.constant 0 : index
    %c0_126 = arith.constant 0 : index
    %c0_127 = arith.constant 0 : index
    %553 = vector.load %arg7[%c0_125, %c0_126, %c0_127] : memref<2x8x16xf32, #tpu.memory_space<vmem>>, vector<1x8x16xf32>
    %554 = vector.shape_cast %553 : vector<1x8x16xf32> to vector<8x16xf32>
    %555 = vector.shape_cast %525 : vector<8x16xf32> to vector<1x8x16xf32>
    tpu.vector_store %arg7[%c0_125, %c0_126, %c0_127], %555 {strides = array<i32>} : memref<2x8x16xf32, #tpu.memory_space<vmem>>, vector<1x8x16xf32>,
    %c0_128 = arith.constant 0 : index
    %c0_129 = arith.constant 0 : index
    %c0_130 = arith.constant 0 : index
    %556 = vector.load %arg8[%c0_128, %c0_129, %c0_130] : memref<2x8x16xf32, #tpu.memory_space<vmem>>, vector<1x8x16xf32>
    %557 = vector.shape_cast %556 : vector<1x8x16xf32> to vector<8x16xf32>
    %558 = vector.shape_cast %523 : vector<8x16xf32> to vector<1x8x16xf32>
    tpu.vector_store %arg8[%c0_128, %c0_129, %c0_130], %558 {strides = array<i32>} : memref<2x8x16xf32, #tpu.memory_space<vmem>>, vector<1x8x16xf32>,
    %c1_131 = arith.constant 1 : index
    %c0_132 = arith.constant 0 : index
    %c0_133 = arith.constant 0 : index
    %559 = vector.load %arg7[%c1_131, %c0_132, %c0_133] : memref<2x8x16xf32, #tpu.memory_space<vmem>>, vector<1x8x16xf32>
    %560 = vector.shape_cast %559 : vector<1x8x16xf32> to vector<8x16xf32>
    %561 = vector.shape_cast %550 : vector<8x16xf32> to vector<1x8x16xf32>
    tpu.vector_store %arg7[%c1_131, %c0_132, %c0_133], %561 {strides = array<i32>} : memref<2x8x16xf32, #tpu.memory_space<vmem>>, vector<1x8x16xf32>,
    %c1_134 = arith.constant 1 : index
    %c0_135 = arith.constant 0 : index
    %c0_136 = arith.constant 0 : index
    %562 = vector.load %arg8[%c1_134, %c0_135, %c0_136] : memref<2x8x16xf32, #tpu.memory_space<vmem>>, vector<1x8x16xf32>
    %563 = vector.shape_cast %562 : vector<1x8x16xf32> to vector<8x16xf32>
    %564 = vector.shape_cast %548 : vector<8x16xf32> to vector<1x8x16xf32>
    tpu.vector_store %arg8[%c1_134, %c0_135, %c0_136], %564 {strides = array<i32>} : memref<2x8x16xf32, #tpu.memory_space<vmem>>, vector<1x8x16xf32>,
    %c0_137 = arith.constant 0 : index
    %c0_138 = arith.constant 0 : index
    %c0_139 = arith.constant 0 : index
    %565 = vector.load %arg9[%c0_137, %c0_138, %c0_139] : memref<2x8x16xf32, #tpu.memory_space<vmem>>, vector<1x8x16xf32>
    %566 = vector.shape_cast %565 : vector<1x8x16xf32> to vector<8x16xf32>
    %567 = vector.shape_cast %551 : vector<8x16xf32> to vector<1x8x16xf32>
    tpu.vector_store %arg9[%c0_137, %c0_138, %c0_139], %567 {strides = array<i32>} : memref<2x8x16xf32, #tpu.memory_space<vmem>>, vector<1x8x16xf32>,
    %c1_140 = arith.constant 1 : index
    %c0_141 = arith.constant 0 : index
    %c0_142 = arith.constant 0 : index
    %568 = vector.load %arg9[%c1_140, %c0_141, %c0_142] : memref<2x8x16xf32, #tpu.memory_space<vmem>>, vector<1x8x16xf32>
    %569 = vector.shape_cast %568 : vector<1x8x16xf32> to vector<8x16xf32>
    %570 = vector.shape_cast %552 : vector<8x16xf32> to vector<1x8x16xf32>
    tpu.vector_store %arg9[%c1_140, %c0_141, %c0_142], %570 {strides = array<i32>} : memref<2x8x16xf32, #tpu.memory_space<vmem>>, vector<1x8x16xf32>,
    %c0_i32_143 = arith.constant 0 : i32
    %571 = arith.cmpi eq, %arg1, %c0_i32_143 : i32
    %572 = arith.extui %571 : i1 to i32
    %c0_i32_144 = arith.constant 0 : i32
    %573 = arith.cmpi ne, %572, %c0_i32_144 : i32
    scf.if %573 {
      %cst_145 = arith.constant 1.250000e-01 : f32
      %574 = vector.broadcast %cst_145 : f32 to vector<8x16xf32>
      %575 = arith.mulf %551, %574 : vector<8x16xf32>
      %c0_146 = arith.constant 0 : index
      %c0_147 = arith.constant 0 : index
      %576 = vector.load %arg6[%c0_146, %c0_147] : memref<8x32xf32, #tpu.memory_space<vmem>>, vector<8x16xf32>
      tpu.vector_store %arg6[%c0_146, %c0_147], %575 {strides = array<i32>} : memref<8x32xf32, #tpu.memory_space<vmem>>, vector<8x16xf32>,
      %cst_148 = arith.constant 1.250000e-01 : f32
      %577 = vector.broadcast %cst_148 : f32 to vector<8x16xf32>
      %578 = arith.mulf %552, %577 : vector<8x16xf32>
      %c0_149 = arith.constant 0 : index
      %c16 = arith.constant 16 : index
      %579 = vector.load %arg6[%c0_149, %c16] : memref<8x32xf32, #tpu.memory_space<vmem>>, vector<8x16xf32>
      tpu.vector_store %arg6[%c0_149, %c16], %578 {strides = array<i32>} : memref<8x32xf32, #tpu.memory_space<vmem>>, vector<8x16xf32>,
    } else {
    }
    return
  }
  func.func @transform_0(%arg0: i32, %arg1: i32) -> (i32, i32, i32) {
    %c0_i32 = arith.constant 0 : i32
    %c0_i32_0 = arith.constant 0 : i32
    return %arg1, %arg0, %c0_i32 : i32, i32, i32
  }
  func.func @transform_1(%arg0: i32, %arg1: i32) -> (i32, i32, i32) {
    %c0_i32 = arith.constant 0 : i32
    %0 = arith.subi %c0_i32, %arg1 : i32
    %c0_i32_0 = arith.constant 0 : i32
    %c0_i32_1 = arith.constant 0 : i32
    return %0, %arg0, %c0_i32_0 : i32, i32, i32
  }
  func.func @transform_2(%arg0: i32, %arg1: i32) -> (i32, i32) {
    %c0_i32 = arith.constant 0 : i32
    %c0_i32_0 = arith.constant 0 : i32
    %c0_i32_1 = arith.constant 0 : i32
    return %c0_i32, %c0_i32_0 : i32, i32
  }
  func.func @transform_3(%arg0: i32, %arg1: i32) -> (i32, i32) {
    %c0_i32 = arith.constant 0 : i32
    %c0_i32_0 = arith.constant 0 : i32
    %c0_i32_1 = arith.constant 0 : i32
    return %c0_i32, %c0_i32_0 : i32, i32
  }
  func.func @transform_4(%arg0: i32, %arg1: i32) -> (i32, i32) {
    %c0_i32 = arith.constant 0 : i32
    %c0_i32_0 = arith.constant 0 : i32
    return %arg0, %c0_i32 : i32, i32
  }
}

module attributes {stable_mosaic.version = 11 : i64} {
  func.func @_proj_single_kernel(%arg0: i32, %arg1: i32, %arg2: memref<8x32xf32, #tpu.memory_space<vmem>>, %arg3: memref<32x64xbf16, #tpu.memory_space<vmem>>, %arg4: memref<32x64xbf16, #tpu.memory_space<vmem>>, %arg5: memref<1x64xf32, #tpu.memory_space<vmem>>, %arg6: memref<1x64xf32, #tpu.memory_space<vmem>>, %arg7: memref<8x64xbf16, #tpu.memory_space<vmem>>, %arg8: memref<8x64xbf16, #tpu.memory_space<vmem>>) attributes {dimension_semantics = [#tpu.dimension_semantics<parallel>, #tpu.dimension_semantics<parallel>], iteration_bounds = array<i64: 1, 1>, scalar_prefetch = 0 : i64, scratch_operands = 0 : i64, tpu.core_type = #tpu.core_type<tc>, window_params = [{transform_indices = @transform_0, window_bounds = array<i64: 8, 32>}, {transform_indices = @transform_1, window_bounds = array<i64: 32, 64>}, {transform_indices = @transform_2, window_bounds = array<i64: 32, 64>}, {transform_indices = @transform_3, window_bounds = array<i64: 1, 64>}, {transform_indices = @transform_4, window_bounds = array<i64: 1, 64>}, {transform_indices = @transform_5, window_bounds = array<i64: 8, 64>}, {transform_indices = @transform_6, window_bounds = array<i64: 8, 64>}]} {
    %c0 = arith.constant 0 : index
    %c0_0 = arith.constant 0 : index
    %0 = vector.load %arg2[%c0, %c0_0] : memref<8x32xf32, #tpu.memory_space<vmem>>, vector<8x32xf32>
    %1 = arith.truncf %0 : vector<8x32xf32> to vector<8x32xbf16>
    %c0_1 = arith.constant 0 : index
    %c0_2 = arith.constant 0 : index
    %2 = vector.load %arg3[%c0_1, %c0_2] : memref<32x64xbf16, #tpu.memory_space<vmem>>, vector<32x64xbf16>
    %cst = arith.constant dense<0.000000e+00> : vector<8x64xf32>
    %3 = tpu.matmul %1, %2, %cst {dimension_numbers = #tpu.dot_dimension_numbers<[1], [0], [0], [1], [0, 0, 1, 1], [], []>} : vector<8x32xbf16>, vector<32x64xbf16>, vector<8x64xf32> -> vector<8x64xf32>
    %c0_3 = arith.constant 0 : index
    %c0_4 = arith.constant 0 : index
    %4 = vector.load %arg5[%c0_3, %c0_4] : memref<1x64xf32, #tpu.memory_space<vmem>>, vector<1x64xf32>
    %5 = vector.broadcast %4 : vector<1x64xf32> to vector<8x64xf32>
    %6 = arith.addf %3, %5 : vector<8x64xf32>
    %c0_5 = arith.constant 0 : index
    %c0_6 = arith.constant 0 : index
    %7 = vector.load %arg4[%c0_5, %c0_6] : memref<32x64xbf16, #tpu.memory_space<vmem>>, vector<32x64xbf16>
    %cst_7 = arith.constant dense<0.000000e+00> : vector<8x64xf32>
    %8 = tpu.matmul %1, %7, %cst_7 {dimension_numbers = #tpu.dot_dimension_numbers<[1], [0], [0], [1], [0, 0, 1, 1], [], []>} : vector<8x32xbf16>, vector<32x64xbf16>, vector<8x64xf32> -> vector<8x64xf32>
    %c0_8 = arith.constant 0 : index
    %c0_9 = arith.constant 0 : index
    %9 = vector.load %arg6[%c0_8, %c0_9] : memref<1x64xf32, #tpu.memory_space<vmem>>, vector<1x64xf32>
    %10 = vector.broadcast %9 : vector<1x64xf32> to vector<8x64xf32>
    %11 = arith.addf %8, %10 : vector<8x64xf32>
    %12 = arith.truncf %6 : vector<8x64xf32> to vector<8x64xbf16>
    %c0_10 = arith.constant 0 : index
    %c0_11 = arith.constant 0 : index
    %13 = vector.load %arg7[%c0_10, %c0_11] : memref<8x64xbf16, #tpu.memory_space<vmem>>, vector<8x64xbf16>
    tpu.vector_store %arg7[%c0_10, %c0_11], %12 {strides = array<i32>} : memref<8x64xbf16, #tpu.memory_space<vmem>>, vector<8x64xbf16>,
    %14 = arith.truncf %11 : vector<8x64xf32> to vector<8x64xbf16>
    %c0_12 = arith.constant 0 : index
    %c0_13 = arith.constant 0 : index
    %15 = vector.load %arg8[%c0_12, %c0_13] : memref<8x64xbf16, #tpu.memory_space<vmem>>, vector<8x64xbf16>
    tpu.vector_store %arg8[%c0_12, %c0_13], %14 {strides = array<i32>} : memref<8x64xbf16, #tpu.memory_space<vmem>>, vector<8x64xbf16>,
    return
  }
  func.func @transform_0(%arg0: i32, %arg1: i32) -> (i32, i32) {
    %c0_i32 = arith.constant 0 : i32
    %c0_i32_0 = arith.constant 0 : i32
    return %arg1, %c0_i32 : i32, i32
  }
  func.func @transform_1(%arg0: i32, %arg1: i32) -> (i32, i32) {
    %c0_i32 = arith.constant 0 : i32
    %c0_i32_0 = arith.constant 0 : i32
    return %c0_i32, %arg0 : i32, i32
  }
  func.func @transform_2(%arg0: i32, %arg1: i32) -> (i32, i32) {
    %c0_i32 = arith.constant 0 : i32
    %c0_i32_0 = arith.constant 0 : i32
    return %c0_i32, %arg0 : i32, i32
  }
  func.func @transform_3(%arg0: i32, %arg1: i32) -> (i32, i32) {
    %c0_i32 = arith.constant 0 : i32
    %c0_i32_0 = arith.constant 0 : i32
    return %c0_i32, %arg0 : i32, i32
  }
  func.func @transform_4(%arg0: i32, %arg1: i32) -> (i32, i32) {
    %c0_i32 = arith.constant 0 : i32
    %c0_i32_0 = arith.constant 0 : i32
    return %c0_i32, %arg0 : i32, i32
  }
  func.func @transform_5(%arg0: i32, %arg1: i32) -> (i32, i32) {
    %c0_i32 = arith.constant 0 : i32
    return %arg1, %arg0 : i32, i32
  }
  func.func @transform_6(%arg0: i32, %arg1: i32) -> (i32, i32) {
    %c0_i32 = arith.constant 0 : i32
    return %arg1, %arg0 : i32, i32
  }
}

module attributes {stable_mosaic.version = 11 : i64} {
  func.func @_bilstm_seq_kernel(%arg0: i32, %arg1: i32, %arg2: memref<4x2x64xbf16, #tpu.memory_space<vmem>>, %arg3: memref<4x2x64xbf16, #tpu.memory_space<vmem>>, %arg4: memref<16x64xbf16, #tpu.memory_space<vmem>>, %arg5: memref<16x64xbf16, #tpu.memory_space<vmem>>, %arg6: memref<4x2x16xbf16, #tpu.memory_space<vmem>>, %arg7: memref<4x2x16xbf16, #tpu.memory_space<vmem>>, %arg8: memref<2x2x16xf32, #tpu.memory_space<vmem>>, %arg9: memref<2x2x16xf32, #tpu.memory_space<vmem>>) attributes {dimension_semantics = [#tpu.dimension_semantics<parallel>, #tpu.dimension_semantics<arbitrary>], iteration_bounds = array<i64: 1, 1>, scalar_prefetch = 0 : i64, scratch_operands = 2 : i64, tpu.core_type = #tpu.core_type<tc>, window_params = [{transform_indices = @transform_0, window_bounds = array<i64: 4, 2, 64>}, {transform_indices = @transform_1, window_bounds = array<i64: 4, 2, 64>}, {pipeline_mode = #tpu.pipeline_mode<synchronous>, transform_indices = @transform_2, window_bounds = array<i64: 16, 64>}, {pipeline_mode = #tpu.pipeline_mode<synchronous>, transform_indices = @transform_3, window_bounds = array<i64: 16, 64>}, {transform_indices = @transform_4, window_bounds = array<i64: 4, 2, 16>}, {transform_indices = @transform_5, window_bounds = array<i64: 4, 2, 16>}]} {
    %c0_i32 = arith.constant 0 : i32
    %0 = arith.cmpi eq, %arg1, %c0_i32 : i32
    %1 = arith.extui %0 : i1 to i32
    %c0_i32_0 = arith.constant 0 : i32
    %2 = arith.cmpi ne, %1, %c0_i32_0 : i32
    scf.if %2 {
      %cst_99 = arith.constant 0.000000e+00 : f32
      %329 = vector.broadcast %cst_99 : f32 to vector<2x2x16xf32>
      %c0_100 = arith.constant 0 : index
      %c0_101 = arith.constant 0 : index
      %c0_102 = arith.constant 0 : index
      %330 = vector.load %arg8[%c0_100, %c0_101, %c0_102] : memref<2x2x16xf32, #tpu.memory_space<vmem>>, vector<2x2x16xf32>
      tpu.vector_store %arg8[%c0_100, %c0_101, %c0_102], %329 {strides = array<i32>} : memref<2x2x16xf32, #tpu.memory_space<vmem>>, vector<2x2x16xf32>,
      %cst_103 = arith.constant 0.000000e+00 : f32
      %331 = vector.broadcast %cst_103 : f32 to vector<2x2x16xf32>
      %c0_104 = arith.constant 0 : index
      %c0_105 = arith.constant 0 : index
      %c0_106 = arith.constant 0 : index
      %332 = vector.load %arg9[%c0_104, %c0_105, %c0_106] : memref<2x2x16xf32, #tpu.memory_space<vmem>>, vector<2x2x16xf32>
      tpu.vector_store %arg9[%c0_104, %c0_105, %c0_106], %331 {strides = array<i32>} : memref<2x2x16xf32, #tpu.memory_space<vmem>>, vector<2x2x16xf32>,
    } else {
    }
    %c0 = arith.constant 0 : index
    %c0_1 = arith.constant 0 : index
    %3 = vector.load %arg4[%c0, %c0_1] : memref<16x64xbf16, #tpu.memory_space<vmem>>, vector<16x64xbf16>
    %c0_2 = arith.constant 0 : index
    %c0_3 = arith.constant 0 : index
    %4 = vector.load %arg5[%c0_2, %c0_3] : memref<16x64xbf16, #tpu.memory_space<vmem>>, vector<16x64xbf16>
    %c0_4 = arith.constant 0 : index
    %c0_5 = arith.constant 0 : index
    %c0_6 = arith.constant 0 : index
    %5 = vector.load %arg8[%c0_4, %c0_5, %c0_6] : memref<2x2x16xf32, #tpu.memory_space<vmem>>, vector<1x2x16xf32>
    %6 = vector.shape_cast %5 : vector<1x2x16xf32> to vector<2x16xf32>
    %c0_7 = arith.constant 0 : index
    %c0_8 = arith.constant 0 : index
    %c0_9 = arith.constant 0 : index
    %7 = vector.load %arg9[%c0_7, %c0_8, %c0_9] : memref<2x2x16xf32, #tpu.memory_space<vmem>>, vector<1x2x16xf32>
    %8 = vector.shape_cast %7 : vector<1x2x16xf32> to vector<2x16xf32>
    %c1 = arith.constant 1 : index
    %c0_10 = arith.constant 0 : index
    %c0_11 = arith.constant 0 : index
    %9 = vector.load %arg8[%c1, %c0_10, %c0_11] : memref<2x2x16xf32, #tpu.memory_space<vmem>>, vector<1x2x16xf32>
    %10 = vector.shape_cast %9 : vector<1x2x16xf32> to vector<2x16xf32>
    %c1_12 = arith.constant 1 : index
    %c0_13 = arith.constant 0 : index
    %c0_14 = arith.constant 0 : index
    %11 = vector.load %arg9[%c1_12, %c0_13, %c0_14] : memref<2x2x16xf32, #tpu.memory_space<vmem>>, vector<1x2x16xf32>
    %12 = vector.shape_cast %11 : vector<1x2x16xf32> to vector<2x16xf32>
    %c0_i32_15 = arith.constant 0 : i32
    %13 = arith.index_cast %c0_i32_15 : i32 to index
    %c0_16 = arith.constant 0 : index
    %c0_17 = arith.constant 0 : index
    %14 = vector.load %arg2[%13, %c0_16, %c0_17] : memref<4x2x64xbf16, #tpu.memory_space<vmem>>, vector<1x2x64xbf16>
    %15 = vector.shape_cast %14 : vector<1x2x64xbf16> to vector<2x64xbf16>
    %16 = arith.extf %15 : vector<2x64xbf16> to vector<2x64xf32>
    %17 = arith.truncf %6 : vector<2x16xf32> to vector<2x16xbf16>
    %cst = arith.constant dense<0.000000e+00> : vector<2x64xf32>
    %18 = tpu.matmul %17, %3, %cst {dimension_numbers = #tpu.dot_dimension_numbers<[1], [0], [0], [1], [0, 0, 1, 1], [], []>} : vector<2x16xbf16>, vector<16x64xbf16>, vector<2x64xf32> -> vector<2x64xf32>
    %19 = arith.addf %16, %18 : vector<2x64xf32>
    %c3_i32 = arith.constant 3 : i32
    %20 = arith.subi %c3_i32, %c0_i32_15 : i32
    %21 = arith.index_cast %20 : i32 to index
    %c0_18 = arith.constant 0 : index
    %c0_19 = arith.constant 0 : index
    %22 = vector.load %arg3[%21, %c0_18, %c0_19] : memref<4x2x64xbf16, #tpu.memory_space<vmem>>, vector<1x2x64xbf16>
    %23 = vector.shape_cast %22 : vector<1x2x64xbf16> to vector<2x64xbf16>
    %24 = arith.extf %23 : vector<2x64xbf16> to vector<2x64xf32>
    %25 = arith.truncf %10 : vector<2x16xf32> to vector<2x16xbf16>
    %cst_20 = arith.constant dense<0.000000e+00> : vector<2x64xf32>
    %26 = tpu.matmul %25, %4, %cst_20 {dimension_numbers = #tpu.dot_dimension_numbers<[1], [0], [0], [1], [0, 0, 1, 1], [], []>} : vector<2x16xbf16>, vector<16x64xbf16>, vector<2x64xf32> -> vector<2x64xf32>
    %27 = arith.addf %24, %26 : vector<2x64xf32>
    %28 = vector.extract_strided_slice %19 {offsets = [0, 0], sizes = [2, 16], strides = [1, 1]} : vector<2x64xf32> to vector<2x16xf32>
    %29 = arith.negf %28 : vector<2x16xf32>
    %30 = math.exp %29 : vector<2x16xf32>
    %cst_21 = arith.constant 1.000000e+00 : f32
    %31 = vector.broadcast %cst_21 : f32 to vector<2x16xf32>
    %32 = arith.addf %31, %30 : vector<2x16xf32>
    %33 = arith.divf %31, %32 : vector<2x16xf32>
    %34 = vector.extract_strided_slice %19 {offsets = [0, 16], sizes = [2, 16], strides = [1, 1]} : vector<2x64xf32> to vector<2x16xf32>
    %35 = arith.negf %34 : vector<2x16xf32>
    %36 = math.exp %35 : vector<2x16xf32>
    %cst_22 = arith.constant 1.000000e+00 : f32
    %37 = vector.broadcast %cst_22 : f32 to vector<2x16xf32>
    %38 = arith.addf %37, %36 : vector<2x16xf32>
    %39 = arith.divf %37, %38 : vector<2x16xf32>
    %40 = vector.extract_strided_slice %19 {offsets = [0, 32], sizes = [2, 16], strides = [1, 1]} : vector<2x64xf32> to vector<2x16xf32>
    %41 = math.tanh %40 : vector<2x16xf32>
    %42 = vector.extract_strided_slice %19 {offsets = [0, 48], sizes = [2, 16], strides = [1, 1]} : vector<2x64xf32> to vector<2x16xf32>
    %43 = arith.negf %42 : vector<2x16xf32>
    %44 = math.exp %43 : vector<2x16xf32>
    %cst_23 = arith.constant 1.000000e+00 : f32
    %45 = vector.broadcast %cst_23 : f32 to vector<2x16xf32>
    %46 = arith.addf %45, %44 : vector<2x16xf32>
    %47 = arith.divf %45, %46 : vector<2x16xf32>
    %48 = arith.mulf %39, %8 : vector<2x16xf32>
    %49 = arith.mulf %33, %41 : vector<2x16xf32>
    %50 = arith.addf %48, %49 : vector<2x16xf32>
    %51 = math.tanh %50 : vector<2x16xf32>
    %52 = arith.mulf %47, %51 : vector<2x16xf32>
    %53 = vector.extract_strided_slice %27 {offsets = [0, 0], sizes = [2, 16], strides = [1, 1]} : vector<2x64xf32> to vector<2x16xf32>
    %54 = arith.negf %53 : vector<2x16xf32>
    %55 = math.exp %54 : vector<2x16xf32>
    %cst_24 = arith.constant 1.000000e+00 : f32
    %56 = vector.broadcast %cst_24 : f32 to vector<2x16xf32>
    %57 = arith.addf %56, %55 : vector<2x16xf32>
    %58 = arith.divf %56, %57 : vector<2x16xf32>
    %59 = vector.extract_strided_slice %27 {offsets = [0, 16], sizes = [2, 16], strides = [1, 1]} : vector<2x64xf32> to vector<2x16xf32>
    %60 = arith.negf %59 : vector<2x16xf32>
    %61 = math.exp %60 : vector<2x16xf32>
    %cst_25 = arith.constant 1.000000e+00 : f32
    %62 = vector.broadcast %cst_25 : f32 to vector<2x16xf32>
    %63 = arith.addf %62, %61 : vector<2x16xf32>
    %64 = arith.divf %62, %63 : vector<2x16xf32>
    %65 = vector.extract_strided_slice %27 {offsets = [0, 32], sizes = [2, 16], strides = [1, 1]} : vector<2x64xf32> to vector<2x16xf32>
    %66 = math.tanh %65 : vector<2x16xf32>
    %67 = vector.extract_strided_slice %27 {offsets = [0, 48], sizes = [2, 16], strides = [1, 1]} : vector<2x64xf32> to vector<2x16xf32>
    %68 = arith.negf %67 : vector<2x16xf32>
    %69 = math.exp %68 : vector<2x16xf32>
    %cst_26 = arith.constant 1.000000e+00 : f32
    %70 = vector.broadcast %cst_26 : f32 to vector<2x16xf32>
    %71 = arith.addf %70, %69 : vector<2x16xf32>
    %72 = arith.divf %70, %71 : vector<2x16xf32>
    %73 = arith.mulf %64, %12 : vector<2x16xf32>
    %74 = arith.mulf %58, %66 : vector<2x16xf32>
    %75 = arith.addf %73, %74 : vector<2x16xf32>
    %76 = math.tanh %75 : vector<2x16xf32>
    %77 = arith.mulf %72, %76 : vector<2x16xf32>
    %78 = arith.truncf %52 : vector<2x16xf32> to vector<2x16xbf16>
    %79 = arith.index_cast %c0_i32_15 : i32 to index
    %c0_27 = arith.constant 0 : index
    %c0_28 = arith.constant 0 : index
    %80 = vector.load %arg6[%79, %c0_27, %c0_28] : memref<4x2x16xbf16, #tpu.memory_space<vmem>>, vector<1x2x16xbf16>
    %81 = vector.shape_cast %80 : vector<1x2x16xbf16> to vector<2x16xbf16>
    %82 = vector.shape_cast %78 : vector<2x16xbf16> to vector<1x2x16xbf16>
    tpu.vector_store %arg6[%79, %c0_27, %c0_28], %82 {strides = array<i32>} : memref<4x2x16xbf16, #tpu.memory_space<vmem>>, vector<1x2x16xbf16>,
    %83 = arith.truncf %77 : vector<2x16xf32> to vector<2x16xbf16>
    %c3_i32_29 = arith.constant 3 : i32
    %84 = arith.subi %c3_i32_29, %c0_i32_15 : i32
    %85 = arith.index_cast %84 : i32 to index
    %c0_30 = arith.constant 0 : index
    %c0_31 = arith.constant 0 : index
    %86 = vector.load %arg7[%85, %c0_30, %c0_31] : memref<4x2x16xbf16, #tpu.memory_space<vmem>>, vector<1x2x16xbf16>
    %87 = vector.shape_cast %86 : vector<1x2x16xbf16> to vector<2x16xbf16>
    %88 = vector.shape_cast %83 : vector<2x16xbf16> to vector<1x2x16xbf16>
    tpu.vector_store %arg7[%85, %c0_30, %c0_31], %88 {strides = array<i32>} : memref<4x2x16xbf16, #tpu.memory_space<vmem>>, vector<1x2x16xbf16>,
    %c1_i32 = arith.constant 1 : i32
    %89 = arith.index_cast %c1_i32 : i32 to index
    %c0_32 = arith.constant 0 : index
    %c0_33 = arith.constant 0 : index
    %90 = vector.load %arg2[%89, %c0_32, %c0_33] : memref<4x2x64xbf16, #tpu.memory_space<vmem>>, vector<1x2x64xbf16>
    %91 = vector.shape_cast %90 : vector<1x2x64xbf16> to vector<2x64xbf16>
    %92 = arith.extf %91 : vector<2x64xbf16> to vector<2x64xf32>
    %93 = arith.truncf %52 : vector<2x16xf32> to vector<2x16xbf16>
    %cst_34 = arith.constant dense<0.000000e+00> : vector<2x64xf32>
    %94 = tpu.matmul %93, %3, %cst_34 {dimension_numbers = #tpu.dot_dimension_numbers<[1], [0], [0], [1], [0, 0, 1, 1], [], []>} : vector<2x16xbf16>, vector<16x64xbf16>, vector<2x64xf32> -> vector<2x64xf32>
    %95 = arith.addf %92, %94 : vector<2x64xf32>
    %c3_i32_35 = arith.constant 3 : i32
    %96 = arith.subi %c3_i32_35, %c1_i32 : i32
    %97 = arith.index_cast %96 : i32 to index
    %c0_36 = arith.constant 0 : index
    %c0_37 = arith.constant 0 : index
    %98 = vector.load %arg3[%97, %c0_36, %c0_37] : memref<4x2x64xbf16, #tpu.memory_space<vmem>>, vector<1x2x64xbf16>
    %99 = vector.shape_cast %98 : vector<1x2x64xbf16> to vector<2x64xbf16>
    %100 = arith.extf %99 : vector<2x64xbf16> to vector<2x64xf32>
    %101 = arith.truncf %77 : vector<2x16xf32> to vector<2x16xbf16>
    %cst_38 = arith.constant dense<0.000000e+00> : vector<2x64xf32>
    %102 = tpu.matmul %101, %4, %cst_38 {dimension_numbers = #tpu.dot_dimension_numbers<[1], [0], [0], [1], [0, 0, 1, 1], [], []>} : vector<2x16xbf16>, vector<16x64xbf16>, vector<2x64xf32> -> vector<2x64xf32>
    %103 = arith.addf %100, %102 : vector<2x64xf32>
    %104 = vector.extract_strided_slice %95 {offsets = [0, 0], sizes = [2, 16], strides = [1, 1]} : vector<2x64xf32> to vector<2x16xf32>
    %105 = arith.negf %104 : vector<2x16xf32>
    %106 = math.exp %105 : vector<2x16xf32>
    %cst_39 = arith.constant 1.000000e+00 : f32
    %107 = vector.broadcast %cst_39 : f32 to vector<2x16xf32>
    %108 = arith.addf %107, %106 : vector<2x16xf32>
    %109 = arith.divf %107, %108 : vector<2x16xf32>
    %110 = vector.extract_strided_slice %95 {offsets = [0, 16], sizes = [2, 16], strides = [1, 1]} : vector<2x64xf32> to vector<2x16xf32>
    %111 = arith.negf %110 : vector<2x16xf32>
    %112 = math.exp %111 : vector<2x16xf32>
    %cst_40 = arith.constant 1.000000e+00 : f32
    %113 = vector.broadcast %cst_40 : f32 to vector<2x16xf32>
    %114 = arith.addf %113, %112 : vector<2x16xf32>
    %115 = arith.divf %113, %114 : vector<2x16xf32>
    %116 = vector.extract_strided_slice %95 {offsets = [0, 32], sizes = [2, 16], strides = [1, 1]} : vector<2x64xf32> to vector<2x16xf32>
    %117 = math.tanh %116 : vector<2x16xf32>
    %118 = vector.extract_strided_slice %95 {offsets = [0, 48], sizes = [2, 16], strides = [1, 1]} : vector<2x64xf32> to vector<2x16xf32>
    %119 = arith.negf %118 : vector<2x16xf32>
    %120 = math.exp %119 : vector<2x16xf32>
    %cst_41 = arith.constant 1.000000e+00 : f32
    %121 = vector.broadcast %cst_41 : f32 to vector<2x16xf32>
    %122 = arith.addf %121, %120 : vector<2x16xf32>
    %123 = arith.divf %121, %122 : vector<2x16xf32>
    %124 = arith.mulf %115, %50 : vector<2x16xf32>
    %125 = arith.mulf %109, %117 : vector<2x16xf32>
    %126 = arith.addf %124, %125 : vector<2x16xf32>
    %127 = math.tanh %126 : vector<2x16xf32>
    %128 = arith.mulf %123, %127 : vector<2x16xf32>
    %129 = vector.extract_strided_slice %103 {offsets = [0, 0], sizes = [2, 16], strides = [1, 1]} : vector<2x64xf32> to vector<2x16xf32>
    %130 = arith.negf %129 : vector<2x16xf32>
    %131 = math.exp %130 : vector<2x16xf32>
    %cst_42 = arith.constant 1.000000e+00 : f32
    %132 = vector.broadcast %cst_42 : f32 to vector<2x16xf32>
    %133 = arith.addf %132, %131 : vector<2x16xf32>
    %134 = arith.divf %132, %133 : vector<2x16xf32>
    %135 = vector.extract_strided_slice %103 {offsets = [0, 16], sizes = [2, 16], strides = [1, 1]} : vector<2x64xf32> to vector<2x16xf32>
    %136 = arith.negf %135 : vector<2x16xf32>
    %137 = math.exp %136 : vector<2x16xf32>
    %cst_43 = arith.constant 1.000000e+00 : f32
    %138 = vector.broadcast %cst_43 : f32 to vector<2x16xf32>
    %139 = arith.addf %138, %137 : vector<2x16xf32>
    %140 = arith.divf %138, %139 : vector<2x16xf32>
    %141 = vector.extract_strided_slice %103 {offsets = [0, 32], sizes = [2, 16], strides = [1, 1]} : vector<2x64xf32> to vector<2x16xf32>
    %142 = math.tanh %141 : vector<2x16xf32>
    %143 = vector.extract_strided_slice %103 {offsets = [0, 48], sizes = [2, 16], strides = [1, 1]} : vector<2x64xf32> to vector<2x16xf32>
    %144 = arith.negf %143 : vector<2x16xf32>
    %145 = math.exp %144 : vector<2x16xf32>
    %cst_44 = arith.constant 1.000000e+00 : f32
    %146 = vector.broadcast %cst_44 : f32 to vector<2x16xf32>
    %147 = arith.addf %146, %145 : vector<2x16xf32>
    %148 = arith.divf %146, %147 : vector<2x16xf32>
    %149 = arith.mulf %140, %75 : vector<2x16xf32>
    %150 = arith.mulf %134, %142 : vector<2x16xf32>
    %151 = arith.addf %149, %150 : vector<2x16xf32>
    %152 = math.tanh %151 : vector<2x16xf32>
    %153 = arith.mulf %148, %152 : vector<2x16xf32>
    %154 = arith.truncf %128 : vector<2x16xf32> to vector<2x16xbf16>
    %155 = arith.index_cast %c1_i32 : i32 to index
    %c0_45 = arith.constant 0 : index
    %c0_46 = arith.constant 0 : index
    %156 = vector.load %arg6[%155, %c0_45, %c0_46] : memref<4x2x16xbf16, #tpu.memory_space<vmem>>, vector<1x2x16xbf16>
    %157 = vector.shape_cast %156 : vector<1x2x16xbf16> to vector<2x16xbf16>
    %158 = vector.shape_cast %154 : vector<2x16xbf16> to vector<1x2x16xbf16>
    tpu.vector_store %arg6[%155, %c0_45, %c0_46], %158 {strides = array<i32>} : memref<4x2x16xbf16, #tpu.memory_space<vmem>>, vector<1x2x16xbf16>,
    %159 = arith.truncf %153 : vector<2x16xf32> to vector<2x16xbf16>
    %c3_i32_47 = arith.constant 3 : i32
    %160 = arith.subi %c3_i32_47, %c1_i32 : i32
    %161 = arith.index_cast %160 : i32 to index
    %c0_48 = arith.constant 0 : index
    %c0_49 = arith.constant 0 : index
    %162 = vector.load %arg7[%161, %c0_48, %c0_49] : memref<4x2x16xbf16, #tpu.memory_space<vmem>>, vector<1x2x16xbf16>
    %163 = vector.shape_cast %162 : vector<1x2x16xbf16> to vector<2x16xbf16>
    %164 = vector.shape_cast %159 : vector<2x16xbf16> to vector<1x2x16xbf16>
    tpu.vector_store %arg7[%161, %c0_48, %c0_49], %164 {strides = array<i32>} : memref<4x2x16xbf16, #tpu.memory_space<vmem>>, vector<1x2x16xbf16>,
    %c2_i32 = arith.constant 2 : i32
    %165 = arith.index_cast %c2_i32 : i32 to index
    %c0_50 = arith.constant 0 : index
    %c0_51 = arith.constant 0 : index
    %166 = vector.load %arg2[%165, %c0_50, %c0_51] : memref<4x2x64xbf16, #tpu.memory_space<vmem>>, vector<1x2x64xbf16>
    %167 = vector.shape_cast %166 : vector<1x2x64xbf16> to vector<2x64xbf16>
    %168 = arith.extf %167 : vector<2x64xbf16> to vector<2x64xf32>
    %169 = arith.truncf %128 : vector<2x16xf32> to vector<2x16xbf16>
    %cst_52 = arith.constant dense<0.000000e+00> : vector<2x64xf32>
    %170 = tpu.matmul %169, %3, %cst_52 {dimension_numbers = #tpu.dot_dimension_numbers<[1], [0], [0], [1], [0, 0, 1, 1], [], []>} : vector<2x16xbf16>, vector<16x64xbf16>, vector<2x64xf32> -> vector<2x64xf32>
    %171 = arith.addf %168, %170 : vector<2x64xf32>
    %c3_i32_53 = arith.constant 3 : i32
    %172 = arith.subi %c3_i32_53, %c2_i32 : i32
    %173 = arith.index_cast %172 : i32 to index
    %c0_54 = arith.constant 0 : index
    %c0_55 = arith.constant 0 : index
    %174 = vector.load %arg3[%173, %c0_54, %c0_55] : memref<4x2x64xbf16, #tpu.memory_space<vmem>>, vector<1x2x64xbf16>
    %175 = vector.shape_cast %174 : vector<1x2x64xbf16> to vector<2x64xbf16>
    %176 = arith.extf %175 : vector<2x64xbf16> to vector<2x64xf32>
    %177 = arith.truncf %153 : vector<2x16xf32> to vector<2x16xbf16>
    %cst_56 = arith.constant dense<0.000000e+00> : vector<2x64xf32>
    %178 = tpu.matmul %177, %4, %cst_56 {dimension_numbers = #tpu.dot_dimension_numbers<[1], [0], [0], [1], [0, 0, 1, 1], [], []>} : vector<2x16xbf16>, vector<16x64xbf16>, vector<2x64xf32> -> vector<2x64xf32>
    %179 = arith.addf %176, %178 : vector<2x64xf32>
    %180 = vector.extract_strided_slice %171 {offsets = [0, 0], sizes = [2, 16], strides = [1, 1]} : vector<2x64xf32> to vector<2x16xf32>
    %181 = arith.negf %180 : vector<2x16xf32>
    %182 = math.exp %181 : vector<2x16xf32>
    %cst_57 = arith.constant 1.000000e+00 : f32
    %183 = vector.broadcast %cst_57 : f32 to vector<2x16xf32>
    %184 = arith.addf %183, %182 : vector<2x16xf32>
    %185 = arith.divf %183, %184 : vector<2x16xf32>
    %186 = vector.extract_strided_slice %171 {offsets = [0, 16], sizes = [2, 16], strides = [1, 1]} : vector<2x64xf32> to vector<2x16xf32>
    %187 = arith.negf %186 : vector<2x16xf32>
    %188 = math.exp %187 : vector<2x16xf32>
    %cst_58 = arith.constant 1.000000e+00 : f32
    %189 = vector.broadcast %cst_58 : f32 to vector<2x16xf32>
    %190 = arith.addf %189, %188 : vector<2x16xf32>
    %191 = arith.divf %189, %190 : vector<2x16xf32>
    %192 = vector.extract_strided_slice %171 {offsets = [0, 32], sizes = [2, 16], strides = [1, 1]} : vector<2x64xf32> to vector<2x16xf32>
    %193 = math.tanh %192 : vector<2x16xf32>
    %194 = vector.extract_strided_slice %171 {offsets = [0, 48], sizes = [2, 16], strides = [1, 1]} : vector<2x64xf32> to vector<2x16xf32>
    %195 = arith.negf %194 : vector<2x16xf32>
    %196 = math.exp %195 : vector<2x16xf32>
    %cst_59 = arith.constant 1.000000e+00 : f32
    %197 = vector.broadcast %cst_59 : f32 to vector<2x16xf32>
    %198 = arith.addf %197, %196 : vector<2x16xf32>
    %199 = arith.divf %197, %198 : vector<2x16xf32>
    %200 = arith.mulf %191, %126 : vector<2x16xf32>
    %201 = arith.mulf %185, %193 : vector<2x16xf32>
    %202 = arith.addf %200, %201 : vector<2x16xf32>
    %203 = math.tanh %202 : vector<2x16xf32>
    %204 = arith.mulf %199, %203 : vector<2x16xf32>
    %205 = vector.extract_strided_slice %179 {offsets = [0, 0], sizes = [2, 16], strides = [1, 1]} : vector<2x64xf32> to vector<2x16xf32>
    %206 = arith.negf %205 : vector<2x16xf32>
    %207 = math.exp %206 : vector<2x16xf32>
    %cst_60 = arith.constant 1.000000e+00 : f32
    %208 = vector.broadcast %cst_60 : f32 to vector<2x16xf32>
    %209 = arith.addf %208, %207 : vector<2x16xf32>
    %210 = arith.divf %208, %209 : vector<2x16xf32>
    %211 = vector.extract_strided_slice %179 {offsets = [0, 16], sizes = [2, 16], strides = [1, 1]} : vector<2x64xf32> to vector<2x16xf32>
    %212 = arith.negf %211 : vector<2x16xf32>
    %213 = math.exp %212 : vector<2x16xf32>
    %cst_61 = arith.constant 1.000000e+00 : f32
    %214 = vector.broadcast %cst_61 : f32 to vector<2x16xf32>
    %215 = arith.addf %214, %213 : vector<2x16xf32>
    %216 = arith.divf %214, %215 : vector<2x16xf32>
    %217 = vector.extract_strided_slice %179 {offsets = [0, 32], sizes = [2, 16], strides = [1, 1]} : vector<2x64xf32> to vector<2x16xf32>
    %218 = math.tanh %217 : vector<2x16xf32>
    %219 = vector.extract_strided_slice %179 {offsets = [0, 48], sizes = [2, 16], strides = [1, 1]} : vector<2x64xf32> to vector<2x16xf32>
    %220 = arith.negf %219 : vector<2x16xf32>
    %221 = math.exp %220 : vector<2x16xf32>
    %cst_62 = arith.constant 1.000000e+00 : f32
    %222 = vector.broadcast %cst_62 : f32 to vector<2x16xf32>
    %223 = arith.addf %222, %221 : vector<2x16xf32>
    %224 = arith.divf %222, %223 : vector<2x16xf32>
    %225 = arith.mulf %216, %151 : vector<2x16xf32>
    %226 = arith.mulf %210, %218 : vector<2x16xf32>
    %227 = arith.addf %225, %226 : vector<2x16xf32>
    %228 = math.tanh %227 : vector<2x16xf32>
    %229 = arith.mulf %224, %228 : vector<2x16xf32>
    %230 = arith.truncf %204 : vector<2x16xf32> to vector<2x16xbf16>
    %231 = arith.index_cast %c2_i32 : i32 to index
    %c0_63 = arith.constant 0 : index
    %c0_64 = arith.constant 0 : index
    %232 = vector.load %arg6[%231, %c0_63, %c0_64] : memref<4x2x16xbf16, #tpu.memory_space<vmem>>, vector<1x2x16xbf16>
    %233 = vector.shape_cast %232 : vector<1x2x16xbf16> to vector<2x16xbf16>
    %234 = vector.shape_cast %230 : vector<2x16xbf16> to vector<1x2x16xbf16>
    tpu.vector_store %arg6[%231, %c0_63, %c0_64], %234 {strides = array<i32>} : memref<4x2x16xbf16, #tpu.memory_space<vmem>>, vector<1x2x16xbf16>,
    %235 = arith.truncf %229 : vector<2x16xf32> to vector<2x16xbf16>
    %c3_i32_65 = arith.constant 3 : i32
    %236 = arith.subi %c3_i32_65, %c2_i32 : i32
    %237 = arith.index_cast %236 : i32 to index
    %c0_66 = arith.constant 0 : index
    %c0_67 = arith.constant 0 : index
    %238 = vector.load %arg7[%237, %c0_66, %c0_67] : memref<4x2x16xbf16, #tpu.memory_space<vmem>>, vector<1x2x16xbf16>
    %239 = vector.shape_cast %238 : vector<1x2x16xbf16> to vector<2x16xbf16>
    %240 = vector.shape_cast %235 : vector<2x16xbf16> to vector<1x2x16xbf16>
    tpu.vector_store %arg7[%237, %c0_66, %c0_67], %240 {strides = array<i32>} : memref<4x2x16xbf16, #tpu.memory_space<vmem>>, vector<1x2x16xbf16>,
    %c3_i32_68 = arith.constant 3 : i32
    %241 = arith.index_cast %c3_i32_68 : i32 to index
    %c0_69 = arith.constant 0 : index
    %c0_70 = arith.constant 0 : index
    %242 = vector.load %arg2[%241, %c0_69, %c0_70] : memref<4x2x64xbf16, #tpu.memory_space<vmem>>, vector<1x2x64xbf16>
    %243 = vector.shape_cast %242 : vector<1x2x64xbf16> to vector<2x64xbf16>
    %244 = arith.extf %243 : vector<2x64xbf16> to vector<2x64xf32>
    %245 = arith.truncf %204 : vector<2x16xf32> to vector<2x16xbf16>
    %cst_71 = arith.constant dense<0.000000e+00> : vector<2x64xf32>
    %246 = tpu.matmul %245, %3, %cst_71 {dimension_numbers = #tpu.dot_dimension_numbers<[1], [0], [0], [1], [0, 0, 1, 1], [], []>} : vector<2x16xbf16>, vector<16x64xbf16>, vector<2x64xf32> -> vector<2x64xf32>
    %247 = arith.addf %244, %246 : vector<2x64xf32>
    %c3_i32_72 = arith.constant 3 : i32
    %248 = arith.subi %c3_i32_72, %c3_i32_68 : i32
    %249 = arith.index_cast %248 : i32 to index
    %c0_73 = arith.constant 0 : index
    %c0_74 = arith.constant 0 : index
    %250 = vector.load %arg3[%249, %c0_73, %c0_74] : memref<4x2x64xbf16, #tpu.memory_space<vmem>>, vector<1x2x64xbf16>
    %251 = vector.shape_cast %250 : vector<1x2x64xbf16> to vector<2x64xbf16>
    %252 = arith.extf %251 : vector<2x64xbf16> to vector<2x64xf32>
    %253 = arith.truncf %229 : vector<2x16xf32> to vector<2x16xbf16>
    %cst_75 = arith.constant dense<0.000000e+00> : vector<2x64xf32>
    %254 = tpu.matmul %253, %4, %cst_75 {dimension_numbers = #tpu.dot_dimension_numbers<[1], [0], [0], [1], [0, 0, 1, 1], [], []>} : vector<2x16xbf16>, vector<16x64xbf16>, vector<2x64xf32> -> vector<2x64xf32>
    %255 = arith.addf %252, %254 : vector<2x64xf32>
    %256 = vector.extract_strided_slice %247 {offsets = [0, 0], sizes = [2, 16], strides = [1, 1]} : vector<2x64xf32> to vector<2x16xf32>
    %257 = arith.negf %256 : vector<2x16xf32>
    %258 = math.exp %257 : vector<2x16xf32>
    %cst_76 = arith.constant 1.000000e+00 : f32
    %259 = vector.broadcast %cst_76 : f32 to vector<2x16xf32>
    %260 = arith.addf %259, %258 : vector<2x16xf32>
    %261 = arith.divf %259, %260 : vector<2x16xf32>
    %262 = vector.extract_strided_slice %247 {offsets = [0, 16], sizes = [2, 16], strides = [1, 1]} : vector<2x64xf32> to vector<2x16xf32>
    %263 = arith.negf %262 : vector<2x16xf32>
    %264 = math.exp %263 : vector<2x16xf32>
    %cst_77 = arith.constant 1.000000e+00 : f32
    %265 = vector.broadcast %cst_77 : f32 to vector<2x16xf32>
    %266 = arith.addf %265, %264 : vector<2x16xf32>
    %267 = arith.divf %265, %266 : vector<2x16xf32>
    %268 = vector.extract_strided_slice %247 {offsets = [0, 32], sizes = [2, 16], strides = [1, 1]} : vector<2x64xf32> to vector<2x16xf32>
    %269 = math.tanh %268 : vector<2x16xf32>
    %270 = vector.extract_strided_slice %247 {offsets = [0, 48], sizes = [2, 16], strides = [1, 1]} : vector<2x64xf32> to vector<2x16xf32>
    %271 = arith.negf %270 : vector<2x16xf32>
    %272 = math.exp %271 : vector<2x16xf32>
    %cst_78 = arith.constant 1.000000e+00 : f32
    %273 = vector.broadcast %cst_78 : f32 to vector<2x16xf32>
    %274 = arith.addf %273, %272 : vector<2x16xf32>
    %275 = arith.divf %273, %274 : vector<2x16xf32>
    %276 = arith.mulf %267, %202 : vector<2x16xf32>
    %277 = arith.mulf %261, %269 : vector<2x16xf32>
    %278 = arith.addf %276, %277 : vector<2x16xf32>
    %279 = math.tanh %278 : vector<2x16xf32>
    %280 = arith.mulf %275, %279 : vector<2x16xf32>
    %281 = vector.extract_strided_slice %255 {offsets = [0, 0], sizes = [2, 16], strides = [1, 1]} : vector<2x64xf32> to vector<2x16xf32>
    %282 = arith.negf %281 : vector<2x16xf32>
    %283 = math.exp %282 : vector<2x16xf32>
    %cst_79 = arith.constant 1.000000e+00 : f32
    %284 = vector.broadcast %cst_79 : f32 to vector<2x16xf32>
    %285 = arith.addf %284, %283 : vector<2x16xf32>
    %286 = arith.divf %284, %285 : vector<2x16xf32>
    %287 = vector.extract_strided_slice %255 {offsets = [0, 16], sizes = [2, 16], strides = [1, 1]} : vector<2x64xf32> to vector<2x16xf32>
    %288 = arith.negf %287 : vector<2x16xf32>
    %289 = math.exp %288 : vector<2x16xf32>
    %cst_80 = arith.constant 1.000000e+00 : f32
    %290 = vector.broadcast %cst_80 : f32 to vector<2x16xf32>
    %291 = arith.addf %290, %289 : vector<2x16xf32>
    %292 = arith.divf %290, %291 : vector<2x16xf32>
    %293 = vector.extract_strided_slice %255 {offsets = [0, 32], sizes = [2, 16], strides = [1, 1]} : vector<2x64xf32> to vector<2x16xf32>
    %294 = math.tanh %293 : vector<2x16xf32>
    %295 = vector.extract_strided_slice %255 {offsets = [0, 48], sizes = [2, 16], strides = [1, 1]} : vector<2x64xf32> to vector<2x16xf32>
    %296 = arith.negf %295 : vector<2x16xf32>
    %297 = math.exp %296 : vector<2x16xf32>
    %cst_81 = arith.constant 1.000000e+00 : f32
    %298 = vector.broadcast %cst_81 : f32 to vector<2x16xf32>
    %299 = arith.addf %298, %297 : vector<2x16xf32>
    %300 = arith.divf %298, %299 : vector<2x16xf32>
    %301 = arith.mulf %292, %227 : vector<2x16xf32>
    %302 = arith.mulf %286, %294 : vector<2x16xf32>
    %303 = arith.addf %301, %302 : vector<2x16xf32>
    %304 = math.tanh %303 : vector<2x16xf32>
    %305 = arith.mulf %300, %304 : vector<2x16xf32>
    %306 = arith.truncf %280 : vector<2x16xf32> to vector<2x16xbf16>
    %307 = arith.index_cast %c3_i32_68 : i32 to index
    %c0_82 = arith.constant 0 : index
    %c0_83 = arith.constant 0 : index
    %308 = vector.load %arg6[%307, %c0_82, %c0_83] : memref<4x2x16xbf16, #tpu.memory_space<vmem>>, vector<1x2x16xbf16>
    %309 = vector.shape_cast %308 : vector<1x2x16xbf16> to vector<2x16xbf16>
    %310 = vector.shape_cast %306 : vector<2x16xbf16> to vector<1x2x16xbf16>
    tpu.vector_store %arg6[%307, %c0_82, %c0_83], %310 {strides = array<i32>} : memref<4x2x16xbf16, #tpu.memory_space<vmem>>, vector<1x2x16xbf16>,
    %311 = arith.truncf %305 : vector<2x16xf32> to vector<2x16xbf16>
    %c3_i32_84 = arith.constant 3 : i32
    %312 = arith.subi %c3_i32_84, %c3_i32_68 : i32
    %313 = arith.index_cast %312 : i32 to index
    %c0_85 = arith.constant 0 : index
    %c0_86 = arith.constant 0 : index
    %314 = vector.load %arg7[%313, %c0_85, %c0_86] : memref<4x2x16xbf16, #tpu.memory_space<vmem>>, vector<1x2x16xbf16>
    %315 = vector.shape_cast %314 : vector<1x2x16xbf16> to vector<2x16xbf16>
    %316 = vector.shape_cast %311 : vector<2x16xbf16> to vector<1x2x16xbf16>
    tpu.vector_store %arg7[%313, %c0_85, %c0_86], %316 {strides = array<i32>} : memref<4x2x16xbf16, #tpu.memory_space<vmem>>, vector<1x2x16xbf16>,
    %c4_i32 = arith.constant 4 : i32
    %c0_87 = arith.constant 0 : index
    %c0_88 = arith.constant 0 : index
    %c0_89 = arith.constant 0 : index
    %317 = vector.load %arg8[%c0_87, %c0_88, %c0_89] : memref<2x2x16xf32, #tpu.memory_space<vmem>>, vector<1x2x16xf32>
    %318 = vector.shape_cast %317 : vector<1x2x16xf32> to vector<2x16xf32>
    %319 = vector.shape_cast %280 : vector<2x16xf32> to vector<1x2x16xf32>
    tpu.vector_store %arg8[%c0_87, %c0_88, %c0_89], %319 {strides = array<i32>} : memref<2x2x16xf32, #tpu.memory_space<vmem>>, vector<1x2x16xf32>,
    %c0_90 = arith.constant 0 : index
    %c0_91 = arith.constant 0 : index
    %c0_92 = arith.constant 0 : index
    %320 = vector.load %arg9[%c0_90, %c0_91, %c0_92] : memref<2x2x16xf32, #tpu.memory_space<vmem>>, vector<1x2x16xf32>
    %321 = vector.shape_cast %320 : vector<1x2x16xf32> to vector<2x16xf32>
    %322 = vector.shape_cast %278 : vector<2x16xf32> to vector<1x2x16xf32>
    tpu.vector_store %arg9[%c0_90, %c0_91, %c0_92], %322 {strides = array<i32>} : memref<2x2x16xf32, #tpu.memory_space<vmem>>, vector<1x2x16xf32>,
    %c1_93 = arith.constant 1 : index
    %c0_94 = arith.constant 0 : index
    %c0_95 = arith.constant 0 : index
    %323 = vector.load %arg8[%c1_93, %c0_94, %c0_95] : memref<2x2x16xf32, #tpu.memory_space<vmem>>, vector<1x2x16xf32>
    %324 = vector.shape_cast %323 : vector<1x2x16xf32> to vector<2x16xf32>
    %325 = vector.shape_cast %305 : vector<2x16xf32> to vector<1x2x16xf32>
    tpu.vector_store %arg8[%c1_93, %c0_94, %c0_95], %325 {strides = array<i32>} : memref<2x2x16xf32, #tpu.memory_space<vmem>>, vector<1x2x16xf32>,
    %c1_96 = arith.constant 1 : index
    %c0_97 = arith.constant 0 : index
    %c0_98 = arith.constant 0 : index
    %326 = vector.load %arg9[%c1_96, %c0_97, %c0_98] : memref<2x2x16xf32, #tpu.memory_space<vmem>>, vector<1x2x16xf32>
    %327 = vector.shape_cast %326 : vector<1x2x16xf32> to vector<2x16xf32>
    %328 = vector.shape_cast %303 : vector<2x16xf32> to vector<1x2x16xf32>
    tpu.vector_store %arg9[%c1_96, %c0_97, %c0_98], %328 {strides = array<i32>} : memref<2x2x16xf32, #tpu.memory_space<vmem>>, vector<1x2x16xf32>,
    return
  }
  func.func @transform_0(%arg0: i32, %arg1: i32) -> (i32, i32, i32) {
    %c0_i32 = arith.constant 0 : i32
    %c0_i32_0 = arith.constant 0 : i32
    return %arg1, %arg0, %c0_i32 : i32, i32, i32
  }
  func.func @transform_1(%arg0: i32, %arg1: i32) -> (i32, i32, i32) {
    %c0_i32 = arith.constant 0 : i32
    %0 = arith.subi %c0_i32, %arg1 : i32
    %c0_i32_0 = arith.constant 0 : i32
    %c0_i32_1 = arith.constant 0 : i32
    return %0, %arg0, %c0_i32_0 : i32, i32, i32
  }
  func.func @transform_2(%arg0: i32, %arg1: i32) -> (i32, i32) {
    %c0_i32 = arith.constant 0 : i32
    %c0_i32_0 = arith.constant 0 : i32
    %c0_i32_1 = arith.constant 0 : i32
    return %c0_i32, %c0_i32_0 : i32, i32
  }
  func.func @transform_3(%arg0: i32, %arg1: i32) -> (i32, i32) {
    %c0_i32 = arith.constant 0 : i32
    %c0_i32_0 = arith.constant 0 : i32
    %c0_i32_1 = arith.constant 0 : i32
    return %c0_i32, %c0_i32_0 : i32, i32
  }
  func.func @transform_4(%arg0: i32, %arg1: i32) -> (i32, i32, i32) {
    %c0_i32 = arith.constant 0 : i32
    %c0_i32_0 = arith.constant 0 : i32
    return %arg1, %arg0, %c0_i32 : i32, i32, i32
  }
  func.func @transform_5(%arg0: i32, %arg1: i32) -> (i32, i32, i32) {
    %c0_i32 = arith.constant 0 : i32
    %0 = arith.subi %c0_i32, %arg1 : i32
    %c0_i32_0 = arith.constant 0 : i32
    %c0_i32_1 = arith.constant 0 : i32
    return %0, %arg0, %c0_i32_0 : i32, i32, i32
  }
}

module attributes {stable_mosaic.version = 11 : i64} {
  func.func @_proj_pair_kernel(%arg0: i32, %arg1: i32, %arg2: memref<8x16xbf16, #tpu.memory_space<vmem>>, %arg3: memref<8x16xbf16, #tpu.memory_space<vmem>>, %arg4: memref<16x64xbf16, #tpu.memory_space<vmem>>, %arg5: memref<16x64xbf16, #tpu.memory_space<vmem>>, %arg6: memref<16x64xbf16, #tpu.memory_space<vmem>>, %arg7: memref<16x64xbf16, #tpu.memory_space<vmem>>, %arg8: memref<1x64xf32, #tpu.memory_space<vmem>>, %arg9: memref<1x64xf32, #tpu.memory_space<vmem>>, %arg10: memref<8x64xbf16, #tpu.memory_space<vmem>>, %arg11: memref<8x64xbf16, #tpu.memory_space<vmem>>) attributes {dimension_semantics = [#tpu.dimension_semantics<parallel>, #tpu.dimension_semantics<parallel>], iteration_bounds = array<i64: 1, 1>, scalar_prefetch = 0 : i64, scratch_operands = 0 : i64, tpu.core_type = #tpu.core_type<tc>, window_params = [{transform_indices = @transform_0, window_bounds = array<i64: 8, 16>}, {transform_indices = @transform_1, window_bounds = array<i64: 8, 16>}, {transform_indices = @transform_2, window_bounds = array<i64: 16, 64>}, {transform_indices = @transform_3, window_bounds = array<i64: 16, 64>}, {transform_indices = @transform_4, window_bounds = array<i64: 16, 64>}, {transform_indices = @transform_5, window_bounds = array<i64: 16, 64>}, {transform_indices = @transform_6, window_bounds = array<i64: 1, 64>}, {transform_indices = @transform_7, window_bounds = array<i64: 1, 64>}, {transform_indices = @transform_8, window_bounds = array<i64: 8, 64>}, {transform_indices = @transform_9, window_bounds = array<i64: 8, 64>}]} {
    %c0 = arith.constant 0 : index
    %c0_0 = arith.constant 0 : index
    %0 = vector.load %arg2[%c0, %c0_0] : memref<8x16xbf16, #tpu.memory_space<vmem>>, vector<8x16xbf16>
    %c0_1 = arith.constant 0 : index
    %c0_2 = arith.constant 0 : index
    %1 = vector.load %arg3[%c0_1, %c0_2] : memref<8x16xbf16, #tpu.memory_space<vmem>>, vector<8x16xbf16>
    %c0_3 = arith.constant 0 : index
    %c0_4 = arith.constant 0 : index
    %2 = vector.load %arg4[%c0_3, %c0_4] : memref<16x64xbf16, #tpu.memory_space<vmem>>, vector<16x64xbf16>
    %cst = arith.constant dense<0.000000e+00> : vector<8x64xf32>
    %3 = tpu.matmul %0, %2, %cst {dimension_numbers = #tpu.dot_dimension_numbers<[1], [0], [0], [1], [0, 0, 1, 1], [], []>} : vector<8x16xbf16>, vector<16x64xbf16>, vector<8x64xf32> -> vector<8x64xf32>
    %c0_5 = arith.constant 0 : index
    %c0_6 = arith.constant 0 : index
    %4 = vector.load %arg5[%c0_5, %c0_6] : memref<16x64xbf16, #tpu.memory_space<vmem>>, vector<16x64xbf16>
    %cst_7 = arith.constant dense<0.000000e+00> : vector<8x64xf32>
    %5 = tpu.matmul %1, %4, %cst_7 {dimension_numbers = #tpu.dot_dimension_numbers<[1], [0], [0], [1], [0, 0, 1, 1], [], []>} : vector<8x16xbf16>, vector<16x64xbf16>, vector<8x64xf32> -> vector<8x64xf32>
    %6 = arith.addf %3, %5 : vector<8x64xf32>
    %c0_8 = arith.constant 0 : index
    %c0_9 = arith.constant 0 : index
    %7 = vector.load %arg8[%c0_8, %c0_9] : memref<1x64xf32, #tpu.memory_space<vmem>>, vector<1x64xf32>
    %8 = vector.broadcast %7 : vector<1x64xf32> to vector<8x64xf32>
    %9 = arith.addf %6, %8 : vector<8x64xf32>
    %c0_10 = arith.constant 0 : index
    %c0_11 = arith.constant 0 : index
    %10 = vector.load %arg6[%c0_10, %c0_11] : memref<16x64xbf16, #tpu.memory_space<vmem>>, vector<16x64xbf16>
    %cst_12 = arith.constant dense<0.000000e+00> : vector<8x64xf32>
    %11 = tpu.matmul %0, %10, %cst_12 {dimension_numbers = #tpu.dot_dimension_numbers<[1], [0], [0], [1], [0, 0, 1, 1], [], []>} : vector<8x16xbf16>, vector<16x64xbf16>, vector<8x64xf32> -> vector<8x64xf32>
    %c0_13 = arith.constant 0 : index
    %c0_14 = arith.constant 0 : index
    %12 = vector.load %arg7[%c0_13, %c0_14] : memref<16x64xbf16, #tpu.memory_space<vmem>>, vector<16x64xbf16>
    %cst_15 = arith.constant dense<0.000000e+00> : vector<8x64xf32>
    %13 = tpu.matmul %1, %12, %cst_15 {dimension_numbers = #tpu.dot_dimension_numbers<[1], [0], [0], [1], [0, 0, 1, 1], [], []>} : vector<8x16xbf16>, vector<16x64xbf16>, vector<8x64xf32> -> vector<8x64xf32>
    %14 = arith.addf %11, %13 : vector<8x64xf32>
    %c0_16 = arith.constant 0 : index
    %c0_17 = arith.constant 0 : index
    %15 = vector.load %arg9[%c0_16, %c0_17] : memref<1x64xf32, #tpu.memory_space<vmem>>, vector<1x64xf32>
    %16 = vector.broadcast %15 : vector<1x64xf32> to vector<8x64xf32>
    %17 = arith.addf %14, %16 : vector<8x64xf32>
    %18 = arith.truncf %9 : vector<8x64xf32> to vector<8x64xbf16>
    %c0_18 = arith.constant 0 : index
    %c0_19 = arith.constant 0 : index
    %19 = vector.load %arg10[%c0_18, %c0_19] : memref<8x64xbf16, #tpu.memory_space<vmem>>, vector<8x64xbf16>
    tpu.vector_store %arg10[%c0_18, %c0_19], %18 {strides = array<i32>} : memref<8x64xbf16, #tpu.memory_space<vmem>>, vector<8x64xbf16>,
    %20 = arith.truncf %17 : vector<8x64xf32> to vector<8x64xbf16>
    %c0_20 = arith.constant 0 : index
    %c0_21 = arith.constant 0 : index
    %21 = vector.load %arg11[%c0_20, %c0_21] : memref<8x64xbf16, #tpu.memory_space<vmem>>, vector<8x64xbf16>
    tpu.vector_store %arg11[%c0_20, %c0_21], %20 {strides = array<i32>} : memref<8x64xbf16, #tpu.memory_space<vmem>>, vector<8x64xbf16>,
    return
  }
  func.func @transform_0(%arg0: i32, %arg1: i32) -> (i32, i32) {
    %c0_i32 = arith.constant 0 : i32
    %c0_i32_0 = arith.constant 0 : i32
    return %arg1, %c0_i32 : i32, i32
  }
  func.func @transform_1(%arg0: i32, %arg1: i32) -> (i32, i32) {
    %c0_i32 = arith.constant 0 : i32
    %c0_i32_0 = arith.constant 0 : i32
    return %arg1, %c0_i32 : i32, i32
  }
  func.func @transform_2(%arg0: i32, %arg1: i32) -> (i32, i32) {
    %c0_i32 = arith.constant 0 : i32
    %c0_i32_0 = arith.constant 0 : i32
    return %c0_i32, %arg0 : i32, i32
  }
  func.func @transform_3(%arg0: i32, %arg1: i32) -> (i32, i32) {
    %c0_i32 = arith.constant 0 : i32
    %c0_i32_0 = arith.constant 0 : i32
    return %c0_i32, %arg0 : i32, i32
  }
  func.func @transform_4(%arg0: i32, %arg1: i32) -> (i32, i32) {
    %c0_i32 = arith.constant 0 : i32
    %c0_i32_0 = arith.constant 0 : i32
    return %c0_i32, %arg0 : i32, i32
  }
  func.func @transform_5(%arg0: i32, %arg1: i32) -> (i32, i32) {
    %c0_i32 = arith.constant 0 : i32
    %c0_i32_0 = arith.constant 0 : i32
    return %c0_i32, %arg0 : i32, i32
  }
  func.func @transform_6(%arg0: i32, %arg1: i32) -> (i32, i32) {
    %c0_i32 = arith.constant 0 : i32
    %c0_i32_0 = arith.constant 0 : i32
    return %c0_i32, %arg0 : i32, i32
  }
  func.func @transform_7(%arg0: i32, %arg1: i32) -> (i32, i32) {
    %c0_i32 = arith.constant 0 : i32
    %c0_i32_0 = arith.constant 0 : i32
    return %c0_i32, %arg0 : i32, i32
  }
  func.func @transform_8(%arg0: i32, %arg1: i32) -> (i32, i32) {
    %c0_i32 = arith.constant 0 : i32
    return %arg1, %arg0 : i32, i32
  }
  func.func @transform_9(%arg0: i32, %arg1: i32) -> (i32, i32) {
    %c0_i32 = arith.constant 0 : i32
    return %arg1, %arg0 : i32, i32
  }
}

module attributes {stable_mosaic.version = 11 : i64} {
  func.func @_bilstm_seq_kernel(%arg0: i32, %arg1: i32, %arg2: memref<4x2x64xbf16, #tpu.memory_space<vmem>>, %arg3: memref<4x2x64xbf16, #tpu.memory_space<vmem>>, %arg4: memref<16x64xbf16, #tpu.memory_space<vmem>>, %arg5: memref<16x64xbf16, #tpu.memory_space<vmem>>, %arg6: memref<4x2x16xf32, #tpu.memory_space<vmem>>, %arg7: memref<4x2x16xf32, #tpu.memory_space<vmem>>, %arg8: memref<2x2x16xf32, #tpu.memory_space<vmem>>, %arg9: memref<2x2x16xf32, #tpu.memory_space<vmem>>) attributes {dimension_semantics = [#tpu.dimension_semantics<parallel>, #tpu.dimension_semantics<arbitrary>], iteration_bounds = array<i64: 1, 1>, scalar_prefetch = 0 : i64, scratch_operands = 2 : i64, tpu.core_type = #tpu.core_type<tc>, window_params = [{transform_indices = @transform_0, window_bounds = array<i64: 4, 2, 64>}, {transform_indices = @transform_1, window_bounds = array<i64: 4, 2, 64>}, {pipeline_mode = #tpu.pipeline_mode<synchronous>, transform_indices = @transform_2, window_bounds = array<i64: 16, 64>}, {pipeline_mode = #tpu.pipeline_mode<synchronous>, transform_indices = @transform_3, window_bounds = array<i64: 16, 64>}, {transform_indices = @transform_4, window_bounds = array<i64: 4, 2, 16>}, {transform_indices = @transform_5, window_bounds = array<i64: 4, 2, 16>}]} {
    %c0_i32 = arith.constant 0 : i32
    %0 = arith.cmpi eq, %arg1, %c0_i32 : i32
    %1 = arith.extui %0 : i1 to i32
    %c0_i32_0 = arith.constant 0 : i32
    %2 = arith.cmpi ne, %1, %c0_i32_0 : i32
    scf.if %2 {
      %cst_99 = arith.constant 0.000000e+00 : f32
      %321 = vector.broadcast %cst_99 : f32 to vector<2x2x16xf32>
      %c0_100 = arith.constant 0 : index
      %c0_101 = arith.constant 0 : index
      %c0_102 = arith.constant 0 : index
      %322 = vector.load %arg8[%c0_100, %c0_101, %c0_102] : memref<2x2x16xf32, #tpu.memory_space<vmem>>, vector<2x2x16xf32>
      tpu.vector_store %arg8[%c0_100, %c0_101, %c0_102], %321 {strides = array<i32>} : memref<2x2x16xf32, #tpu.memory_space<vmem>>, vector<2x2x16xf32>,
      %cst_103 = arith.constant 0.000000e+00 : f32
      %323 = vector.broadcast %cst_103 : f32 to vector<2x2x16xf32>
      %c0_104 = arith.constant 0 : index
      %c0_105 = arith.constant 0 : index
      %c0_106 = arith.constant 0 : index
      %324 = vector.load %arg9[%c0_104, %c0_105, %c0_106] : memref<2x2x16xf32, #tpu.memory_space<vmem>>, vector<2x2x16xf32>
      tpu.vector_store %arg9[%c0_104, %c0_105, %c0_106], %323 {strides = array<i32>} : memref<2x2x16xf32, #tpu.memory_space<vmem>>, vector<2x2x16xf32>,
    } else {
    }
    %c0 = arith.constant 0 : index
    %c0_1 = arith.constant 0 : index
    %3 = vector.load %arg4[%c0, %c0_1] : memref<16x64xbf16, #tpu.memory_space<vmem>>, vector<16x64xbf16>
    %c0_2 = arith.constant 0 : index
    %c0_3 = arith.constant 0 : index
    %4 = vector.load %arg5[%c0_2, %c0_3] : memref<16x64xbf16, #tpu.memory_space<vmem>>, vector<16x64xbf16>
    %c0_4 = arith.constant 0 : index
    %c0_5 = arith.constant 0 : index
    %c0_6 = arith.constant 0 : index
    %5 = vector.load %arg8[%c0_4, %c0_5, %c0_6] : memref<2x2x16xf32, #tpu.memory_space<vmem>>, vector<1x2x16xf32>
    %6 = vector.shape_cast %5 : vector<1x2x16xf32> to vector<2x16xf32>
    %c0_7 = arith.constant 0 : index
    %c0_8 = arith.constant 0 : index
    %c0_9 = arith.constant 0 : index
    %7 = vector.load %arg9[%c0_7, %c0_8, %c0_9] : memref<2x2x16xf32, #tpu.memory_space<vmem>>, vector<1x2x16xf32>
    %8 = vector.shape_cast %7 : vector<1x2x16xf32> to vector<2x16xf32>
    %c1 = arith.constant 1 : index
    %c0_10 = arith.constant 0 : index
    %c0_11 = arith.constant 0 : index
    %9 = vector.load %arg8[%c1, %c0_10, %c0_11] : memref<2x2x16xf32, #tpu.memory_space<vmem>>, vector<1x2x16xf32>
    %10 = vector.shape_cast %9 : vector<1x2x16xf32> to vector<2x16xf32>
    %c1_12 = arith.constant 1 : index
    %c0_13 = arith.constant 0 : index
    %c0_14 = arith.constant 0 : index
    %11 = vector.load %arg9[%c1_12, %c0_13, %c0_14] : memref<2x2x16xf32, #tpu.memory_space<vmem>>, vector<1x2x16xf32>
    %12 = vector.shape_cast %11 : vector<1x2x16xf32> to vector<2x16xf32>
    %c0_i32_15 = arith.constant 0 : i32
    %13 = arith.index_cast %c0_i32_15 : i32 to index
    %c0_16 = arith.constant 0 : index
    %c0_17 = arith.constant 0 : index
    %14 = vector.load %arg2[%13, %c0_16, %c0_17] : memref<4x2x64xbf16, #tpu.memory_space<vmem>>, vector<1x2x64xbf16>
    %15 = vector.shape_cast %14 : vector<1x2x64xbf16> to vector<2x64xbf16>
    %16 = arith.extf %15 : vector<2x64xbf16> to vector<2x64xf32>
    %17 = arith.truncf %6 : vector<2x16xf32> to vector<2x16xbf16>
    %cst = arith.constant dense<0.000000e+00> : vector<2x64xf32>
    %18 = tpu.matmul %17, %3, %cst {dimension_numbers = #tpu.dot_dimension_numbers<[1], [0], [0], [1], [0, 0, 1, 1], [], []>} : vector<2x16xbf16>, vector<16x64xbf16>, vector<2x64xf32> -> vector<2x64xf32>
    %19 = arith.addf %16, %18 : vector<2x64xf32>
    %c3_i32 = arith.constant 3 : i32
    %20 = arith.subi %c3_i32, %c0_i32_15 : i32
    %21 = arith.index_cast %20 : i32 to index
    %c0_18 = arith.constant 0 : index
    %c0_19 = arith.constant 0 : index
    %22 = vector.load %arg3[%21, %c0_18, %c0_19] : memref<4x2x64xbf16, #tpu.memory_space<vmem>>, vector<1x2x64xbf16>
    %23 = vector.shape_cast %22 : vector<1x2x64xbf16> to vector<2x64xbf16>
    %24 = arith.extf %23 : vector<2x64xbf16> to vector<2x64xf32>
    %25 = arith.truncf %10 : vector<2x16xf32> to vector<2x16xbf16>
    %cst_20 = arith.constant dense<0.000000e+00> : vector<2x64xf32>
    %26 = tpu.matmul %25, %4, %cst_20 {dimension_numbers = #tpu.dot_dimension_numbers<[1], [0], [0], [1], [0, 0, 1, 1], [], []>} : vector<2x16xbf16>, vector<16x64xbf16>, vector<2x64xf32> -> vector<2x64xf32>
    %27 = arith.addf %24, %26 : vector<2x64xf32>
    %28 = vector.extract_strided_slice %19 {offsets = [0, 0], sizes = [2, 16], strides = [1, 1]} : vector<2x64xf32> to vector<2x16xf32>
    %29 = arith.negf %28 : vector<2x16xf32>
    %30 = math.exp %29 : vector<2x16xf32>
    %cst_21 = arith.constant 1.000000e+00 : f32
    %31 = vector.broadcast %cst_21 : f32 to vector<2x16xf32>
    %32 = arith.addf %31, %30 : vector<2x16xf32>
    %33 = arith.divf %31, %32 : vector<2x16xf32>
    %34 = vector.extract_strided_slice %19 {offsets = [0, 16], sizes = [2, 16], strides = [1, 1]} : vector<2x64xf32> to vector<2x16xf32>
    %35 = arith.negf %34 : vector<2x16xf32>
    %36 = math.exp %35 : vector<2x16xf32>
    %cst_22 = arith.constant 1.000000e+00 : f32
    %37 = vector.broadcast %cst_22 : f32 to vector<2x16xf32>
    %38 = arith.addf %37, %36 : vector<2x16xf32>
    %39 = arith.divf %37, %38 : vector<2x16xf32>
    %40 = vector.extract_strided_slice %19 {offsets = [0, 32], sizes = [2, 16], strides = [1, 1]} : vector<2x64xf32> to vector<2x16xf32>
    %41 = math.tanh %40 : vector<2x16xf32>
    %42 = vector.extract_strided_slice %19 {offsets = [0, 48], sizes = [2, 16], strides = [1, 1]} : vector<2x64xf32> to vector<2x16xf32>
    %43 = arith.negf %42 : vector<2x16xf32>
    %44 = math.exp %43 : vector<2x16xf32>
    %cst_23 = arith.constant 1.000000e+00 : f32
    %45 = vector.broadcast %cst_23 : f32 to vector<2x16xf32>
    %46 = arith.addf %45, %44 : vector<2x16xf32>
    %47 = arith.divf %45, %46 : vector<2x16xf32>
    %48 = arith.mulf %39, %8 : vector<2x16xf32>
    %49 = arith.mulf %33, %41 : vector<2x16xf32>
    %50 = arith.addf %48, %49 : vector<2x16xf32>
    %51 = math.tanh %50 : vector<2x16xf32>
    %52 = arith.mulf %47, %51 : vector<2x16xf32>
    %53 = vector.extract_strided_slice %27 {offsets = [0, 0], sizes = [2, 16], strides = [1, 1]} : vector<2x64xf32> to vector<2x16xf32>
    %54 = arith.negf %53 : vector<2x16xf32>
    %55 = math.exp %54 : vector<2x16xf32>
    %cst_24 = arith.constant 1.000000e+00 : f32
    %56 = vector.broadcast %cst_24 : f32 to vector<2x16xf32>
    %57 = arith.addf %56, %55 : vector<2x16xf32>
    %58 = arith.divf %56, %57 : vector<2x16xf32>
    %59 = vector.extract_strided_slice %27 {offsets = [0, 16], sizes = [2, 16], strides = [1, 1]} : vector<2x64xf32> to vector<2x16xf32>
    %60 = arith.negf %59 : vector<2x16xf32>
    %61 = math.exp %60 : vector<2x16xf32>
    %cst_25 = arith.constant 1.000000e+00 : f32
    %62 = vector.broadcast %cst_25 : f32 to vector<2x16xf32>
    %63 = arith.addf %62, %61 : vector<2x16xf32>
    %64 = arith.divf %62, %63 : vector<2x16xf32>
    %65 = vector.extract_strided_slice %27 {offsets = [0, 32], sizes = [2, 16], strides = [1, 1]} : vector<2x64xf32> to vector<2x16xf32>
    %66 = math.tanh %65 : vector<2x16xf32>
    %67 = vector.extract_strided_slice %27 {offsets = [0, 48], sizes = [2, 16], strides = [1, 1]} : vector<2x64xf32> to vector<2x16xf32>
    %68 = arith.negf %67 : vector<2x16xf32>
    %69 = math.exp %68 : vector<2x16xf32>
    %cst_26 = arith.constant 1.000000e+00 : f32
    %70 = vector.broadcast %cst_26 : f32 to vector<2x16xf32>
    %71 = arith.addf %70, %69 : vector<2x16xf32>
    %72 = arith.divf %70, %71 : vector<2x16xf32>
    %73 = arith.mulf %64, %12 : vector<2x16xf32>
    %74 = arith.mulf %58, %66 : vector<2x16xf32>
    %75 = arith.addf %73, %74 : vector<2x16xf32>
    %76 = math.tanh %75 : vector<2x16xf32>
    %77 = arith.mulf %72, %76 : vector<2x16xf32>
    %78 = arith.index_cast %c0_i32_15 : i32 to index
    %c0_27 = arith.constant 0 : index
    %c0_28 = arith.constant 0 : index
    %79 = vector.load %arg6[%78, %c0_27, %c0_28] : memref<4x2x16xf32, #tpu.memory_space<vmem>>, vector<1x2x16xf32>
    %80 = vector.shape_cast %79 : vector<1x2x16xf32> to vector<2x16xf32>
    %81 = vector.shape_cast %52 : vector<2x16xf32> to vector<1x2x16xf32>
    tpu.vector_store %arg6[%78, %c0_27, %c0_28], %81 {strides = array<i32>} : memref<4x2x16xf32, #tpu.memory_space<vmem>>, vector<1x2x16xf32>,
    %c3_i32_29 = arith.constant 3 : i32
    %82 = arith.subi %c3_i32_29, %c0_i32_15 : i32
    %83 = arith.index_cast %82 : i32 to index
    %c0_30 = arith.constant 0 : index
    %c0_31 = arith.constant 0 : index
    %84 = vector.load %arg7[%83, %c0_30, %c0_31] : memref<4x2x16xf32, #tpu.memory_space<vmem>>, vector<1x2x16xf32>
    %85 = vector.shape_cast %84 : vector<1x2x16xf32> to vector<2x16xf32>
    %86 = vector.shape_cast %77 : vector<2x16xf32> to vector<1x2x16xf32>
    tpu.vector_store %arg7[%83, %c0_30, %c0_31], %86 {strides = array<i32>} : memref<4x2x16xf32, #tpu.memory_space<vmem>>, vector<1x2x16xf32>,
    %c1_i32 = arith.constant 1 : i32
    %87 = arith.index_cast %c1_i32 : i32 to index
    %c0_32 = arith.constant 0 : index
    %c0_33 = arith.constant 0 : index
    %88 = vector.load %arg2[%87, %c0_32, %c0_33] : memref<4x2x64xbf16, #tpu.memory_space<vmem>>, vector<1x2x64xbf16>
    %89 = vector.shape_cast %88 : vector<1x2x64xbf16> to vector<2x64xbf16>
    %90 = arith.extf %89 : vector<2x64xbf16> to vector<2x64xf32>
    %91 = arith.truncf %52 : vector<2x16xf32> to vector<2x16xbf16>
    %cst_34 = arith.constant dense<0.000000e+00> : vector<2x64xf32>
    %92 = tpu.matmul %91, %3, %cst_34 {dimension_numbers = #tpu.dot_dimension_numbers<[1], [0], [0], [1], [0, 0, 1, 1], [], []>} : vector<2x16xbf16>, vector<16x64xbf16>, vector<2x64xf32> -> vector<2x64xf32>
    %93 = arith.addf %90, %92 : vector<2x64xf32>
    %c3_i32_35 = arith.constant 3 : i32
    %94 = arith.subi %c3_i32_35, %c1_i32 : i32
    %95 = arith.index_cast %94 : i32 to index
    %c0_36 = arith.constant 0 : index
    %c0_37 = arith.constant 0 : index
    %96 = vector.load %arg3[%95, %c0_36, %c0_37] : memref<4x2x64xbf16, #tpu.memory_space<vmem>>, vector<1x2x64xbf16>
    %97 = vector.shape_cast %96 : vector<1x2x64xbf16> to vector<2x64xbf16>
    %98 = arith.extf %97 : vector<2x64xbf16> to vector<2x64xf32>
    %99 = arith.truncf %77 : vector<2x16xf32> to vector<2x16xbf16>
    %cst_38 = arith.constant dense<0.000000e+00> : vector<2x64xf32>
    %100 = tpu.matmul %99, %4, %cst_38 {dimension_numbers = #tpu.dot_dimension_numbers<[1], [0], [0], [1], [0, 0, 1, 1], [], []>} : vector<2x16xbf16>, vector<16x64xbf16>, vector<2x64xf32> -> vector<2x64xf32>
    %101 = arith.addf %98, %100 : vector<2x64xf32>
    %102 = vector.extract_strided_slice %93 {offsets = [0, 0], sizes = [2, 16], strides = [1, 1]} : vector<2x64xf32> to vector<2x16xf32>
    %103 = arith.negf %102 : vector<2x16xf32>
    %104 = math.exp %103 : vector<2x16xf32>
    %cst_39 = arith.constant 1.000000e+00 : f32
    %105 = vector.broadcast %cst_39 : f32 to vector<2x16xf32>
    %106 = arith.addf %105, %104 : vector<2x16xf32>
    %107 = arith.divf %105, %106 : vector<2x16xf32>
    %108 = vector.extract_strided_slice %93 {offsets = [0, 16], sizes = [2, 16], strides = [1, 1]} : vector<2x64xf32> to vector<2x16xf32>
    %109 = arith.negf %108 : vector<2x16xf32>
    %110 = math.exp %109 : vector<2x16xf32>
    %cst_40 = arith.constant 1.000000e+00 : f32
    %111 = vector.broadcast %cst_40 : f32 to vector<2x16xf32>
    %112 = arith.addf %111, %110 : vector<2x16xf32>
    %113 = arith.divf %111, %112 : vector<2x16xf32>
    %114 = vector.extract_strided_slice %93 {offsets = [0, 32], sizes = [2, 16], strides = [1, 1]} : vector<2x64xf32> to vector<2x16xf32>
    %115 = math.tanh %114 : vector<2x16xf32>
    %116 = vector.extract_strided_slice %93 {offsets = [0, 48], sizes = [2, 16], strides = [1, 1]} : vector<2x64xf32> to vector<2x16xf32>
    %117 = arith.negf %116 : vector<2x16xf32>
    %118 = math.exp %117 : vector<2x16xf32>
    %cst_41 = arith.constant 1.000000e+00 : f32
    %119 = vector.broadcast %cst_41 : f32 to vector<2x16xf32>
    %120 = arith.addf %119, %118 : vector<2x16xf32>
    %121 = arith.divf %119, %120 : vector<2x16xf32>
    %122 = arith.mulf %113, %50 : vector<2x16xf32>
    %123 = arith.mulf %107, %115 : vector<2x16xf32>
    %124 = arith.addf %122, %123 : vector<2x16xf32>
    %125 = math.tanh %124 : vector<2x16xf32>
    %126 = arith.mulf %121, %125 : vector<2x16xf32>
    %127 = vector.extract_strided_slice %101 {offsets = [0, 0], sizes = [2, 16], strides = [1, 1]} : vector<2x64xf32> to vector<2x16xf32>
    %128 = arith.negf %127 : vector<2x16xf32>
    %129 = math.exp %128 : vector<2x16xf32>
    %cst_42 = arith.constant 1.000000e+00 : f32
    %130 = vector.broadcast %cst_42 : f32 to vector<2x16xf32>
    %131 = arith.addf %130, %129 : vector<2x16xf32>
    %132 = arith.divf %130, %131 : vector<2x16xf32>
    %133 = vector.extract_strided_slice %101 {offsets = [0, 16], sizes = [2, 16], strides = [1, 1]} : vector<2x64xf32> to vector<2x16xf32>
    %134 = arith.negf %133 : vector<2x16xf32>
    %135 = math.exp %134 : vector<2x16xf32>
    %cst_43 = arith.constant 1.000000e+00 : f32
    %136 = vector.broadcast %cst_43 : f32 to vector<2x16xf32>
    %137 = arith.addf %136, %135 : vector<2x16xf32>
    %138 = arith.divf %136, %137 : vector<2x16xf32>
    %139 = vector.extract_strided_slice %101 {offsets = [0, 32], sizes = [2, 16], strides = [1, 1]} : vector<2x64xf32> to vector<2x16xf32>
    %140 = math.tanh %139 : vector<2x16xf32>
    %141 = vector.extract_strided_slice %101 {offsets = [0, 48], sizes = [2, 16], strides = [1, 1]} : vector<2x64xf32> to vector<2x16xf32>
    %142 = arith.negf %141 : vector<2x16xf32>
    %143 = math.exp %142 : vector<2x16xf32>
    %cst_44 = arith.constant 1.000000e+00 : f32
    %144 = vector.broadcast %cst_44 : f32 to vector<2x16xf32>
    %145 = arith.addf %144, %143 : vector<2x16xf32>
    %146 = arith.divf %144, %145 : vector<2x16xf32>
    %147 = arith.mulf %138, %75 : vector<2x16xf32>
    %148 = arith.mulf %132, %140 : vector<2x16xf32>
    %149 = arith.addf %147, %148 : vector<2x16xf32>
    %150 = math.tanh %149 : vector<2x16xf32>
    %151 = arith.mulf %146, %150 : vector<2x16xf32>
    %152 = arith.index_cast %c1_i32 : i32 to index
    %c0_45 = arith.constant 0 : index
    %c0_46 = arith.constant 0 : index
    %153 = vector.load %arg6[%152, %c0_45, %c0_46] : memref<4x2x16xf32, #tpu.memory_space<vmem>>, vector<1x2x16xf32>
    %154 = vector.shape_cast %153 : vector<1x2x16xf32> to vector<2x16xf32>
    %155 = vector.shape_cast %126 : vector<2x16xf32> to vector<1x2x16xf32>
    tpu.vector_store %arg6[%152, %c0_45, %c0_46], %155 {strides = array<i32>} : memref<4x2x16xf32, #tpu.memory_space<vmem>>, vector<1x2x16xf32>,
    %c3_i32_47 = arith.constant 3 : i32
    %156 = arith.subi %c3_i32_47, %c1_i32 : i32
    %157 = arith.index_cast %156 : i32 to index
    %c0_48 = arith.constant 0 : index
    %c0_49 = arith.constant 0 : index
    %158 = vector.load %arg7[%157, %c0_48, %c0_49] : memref<4x2x16xf32, #tpu.memory_space<vmem>>, vector<1x2x16xf32>
    %159 = vector.shape_cast %158 : vector<1x2x16xf32> to vector<2x16xf32>
    %160 = vector.shape_cast %151 : vector<2x16xf32> to vector<1x2x16xf32>
    tpu.vector_store %arg7[%157, %c0_48, %c0_49], %160 {strides = array<i32>} : memref<4x2x16xf32, #tpu.memory_space<vmem>>, vector<1x2x16xf32>,
    %c2_i32 = arith.constant 2 : i32
    %161 = arith.index_cast %c2_i32 : i32 to index
    %c0_50 = arith.constant 0 : index
    %c0_51 = arith.constant 0 : index
    %162 = vector.load %arg2[%161, %c0_50, %c0_51] : memref<4x2x64xbf16, #tpu.memory_space<vmem>>, vector<1x2x64xbf16>
    %163 = vector.shape_cast %162 : vector<1x2x64xbf16> to vector<2x64xbf16>
    %164 = arith.extf %163 : vector<2x64xbf16> to vector<2x64xf32>
    %165 = arith.truncf %126 : vector<2x16xf32> to vector<2x16xbf16>
    %cst_52 = arith.constant dense<0.000000e+00> : vector<2x64xf32>
    %166 = tpu.matmul %165, %3, %cst_52 {dimension_numbers = #tpu.dot_dimension_numbers<[1], [0], [0], [1], [0, 0, 1, 1], [], []>} : vector<2x16xbf16>, vector<16x64xbf16>, vector<2x64xf32> -> vector<2x64xf32>
    %167 = arith.addf %164, %166 : vector<2x64xf32>
    %c3_i32_53 = arith.constant 3 : i32
    %168 = arith.subi %c3_i32_53, %c2_i32 : i32
    %169 = arith.index_cast %168 : i32 to index
    %c0_54 = arith.constant 0 : index
    %c0_55 = arith.constant 0 : index
    %170 = vector.load %arg3[%169, %c0_54, %c0_55] : memref<4x2x64xbf16, #tpu.memory_space<vmem>>, vector<1x2x64xbf16>
    %171 = vector.shape_cast %170 : vector<1x2x64xbf16> to vector<2x64xbf16>
    %172 = arith.extf %171 : vector<2x64xbf16> to vector<2x64xf32>
    %173 = arith.truncf %151 : vector<2x16xf32> to vector<2x16xbf16>
    %cst_56 = arith.constant dense<0.000000e+00> : vector<2x64xf32>
    %174 = tpu.matmul %173, %4, %cst_56 {dimension_numbers = #tpu.dot_dimension_numbers<[1], [0], [0], [1], [0, 0, 1, 1], [], []>} : vector<2x16xbf16>, vector<16x64xbf16>, vector<2x64xf32> -> vector<2x64xf32>
    %175 = arith.addf %172, %174 : vector<2x64xf32>
    %176 = vector.extract_strided_slice %167 {offsets = [0, 0], sizes = [2, 16], strides = [1, 1]} : vector<2x64xf32> to vector<2x16xf32>
    %177 = arith.negf %176 : vector<2x16xf32>
    %178 = math.exp %177 : vector<2x16xf32>
    %cst_57 = arith.constant 1.000000e+00 : f32
    %179 = vector.broadcast %cst_57 : f32 to vector<2x16xf32>
    %180 = arith.addf %179, %178 : vector<2x16xf32>
    %181 = arith.divf %179, %180 : vector<2x16xf32>
    %182 = vector.extract_strided_slice %167 {offsets = [0, 16], sizes = [2, 16], strides = [1, 1]} : vector<2x64xf32> to vector<2x16xf32>
    %183 = arith.negf %182 : vector<2x16xf32>
    %184 = math.exp %183 : vector<2x16xf32>
    %cst_58 = arith.constant 1.000000e+00 : f32
    %185 = vector.broadcast %cst_58 : f32 to vector<2x16xf32>
    %186 = arith.addf %185, %184 : vector<2x16xf32>
    %187 = arith.divf %185, %186 : vector<2x16xf32>
    %188 = vector.extract_strided_slice %167 {offsets = [0, 32], sizes = [2, 16], strides = [1, 1]} : vector<2x64xf32> to vector<2x16xf32>
    %189 = math.tanh %188 : vector<2x16xf32>
    %190 = vector.extract_strided_slice %167 {offsets = [0, 48], sizes = [2, 16], strides = [1, 1]} : vector<2x64xf32> to vector<2x16xf32>
    %191 = arith.negf %190 : vector<2x16xf32>
    %192 = math.exp %191 : vector<2x16xf32>
    %cst_59 = arith.constant 1.000000e+00 : f32
    %193 = vector.broadcast %cst_59 : f32 to vector<2x16xf32>
    %194 = arith.addf %193, %192 : vector<2x16xf32>
    %195 = arith.divf %193, %194 : vector<2x16xf32>
    %196 = arith.mulf %187, %124 : vector<2x16xf32>
    %197 = arith.mulf %181, %189 : vector<2x16xf32>
    %198 = arith.addf %196, %197 : vector<2x16xf32>
    %199 = math.tanh %198 : vector<2x16xf32>
    %200 = arith.mulf %195, %199 : vector<2x16xf32>
    %201 = vector.extract_strided_slice %175 {offsets = [0, 0], sizes = [2, 16], strides = [1, 1]} : vector<2x64xf32> to vector<2x16xf32>
    %202 = arith.negf %201 : vector<2x16xf32>
    %203 = math.exp %202 : vector<2x16xf32>
    %cst_60 = arith.constant 1.000000e+00 : f32
    %204 = vector.broadcast %cst_60 : f32 to vector<2x16xf32>
    %205 = arith.addf %204, %203 : vector<2x16xf32>
    %206 = arith.divf %204, %205 : vector<2x16xf32>
    %207 = vector.extract_strided_slice %175 {offsets = [0, 16], sizes = [2, 16], strides = [1, 1]} : vector<2x64xf32> to vector<2x16xf32>
    %208 = arith.negf %207 : vector<2x16xf32>
    %209 = math.exp %208 : vector<2x16xf32>
    %cst_61 = arith.constant 1.000000e+00 : f32
    %210 = vector.broadcast %cst_61 : f32 to vector<2x16xf32>
    %211 = arith.addf %210, %209 : vector<2x16xf32>
    %212 = arith.divf %210, %211 : vector<2x16xf32>
    %213 = vector.extract_strided_slice %175 {offsets = [0, 32], sizes = [2, 16], strides = [1, 1]} : vector<2x64xf32> to vector<2x16xf32>
    %214 = math.tanh %213 : vector<2x16xf32>
    %215 = vector.extract_strided_slice %175 {offsets = [0, 48], sizes = [2, 16], strides = [1, 1]} : vector<2x64xf32> to vector<2x16xf32>
    %216 = arith.negf %215 : vector<2x16xf32>
    %217 = math.exp %216 : vector<2x16xf32>
    %cst_62 = arith.constant 1.000000e+00 : f32
    %218 = vector.broadcast %cst_62 : f32 to vector<2x16xf32>
    %219 = arith.addf %218, %217 : vector<2x16xf32>
    %220 = arith.divf %218, %219 : vector<2x16xf32>
    %221 = arith.mulf %212, %149 : vector<2x16xf32>
    %222 = arith.mulf %206, %214 : vector<2x16xf32>
    %223 = arith.addf %221, %222 : vector<2x16xf32>
    %224 = math.tanh %223 : vector<2x16xf32>
    %225 = arith.mulf %220, %224 : vector<2x16xf32>
    %226 = arith.index_cast %c2_i32 : i32 to index
    %c0_63 = arith.constant 0 : index
    %c0_64 = arith.constant 0 : index
    %227 = vector.load %arg6[%226, %c0_63, %c0_64] : memref<4x2x16xf32, #tpu.memory_space<vmem>>, vector<1x2x16xf32>
    %228 = vector.shape_cast %227 : vector<1x2x16xf32> to vector<2x16xf32>
    %229 = vector.shape_cast %200 : vector<2x16xf32> to vector<1x2x16xf32>
    tpu.vector_store %arg6[%226, %c0_63, %c0_64], %229 {strides = array<i32>} : memref<4x2x16xf32, #tpu.memory_space<vmem>>, vector<1x2x16xf32>,
    %c3_i32_65 = arith.constant 3 : i32
    %230 = arith.subi %c3_i32_65, %c2_i32 : i32
    %231 = arith.index_cast %230 : i32 to index
    %c0_66 = arith.constant 0 : index
    %c0_67 = arith.constant 0 : index
    %232 = vector.load %arg7[%231, %c0_66, %c0_67] : memref<4x2x16xf32, #tpu.memory_space<vmem>>, vector<1x2x16xf32>
    %233 = vector.shape_cast %232 : vector<1x2x16xf32> to vector<2x16xf32>
    %234 = vector.shape_cast %225 : vector<2x16xf32> to vector<1x2x16xf32>
    tpu.vector_store %arg7[%231, %c0_66, %c0_67], %234 {strides = array<i32>} : memref<4x2x16xf32, #tpu.memory_space<vmem>>, vector<1x2x16xf32>,
    %c3_i32_68 = arith.constant 3 : i32
    %235 = arith.index_cast %c3_i32_68 : i32 to index
    %c0_69 = arith.constant 0 : index
    %c0_70 = arith.constant 0 : index
    %236 = vector.load %arg2[%235, %c0_69, %c0_70] : memref<4x2x64xbf16, #tpu.memory_space<vmem>>, vector<1x2x64xbf16>
    %237 = vector.shape_cast %236 : vector<1x2x64xbf16> to vector<2x64xbf16>
    %238 = arith.extf %237 : vector<2x64xbf16> to vector<2x64xf32>
    %239 = arith.truncf %200 : vector<2x16xf32> to vector<2x16xbf16>
    %cst_71 = arith.constant dense<0.000000e+00> : vector<2x64xf32>
    %240 = tpu.matmul %239, %3, %cst_71 {dimension_numbers = #tpu.dot_dimension_numbers<[1], [0], [0], [1], [0, 0, 1, 1], [], []>} : vector<2x16xbf16>, vector<16x64xbf16>, vector<2x64xf32> -> vector<2x64xf32>
    %241 = arith.addf %238, %240 : vector<2x64xf32>
    %c3_i32_72 = arith.constant 3 : i32
    %242 = arith.subi %c3_i32_72, %c3_i32_68 : i32
    %243 = arith.index_cast %242 : i32 to index
    %c0_73 = arith.constant 0 : index
    %c0_74 = arith.constant 0 : index
    %244 = vector.load %arg3[%243, %c0_73, %c0_74] : memref<4x2x64xbf16, #tpu.memory_space<vmem>>, vector<1x2x64xbf16>
    %245 = vector.shape_cast %244 : vector<1x2x64xbf16> to vector<2x64xbf16>
    %246 = arith.extf %245 : vector<2x64xbf16> to vector<2x64xf32>
    %247 = arith.truncf %225 : vector<2x16xf32> to vector<2x16xbf16>
    %cst_75 = arith.constant dense<0.000000e+00> : vector<2x64xf32>
    %248 = tpu.matmul %247, %4, %cst_75 {dimension_numbers = #tpu.dot_dimension_numbers<[1], [0], [0], [1], [0, 0, 1, 1], [], []>} : vector<2x16xbf16>, vector<16x64xbf16>, vector<2x64xf32> -> vector<2x64xf32>
    %249 = arith.addf %246, %248 : vector<2x64xf32>
    %250 = vector.extract_strided_slice %241 {offsets = [0, 0], sizes = [2, 16], strides = [1, 1]} : vector<2x64xf32> to vector<2x16xf32>
    %251 = arith.negf %250 : vector<2x16xf32>
    %252 = math.exp %251 : vector<2x16xf32>
    %cst_76 = arith.constant 1.000000e+00 : f32
    %253 = vector.broadcast %cst_76 : f32 to vector<2x16xf32>
    %254 = arith.addf %253, %252 : vector<2x16xf32>
    %255 = arith.divf %253, %254 : vector<2x16xf32>
    %256 = vector.extract_strided_slice %241 {offsets = [0, 16], sizes = [2, 16], strides = [1, 1]} : vector<2x64xf32> to vector<2x16xf32>
    %257 = arith.negf %256 : vector<2x16xf32>
    %258 = math.exp %257 : vector<2x16xf32>
    %cst_77 = arith.constant 1.000000e+00 : f32
    %259 = vector.broadcast %cst_77 : f32 to vector<2x16xf32>
    %260 = arith.addf %259, %258 : vector<2x16xf32>
    %261 = arith.divf %259, %260 : vector<2x16xf32>
    %262 = vector.extract_strided_slice %241 {offsets = [0, 32], sizes = [2, 16], strides = [1, 1]} : vector<2x64xf32> to vector<2x16xf32>
    %263 = math.tanh %262 : vector<2x16xf32>
    %264 = vector.extract_strided_slice %241 {offsets = [0, 48], sizes = [2, 16], strides = [1, 1]} : vector<2x64xf32> to vector<2x16xf32>
    %265 = arith.negf %264 : vector<2x16xf32>
    %266 = math.exp %265 : vector<2x16xf32>
    %cst_78 = arith.constant 1.000000e+00 : f32
    %267 = vector.broadcast %cst_78 : f32 to vector<2x16xf32>
    %268 = arith.addf %267, %266 : vector<2x16xf32>
    %269 = arith.divf %267, %268 : vector<2x16xf32>
    %270 = arith.mulf %261, %198 : vector<2x16xf32>
    %271 = arith.mulf %255, %263 : vector<2x16xf32>
    %272 = arith.addf %270, %271 : vector<2x16xf32>
    %273 = math.tanh %272 : vector<2x16xf32>
    %274 = arith.mulf %269, %273 : vector<2x16xf32>
    %275 = vector.extract_strided_slice %249 {offsets = [0, 0], sizes = [2, 16], strides = [1, 1]} : vector<2x64xf32> to vector<2x16xf32>
    %276 = arith.negf %275 : vector<2x16xf32>
    %277 = math.exp %276 : vector<2x16xf32>
    %cst_79 = arith.constant 1.000000e+00 : f32
    %278 = vector.broadcast %cst_79 : f32 to vector<2x16xf32>
    %279 = arith.addf %278, %277 : vector<2x16xf32>
    %280 = arith.divf %278, %279 : vector<2x16xf32>
    %281 = vector.extract_strided_slice %249 {offsets = [0, 16], sizes = [2, 16], strides = [1, 1]} : vector<2x64xf32> to vector<2x16xf32>
    %282 = arith.negf %281 : vector<2x16xf32>
    %283 = math.exp %282 : vector<2x16xf32>
    %cst_80 = arith.constant 1.000000e+00 : f32
    %284 = vector.broadcast %cst_80 : f32 to vector<2x16xf32>
    %285 = arith.addf %284, %283 : vector<2x16xf32>
    %286 = arith.divf %284, %285 : vector<2x16xf32>
    %287 = vector.extract_strided_slice %249 {offsets = [0, 32], sizes = [2, 16], strides = [1, 1]} : vector<2x64xf32> to vector<2x16xf32>
    %288 = math.tanh %287 : vector<2x16xf32>
    %289 = vector.extract_strided_slice %249 {offsets = [0, 48], sizes = [2, 16], strides = [1, 1]} : vector<2x64xf32> to vector<2x16xf32>
    %290 = arith.negf %289 : vector<2x16xf32>
    %291 = math.exp %290 : vector<2x16xf32>
    %cst_81 = arith.constant 1.000000e+00 : f32
    %292 = vector.broadcast %cst_81 : f32 to vector<2x16xf32>
    %293 = arith.addf %292, %291 : vector<2x16xf32>
    %294 = arith.divf %292, %293 : vector<2x16xf32>
    %295 = arith.mulf %286, %223 : vector<2x16xf32>
    %296 = arith.mulf %280, %288 : vector<2x16xf32>
    %297 = arith.addf %295, %296 : vector<2x16xf32>
    %298 = math.tanh %297 : vector<2x16xf32>
    %299 = arith.mulf %294, %298 : vector<2x16xf32>
    %300 = arith.index_cast %c3_i32_68 : i32 to index
    %c0_82 = arith.constant 0 : index
    %c0_83 = arith.constant 0 : index
    %301 = vector.load %arg6[%300, %c0_82, %c0_83] : memref<4x2x16xf32, #tpu.memory_space<vmem>>, vector<1x2x16xf32>
    %302 = vector.shape_cast %301 : vector<1x2x16xf32> to vector<2x16xf32>
    %303 = vector.shape_cast %274 : vector<2x16xf32> to vector<1x2x16xf32>
    tpu.vector_store %arg6[%300, %c0_82, %c0_83], %303 {strides = array<i32>} : memref<4x2x16xf32, #tpu.memory_space<vmem>>, vector<1x2x16xf32>,
    %c3_i32_84 = arith.constant 3 : i32
    %304 = arith.subi %c3_i32_84, %c3_i32_68 : i32
    %305 = arith.index_cast %304 : i32 to index
    %c0_85 = arith.constant 0 : index
    %c0_86 = arith.constant 0 : index
    %306 = vector.load %arg7[%305, %c0_85, %c0_86] : memref<4x2x16xf32, #tpu.memory_space<vmem>>, vector<1x2x16xf32>
    %307 = vector.shape_cast %306 : vector<1x2x16xf32> to vector<2x16xf32>
    %308 = vector.shape_cast %299 : vector<2x16xf32> to vector<1x2x16xf32>
    tpu.vector_store %arg7[%305, %c0_85, %c0_86], %308 {strides = array<i32>} : memref<4x2x16xf32, #tpu.memory_space<vmem>>, vector<1x2x16xf32>,
    %c4_i32 = arith.constant 4 : i32
    %c0_87 = arith.constant 0 : index
    %c0_88 = arith.constant 0 : index
    %c0_89 = arith.constant 0 : index
    %309 = vector.load %arg8[%c0_87, %c0_88, %c0_89] : memref<2x2x16xf32, #tpu.memory_space<vmem>>, vector<1x2x16xf32>
    %310 = vector.shape_cast %309 : vector<1x2x16xf32> to vector<2x16xf32>
    %311 = vector.shape_cast %274 : vector<2x16xf32> to vector<1x2x16xf32>
    tpu.vector_store %arg8[%c0_87, %c0_88, %c0_89], %311 {strides = array<i32>} : memref<2x2x16xf32, #tpu.memory_space<vmem>>, vector<1x2x16xf32>,
    %c0_90 = arith.constant 0 : index
    %c0_91 = arith.constant 0 : index
    %c0_92 = arith.constant 0 : index
    %312 = vector.load %arg9[%c0_90, %c0_91, %c0_92] : memref<2x2x16xf32, #tpu.memory_space<vmem>>, vector<1x2x16xf32>
    %313 = vector.shape_cast %312 : vector<1x2x16xf32> to vector<2x16xf32>
    %314 = vector.shape_cast %272 : vector<2x16xf32> to vector<1x2x16xf32>
    tpu.vector_store %arg9[%c0_90, %c0_91, %c0_92], %314 {strides = array<i32>} : memref<2x2x16xf32, #tpu.memory_space<vmem>>, vector<1x2x16xf32>,
    %c1_93 = arith.constant 1 : index
    %c0_94 = arith.constant 0 : index
    %c0_95 = arith.constant 0 : index
    %315 = vector.load %arg8[%c1_93, %c0_94, %c0_95] : memref<2x2x16xf32, #tpu.memory_space<vmem>>, vector<1x2x16xf32>
    %316 = vector.shape_cast %315 : vector<1x2x16xf32> to vector<2x16xf32>
    %317 = vector.shape_cast %299 : vector<2x16xf32> to vector<1x2x16xf32>
    tpu.vector_store %arg8[%c1_93, %c0_94, %c0_95], %317 {strides = array<i32>} : memref<2x2x16xf32, #tpu.memory_space<vmem>>, vector<1x2x16xf32>,
    %c1_96 = arith.constant 1 : index
    %c0_97 = arith.constant 0 : index
    %c0_98 = arith.constant 0 : index
    %318 = vector.load %arg9[%c1_96, %c0_97, %c0_98] : memref<2x2x16xf32, #tpu.memory_space<vmem>>, vector<1x2x16xf32>
    %319 = vector.shape_cast %318 : vector<1x2x16xf32> to vector<2x16xf32>
    %320 = vector.shape_cast %297 : vector<2x16xf32> to vector<1x2x16xf32>
    tpu.vector_store %arg9[%c1_96, %c0_97, %c0_98], %320 {strides = array<i32>} : memref<2x2x16xf32, #tpu.memory_space<vmem>>, vector<1x2x16xf32>,
    return
  }
  func.func @transform_0(%arg0: i32, %arg1: i32) -> (i32, i32, i32) {
    %c0_i32 = arith.constant 0 : i32
    %c0_i32_0 = arith.constant 0 : i32
    return %arg1, %arg0, %c0_i32 : i32, i32, i32
  }
  func.func @transform_1(%arg0: i32, %arg1: i32) -> (i32, i32, i32) {
    %c0_i32 = arith.constant 0 : i32
    %0 = arith.subi %c0_i32, %arg1 : i32
    %c0_i32_0 = arith.constant 0 : i32
    %c0_i32_1 = arith.constant 0 : i32
    return %0, %arg0, %c0_i32_0 : i32, i32, i32
  }
  func.func @transform_2(%arg0: i32, %arg1: i32) -> (i32, i32) {
    %c0_i32 = arith.constant 0 : i32
    %c0_i32_0 = arith.constant 0 : i32
    %c0_i32_1 = arith.constant 0 : i32
    return %c0_i32, %c0_i32_0 : i32, i32
  }
  func.func @transform_3(%arg0: i32, %arg1: i32) -> (i32, i32) {
    %c0_i32 = arith.constant 0 : i32
    %c0_i32_0 = arith.constant 0 : i32
    %c0_i32_1 = arith.constant 0 : i32
    return %c0_i32, %c0_i32_0 : i32, i32
  }
  func.func @transform_4(%arg0: i32, %arg1: i32) -> (i32, i32, i32) {
    %c0_i32 = arith.constant 0 : i32
    %c0_i32_0 = arith.constant 0 : i32
    return %arg1, %arg0, %c0_i32 : i32, i32, i32
  }
  func.func @transform_5(%arg0: i32, %arg1: i32) -> (i32, i32, i32) {
    %c0_i32 = arith.constant 0 : i32
    %0 = arith.subi %c0_i32, %arg1 : i32
    %c0_i32_0 = arith.constant 0 : i32
    %c0_i32_1 = arith.constant 0 : i32
    return %0, %arg0, %c0_i32_0 : i32, i32, i32
  }
}

module attributes {stable_mosaic.version = 11 : i64} {
  func.func @_tagger_head_kernel(%arg0: i32, %arg1: memref<4x2x32xf32, #tpu.memory_space<vmem>>, %arg2: memref<32x32xf32, #tpu.memory_space<vmem>>, %arg3: memref<1x32xf32, #tpu.memory_space<vmem>>, %arg4: memref<1x32xf32, #tpu.memory_space<vmem>>, %arg5: memref<1x1xf32, #tpu.memory_space<vmem>>, %arg6: memref<32x32xf32, #tpu.memory_space<vmem>>, %arg7: memref<1x32xf32, #tpu.memory_space<vmem>>, %arg8: memref<32x32xf32, #tpu.memory_space<vmem>>, %arg9: memref<1x32xf32, #tpu.memory_space<vmem>>, %arg10: memref<4x2xf32, #tpu.memory_space<vmem>>) attributes {dimension_semantics = [#tpu.dimension_semantics<parallel>], iteration_bounds = array<i64: 1>, scalar_prefetch = 0 : i64, scratch_operands = 0 : i64, tpu.core_type = #tpu.core_type<tc>, window_params = [{transform_indices = @transform_0, window_bounds = array<i64: 4, 2, 32>}, {pipeline_mode = #tpu.pipeline_mode<synchronous>, transform_indices = @transform_1, window_bounds = array<i64: 32, 32>}, {pipeline_mode = #tpu.pipeline_mode<synchronous>, transform_indices = @transform_2, window_bounds = array<i64: 1, 32>}, {pipeline_mode = #tpu.pipeline_mode<synchronous>, transform_indices = @transform_3, window_bounds = array<i64: 1, 32>}, {pipeline_mode = #tpu.pipeline_mode<synchronous>, transform_indices = @transform_4, window_bounds = array<i64: 1, 1>}, {pipeline_mode = #tpu.pipeline_mode<synchronous>, transform_indices = @transform_5, window_bounds = array<i64: 32, 32>}, {pipeline_mode = #tpu.pipeline_mode<synchronous>, transform_indices = @transform_6, window_bounds = array<i64: 1, 32>}, {pipeline_mode = #tpu.pipeline_mode<synchronous>, transform_indices = @transform_7, window_bounds = array<i64: 32, 32>}, {pipeline_mode = #tpu.pipeline_mode<synchronous>, transform_indices = @transform_8, window_bounds = array<i64: 1, 32>}, {transform_indices = @transform_9, window_bounds = array<i64: 4, 2>}]} {
    %c0 = arith.constant 0 : index
    %c0_0 = arith.constant 0 : index
    %c0_1 = arith.constant 0 : index
    %0 = vector.load %arg1[%c0, %c0_0, %c0_1] : memref<4x2x32xf32, #tpu.memory_space<vmem>>, vector<4x2x32xf32>
    %cst = arith.constant dense<0.000000e+00> : vector<2x32xf32>
    %1 = vector.multi_reduction <add>, %0, %cst [0] : vector<4x2x32xf32> to vector<2x32xf32>
    %cst_2 = arith.constant 4.000000e+00 : f32
    %2 = vector.broadcast %cst_2 : f32 to vector<2x32xf32>
    %3 = arith.divf %1, %2 : vector<2x32xf32>
    %c0_3 = arith.constant 0 : index
    %c0_4 = arith.constant 0 : index
    %4 = vector.load %arg2[%c0_3, %c0_4] : memref<32x32xf32, #tpu.memory_space<vmem>>, vector<32x32xf32>
    %cst_5 = arith.constant dense<0.000000e+00> : vector<2x32xf32>
    %5 = tpu.matmul %3, %4, %cst_5 {dimension_numbers = #tpu.dot_dimension_numbers<[1], [0], [0], [1], [0, 0, 1, 1], [], []>} : vector<2x32xf32>, vector<32x32xf32>, vector<2x32xf32> -> vector<2x32xf32>
    %c0_6 = arith.constant 0 : index
    %c0_7 = arith.constant 0 : index
    %6 = vector.load %arg3[%c0_6, %c0_7] : memref<1x32xf32, #tpu.memory_space<vmem>>, vector<1x32xf32>
    %7 = vector.broadcast %6 : vector<1x32xf32> to vector<2x32xf32>
    %8 = arith.addf %5, %7 : vector<2x32xf32>
    %9 = math.tanh %8 : vector<2x32xf32>
    %c0_8 = arith.constant 0 : index
    %c0_9 = arith.constant 0 : index
    %10 = vector.load %arg4[%c0_8, %c0_9] : memref<1x32xf32, #tpu.memory_space<vmem>>, vector<1x32xf32>
    %c0_10 = arith.constant 0 : index
    %c0_11 = arith.constant 0 : index
    %11 = vector.load %arg5[%c0_10, %c0_11] : memref<1x1xf32, #tpu.memory_space<vmem>>, vector<1x1xf32>
    %12 = vector.shape_cast %10 : vector<1x32xf32> to vector<1x1x32xf32>
    %13 = vector.broadcast %12 : vector<1x1x32xf32> to vector<4x2x32xf32>
    %14 = arith.mulf %0, %13 : vector<4x2x32xf32>
    %cst_12 = arith.constant dense<0.000000e+00> : vector<4x2xf32>
    %15 = vector.multi_reduction <add>, %14, %cst_12 [2] : vector<4x2x32xf32> to vector<4x2xf32>
    %16 = vector.broadcast %11 : vector<1x1xf32> to vector<4x2xf32>
    %17 = arith.addf %15, %16 : vector<4x2xf32>
    %c0_13 = arith.constant 0 : index
    %c0_14 = arith.constant 0 : index
    %18 = vector.load %arg6[%c0_13, %c0_14] : memref<32x32xf32, #tpu.memory_space<vmem>>, vector<32x32xf32>
    %cst_15 = arith.constant dense<0.000000e+00> : vector<2x32xf32>
    %19 = tpu.matmul %9, %18, %cst_15 {dimension_numbers = #tpu.dot_dimension_numbers<[1], [0], [0], [1], [0, 0, 1, 1], [], []>} : vector<2x32xf32>, vector<32x32xf32>, vector<2x32xf32> -> vector<2x32xf32>
    %c0_16 = arith.constant 0 : index
    %c0_17 = arith.constant 0 : index
    %20 = vector.load %arg7[%c0_16, %c0_17] : memref<1x32xf32, #tpu.memory_space<vmem>>, vector<1x32xf32>
    %21 = vector.broadcast %20 : vector<1x32xf32> to vector<2x32xf32>
    %22 = arith.addf %19, %21 : vector<2x32xf32>
    %23 = vector.shape_cast %22 : vector<2x32xf32> to vector<1x2x32xf32>
    %24 = vector.broadcast %23 : vector<1x2x32xf32> to vector<4x2x32xf32>
    %25 = arith.mulf %0, %24 : vector<4x2x32xf32>
    %cst_18 = arith.constant dense<0.000000e+00> : vector<4x2xf32>
    %26 = vector.multi_reduction <add>, %25, %cst_18 [2] : vector<4x2x32xf32> to vector<4x2xf32>
    %c0_19 = arith.constant 0 : index
    %c0_20 = arith.constant 0 : index
    %27 = vector.load %arg8[%c0_19, %c0_20] : memref<32x32xf32, #tpu.memory_space<vmem>>, vector<32x32xf32>
    %c0_21 = arith.constant 0 : index
    %c0_22 = arith.constant 0 : index
    %28 = vector.load %arg9[%c0_21, %c0_22] : memref<1x32xf32, #tpu.memory_space<vmem>>, vector<1x32xf32>
    %cst_23 = arith.constant 0.000000e+00 : f32
    %29 = vector.broadcast %cst_23 : f32 to vector<2x32xf32>
    %c0_i32 = arith.constant 0 : i32
    %30 = math.tanh %29 : vector<2x32xf32>
    %cst_24 = arith.constant dense<0.000000e+00> : vector<2x32xf32>
    %31 = tpu.matmul %30, %27, %cst_24 {dimension_numbers = #tpu.dot_dimension_numbers<[1], [0], [0], [1], [0, 0, 1, 1], [], []>} : vector<2x32xf32>, vector<32x32xf32>, vector<2x32xf32> -> vector<2x32xf32>
    %32 = vector.broadcast %28 : vector<1x32xf32> to vector<2x32xf32>
    %33 = arith.addf %31, %32 : vector<2x32xf32>
    %34 = arith.index_cast %c0_i32 : i32 to index
    %c0_25 = arith.constant 0 : index
    %c0_26 = arith.constant 0 : index
    %35 = vector.load %arg1[%34, %c0_25, %c0_26] : memref<4x2x32xf32, #tpu.memory_space<vmem>>, vector<1x2x32xf32>
    %36 = vector.shape_cast %35 : vector<1x2x32xf32> to vector<2x32xf32>
    %37 = arith.mulf %36, %33 : vector<2x32xf32>
    %cst_27 = arith.constant dense<0.000000e+00> : vector<2xf32>
    %38 = vector.multi_reduction <add>, %37, %cst_27 [1] : vector<2x32xf32> to vector<2xf32>
    %39 = vector.shape_cast %38 : vector<2xf32> to vector<2x1xf32>
    %40 = vector.broadcast %10 : vector<1x32xf32> to vector<2x32xf32>
    %41 = arith.mulf %36, %40 : vector<2x32xf32>
    %cst_28 = arith.constant dense<0.000000e+00> : vector<2xf32>
    %42 = vector.multi_reduction <add>, %41, %cst_28 [1] : vector<2x32xf32> to vector<2xf32>
    %43 = vector.shape_cast %42 : vector<2xf32> to vector<2x1xf32>
    %44 = vector.broadcast %11 : vector<1x1xf32> to vector<2x1xf32>
    %45 = arith.addf %43, %44 : vector<2x1xf32>
    %46 = arith.mulf %36, %22 : vector<2x32xf32>
    %cst_29 = arith.constant dense<0.000000e+00> : vector<2xf32>
    %47 = vector.multi_reduction <add>, %46, %cst_29 [1] : vector<2x32xf32> to vector<2xf32>
    %48 = vector.shape_cast %47 : vector<2xf32> to vector<2x1xf32>
    %49 = arith.addf %45, %48 : vector<2x1xf32>
    %50 = arith.subf %49, %39 : vector<2x1xf32>
    %51 = arith.negf %50 : vector<2x1xf32>
    %52 = math.exp %51 : vector<2x1xf32>
    %cst_30 = arith.constant 1.000000e+00 : f32
    %53 = vector.broadcast %cst_30 : f32 to vector<2x1xf32>
    %54 = arith.addf %53, %52 : vector<2x1xf32>
    %55 = arith.divf %53, %54 : vector<2x1xf32>
    %56 = vector.broadcast %55 : vector<2x1xf32> to vector<2x32xf32>
    %57 = arith.mulf %56, %36 : vector<2x32xf32>
    %58 = arith.addf %29, %57 : vector<2x32xf32>
    %c1_i32 = arith.constant 1 : i32
    %59 = math.tanh %58 : vector<2x32xf32>
    %cst_31 = arith.constant dense<0.000000e+00> : vector<2x32xf32>
    %60 = tpu.matmul %59, %27, %cst_31 {dimension_numbers = #tpu.dot_dimension_numbers<[1], [0], [0], [1], [0, 0, 1, 1], [], []>} : vector<2x32xf32>, vector<32x32xf32>, vector<2x32xf32> -> vector<2x32xf32>
    %61 = vector.broadcast %28 : vector<1x32xf32> to vector<2x32xf32>
    %62 = arith.addf %60, %61 : vector<2x32xf32>
    %63 = arith.index_cast %c1_i32 : i32 to index
    %c0_32 = arith.constant 0 : index
    %c0_33 = arith.constant 0 : index
    %64 = vector.load %arg1[%63, %c0_32, %c0_33] : memref<4x2x32xf32, #tpu.memory_space<vmem>>, vector<1x2x32xf32>
    %65 = vector.shape_cast %64 : vector<1x2x32xf32> to vector<2x32xf32>
    %66 = arith.mulf %65, %62 : vector<2x32xf32>
    %cst_34 = arith.constant dense<0.000000e+00> : vector<2xf32>
    %67 = vector.multi_reduction <add>, %66, %cst_34 [1] : vector<2x32xf32> to vector<2xf32>
    %68 = vector.shape_cast %67 : vector<2xf32> to vector<2x1xf32>
    %69 = vector.broadcast %10 : vector<1x32xf32> to vector<2x32xf32>
    %70 = arith.mulf %65, %69 : vector<2x32xf32>
    %cst_35 = arith.constant dense<0.000000e+00> : vector<2xf32>
    %71 = vector.multi_reduction <add>, %70, %cst_35 [1] : vector<2x32xf32> to vector<2xf32>
    %72 = vector.shape_cast %71 : vector<2xf32> to vector<2x1xf32>
    %73 = vector.broadcast %11 : vector<1x1xf32> to vector<2x1xf32>
    %74 = arith.addf %72, %73 : vector<2x1xf32>
    %75 = arith.mulf %65, %22 : vector<2x32xf32>
    %cst_36 = arith.constant dense<0.000000e+00> : vector<2xf32>
    %76 = vector.multi_reduction <add>, %75, %cst_36 [1] : vector<2x32xf32> to vector<2xf32>
    %77 = vector.shape_cast %76 : vector<2xf32> to vector<2x1xf32>
    %78 = arith.addf %74, %77 : vector<2x1xf32>
    %79 = arith.subf %78, %68 : vector<2x1xf32>
    %80 = arith.negf %79 : vector<2x1xf32>
    %81 = math.exp %80 : vector<2x1xf32>
    %cst_37 = arith.constant 1.000000e+00 : f32
    %82 = vector.broadcast %cst_37 : f32 to vector<2x1xf32>
    %83 = arith.addf %82, %81 : vector<2x1xf32>
    %84 = arith.divf %82, %83 : vector<2x1xf32>
    %85 = vector.broadcast %84 : vector<2x1xf32> to vector<2x32xf32>
    %86 = arith.mulf %85, %65 : vector<2x32xf32>
    %87 = arith.addf %58, %86 : vector<2x32xf32>
    %c2_i32 = arith.constant 2 : i32
    %88 = math.tanh %87 : vector<2x32xf32>
    %cst_38 = arith.constant dense<0.000000e+00> : vector<2x32xf32>
    %89 = tpu.matmul %88, %27, %cst_38 {dimension_numbers = #tpu.dot_dimension_numbers<[1], [0], [0], [1], [0, 0, 1, 1], [], []>} : vector<2x32xf32>, vector<32x32xf32>, vector<2x32xf32> -> vector<2x32xf32>
    %90 = vector.broadcast %28 : vector<1x32xf32> to vector<2x32xf32>
    %91 = arith.addf %89, %90 : vector<2x32xf32>
    %92 = arith.index_cast %c2_i32 : i32 to index
    %c0_39 = arith.constant 0 : index
    %c0_40 = arith.constant 0 : index
    %93 = vector.load %arg1[%92, %c0_39, %c0_40] : memref<4x2x32xf32, #tpu.memory_space<vmem>>, vector<1x2x32xf32>
    %94 = vector.shape_cast %93 : vector<1x2x32xf32> to vector<2x32xf32>
    %95 = arith.mulf %94, %91 : vector<2x32xf32>
    %cst_41 = arith.constant dense<0.000000e+00> : vector<2xf32>
    %96 = vector.multi_reduction <add>, %95, %cst_41 [1] : vector<2x32xf32> to vector<2xf32>
    %97 = vector.shape_cast %96 : vector<2xf32> to vector<2x1xf32>
    %98 = vector.broadcast %10 : vector<1x32xf32> to vector<2x32xf32>
    %99 = arith.mulf %94, %98 : vector<2x32xf32>
    %cst_42 = arith.constant dense<0.000000e+00> : vector<2xf32>
    %100 = vector.multi_reduction <add>, %99, %cst_42 [1] : vector<2x32xf32> to vector<2xf32>
    %101 = vector.shape_cast %100 : vector<2xf32> to vector<2x1xf32>
    %102 = vector.broadcast %11 : vector<1x1xf32> to vector<2x1xf32>
    %103 = arith.addf %101, %102 : vector<2x1xf32>
    %104 = arith.mulf %94, %22 : vector<2x32xf32>
    %cst_43 = arith.constant dense<0.000000e+00> : vector<2xf32>
    %105 = vector.multi_reduction <add>, %104, %cst_43 [1] : vector<2x32xf32> to vector<2xf32>
    %106 = vector.shape_cast %105 : vector<2xf32> to vector<2x1xf32>
    %107 = arith.addf %103, %106 : vector<2x1xf32>
    %108 = arith.subf %107, %97 : vector<2x1xf32>
    %109 = arith.negf %108 : vector<2x1xf32>
    %110 = math.exp %109 : vector<2x1xf32>
    %cst_44 = arith.constant 1.000000e+00 : f32
    %111 = vector.broadcast %cst_44 : f32 to vector<2x1xf32>
    %112 = arith.addf %111, %110 : vector<2x1xf32>
    %113 = arith.divf %111, %112 : vector<2x1xf32>
    %114 = vector.broadcast %113 : vector<2x1xf32> to vector<2x32xf32>
    %115 = arith.mulf %114, %94 : vector<2x32xf32>
    %116 = arith.addf %87, %115 : vector<2x32xf32>
    %c3_i32 = arith.constant 3 : i32
    %117 = math.tanh %116 : vector<2x32xf32>
    %cst_45 = arith.constant dense<0.000000e+00> : vector<2x32xf32>
    %118 = tpu.matmul %117, %27, %cst_45 {dimension_numbers = #tpu.dot_dimension_numbers<[1], [0], [0], [1], [0, 0, 1, 1], [], []>} : vector<2x32xf32>, vector<32x32xf32>, vector<2x32xf32> -> vector<2x32xf32>
    %119 = vector.broadcast %28 : vector<1x32xf32> to vector<2x32xf32>
    %120 = arith.addf %118, %119 : vector<2x32xf32>
    %121 = vector.shape_cast %120 : vector<2x32xf32> to vector<1x2x32xf32>
    %122 = vector.broadcast %121 : vector<1x2x32xf32> to vector<4x2x32xf32>
    %123 = arith.mulf %0, %122 : vector<4x2x32xf32>
    %cst_46 = arith.constant dense<0.000000e+00> : vector<4x2xf32>
    %124 = vector.multi_reduction <add>, %123, %cst_46 [2] : vector<4x2x32xf32> to vector<4x2xf32>
    %125 = arith.addf %17, %26 : vector<4x2xf32>
    %126 = arith.subf %125, %124 : vector<4x2xf32>
    %c0_47 = arith.constant 0 : index
    %c0_48 = arith.constant 0 : index
    %127 = vector.load %arg10[%c0_47, %c0_48] : memref<4x2xf32, #tpu.memory_space<vmem>>, vector<4x2xf32>
    tpu.vector_store %arg10[%c0_47, %c0_48], %126 {strides = array<i32>} : memref<4x2xf32, #tpu.memory_space<vmem>>, vector<4x2xf32>,
    return
  }
  func.func @transform_0(%arg0: i32) -> (i32, i32, i32) {
    %c0_i32 = arith.constant 0 : i32
    %c0_i32_0 = arith.constant 0 : i32
    %c0_i32_1 = arith.constant 0 : i32
    return %c0_i32, %arg0, %c0_i32_0 : i32, i32, i32
  }
  func.func @transform_1(%arg0: i32) -> (i32, i32) {
    %c0_i32 = arith.constant 0 : i32
    %c0_i32_0 = arith.constant 0 : i32
    %c0_i32_1 = arith.constant 0 : i32
    return %c0_i32, %c0_i32_0 : i32, i32
  }
  func.func @transform_2(%arg0: i32) -> (i32, i32) {
    %c0_i32 = arith.constant 0 : i32
    %c0_i32_0 = arith.constant 0 : i32
    %c0_i32_1 = arith.constant 0 : i32
    return %c0_i32, %c0_i32_0 : i32, i32
  }
  func.func @transform_3(%arg0: i32) -> (i32, i32) {
    %c0_i32 = arith.constant 0 : i32
    %c0_i32_0 = arith.constant 0 : i32
    %c0_i32_1 = arith.constant 0 : i32
    return %c0_i32, %c0_i32_0 : i32, i32
  }
  func.func @transform_4(%arg0: i32) -> (i32, i32) {
    %c0_i32 = arith.constant 0 : i32
    %c0_i32_0 = arith.constant 0 : i32
    %c0_i32_1 = arith.constant 0 : i32
    return %c0_i32, %c0_i32_0 : i32, i32
  }
  func.func @transform_5(%arg0: i32) -> (i32, i32) {
    %c0_i32 = arith.constant 0 : i32
    %c0_i32_0 = arith.constant 0 : i32
    %c0_i32_1 = arith.constant 0 : i32
    return %c0_i32, %c0_i32_0 : i32, i32
  }
  func.func @transform_6(%arg0: i32) -> (i32, i32) {
    %c0_i32 = arith.constant 0 : i32
    %c0_i32_0 = arith.constant 0 : i32
    %c0_i32_1 = arith.constant 0 : i32
    return %c0_i32, %c0_i32_0 : i32, i32
  }
  func.func @transform_7(%arg0: i32) -> (i32, i32) {
    %c0_i32 = arith.constant 0 : i32
    %c0_i32_0 = arith.constant 0 : i32
    %c0_i32_1 = arith.constant 0 : i32
    return %c0_i32, %c0_i32_0 : i32, i32
  }
  func.func @transform_8(%arg0: i32) -> (i32, i32) {
    %c0_i32 = arith.constant 0 : i32
    %c0_i32_0 = arith.constant 0 : i32
    %c0_i32_1 = arith.constant 0 : i32
    return %c0_i32, %c0_i32_0 : i32, i32
  }
  func.func @transform_9(%arg0: i32) -> (i32, i32) {
    %c0_i32 = arith.constant 0 : i32
    %c0_i32_0 = arith.constant 0 : i32
    return %c0_i32, %arg0 : i32, i32
  }
}

</mosaic_0001>

<llo_original>
// kernel: sentence_tagger_forward.11
$region0: #{sentence_tagger_forward.11}
  #allocation0 [shape = 'u32[]', space=smem, size = 0x4, offset = 0x4, fixed_abs, tag = 'smem constant byte address 0x4 - core index']
  #allocation1 [shape = 'u32[144,128]{1,0:T(1,128)}', space=vmem, size = 0x12000, scoped, tag = 'internal scratch']
  %s0 = inlined_call_operand.vmem [shape: bf16[64,16], index: 0, kind: input, shape index: {}]
  %s1 = inlined_call_operand.vmem [shape: bf16[64,16], index: 1, kind: input, shape index: {}]
  %s2 = inlined_call_operand.vmem [shape: bf16[16,64], index: 2, kind: input, shape index: {}]
  %s3 = inlined_call_operand.vmem [shape: bf16[16,64], index: 3, kind: input, shape index: {}]
  %s4 = inlined_call_operand.vmem [shape: bf16[16,64], index: 4, kind: input, shape index: {}]
  %s5 = inlined_call_operand.vmem [shape: bf16[16,64], index: 5, kind: input, shape index: {}]
  %s6 = inlined_call_operand.vmem [shape: f32[1,64], index: 6, kind: input, shape index: {}]
  %s7 = inlined_call_operand.vmem [shape: f32[1,64], index: 7, kind: input, shape index: {}]
  %s8 = inlined_call_operand.vmem [shape: bf16[64,64], index: 8, kind: output, shape index: {0}]
  %s9 = inlined_call_operand.vmem [shape: bf16[64,64], index: 9, kind: output, shape index: {1}]
  %10 = xla_tuple %s8, %s9
  %s11 = sld [smem:[#allocation0]]
  $region50: #{sentence_tagger_forward.11} parent=0
    _
  %s13 = ssub.s32 1, %s11
  %s14 = scalar_select 0, %s13, %s11
  // Predicated region
  $region2: #{sentence_tagger_forward.11} parent=0 // pred_check
    _
  $region3: #{sentence_tagger_forward.11} parent=0 // pred_check_branch
    %16 = sbr.rel (0) target = $region5
  $region4: #{sentence_tagger_forward.11} parent=0 // pred_region
    _
  $region5: #{sentence_tagger_forward.11} parent=0 // pred_fallthru
    _
  // Predicated region
  $region6: #{sentence_tagger_forward.11} parent=0 // pred_check
    _
  $region7: #{sentence_tagger_forward.11} parent=0 // pred_check_branch
    %18 = sbr.rel (0) target = $region9
  $region8: #{sentence_tagger_forward.11} parent=0 // pred_region
    _
  $region9: #{sentence_tagger_forward.11} parent=0 // pred_fallthru
    _
  // Predicated region
  $region10: #{sentence_tagger_forward.11} parent=0 // pred_check
    _
  $region11: #{sentence_tagger_forward.11} parent=0 // pred_check_branch
    %20 = sbr.rel (0) target = $region13
  $region12: #{sentence_tagger_forward.11} parent=0 // pred_region
    _
  $region13: #{sentence_tagger_forward.11} parent=0 // pred_fallthru
    _
  // Predicated region
  $region14: #{sentence_tagger_forward.11} parent=0 // pred_check
    _
  $region15: #{sentence_tagger_forward.11} parent=0 // pred_check_branch
    %22 = sbr.rel (0) target = $region17
  $region16: #{sentence_tagger_forward.11} parent=0 // pred_region
    _
  $region17: #{sentence_tagger_forward.11} parent=0 // pred_fallthru
    _
  // Predicated region
  $region18: #{sentence_tagger_forward.11} parent=0 // pred_check
    _
  $region19: #{sentence_tagger_forward.11} parent=0 // pred_check_branch
    %24 = sbr.rel (0) target = $region21
  $region20: #{sentence_tagger_forward.11} parent=0 // pred_region
    _
  $region21: #{sentence_tagger_forward.11} parent=0 // pred_fallthru
    _
  // Predicated region
  $region22: #{sentence_tagger_forward.11} parent=0 // pred_check
    _
  $region23: #{sentence_tagger_forward.11} parent=0 // pred_check_branch
    %26 = sbr.rel (0) target = $region25
  $region24: #{sentence_tagger_forward.11} parent=0 // pred_region
    _
  $region25: #{sentence_tagger_forward.11} parent=0 // pred_fallthru
    _
  // Predicated region
  $region26: #{sentence_tagger_forward.11} parent=0 // pred_check
    _
  $region27: #{sentence_tagger_forward.11} parent=0 // pred_check_branch
    %28 = sbr.rel (0) target = $region29
  $region28: #{sentence_tagger_forward.11} parent=0 // pred_region
    _
  $region29: #{sentence_tagger_forward.11} parent=0 // pred_fallthru
    _
  // Predicated region
  $region30: #{sentence_tagger_forward.11} parent=0 // pred_check
    _
  $region31: #{sentence_tagger_forward.11} parent=0 // pred_check_branch
    %30 = sbr.rel (0) target = $region33
  $region32: #{sentence_tagger_forward.11} parent=0 // pred_region
    _
  $region33: #{sentence_tagger_forward.11} parent=0 // pred_fallthru
    _
  %v32 = vld [vmem:[%s0] sm:$0xf]
  %v33 = vld [vmem:[%s0 + $0x4] sm:$0xf]
  %v34 = vld [vmem:[%s0 + $0x8] sm:$0xf]
  %v35 = vld [vmem:[%s0 + $0xc] sm:$0xf]
  %v36 = vld [vmem:[%s0 + $0x10] sm:$0xf]
  %v37 = vld [vmem:[%s0 + $0x14] sm:$0xf]
  %v38 = vld [vmem:[%s0 + $0x18] sm:$0xf]
  %v39 = vld [vmem:[%s0 + $0x1c] sm:$0xf]
  %v40 = vld [vmem:[%s1] sm:$0xf]
  %v41 = vld [vmem:[%s1 + $0x4] sm:$0xf]
  %v42 = vld [vmem:[%s1 + $0x8] sm:$0xf]
  %v43 = vld [vmem:[%s1 + $0xc] sm:$0xf]
  %v44 = vld [vmem:[%s1 + $0x10] sm:$0xf]
  %v45 = vld [vmem:[%s1 + $0x14] sm:$0xf]
  %v46 = vld [vmem:[%s1 + $0x18] sm:$0xf]
  %v47 = vld [vmem:[%s1 + $0x1c] sm:$0xf]
  %v48 = vld [vmem:[%s2] sm:$0xf]
  %v49 = vld [vmem:[%s2 + $0x4] sm:$0xf]
  %v50 = vld [vmem:[%s3] sm:$0xf]
  %v51 = vld [vmem:[%s3 + $0x4] sm:$0xf]
  %v60 = vunpack.c.l.b16 %v40
  %v61 = vunpack.c.l.b16 %v41
  %v62 = vunpack.c.l.b16 %v42
  %v63 = vunpack.c.l.b16 %v43
  %v64 = vunpack.c.l.b16 %v44
  %v65 = vunpack.c.l.b16 %v45
  %v66 = vunpack.c.l.b16 %v46
  %v67 = vunpack.c.l.b16 %v47
  %v68 = vpack.c.b16 %v61, %v60
  %v69 = vpack.c.b16 %v63, %v62
  %v70 = vpack.c.b16 %v65, %v64
  %v71 = vpack.c.b16 %v67, %v66
  %v74 = vunpack.c.l.b16 %v50
  %v75 = vunpack.c.l.b16 %v51
  %v76 = vpack.c.b16 %v75, %v74
  %vm78 = vcmask 130048
  %v80 = vsel %vm78, %v68, 0
  %v83 = vsel %vm78, %v69, 0
  %v86 = vsel %vm78, %v70, 0
  %v89 = vsel %vm78, %v71, 0
  %91 = vmatprep.subr.bf16.mxu0 0
  %92 = vmatpush1.bf16.msra.mxu0 0
  %93 = vmatprep.subr.bf16.mxu0 0
  %94 = vmatpush1.bf16.msra.mxu0 0
  %95 = vmatprep.subr.bf16.mxu0 0
  %96 = vmatpush1.bf16.msra.mxu0 0
  %97 = vmatprep.subr.bf16.mxu0 0
  %98 = vmatpush1.bf16.msra.mxu0 0
  %99 = vmatprep.subr.bf16.mxu0 0
  %100 = vmatpush1.bf16.msra.mxu0 0
  %101 = vmatprep.subr.bf16.mxu0 0
  %102 = vmatpush1.bf16.msra.mxu0 0
  %103 = vmatprep.subr.bf16.mxu0 0
  %104 = vmatpush1.bf16.msra.mxu0 0
  %105 = vmatprep.subr.bf16.mxu0 0
  %106 = vmatpush1.bf16.msra.mxu0 %v76
  %107 = vmatprep.subr.bf16.mxu0 0
  %108 = vmatpush2.bf16.msra.mxu0 0
  %109 = vmatprep.subr.bf16.mxu0 0
  %110 = vmatpush2.bf16.msra.mxu0 0
  %111 = vmatprep.subr.bf16.mxu0 0
  %112 = vmatpush2.bf16.msra.mxu0 0
  %113 = vmatprep.subr.bf16.mxu0 0
  %114 = vmatpush2.bf16.msra.mxu0 0
  %115 = vmatprep.subr.bf16.mxu0 0
  %116 = vmatpush2.bf16.msra.mxu0 0
  %117 = vmatprep.subr.bf16.mxu0 0
  %118 = vmatpush2.bf16.msra.mxu0 0
  %119 = vmatprep.subr.bf16.mxu0 0
  %120 = vmatpush2.bf16.msra.mxu0 0
  %121 = vmatprep.subr.bf16.mxu0 0
  %122 = vmatpush2.bf16.msra.mxu0 0
  %123 = vmatprep.mubr.bf16.mxu0 0
  %124 = vmatmul.mubr.bf16.gmra.mxu0 %v80
  %v125 = vpop.f32.mrf.mxu0
  %v126 = vadd.f32 0.0, %v125
  %v127 = vpop.f32.mrf.mxu0
  %v128 = vpop.f32.mrf.mxu0
  %v129 = vadd.f32 0.0, %v128
  %v130 = vpop.f32.mrf.mxu0
  %131 = vmatprep.mubr.bf16.mxu0 0
  %132 = vmatmul.mubr.bf16.gmra.mxu0 %v83
  %v133 = vpop.f32.mrf.mxu0
  %v134 = vadd.f32 0.0, %v133
  %v135 = vpop.f32.mrf.mxu0
  %v136 = vpop.f32.mrf.mxu0
  %v137 = vadd.f32 0.0, %v136
  %v138 = vpop.f32.mrf.mxu0
  %139 = vmatprep.mubr.bf16.mxu0 0
  %140 = vmatmul.mubr.bf16.gmra.mxu0 %v86
  %v141 = vpop.f32.mrf.mxu0
  %v142 = vadd.f32 0.0, %v141
  %v143 = vpop.f32.mrf.mxu0
  %v144 = vpop.f32.mrf.mxu0
  %v145 = vadd.f32 0.0, %v144
  %v146 = vpop.f32.mrf.mxu0
  %147 = vmatprep.mubr.bf16.mxu0 0
  %148 = vmatmul.mubr.bf16.gmra.mxu0 %v89
  %v149 = vpop.f32.mrf.mxu0
  %v150 = vadd.f32 0.0, %v149
  %v151 = vpop.f32.mrf.mxu0
  %v152 = vpop.f32.mrf.mxu0
  %v153 = vadd.f32 0.0, %v152
  %v154 = vpop.f32.mrf.mxu0
  %155 = vdwg.mxu0
  %v164 = vunpack.c.l.b16 %v32
  %v165 = vunpack.c.l.b16 %v33
  %v166 = vunpack.c.l.b16 %v34
  %v167 = vunpack.c.l.b16 %v35
  %v168 = vunpack.c.l.b16 %v36
  %v169 = vunpack.c.l.b16 %v37
  %v170 = vunpack.c.l.b16 %v38
  %v171 = vunpack.c.l.b16 %v39
  %v172 = vpack.c.b16 %v165, %v164
  %v173 = vpack.c.b16 %v167, %v166
  %v174 = vpack.c.b16 %v169, %v168
  %v175 = vpack.c.b16 %v171, %v170
  %v178 = vunpack.c.l.b16 %v48
  %v179 = vunpack.c.l.b16 %v49
  %v180 = vpack.c.b16 %v179, %v178
  %v183 = vsel %vm78, %v172, 0
  %v186 = vsel %vm78, %v173, 0
  %v189 = vsel %vm78, %v174, 0
  %v192 = vsel %vm78, %v175, 0
  %194 = vmatprep.subr.bf16.mxu0 0
  %195 = vmatpush1.bf16.msra.mxu0 0
  %196 = vmatprep.subr.bf16.mxu0 0
  %197 = vmatpush1.bf16.msra.mxu0 0
  %198 = vmatprep.subr.bf16.mxu0 0
  %199 = vmatpush1.bf16.msra.mxu0 0
  %200 = vmatprep.subr.bf16.mxu0 0
  %201 = vmatpush1.bf16.msra.mxu0 0
  %202 = vmatprep.subr.bf16.mxu0 0
  %203 = vmatpush1.bf16.msra.mxu0 0
  %204 = vmatprep.subr.bf16.mxu0 0
  %205 = vmatpush1.bf16.msra.mxu0 0
  %206 = vmatprep.subr.bf16.mxu0 0
  %207 = vmatpush1.bf16.msra.mxu0 0
  %208 = vmatprep.subr.bf16.mxu0 0
  %209 = vmatpush1.bf16.msra.mxu0 %v180
  %210 = vmatprep.subr.bf16.mxu0 0
  %211 = vmatpush2.bf16.msra.mxu0 0
  %212 = vmatprep.subr.bf16.mxu0 0
  %213 = vmatpush2.bf16.msra.mxu0 0
  %214 = vmatprep.subr.bf16.mxu0 0
  %215 = vmatpush2.bf16.msra.mxu0 0
  %216 = vmatprep.subr.bf16.mxu0 0
  %217 = vmatpush2.bf16.msra.mxu0 0
  %218 = vmatprep.subr.bf16.mxu0 0
  %219 = vmatpush2.bf16.msra.mxu0 0
  %220 = vmatprep.subr.bf16.mxu0 0
  %221 = vmatpush2.bf16.msra.mxu0 0
  %222 = vmatprep.subr.bf16.mxu0 0
  %223 = vmatpush2.bf16.msra.mxu0 0
  %224 = vmatprep.subr.bf16.mxu0 0
  %225 = vmatpush2.bf16.msra.mxu0 0
  %226 = vmatprep.mubr.bf16.mxu0 0
  %227 = vmatmul.mubr.bf16.gmra.mxu0 %v183
  %v228 = vpop.f32.mrf.mxu0
  %v229 = vadd.f32 %v126, %v228
  %v230 = vpop.f32.mrf.mxu0
  %v231 = vpop.f32.mrf.mxu0
  %v232 = vadd.f32 %v129, %v231
  %v233 = vpop.f32.mrf.mxu0
  %234 = vmatprep.mubr.bf16.mxu0 0
  %235 = vmatmul.mubr.bf16.gmra.mxu0 %v186
  %v236 = vpop.f32.mrf.mxu0
  %v237 = vadd.f32 %v134, %v236
  %v238 = vpop.f32.mrf.mxu0
  %v239 = vpop.f32.mrf.mxu0
  %v240 = vadd.f32 %v137, %v239
  %v241 = vpop.f32.mrf.mxu0
  %242 = vmatprep.mubr.bf16.mxu0 0
  %243 = vmatmul.mubr.bf16.gmra.mxu0 %v189
  %v244 = vpop.f32.mrf.mxu0
  %v245 = vadd.f32 %v142, %v244
  %v246 = vpop.f32.mrf.mxu0
  %v247 = vpop.f32.mrf.mxu0
  %v248 = vadd.f32 %v145, %v247
  %v249 = vpop.f32.mrf.mxu0
  %250 = vmatprep.mubr.bf16.mxu0 0
  %251 = vmatmul.mubr.bf16.gmra.mxu0 %v192
  %v252 = vpop.f32.mrf.mxu0
  %v253 = vadd.f32 %v150, %v252
  %v254 = vpop.f32.mrf.mxu0
  %v255 = vpop.f32.mrf.mxu0
  %v256 = vadd.f32 %v153, %v255
  %v257 = vpop.f32.mrf.mxu0
  %258 = vdwg.mxu0
  %v259 = vld [vmem:[%s6] sm:$0x1]
  %v261 = vlaneseq
  %v262 = vshrl.u32 %v261, 7
  %v263 = vsub.s32 0, %v262
  %v264 = vrot.slane %v259, %v263
  %v266 = vadd.f32 %v229, %v264
  %v267 = vadd.f32 %v232, %v264
  %v268 = vadd.f32 %v237, %v264
  %v269 = vadd.f32 %v240, %v264
  %v270 = vadd.f32 %v245, %v264
  %v271 = vadd.f32 %v248, %v264
  %v272 = vadd.f32 %v253, %v264
  %v273 = vadd.f32 %v256, %v264
  %v274 = vld [vmem:[%s4] sm:$0xf]
  %v275 = vld [vmem:[%s4 + $0x4] sm:$0xf]
  %v276 = vld [vmem:[%s5] sm:$0xf]
  %v277 = vld [vmem:[%s5 + $0x4] sm:$0xf]
  %v280 = vunpack.c.l.b16 %v276
  %v281 = vunpack.c.l.b16 %v277
  %v282 = vpack.c.b16 %v281, %v280
  %284 = vmatprep.subr.bf16.mxu0 0
  %285 = vmatpush1.bf16.msra.mxu0 0
  %286 = vmatprep.subr.bf16.mxu0 0
  %287 = vmatpush1.bf16.msra.mxu0 0
  %288 = vmatprep.subr.bf16.mxu0 0
  %289 = vmatpush1.bf16.msra.mxu0 0
  %290 = vmatprep.subr.bf16.mxu0 0
  %291 = vmatpush1.bf16.msra.mxu0 0
  %292 = vmatprep.subr.bf16.mxu0 0
  %293 = vmatpush1.bf16.msra.mxu0 0
  %294 = vmatprep.subr.bf16.mxu0 0
  %295 = vmatpush1.bf16.msra.mxu0 0
  %296 = vmatprep.subr.bf16.mxu0 0
  %297 = vmatpush1.bf16.msra.mxu0 0
  %298 = vmatprep.subr.bf16.mxu0 0
  %299 = vmatpush1.bf16.msra.mxu0 %v282
  %300 = vmatprep.subr.bf16.mxu0 0
  %301 = vmatpush2.bf16.msra.mxu0 0
  %302 = vmatprep.subr.bf16.mxu0 0
  %303 = vmatpush2.bf16.msra.mxu0 0
  %304 = vmatprep.subr.bf16.mxu0 0
  %305 = vmatpush2.bf16.msra.mxu0 0
  %306 = vmatprep.subr.bf16.mxu0 0
  %307 = vmatpush2.bf16.msra.mxu0 0
  %308 = vmatprep.subr.bf16.mxu0 0
  %309 = vmatpush2.bf16.msra.mxu0 0
  %310 = vmatprep.subr.bf16.mxu0 0
  %311 = vmatpush2.bf16.msra.mxu0 0
  %312 = vmatprep.subr.bf16.mxu0 0
  %313 = vmatpush2.bf16.msra.mxu0 0
  %314 = vmatprep.subr.bf16.mxu0 0
  %315 = vmatpush2.bf16.msra.mxu0 0
  %316 = vmatprep.mubr.bf16.mxu0 0
  %317 = vmatmul.mubr.bf16.gmra.mxu0 %v80
  %v318 = vpop.f32.mrf.mxu0
  %v319 = vadd.f32 0.0, %v318
  %v320 = vpop.f32.mrf.mxu0
  %v321 = vpop.f32.mrf.mxu0
  %v322 = vadd.f32 0.0, %v321
  %v323 = vpop.f32.mrf.mxu0
  %324 = vmatprep.mubr.bf16.mxu0 0
  %325 = vmatmul.mubr.bf16.gmra.mxu0 %v83
  %v326 = vpop.f32.mrf.mxu0
  %v327 = vadd.f32 0.0, %v326
  %v328 = vpop.f32.mrf.mxu0
  %v329 = vpop.f32.mrf.mxu0
  %v330 = vadd.f32 0.0, %v329
  %v331 = vpop.f32.mrf.mxu0
  %332 = vmatprep.mubr.bf16.mxu0 0
  %333 = vmatmul.mubr.bf16.gmra.mxu0 %v86
  %v334 = vpop.f32.mrf.mxu0
  %v335 = vadd.f32 0.0, %v334
  %v336 = vpop.f32.mrf.mxu0
  %v337 = vpop.f32.mrf.mxu0
  %v338 = vadd.f32 0.0, %v337
  %v339 = vpop.f32.mrf.mxu0
  %340 = vmatprep.mubr.bf16.mxu0 0
  %341 = vmatmul.mubr.bf16.gmra.mxu0 %v89
  %v342 = vpop.f32.mrf.mxu0
  %v343 = vadd.f32 0.0, %v342
  %v344 = vpop.f32.mrf.mxu0
  %v345 = vpop.f32.mrf.mxu0
  %v346 = vadd.f32 0.0, %v345
  %v347 = vpop.f32.mrf.mxu0
  %348 = vdwg.mxu0
  %v351 = vunpack.c.l.b16 %v274
  %v352 = vunpack.c.l.b16 %v275
  %v353 = vpack.c.b16 %v352, %v351
  %355 = vmatprep.subr.bf16.mxu0 0
  %356 = vmatpush1.bf16.msra.mxu0 0
  %357 = vmatprep.subr.bf16.mxu0 0
  %358 = vmatpush1.bf16.msra.mxu0 0
  %359 = vmatprep.subr.bf16.mxu0 0
  %360 = vmatpush1.bf16.msra.mxu0 0
  %361 = vmatprep.subr.bf16.mxu0 0
  %362 = vmatpush1.bf16.msra.mxu0 0
  %363 = vmatprep.subr.bf16.mxu0 0
  %364 = vmatpush1.bf16.msra.mxu0 0
  %365 = vmatprep.subr.bf16.mxu0 0
  %366 = vmatpush1.bf16.msra.mxu0 0
  %367 = vmatprep.subr.bf16.mxu0 0
  %368 = vmatpush1.bf16.msra.mxu0 0
  %369 = vmatprep.subr.bf16.mxu0 0
  %370 = vmatpush1.bf16.msra.mxu0 %v353
  %371 = vmatprep.subr.bf16.mxu0 0
  %372 = vmatpush2.bf16.msra.mxu0 0
  %373 = vmatprep.subr.bf16.mxu0 0
  %374 = vmatpush2.bf16.msra.mxu0 0
  %375 = vmatprep.subr.bf16.mxu0 0
  %376 = vmatpush2.bf16.msra.mxu0 0
  %377 = vmatprep.subr.bf16.mxu0 0
  %378 = vmatpush2.bf16.msra.mxu0 0
  %379 = vmatprep.subr.bf16.mxu0 0
  %380 = vmatpush2.bf16.msra.mxu0 0
  %381 = vmatprep.subr.bf16.mxu0 0
  %382 = vmatpush2.bf16.msra.mxu0 0
  %383 = vmatprep.subr.bf16.mxu0 0
  %384 = vmatpush2.bf16.msra.mxu0 0
  %385 = vmatprep.subr.bf16.mxu0 0
  %386 = vmatpush2.bf16.msra.mxu0 0
  %387 = vmatprep.mubr.bf16.mxu0 0
  %388 = vmatmul.mubr.bf16.gmra.mxu0 %v183
  %v389 = vpop.f32.mrf.mxu0
  %v390 = vadd.f32 %v319, %v389
  %v391 = vpop.f32.mrf.mxu0
  %v392 = vpop.f32.mrf.mxu0
  %v393 = vadd.f32 %v322, %v392
  %v394 = vpop.f32.mrf.mxu0
  %395 = vmatprep.mubr.bf16.mxu0 0
  %396 = vmatmul.mubr.bf16.gmra.mxu0 %v186
  %v397 = vpop.f32.mrf.mxu0
  %v398 = vadd.f32 %v327, %v397
  %v399 = vpop.f32.mrf.mxu0
  %v400 = vpop.f32.mrf.mxu0
  %v401 = vadd.f32 %v330, %v400
  %v402 = vpop.f32.mrf.mxu0
  %403 = vmatprep.mubr.bf16.mxu0 0
  %404 = vmatmul.mubr.bf16.gmra.mxu0 %v189
  %v405 = vpop.f32.mrf.mxu0
  %v406 = vadd.f32 %v335, %v405
  %v407 = vpop.f32.mrf.mxu0
  %v408 = vpop.f32.mrf.mxu0
  %v409 = vadd.f32 %v338, %v408
  %v410 = vpop.f32.mrf.mxu0
  %411 = vmatprep.mubr.bf16.mxu0 0
  %412 = vmatmul.mubr.bf16.gmra.mxu0 %v192
  %v413 = vpop.f32.mrf.mxu0
  %v414 = vadd.f32 %v343, %v413
  %v415 = vpop.f32.mrf.mxu0
  %v416 = vpop.f32.mrf.mxu0
  %v417 = vadd.f32 %v346, %v416
  %v418 = vpop.f32.mrf.mxu0
  %419 = vdwg.mxu0
  %v420 = vld [vmem:[%s7] sm:$0x1]
  %v422 = vlaneseq
  %v423 = vshrl.u32 %v422, 7
  %v424 = vsub.s32 0, %v423
  %v425 = vrot.slane %v420, %v424
  %v427 = vadd.f32 %v390, %v425
  %v428 = vadd.f32 %v393, %v425
  %v429 = vadd.f32 %v398, %v425
  %v430 = vadd.f32 %v401, %v425
  %v431 = vadd.f32 %v406, %v425
  %v432 = vadd.f32 %v409, %v425
  %v433 = vadd.f32 %v414, %v425
  %v434 = vadd.f32 %v417, %v425
  %v435 = vpack.c.bf16 %v267, %v266
  %v436 = vpack.c.bf16 %v269, %v268
  %v437 = vpack.c.bf16 %v271, %v270
  %v438 = vpack.c.bf16 %v273, %v272
  %v443 = vunpack.c.l.b16 %v435
  %v444 = vunpack.c.h.b16 %v435
  %v445 = vunpack.c.l.b16 %v436
  %v446 = vunpack.c.h.b16 %v436
  %v447 = vunpack.c.l.b16 %v437
  %v448 = vunpack.c.h.b16 %v437
  %v449 = vunpack.c.l.b16 %v438
  %v450 = vunpack.c.h.b16 %v438
  %v451 = vpack.c.b16 %v443, %v443
  %v452 = vpack.c.b16 %v444, %v444
  %v453 = vpack.c.b16 %v445, %v445
  %v454 = vpack.c.b16 %v446, %v446
  %v455 = vpack.c.b16 %v447, %v447
  %v456 = vpack.c.b16 %v448, %v448
  %v457 = vpack.c.b16 %v449, %v449
  %v458 = vpack.c.b16 %v450, %v450
  %vm467 = vcmask 519168
  %468 = vst.msk [vmem:[%s8] sm:$0xf] %vm467, %v451
  %469 = vst.msk [vmem:[%s8 + $0x4] sm:$0xf] %vm467, %v452
  %470 = vst.msk [vmem:[%s8 + $0x8] sm:$0xf] %vm467, %v453
  %471 = vst.msk [vmem:[%s8 + $0xc] sm:$0xf] %vm467, %v454
  %472 = vst.msk [vmem:[%s8 + $0x10] sm:$0xf] %vm467, %v455
  %473 = vst.msk [vmem:[%s8 + $0x14] sm:$0xf] %vm467, %v456
  %474 = vst.msk [vmem:[%s8 + $0x18] sm:$0xf] %vm467, %v457
  %475 = vst.msk [vmem:[%s8 + $0x1c] sm:$0xf] %vm467, %v458
  %v476 = vpack.c.bf16 %v428, %v427
  %v477 = vpack.c.bf16 %v430, %v429
  %v478 = vpack.c.bf16 %v432, %v431
  %v479 = vpack.c.bf16 %v434, %v433
  %v484 = vunpack.c.l.b16 %v476
  %v485 = vunpack.c.h.b16 %v476
  %v486 = vunpack.c.l.b16 %v477
  %v487 = vunpack.c.h.b16 %v477
  %v488 = vunpack.c.l.b16 %v478
  %v489 = vunpack.c.h.b16 %v478
  %v490 = vunpack.c.l.b16 %v479
  %v491 = vunpack.c.h.b16 %v479
  %v492 = vpack.c.b16 %v484, %v484
  %v493 = vpack.c.b16 %v485, %v485
  %v494 = vpack.c.b16 %v486, %v486
  %v495 = vpack.c.b16 %v487, %v487
  %v496 = vpack.c.b16 %v488, %v488
  %v497 = vpack.c.b16 %v489, %v489
  %v498 = vpack.c.b16 %v490, %v490
  %v499 = vpack.c.b16 %v491, %v491
  %508 = vst.msk [vmem:[%s9] sm:$0xf] %vm467, %v492
  %509 = vst.msk [vmem:[%s9 + $0x4] sm:$0xf] %vm467, %v493
  %510 = vst.msk [vmem:[%s9 + $0x8] sm:$0xf] %vm467, %v494
  %511 = vst.msk [vmem:[%s9 + $0xc] sm:$0xf] %vm467, %v495
  %512 = vst.msk [vmem:[%s9 + $0x10] sm:$0xf] %vm467, %v496
  %513 = vst.msk [vmem:[%s9 + $0x14] sm:$0xf] %vm467, %v497
  %514 = vst.msk [vmem:[%s9 + $0x18] sm:$0xf] %vm467, %v498
  %515 = vst.msk [vmem:[%s9 + $0x1c] sm:$0xf] %vm467, %v499
  // Predicated region
  $region34: #{sentence_tagger_forward.11} parent=0 // pred_check
    _
  $region35: #{sentence_tagger_forward.11} parent=0 // pred_check_branch
    %517 = sbr.rel (0) target = $region37
  $region36: #{sentence_tagger_forward.11} parent=0 // pred_region
    _
  $region37: #{sentence_tagger_forward.11} parent=0 // pred_fallthru
    _
  // Predicated region
  $region38: #{sentence_tagger_forward.11} parent=0 // pred_check
    _
  $region39: #{sentence_tagger_forward.11} parent=0 // pred_check_branch
    %519 = sbr.rel (0) target = $region41
  $region40: #{sentence_tagger_forward.11} parent=0 // pred_region
    _
  $region41: #{sentence_tagger_forward.11} parent=0 // pred_fallthru
    _
  // Predicated region
  $region42: #{sentence_tagger_forward.11} parent=0 // pred_check
    _
  $region43: #{sentence_tagger_forward.11} parent=0 // pred_check_branch
    %521 = sbr.rel (0) target = $region45
  $region44: #{sentence_tagger_forward.11} parent=0 // pred_region
    _
  $region45: #{sentence_tagger_forward.11} parent=0 // pred_fallthru
    _
  // Predicated region
  $region46: #{sentence_tagger_forward.11} parent=0 // pred_check
    _
  $region47: #{sentence_tagger_forward.11} parent=0 // pred_check_branch
    %523 = sbr.rel (0) target = $region49
  $region48: #{sentence_tagger_forward.11} parent=0 // pred_region
    _
  $region49: #{sentence_tagger_forward.11} parent=0 // pred_fallthru
    _

// kernel: sentence_tagger_forward.9
$region0: #{sentence_tagger_forward.9}
  #allocation0 [shape = 'u32[]', space=smem, size = 0x4, offset = 0x4, fixed_abs, tag = 'smem constant byte address 0x4 - core index']
  #allocation1 [shape = 'u32[144,128]{1,0:T(1,128)}', space=vmem, size = 0x12000, scoped, tag = 'internal scratch']
  %s0 = inlined_call_operand.vmem [shape: bf16[64,16], index: 0, kind: input, shape index: {}]
  %s1 = inlined_call_operand.vmem [shape: bf16[16,64], index: 1, kind: input, shape index: {}]
  %s2 = inlined_call_operand.vmem [shape: bf16[16,64], index: 2, kind: input, shape index: {}]
  %s3 = inlined_call_operand.vmem [shape: f32[1,64], index: 3, kind: input, shape index: {}]
  %s4 = inlined_call_operand.vmem [shape: f32[1,64], index: 4, kind: input, shape index: {}]
  %s5 = inlined_call_operand.vmem [shape: bf16[64,64], index: 5, kind: output, shape index: {0}]
  %s6 = inlined_call_operand.vmem [shape: bf16[64,64], index: 6, kind: output, shape index: {1}]
  %7 = xla_tuple %s5, %s6
  %s8 = sld [smem:[#allocation0]]
  $region38: #{sentence_tagger_forward.9} parent=0
    _
  %s10 = ssub.s32 1, %s8
  %s11 = scalar_select 0, %s10, %s8
  // Predicated region
  $region2: #{sentence_tagger_forward.9} parent=0 // pred_check
    _
  $region3: #{sentence_tagger_forward.9} parent=0 // pred_check_branch
    %13 = sbr.rel (0) target = $region5
  $region4: #{sentence_tagger_forward.9} parent=0 // pred_region
    _
  $region5: #{sentence_tagger_forward.9} parent=0 // pred_fallthru
    _
  // Predicated region
  $region6: #{sentence_tagger_forward.9} parent=0 // pred_check
    _
  $region7: #{sentence_tagger_forward.9} parent=0 // pred_check_branch
    %15 = sbr.rel (0) target = $region9
  $region8: #{sentence_tagger_forward.9} parent=0 // pred_region
    _
  $region9: #{sentence_tagger_forward.9} parent=0 // pred_fallthru
    _
  // Predicated region
  $region10: #{sentence_tagger_forward.9} parent=0 // pred_check
    _
  $region11: #{sentence_tagger_forward.9} parent=0 // pred_check_branch
    %17 = sbr.rel (0) target = $region13
  $region12: #{sentence_tagger_forward.9} parent=0 // pred_region
    _
  $region13: #{sentence_tagger_forward.9} parent=0 // pred_fallthru
    _
  // Predicated region
  $region14: #{sentence_tagger_forward.9} parent=0 // pred_check
    _
  $region15: #{sentence_tagger_forward.9} parent=0 // pred_check_branch
    %19 = sbr.rel (0) target = $region17
  $region16: #{sentence_tagger_forward.9} parent=0 // pred_region
    _
  $region17: #{sentence_tagger_forward.9} parent=0 // pred_fallthru
    _
  // Predicated region
  $region18: #{sentence_tagger_forward.9} parent=0 // pred_check
    _
  $region19: #{sentence_tagger_forward.9} parent=0 // pred_check_branch
    %21 = sbr.rel (0) target = $region21
  $region20: #{sentence_tagger_forward.9} parent=0 // pred_region
    _
  $region21: #{sentence_tagger_forward.9} parent=0 // pred_fallthru
    _
  %v23 = vld [vmem:[%s0] sm:$0xf]
  %v24 = vld [vmem:[%s0 + $0x4] sm:$0xf]
  %v25 = vld [vmem:[%s0 + $0x8] sm:$0xf]
  %v26 = vld [vmem:[%s0 + $0xc] sm:$0xf]
  %v27 = vld [vmem:[%s0 + $0x10] sm:$0xf]
  %v28 = vld [vmem:[%s0 + $0x14] sm:$0xf]
  %v29 = vld [vmem:[%s0 + $0x18] sm:$0xf]
  %v30 = vld [vmem:[%s0 + $0x1c] sm:$0xf]
  %v31 = vld [vmem:[%s1] sm:$0xf]
  %v32 = vld [vmem:[%s1 + $0x4] sm:$0xf]
  %v33 = vld [vmem:[%s3] sm:$0x1]
  %v35 = vlaneseq
  %v36 = vshrl.u32 %v35, 7
  %v37 = vsub.s32 0, %v36
  %v38 = vrot.slane %v33, %v37
  %v48 = vunpack.c.l.b16 %v23
  %v49 = vunpack.c.l.b16 %v24
  %v50 = vunpack.c.l.b16 %v25
  %v51 = vunpack.c.l.b16 %v26
  %v52 = vunpack.c.l.b16 %v27
  %v53 = vunpack.c.l.b16 %v28
  %v54 = vunpack.c.l.b16 %v29
  %v55 = vunpack.c.l.b16 %v30
  %v56 = vpack.c.b16 %v49, %v48
  %v57 = vpack.c.b16 %v51, %v50
  %v58 = vpack.c.b16 %v53, %v52
  %v59 = vpack.c.b16 %v55, %v54
  %v62 = vunpack.c.l.b16 %v31
  %v63 = vunpack.c.l.b16 %v32
  %v64 = vpack.c.b16 %v63, %v62
  %vm66 = vcmask 130048
  %v68 = vsel %vm66, %v56, 0
  %v71 = vsel %vm66, %v57, 0
  %v74 = vsel %vm66, %v58, 0
  %v77 = vsel %vm66, %v59, 0
  %79 = vmatprep.subr.bf16.mxu0 0
  %80 = vmatpush1.bf16.msra.mxu0 0
  %81 = vmatprep.subr.bf16.mxu0 0
  %82 = vmatpush1.bf16.msra.mxu0 0
  %83 = vmatprep.subr.bf16.mxu0 0
  %84 = vmatpush1.bf16.msra.mxu0 0
  %85 = vmatprep.subr.bf16.mxu0 0
  %86 = vmatpush1.bf16.msra.mxu0 0
  %87 = vmatprep.subr.bf16.mxu0 0
  %88 = vmatpush1.bf16.msra.mxu0 0
  %89 = vmatprep.subr.bf16.mxu0 0
  %90 = vmatpush1.bf16.msra.mxu0 0
  %91 = vmatprep.subr.bf16.mxu0 0
  %92 = vmatpush1.bf16.msra.mxu0 0
  %93 = vmatprep.subr.bf16.mxu0 0
  %94 = vmatpush1.bf16.msra.mxu0 %v64
  %95 = vmatprep.subr.bf16.mxu0 0
  %96 = vmatpush2.bf16.msra.mxu0 0
  %97 = vmatprep.subr.bf16.mxu0 0
  %98 = vmatpush2.bf16.msra.mxu0 0
  %99 = vmatprep.subr.bf16.mxu0 0
  %100 = vmatpush2.bf16.msra.mxu0 0
  %101 = vmatprep.subr.bf16.mxu0 0
  %102 = vmatpush2.bf16.msra.mxu0 0
  %103 = vmatprep.subr.bf16.mxu0 0
  %104 = vmatpush2.bf16.msra.mxu0 0
  %105 = vmatprep.subr.bf16.mxu0 0
  %106 = vmatpush2.bf16.msra.mxu0 0
  %107 = vmatprep.subr.bf16.mxu0 0
  %108 = vmatpush2.bf16.msra.mxu0 0
  %109 = vmatprep.subr.bf16.mxu0 0
  %110 = vmatpush2.bf16.msra.mxu0 0
  %111 = vmatprep.mubr.bf16.mxu0 0
  %112 = vmatmul.mubr.bf16.gmra.mxu0 %v68
  %v113 = vpop.f32.mrf.mxu0
  %v114 = vadd.f32 %v38, %v113
  %v115 = vpop.f32.mrf.mxu0
  %v116 = vpop.f32.mrf.mxu0
  %v117 = vadd.f32 %v38, %v116
  %v118 = vpop.f32.mrf.mxu0
  %119 = vmatprep.mubr.bf16.mxu0 0
  %120 = vmatmul.mubr.bf16.gmra.mxu0 %v71
  %v121 = vpop.f32.mrf.mxu0
  %v122 = vadd.f32 %v38, %v121
  %v123 = vpop.f32.mrf.mxu0
  %v124 = vpop.f32.mrf.mxu0
  %v125 = vadd.f32 %v38, %v124
  %v126 = vpop.f32.mrf.mxu0
  %127 = vmatprep.mubr.bf16.mxu0 0
  %128 = vmatmul.mubr.bf16.gmra.mxu0 %v74
  %v129 = vpop.f32.mrf.mxu0
  %v130 = vadd.f32 %v38, %v129
  %v131 = vpop.f32.mrf.mxu0
  %v132 = vpop.f32.mrf.mxu0
  %v133 = vadd.f32 %v38, %v132
  %v134 = vpop.f32.mrf.mxu0
  %135 = vmatprep.mubr.bf16.mxu0 0
  %136 = vmatmul.mubr.bf16.gmra.mxu0 %v77
  %v137 = vpop.f32.mrf.mxu0
  %v138 = vadd.f32 %v38, %v137
  %v139 = vpop.f32.mrf.mxu0
  %v140 = vpop.f32.mrf.mxu0
  %v141 = vadd.f32 %v38, %v140
  %v142 = vpop.f32.mrf.mxu0
  %143 = vdwg.mxu0
  %v144 = vld [vmem:[%s2] sm:$0xf]
  %v145 = vld [vmem:[%s2 + $0x4] sm:$0xf]
  %v146 = vld [vmem:[%s4] sm:$0x1]
  %v148 = vlaneseq
  %v149 = vshrl.u32 %v148, 7
  %v150 = vsub.s32 0, %v149
  %v151 = vrot.slane %v146, %v150
  %v155 = vunpack.c.l.b16 %v144
  %v156 = vunpack.c.l.b16 %v145
  %v157 = vpack.c.b16 %v156, %v155
  %159 = vmatprep.subr.bf16.mxu0 0
  %160 = vmatpush1.bf16.msra.mxu0 0
  %161 = vmatprep.subr.bf16.mxu0 0
  %162 = vmatpush1.bf16.msra.mxu0 0
  %163 = vmatprep.subr.bf16.mxu0 0
  %164 = vmatpush1.bf16.msra.mxu0 0
  %165 = vmatprep.subr.bf16.mxu0 0
  %166 = vmatpush1.bf16.msra.mxu0 0
  %167 = vmatprep.subr.bf16.mxu0 0
  %168 = vmatpush1.bf16.msra.mxu0 0
  %169 = vmatprep.subr.bf16.mxu0 0
  %170 = vmatpush1.bf16.msra.mxu0 0
  %171 = vmatprep.subr.bf16.mxu0 0
  %172 = vmatpush1.bf16.msra.mxu0 0
  %173 = vmatprep.subr.bf16.mxu0 0
  %174 = vmatpush1.bf16.msra.mxu0 %v157
  %175 = vmatprep.subr.bf16.mxu0 0
  %176 = vmatpush2.bf16.msra.mxu0 0
  %177 = vmatprep.subr.bf16.mxu0 0
  %178 = vmatpush2.bf16.msra.mxu0 0
  %179 = vmatprep.subr.bf16.mxu0 0
  %180 = vmatpush2.bf16.msra.mxu0 0
  %181 = vmatprep.subr.bf16.mxu0 0
  %182 = vmatpush2.bf16.msra.mxu0 0
  %183 = vmatprep.subr.bf16.mxu0 0
  %184 = vmatpush2.bf16.msra.mxu0 0
  %185 = vmatprep.subr.bf16.mxu0 0
  %186 = vmatpush2.bf16.msra.mxu0 0
  %187 = vmatprep.subr.bf16.mxu0 0
  %188 = vmatpush2.bf16.msra.mxu0 0
  %189 = vmatprep.subr.bf16.mxu0 0
  %190 = vmatpush2.bf16.msra.mxu0 0
  %191 = vmatprep.mubr.bf16.mxu0 0
  %192 = vmatmul.mubr.bf16.gmra.mxu0 %v68
  %v193 = vpop.f32.mrf.mxu0
  %v194 = vadd.f32 %v151, %v193
  %v195 = vpop.f32.mrf.mxu0
  %v196 = vpop.f32.mrf.mxu0
  %v197 = vadd.f32 %v151, %v196
  %v198 = vpop.f32.mrf.mxu0
  %199 = vmatprep.mubr.bf16.mxu0 0
  %200 = vmatmul.mubr.bf16.gmra.mxu0 %v71
  %v201 = vpop.f32.mrf.mxu0
  %v202 = vadd.f32 %v151, %v201
  %v203 = vpop.f32.mrf.mxu0
  %v204 = vpop.f32.mrf.mxu0
  %v205 = vadd.f32 %v151, %v204
  %v206 = vpop.f32.mrf.mxu0
  %207 = vmatprep.mubr.bf16.mxu0 0
  %208 = vmatmul.mubr.bf16.gmra.mxu0 %v74
  %v209 = vpop.f32.mrf.mxu0
  %v210 = vadd.f32 %v151, %v209
  %v211 = vpop.f32.mrf.mxu0
  %v212 = vpop.f32.mrf.mxu0
  %v213 = vadd.f32 %v151, %v212
  %v214 = vpop.f32.mrf.mxu0
  %215 = vmatprep.mubr.bf16.mxu0 0
  %216 = vmatmul.mubr.bf16.gmra.mxu0 %v77
  %v217 = vpop.f32.mrf.mxu0
  %v218 = vadd.f32 %v151, %v217
  %v219 = vpop.f32.mrf.mxu0
  %v220 = vpop.f32.mrf.mxu0
  %v221 = vadd.f32 %v151, %v220
  %v222 = vpop.f32.mrf.mxu0
  %223 = vdwg.mxu0
  %v224 = vpack.c.bf16 %v117, %v114
  %v225 = vpack.c.bf16 %v125, %v122
  %v226 = vpack.c.bf16 %v133, %v130
  %v227 = vpack.c.bf16 %v141, %v138
  %v232 = vunpack.c.l.b16 %v224
  %v233 = vunpack.c.h.b16 %v224
  %v234 = vunpack.c.l.b16 %v225
  %v235 = vunpack.c.h.b16 %v225
  %v236 = vunpack.c.l.b16 %v226
  %v237 = vunpack.c.h.b16 %v226
  %v238 = vunpack.c.l.b16 %v227
  %v239 = vunpack.c.h.b16 %v227
  %v240 = vpack.c.b16 %v232, %v232
  %v241 = vpack.c.b16 %v233, %v233
  %v242 = vpack.c.b16 %v234, %v234
  %v243 = vpack.c.b16 %v235, %v235
  %v244 = vpack.c.b16 %v236, %v236
  %v245 = vpack.c.b16 %v237, %v237
  %v246 = vpack.c.b16 %v238, %v238
  %v247 = vpack.c.b16 %v239, %v239
  %vm256 = vcmask 519168
  %257 = vst.msk [vmem:[%s5] sm:$0xf] %vm256, %v240
  %258 = vst.msk [vmem:[%s5 + $0x4] sm:$0xf] %vm256, %v241
  %259 = vst.msk [vmem:[%s5 + $0x8] sm:$0xf] %vm256, %v242
  %260 = vst.msk [vmem:[%s5 + $0xc] sm:$0xf] %vm256, %v243
  %261 = vst.msk [vmem:[%s5 + $0x10] sm:$0xf] %vm256, %v244
  %262 = vst.msk [vmem:[%s5 + $0x14] sm:$0xf] %vm256, %v245
  %263 = vst.msk [vmem:[%s5 + $0x18] sm:$0xf] %vm256, %v246
  %264 = vst.msk [vmem:[%s5 + $0x1c] sm:$0xf] %vm256, %v247
  %v265 = vpack.c.bf16 %v197, %v194
  %v266 = vpack.c.bf16 %v205, %v202
  %v267 = vpack.c.bf16 %v213, %v210
  %v268 = vpack.c.bf16 %v221, %v218
  %v273 = vunpack.c.l.b16 %v265
  %v274 = vunpack.c.h.b16 %v265
  %v275 = vunpack.c.l.b16 %v266
  %v276 = vunpack.c.h.b16 %v266
  %v277 = vunpack.c.l.b16 %v267
  %v278 = vunpack.c.h.b16 %v267
  %v279 = vunpack.c.l.b16 %v268
  %v280 = vunpack.c.h.b16 %v268
  %v281 = vpack.c.b16 %v273, %v273
  %v282 = vpack.c.b16 %v274, %v274
  %v283 = vpack.c.b16 %v275, %v275
  %v284 = vpack.c.b16 %v276, %v276
  %v285 = vpack.c.b16 %v277, %v277
  %v286 = vpack.c.b16 %v278, %v278
  %v287 = vpack.c.b16 %v279, %v279
  %v288 = vpack.c.b16 %v280, %v280
  %297 = vst.msk [vmem:[%s6] sm:$0xf] %vm256, %v281
  %298 = vst.msk [vmem:[%s6 + $0x4] sm:$0xf] %vm256, %v282
  %299 = vst.msk [vmem:[%s6 + $0x8] sm:$0xf] %vm256, %v283
  %300 = vst.msk [vmem:[%s6 + $0xc] sm:$0xf] %vm256, %v284
  %301 = vst.msk [vmem:[%s6 + $0x10] sm:$0xf] %vm256, %v285
  %302 = vst.msk [vmem:[%s6 + $0x14] sm:$0xf] %vm256, %v286
  %303 = vst.msk [vmem:[%s6 + $0x18] sm:$0xf] %vm256, %v287
  %304 = vst.msk [vmem:[%s6 + $0x1c] sm:$0xf] %vm256, %v288
  // Predicated region
  $region22: #{sentence_tagger_forward.9} parent=0 // pred_check
    _
  $region23: #{sentence_tagger_forward.9} parent=0 // pred_check_branch
    %306 = sbr.rel (0) target = $region25
  $region24: #{sentence_tagger_forward.9} parent=0 // pred_region
    _
  $region25: #{sentence_tagger_forward.9} parent=0 // pred_fallthru
    _
  // Predicated region
  $region26: #{sentence_tagger_forward.9} parent=0 // pred_check
    _
  $region27: #{sentence_tagger_forward.9} parent=0 // pred_check_branch
    %308 = sbr.rel (0) target = $region29
  $region28: #{sentence_tagger_forward.9} parent=0 // pred_region
    _
  $region29: #{sentence_tagger_forward.9} parent=0 // pred_fallthru
    _
  // Predicated region
  $region30: #{sentence_tagger_forward.9} parent=0 // pred_check
    _
  $region31: #{sentence_tagger_forward.9} parent=0 // pred_check_branch
    %310 = sbr.rel (0) target = $region33
  $region32: #{sentence_tagger_forward.9} parent=0 // pred_region
    _
  $region33: #{sentence_tagger_forward.9} parent=0 // pred_fallthru
    _
  // Predicated region
  $region34: #{sentence_tagger_forward.9} parent=0 // pred_check
    _
  $region35: #{sentence_tagger_forward.9} parent=0 // pred_check_branch
    %312 = sbr.rel (0) target = $region37
  $region36: #{sentence_tagger_forward.9} parent=0 // pred_region
    _
  $region37: #{sentence_tagger_forward.9} parent=0 // pred_fallthru
    _

// kernel: sentence_tagger_forward.10
$region0: #{sentence_tagger_forward.10}
  #allocation0 [shape = 'u32[]', space=smem, size = 0x4, offset = 0x4, fixed_abs, tag = 'smem constant byte address 0x4 - core index']
  #allocation1 [shape = 'u32[144,128]{1,0:T(1,128)}', space=vmem, size = 0x12000, scoped, tag = 'internal scratch']
  #allocation2 [shape = 'f32[2,8,16]{2,1,0:T(8,128)}', space=vmem, size = 0x2000, scoped, tag = 'scratch operand']
  #allocation3 [shape = 'f32[2,8,16]{2,1,0:T(8,128)}', space=vmem, size = 0x2000, scoped, tag = 'scratch operand']
  %s0 = inlined_call_operand.vmem [shape: bf16[8,8,64], index: 0, kind: input, shape index: {}]
  %s1 = inlined_call_operand.vmem [shape: bf16[8,8,64], index: 1, kind: input, shape index: {}]
  %s2 = inlined_call_operand.vmem [shape: bf16[16,64], index: 2, kind: input, shape index: {}]
  %s3 = inlined_call_operand.vmem [shape: bf16[16,64], index: 3, kind: input, shape index: {}]
  %s4 = inlined_call_operand.vmem [shape: bf16[8,8,16], index: 4, kind: output, shape index: {0}]
  %s5 = inlined_call_operand.vmem [shape: bf16[8,8,16], index: 5, kind: output, shape index: {1}]
  %6 = xla_tuple %s4, %s5
  %s7 = sld [smem:[#allocation0]]
  $region38: #{sentence_tagger_forward.10} parent=0
    _
  %s9 = ssub.s32 1, %s7
  %s10 = scalar_select 0, %s9, %s7
  // Predicated region
  $region2: #{sentence_tagger_forward.10} parent=0 // pred_check
    _
  $region3: #{sentence_tagger_forward.10} parent=0 // pred_check_branch
    %12 = sbr.rel (0) target = $region5
  $region4: #{sentence_tagger_forward.10} parent=0 // pred_region
    _
  $region5: #{sentence_tagger_forward.10} parent=0 // pred_fallthru
    _
  // Predicated region
  $region6: #{sentence_tagger_forward.10} parent=0 // pred_check
    _
  $region7: #{sentence_tagger_forward.10} parent=0 // pred_check_branch
    %14 = sbr.rel (0) target = $region9
  $region8: #{sentence_tagger_forward.10} parent=0 // pred_region
    %s15 = ssub.s32 0, 0
    %s16 = smul.u32 8, %s15
    %p17 = scmp.lt.s32.totalorder %s16, 7
    %s18 = scalar_select %p17, %s16, 7
    %s19 = smul.addr %s18, 4
    %s20 = scalar_lea.vmem %s1, %s19
    %s21 = ssub.s32 0, 0
    %s22 = smul.u32 8, %s21
  $region9: #{sentence_tagger_forward.10} parent=0 // pred_fallthru
    _
  // Predicated region
  $region10: #{sentence_tagger_forward.10} parent=0 // pred_check
    _
  $region11: #{sentence_tagger_forward.10} parent=0 // pred_check_branch
    %24 = sbr.rel (0) target = $region13
  $region12: #{sentence_tagger_forward.10} parent=0 // pred_region
    _
  $region13: #{sentence_tagger_forward.10} parent=0 // pred_fallthru
    _
  // Predicated region
  $region14: #{sentence_tagger_forward.10} parent=0 // pred_check
    _
  $region15: #{sentence_tagger_forward.10} parent=0 // pred_check_branch
    %26 = sbr.rel (0) target = $region17
  $region16: #{sentence_tagger_forward.10} parent=0 // pred_region
    _
  $region17: #{sentence_tagger_forward.10} parent=0 // pred_fallthru
    _
  %s27 = ssub.s32 0, 0
  %s28 = smul.u32 8, %s27
  %p29 = scmp.lt.s32.totalorder %s28, 7
  %s30 = scalar_select %p29, %s28, 7
  %s31 = smul.addr %s30, 4
  %s32 = scalar_lea.vmem %s1, %s31
  %s33 = ssub.s32 0, 0
  %s34 = smul.u32 8, %s33
  %p35 = scmp.lt.s32.totalorder %s34, 7
  %s36 = scalar_select %p35, %s34, 7
  %s37 = smul.addr %s36, 4
  %s38 = scalar_lea.vmem %s5, %s37
  %s39 = ssub.s32 0, 0
  %s40 = smul.u32 8, %s39
  %p41 = scmp.lt.s32.totalorder %s40, 7
  %s42 = scalar_select %p41, %s40, 7
  %s43 = smul.addr %s42, 4
  %s44 = scalar_lea.vmem %s1, %s43
  %s45 = ssub.s32 0, 0
  %s46 = smul.u32 8, %s45
  %s47 = ssub.s32 0, 0
  %s48 = smul.u32 8, %s47
  %p49 = scmp.lt.s32.totalorder %s48, 7
  %s50 = scalar_select %p49, %s48, 7
  %s51 = smul.addr %s50, 4
  %s52 = scalar_lea.vmem %s5, %s51
  %s53 = ssub.s32 0, 0
  %s54 = smul.u32 8, %s53
  %p56 = scmp.eq.s32.totalorder 0, 0
  // Predicated region
  $region18: #{sentence_tagger_forward.10} parent=0 // pred_check
    %p57 = pneg %p56
  $region19: #{sentence_tagger_forward.10} parent=0 // pred_check_branch
    %59 = sbr.rel (%p57) target = $region21
  $region20: #{sentence_tagger_forward.10} parent=0 // pred_region
    %vm60 = vcmask 130048
    %61 = vst.msk [vmem:[#allocation2] sm:$0xff] %vm60, 0.0
    %62 = vst.msk [vmem:[#allocation2 + $0x8] sm:$0xff] %vm60, 0.0
    %63 = vst.msk [vmem:[#allocation3] sm:$0xff] %vm60, 0.0
    %64 = vst.msk [vmem:[#allocation3 + $0x8] sm:$0xff] %vm60, 0.0
  $region21: #{sentence_tagger_forward.10} parent=0 // pred_fallthru
    _
  %v65 = vld [vmem:[%s2] sm:$0xf]
  %v66 = vld [vmem:[%s2 + $0x4] sm:$0xf]
  %v67 = vld [vmem:[%s3] sm:$0xf]
  %v68 = vld [vmem:[%s3 + $0x4] sm:$0xf]
  %v69 = vld [vmem:[#allocation2] sm:$0xff]
  %v70 = vld [vmem:[#allocation3] sm:$0xff]
  %s71 = scalar_lea.vmem [#allocation2], 8
  %v72 = vld [vmem:[%s71] sm:$0xff]
  %s73 = scalar_lea.vmem [#allocation3], 8
  %v74 = vld [vmem:[%s73] sm:$0xff]
  %v75 = vld [vmem:[%s0] sm:$0xf]
  %v76 = vunpack.c.l.bf16 %v75
  %v77 = vpack.c.bf16 %v69, %v69
  %v80 = vunpack.c.l.b16 %v65
  %v81 = vunpack.c.l.b16 %v66
  %v82 = vpack.c.b16 %v81, %v80
  %vm84 = vcmask 130048
  %v86 = vsel %vm84, %v77, 0
  %88 = vmatprep.subr.bf16.mxu0 0
  %89 = vmatpush1.bf16.msra.mxu0 0
  %90 = vmatprep.subr.bf16.mxu0 0
  %91 = vmatpush1.bf16.msra.mxu0 0
  %92 = vmatprep.subr.bf16.mxu0 0
  %93 = vmatpush1.bf16.msra.mxu0 0
  %94 = vmatprep.subr.bf16.mxu0 0
  %95 = vmatpush1.bf16.msra.mxu0 0
  %96 = vmatprep.subr.bf16.mxu0 0
  %97 = vmatpush1.bf16.msra.mxu0 0
  %98 = vmatprep.subr.bf16.mxu0 0
  %99 = vmatpush1.bf16.msra.mxu0 0
  %100 = vmatprep.subr.bf16.mxu0 0
  %101 = vmatpush1.bf16.msra.mxu0 0
  %102 = vmatprep.subr.bf16.mxu0 0
  %103 = vmatpush1.bf16.msra.mxu0 %v82
  %104 = vmatprep.subr.bf16.mxu0 0
  %105 = vmatpush2.bf16.msra.mxu0 0
  %106 = vmatprep.subr.bf16.mxu0 0
  %107 = vmatpush2.bf16.msra.mxu0 0
  %108 = vmatprep.subr.bf16.mxu0 0
  %109 = vmatpush2.bf16.msra.mxu0 0
  %110 = vmatprep.subr.bf16.mxu0 0
  %111 = vmatpush2.bf16.msra.mxu0 0
  %112 = vmatprep.subr.bf16.mxu0 0
  %113 = vmatpush2.bf16.msra.mxu0 0
  %114 = vmatprep.subr.bf16.mxu0 0
  %115 = vmatpush2.bf16.msra.mxu0 0
  %116 = vmatprep.subr.bf16.mxu0 0
  %117 = vmatpush2.bf16.msra.mxu0 0
  %118 = vmatprep.subr.bf16.mxu0 0
  %119 = vmatpush2.bf16.msra.mxu0 0
  %120 = vmatprep.mubr.bf16.mxu0 0
  %121 = vmatmul.mubr.bf16.gmra.mxu0 %v86
  %v122 = vpop.f32.mrf.mxu0
  %v123 = vadd.f32 0.0, %v122
  %v124 = vpop.f32.mrf.mxu0
  %v125 = vpop.f32.mrf.mxu0
  %v126 = vpop.f32.mrf.mxu0
  %127 = vdwg.mxu0
  %v128 = vadd.f32 %v76, %v123
  %s129 = scalar_lea.vmem %s44, 28
  %v130 = vld [vmem:[%s129] sm:$0xf]
  %v131 = vunpack.c.l.bf16 %v130
  %v132 = vpack.c.bf16 %v72, %v72
  %v135 = vunpack.c.l.b16 %v67
  %v136 = vunpack.c.l.b16 %v68
  %v137 = vpack.c.b16 %v136, %v135
  %v140 = vsel %vm84, %v132, 0
  %142 = vmatprep.subr.bf16.mxu0 0
  %143 = vmatpush1.bf16.msra.mxu0 0
  %144 = vmatprep.subr.bf16.mxu0 0
  %145 = vmatpush1.bf16.msra.mxu0 0
  %146 = vmatprep.subr.bf16.mxu0 0
  %147 = vmatpush1.bf16.msra.mxu0 0
  %148 = vmatprep.subr.bf16.mxu0 0
  %149 = vmatpush1.bf16.msra.mxu0 0
  %150 = vmatprep.subr.bf16.mxu0 0
  %151 = vmatpush1.bf16.msra.mxu0 0
  %152 = vmatprep.subr.bf16.mxu0 0
  %153 = vmatpush1.bf16.msra.mxu0 0
  %154 = vmatprep.subr.bf16.mxu0 0
  %155 = vmatpush1.bf16.msra.mxu0 0
  %156 = vmatprep.subr.bf16.mxu0 0
  %157 = vmatpush1.bf16.msra.mxu0 %v137
  %158 = vmatprep.subr.bf16.mxu0 0
  %159 = vmatpush2.bf16.msra.mxu0 0
  %160 = vmatprep.subr.bf16.mxu0 0
  %161 = vmatpush2.bf16.msra.mxu0 0
  %162 = vmatprep.subr.bf16.mxu0 0
  %163 = vmatpush2.bf16.msra.mxu0 0
  %164 = vmatprep.subr.bf16.mxu0 0
  %165 = vmatpush2.bf16.msra.mxu0 0
  %166 = vmatprep.subr.bf16.mxu0 0
  %167 = vmatpush2.bf16.msra.mxu0 0
  %168 = vmatprep.subr.bf16.mxu0 0
  %169 = vmatpush2.bf16.msra.mxu0 0
  %170 = vmatprep.subr.bf16.mxu0 0
  %171 = vmatpush2.bf16.msra.mxu0 0
  %172 = vmatprep.subr.bf16.mxu0 0
  %173 = vmatpush2.bf16.msra.mxu0 0
  %174 = vmatprep.mubr.bf16.mxu0 0
  %175 = vmatmul.mubr.bf16.gmra.mxu0 %v140
  %v176 = vpop.f32.mrf.mxu0
  %v177 = vadd.f32 0.0, %v176
  %v178 = vpop.f32.mrf.mxu0
  %v179 = vpop.f32.mrf.mxu0
  %v180 = vpop.f32.mrf.mxu0
  %181 = vdwg.mxu0
  %v182 = vadd.f32 %v131, %v177
  %v183 = vxor.u32 %v128, 2147483648
  %v184 = vmul.f32 %v183, 1.442695
  %v185 = vpow.pop %v184
  %v186 = vadd.f32 %v185, 1.0
  %v187 = vrcp.pop %v186
  %v188 = vmul.f32 1.0, %v187
  %v189 = vtanh.pop %v128
  %191 = vrot.lane.b32.xlu0 %v70, 16
  %v192 = vpop.permute.xlu0 %191
  %v194 = vmul.f32 %v188, %v192
  %196 = vrot.lane.b32.xlu0 %v189, 96
  %v197 = vpop.permute.xlu0 %196
  %v199 = vmul.f32 %v188, %v197
  %201 = vrot.lane.b32.xlu0 %v199, 16
  %v202 = vpop.permute.xlu0 %201
  %v204 = vadd.f32 %v194, %v202
  %v205 = vtanh.pop %v204
  %207 = vrot.lane.b32.xlu0 %v205, 32
  %v208 = vpop.permute.xlu0 %207
  %v210 = vmul.f32 %v188, %v208
  %v211 = vxor.u32 %v182, 2147483648
  %v212 = vmul.f32 %v211, 1.442695
  %v213 = vpow.pop %v212
  %v214 = vadd.f32 %v213, 1.0
  %v215 = vrcp.pop %v214
  %v216 = vmul.f32 1.0, %v215
  %v217 = vtanh.pop %v182
  %219 = vrot.lane.b32.xlu0 %v74, 16
  %v220 = vpop.permute.xlu0 %219
  %v222 = vmul.f32 %v216, %v220
  %224 = vrot.lane.b32.xlu0 %v217, 96
  %v225 = vpop.permute.xlu0 %224
  %v227 = vmul.f32 %v216, %v225
  %229 = vrot.lane.b32.xlu0 %v227, 16
  %v230 = vpop.permute.xlu0 %229
  %v232 = vadd.f32 %v222, %v230
  %v233 = vtanh.pop %v232
  %235 = vrot.lane.b32.xlu0 %v233, 32
  %v236 = vpop.permute.xlu0 %235
  %v238 = vmul.f32 %v216, %v236
  %v239 = vpack.c.bf16 %v210, %v210
  %v241 = vunpack.c.l.b16 %v239
  %v242 = vpack.c.b16 %v241, %v241
  %243 = vrot.lane.b32.xlu0 %v242, 80
  %v244 = vpop.permute.xlu0 %243
  %vm246 = vcmask 125952
  %247 = vst.msk [vmem:[%s4] sm:$0xf] %vm246, %v244
  %v248 = vpack.c.bf16 %v238, %v238
  %v250 = vunpack.c.l.b16 %v248
  %v251 = vpack.c.b16 %v250, %v250
  %252 = vrot.lane.b32.xlu0 %v251, 80
  %v253 = vpop.permute.xlu0 %252
  %s255 = scalar_lea.vmem %s52, 28
  %256 = vst.msk [vmem:[%s255] sm:$0xf] %vm246, %v253
  %s257 = scalar_lea.vmem %s0, 4
  %v258 = vld [vmem:[%s257] sm:$0xf]
  %v259 = vunpack.c.l.bf16 %v258
  %260 = vrot.lane.b32.xlu0 %v239, 80
  %v261 = vpop.permute.xlu0 %260
  %v263 = vsel %vm84, %v261, 0
  %265 = vmatprep.subr.bf16.mxu0 0
  %266 = vmatpush1.bf16.msra.mxu0 0
  %267 = vmatprep.subr.bf16.mxu0 0
  %268 = vmatpush1.bf16.msra.mxu0 0
  %269 = vmatprep.subr.bf16.mxu0 0
  %270 = vmatpush1.bf16.msra.mxu0 0
  %271 = vmatprep.subr.bf16.mxu0 0
  %272 = vmatpush1.bf16.msra.mxu0 0
  %273 = vmatprep.subr.bf16.mxu0 0
  %274 = vmatpush1.bf16.msra.mxu0 0
  %275 = vmatprep.subr.bf16.mxu0 0
  %276 = vmatpush1.bf16.msra.mxu0 0
  %277 = vmatprep.subr.bf16.mxu0 0
  %278 = vmatpush1.bf16.msra.mxu0 0
  %279 = vmatprep.subr.bf16.mxu0 0
  %280 = vmatpush1.bf16.msra.mxu0 %v82
  %281 = vmatprep.subr.bf16.mxu0 0
  %282 = vmatpush2.bf16.msra.mxu0 0
  %283 = vmatprep.subr.bf16.mxu0 0
  %284 = vmatpush2.bf16.msra.mxu0 0
  %285 = vmatprep.subr.bf16.mxu0 0
  %286 = vmatpush2.bf16.msra.mxu0 0
  %287 = vmatprep.subr.bf16.mxu0 0
  %288 = vmatpush2.bf16.msra.mxu0 0
  %289 = vmatprep.subr.bf16.mxu0 0
  %290 = vmatpush2.bf16.msra.mxu0 0
  %291 = vmatprep.subr.bf16.mxu0 0
  %292 = vmatpush2.bf16.msra.mxu0 0
  %293 = vmatprep.subr.bf16.mxu0 0
  %294 = vmatpush2.bf16.msra.mxu0 0
  %295 = vmatprep.subr.bf16.mxu0 0
  %296 = vmatpush2.bf16.msra.mxu0 0
  %297 = vmatprep.mubr.bf16.mxu0 0
  %298 = vmatmul.mubr.bf16.gmra.mxu0 %v263
  %v299 = vpop.f32.mrf.mxu0
  %v300 = vadd.f32 0.0, %v299
  %v301 = vpop.f32.mrf.mxu0
  %v302 = vpop.f32.mrf.mxu0
  %v303 = vpop.f32.mrf.mxu0
  %304 = vdwg.mxu0
  %v305 = vadd.f32 %v259, %v300
  %s306 = scalar_lea.vmem %s44, 24
  %v307 = vld [vmem:[%s306] sm:$0xf]
  %v308 = vunpack.c.l.bf16 %v307
  %309 = vrot.lane.b32.xlu0 %v248, 80
  %v310 = vpop.permute.xlu0 %309
  %v312 = vsel %vm84, %v310, 0
  %314 = vmatprep.subr.bf16.mxu0 0
  %315 = vmatpush1.bf16.msra.mxu0 0
  %316 = vmatprep.subr.bf16.mxu0 0
  %317 = vmatpush1.bf16.msra.mxu0 0
  %318 = vmatprep.subr.bf16.mxu0 0
  %319 = vmatpush1.bf16.msra.mxu0 0
  %320 = vmatprep.subr.bf16.mxu0 0
  %321 = vmatpush1.bf16.msra.mxu0 0
  %322 = vmatprep.subr.bf16.mxu0 0
  %323 = vmatpush1.bf16.msra.mxu0 0
  %324 = vmatprep.subr.bf16.mxu0 0
  %325 = vmatpush1.bf16.msra.mxu0 0
  %326 = vmatprep.subr.bf16.mxu0 0
  %327 = vmatpush1.bf16.msra.mxu0 0
  %328 = vmatprep.subr.bf16.mxu0 0
  %329 = vmatpush1.bf16.msra.mxu0 %v137
  %330 = vmatprep.subr.bf16.mxu0 0
  %331 = vmatpush2.bf16.msra.mxu0 0
  %332 = vmatprep.subr.bf16.mxu0 0
  %333 = vmatpush2.bf16.msra.mxu0 0
  %334 = vmatprep.subr.bf16.mxu0 0
  %335 = vmatpush2.bf16.msra.mxu0 0
  %336 = vmatprep.subr.bf16.mxu0 0
  %337 = vmatpush2.bf16.msra.mxu0 0
  %338 = vmatprep.subr.bf16.mxu0 0
  %339 = vmatpush2.bf16.msra.mxu0 0
  %340 = vmatprep.subr.bf16.mxu0 0
  %341 = vmatpush2.bf16.msra.mxu0 0
  %342 = vmatprep.subr.bf16.mxu0 0
  %343 = vmatpush2.bf16.msra.mxu0 0
  %344 = vmatprep.subr.bf16.mxu0 0
  %345 = vmatpush2.bf16.msra.mxu0 0
  %346 = vmatprep.mubr.bf16.mxu0 0
  %347 = vmatmul.mubr.bf16.gmra.mxu0 %v312
  %v348 = vpop.f32.mrf.mxu0
  %v349 = vadd.f32 0.0, %v348
  %v350 = vpop.f32.mrf.mxu0
  %v351 = vpop.f32.mrf.mxu0
  %v352 = vpop.f32.mrf.mxu0
  %353 = vdwg.mxu0
  %v354 = vadd.f32 %v308, %v349
  %v355 = vxor.u32 %v305, 2147483648
  %v356 = vmul.f32 %v355, 1.442695
  %v357 = vpow.pop %v356
  %v358 = vadd.f32 %v357, 1.0
  %v359 = vrcp.pop %v358
  %v360 = vmul.f32 1.0, %v359
  %v361 = vtanh.pop %v305
  %v362 = vmul.f32 %v360, %v204
  %364 = vrot.lane.b32.xlu0 %v361, 96
  %v365 = vpop.permute.xlu0 %364
  %v367 = vmul.f32 %v360, %v365
  %369 = vrot.lane.b32.xlu0 %v367, 16
  %v370 = vpop.permute.xlu0 %369
  %v372 = vadd.f32 %v362, %v370
  %v373 = vtanh.pop %v372
  %375 = vrot.lane.b32.xlu0 %v373, 32
  %v376 = vpop.permute.xlu0 %375
  %v378 = vmul.f32 %v360, %v376
  %v379 = vxor.u32 %v354, 2147483648
  %v380 = vmul.f32 %v379, 1.442695
  %v381 = vpow.pop %v380
  %v382 = vadd.f32 %v381, 1.0
  %v383 = vrcp.pop %v382
  %v384 = vmul.f32 1.0, %v383
  %v385 = vtanh.pop %v354
  %v386 = vmul.f32 %v384, %v232
  %388 = vrot.lane.b32.xlu0 %v385, 96
  %v389 = vpop.permute.xlu0 %388
  %v391 = vmul.f32 %v384, %v389
  %393 = vrot.lane.b32.xlu0 %v391, 16
  %v394 = vpop.permute.xlu0 %393
  %v396 = vadd.f32 %v386, %v394
  %v397 = vtanh.pop %v396
  %399 = vrot.lane.b32.xlu0 %v397, 32
  %v400 = vpop.permute.xlu0 %399
  %v402 = vmul.f32 %v384, %v400
  %v403 = vpack.c.bf16 %v378, %v378
  %v405 = vunpack.c.l.b16 %v403
  %v406 = vpack.c.b16 %v405, %v405
  %407 = vrot.lane.b32.xlu0 %v406, 80
  %v408 = vpop.permute.xlu0 %407
  %s410 = scalar_lea.vmem %s4, 4
  %411 = vst.msk [vmem:[%s410] sm:$0xf] %vm246, %v408
  %v412 = vpack.c.bf16 %v402, %v402
  %v414 = vunpack.c.l.b16 %v412
  %v415 = vpack.c.b16 %v414, %v414
  %416 = vrot.lane.b32.xlu0 %v415, 80
  %v417 = vpop.permute.xlu0 %416
  %s419 = scalar_lea.vmem %s52, 24
  %420 = vst.msk [vmem:[%s419] sm:$0xf] %vm246, %v417
  %s421 = scalar_lea.vmem %s0, 8
  %v422 = vld [vmem:[%s421] sm:$0xf]
  %v423 = vunpack.c.l.bf16 %v422
  %424 = vrot.lane.b32.xlu0 %v403, 80
  %v425 = vpop.permute.xlu0 %424
  %v427 = vsel %vm84, %v425, 0
  %429 = vmatprep.subr.bf16.mxu0 0
  %430 = vmatpush1.bf16.msra.mxu0 0
  %431 = vmatprep.subr.bf16.mxu0 0
  %432 = vmatpush1.bf16.msra.mxu0 0
  %433 = vmatprep.subr.bf16.mxu0 0
  %434 = vmatpush1.bf16.msra.mxu0 0
  %435 = vmatprep.subr.bf16.mxu0 0
  %436 = vmatpush1.bf16.msra.mxu0 0
  %437 = vmatprep.subr.bf16.mxu0 0
  %438 = vmatpush1.bf16.msra.mxu0 0
  %439 = vmatprep.subr.bf16.mxu0 0
  %440 = vmatpush1.bf16.msra.mxu0 0
  %441 = vmatprep.subr.bf16.mxu0 0
  %442 = vmatpush1.bf16.msra.mxu0 0
  %443 = vmatprep.subr.bf16.mxu0 0
  %444 = vmatpush1.bf16.msra.mxu0 %v82
  %445 = vmatprep.subr.bf16.mxu0 0
  %446 = vmatpush2.bf16.msra.mxu0 0
  %447 = vmatprep.subr.bf16.mxu0 0
  %448 = vmatpush2.bf16.msra.mxu0 0
  %449 = vmatprep.subr.bf16.mxu0 0
  %450 = vmatpush2.bf16.msra.mxu0 0
  %451 = vmatprep.subr.bf16.mxu0 0
  %452 = vmatpush2.bf16.msra.mxu0 0
  %453 = vmatprep.subr.bf16.mxu0 0
  %454 = vmatpush2.bf16.msra.mxu0 0
  %455 = vmatprep.subr.bf16.mxu0 0
  %456 = vmatpush2.bf16.msra.mxu0 0
  %457 = vmatprep.subr.bf16.mxu0 0
  %458 = vmatpush2.bf16.msra.mxu0 0
  %459 = vmatprep.subr.bf16.mxu0 0
  %460 = vmatpush2.bf16.msra.mxu0 0
  %461 = vmatprep.mubr.bf16.mxu0 0
  %462 = vmatmul.mubr.bf16.gmra.mxu0 %v427
  %v463 = vpop.f32.mrf.mxu0
  %v464 = vadd.f32 0.0, %v463
  %v465 = vpop.f32.mrf.mxu0
  %v466 = vpop.f32.mrf.mxu0
  %v467 = vpop.f32.mrf.mxu0
  %468 = vdwg.mxu0
  %v469 = vadd.f32 %v423, %v464
  %s470 = scalar_lea.vmem %s44, 20
  %v471 = vld [vmem:[%s470] sm:$0xf]
  %v472 = vunpack.c.l.bf16 %v471
  %473 = vrot.lane.b32.xlu0 %v412, 80
  %v474 = vpop.permute.xlu0 %473
  %v476 = vsel %vm84, %v474, 0
  %478 = vmatprep.subr.bf16.mxu0 0
  %479 = vmatpush1.bf16.msra.mxu0 0
  %480 = vmatprep.subr.bf16.mxu0 0
  %481 = vmatpush1.bf16.msra.mxu0 0
  %482 = vmatprep.subr.bf16.mxu0 0
  %483 = vmatpush1.bf16.msra.mxu0 0
  %484 = vmatprep.subr.bf16.mxu0 0
  %485 = vmatpush1.bf16.msra.mxu0 0
  %486 = vmatprep.subr.bf16.mxu0 0
  %487 = vmatpush1.bf16.msra.mxu0 0
  %488 = vmatprep.subr.bf16.mxu0 0
  %489 = vmatpush1.bf16.msra.mxu0 0
  %490 = vmatprep.subr.bf16.mxu0 0
  %491 = vmatpush1.bf16.msra.mxu0 0
  %492 = vmatprep.subr.bf16.mxu0 0
  %493 = vmatpush1.bf16.msra.mxu0 %v137
  %494 = vmatprep.subr.bf16.mxu0 0
  %495 = vmatpush2.bf16.msra.mxu0 0
  %496 = vmatprep.subr.bf16.mxu0 0
  %497 = vmatpush2.bf16.msra.mxu0 0
  %498 = vmatprep.subr.bf16.mxu0 0
  %499 = vmatpush2.bf16.msra.mxu0 0
  %500 = vmatprep.subr.bf16.mxu0 0
  %501 = vmatpush2.bf16.msra.mxu0 0
  %502 = vmatprep.subr.bf16.mxu0 0
  %503 = vmatpush2.bf16.msra.mxu0 0
  %504 = vmatprep.subr.bf16.mxu0 0
  %505 = vmatpush2.bf16.msra.mxu0 0
  %506 = vmatprep.subr.bf16.mxu0 0
  %507 = vmatpush2.bf16.msra.mxu0 0
  %508 = vmatprep.subr.bf16.mxu0 0
  %509 = vmatpush2.bf16.msra.mxu0 0
  %510 = vmatprep.mubr.bf16.mxu0 0
  %511 = vmatmul.mubr.bf16.gmra.mxu0 %v476
  %v512 = vpop.f32.mrf.mxu0
  %v513 = vadd.f32 0.0, %v512
  %v514 = vpop.f32.mrf.mxu0
  %v515 = vpop.f32.mrf.mxu0
  %v516 = vpop.f32.mrf.mxu0
  %517 = vdwg.mxu0
  %v518 = vadd.f32 %v472, %v513
  %v519 = vxor.u32 %v469, 2147483648
  %v520 = vmul.f32 %v519, 1.442695
  %v521 = vpow.pop %v520
  %v522 = vadd.f32 %v521, 1.0
  %v523 = vrcp.pop %v522
  %v524 = vmul.f32 1.0, %v523
  %v525 = vtanh.pop %v469
  %v526 = vmul.f32 %v524, %v372
  %528 = vrot.lane.b32.xlu0 %v525, 96
  %v529 = vpop.permute.xlu0 %528
  %v531 = vmul.f32 %v524, %v529
  %533 = vrot.lane.b32.xlu0 %v531, 16
  %v534 = vpop.permute.xlu0 %533
  %v536 = vadd.f32 %v526, %v534
  %v537 = vtanh.pop %v536
  %539 = vrot.lane.b32.xlu0 %v537, 32
  %v540 = vpop.permute.xlu0 %539
  %v542 = vmul.f32 %v524, %v540
  %v543 = vxor.u32 %v518, 2147483648
  %v544 = vmul.f32 %v543, 1.442695
  %v545 = vpow.pop %v544
  %v546 = vadd.f32 %v545, 1.0
  %v547 = vrcp.pop %v546
  %v548 = vmul.f32 1.0, %v547
  %v549 = vtanh.pop %v518
  %v550 = vmul.f32 %v548, %v396
  %552 = vrot.lane.b32.xlu0 %v549, 96
  %v553 = vpop.permute.xlu0 %552
  %v555 = vmul.f32 %v548, %v553
  %557 = vrot.lane.b32.xlu0 %v555, 16
  %v558 = vpop.permute.xlu0 %557
  %v560 = vadd.f32 %v550, %v558
  %v561 = vtanh.pop %v560
  %563 = vrot.lane.b32.xlu0 %v561, 32
  %v564 = vpop.permute.xlu0 %563
  %v566 = vmul.f32 %v548, %v564
  %v567 = vpack.c.bf16 %v542, %v542
  %v569 = vunpack.c.l.b16 %v567
  %v570 = vpack.c.b16 %v569, %v569
  %571 = vrot.lane.b32.xlu0 %v570, 80
  %v572 = vpop.permute.xlu0 %571
  %s574 = scalar_lea.vmem %s4, 8
  %575 = vst.msk [vmem:[%s574] sm:$0xf] %vm246, %v572
  %v576 = vpack.c.bf16 %v566, %v566
  %v578 = vunpack.c.l.b16 %v576
  %v579 = vpack.c.b16 %v578, %v578
  %580 = vrot.lane.b32.xlu0 %v579, 80
  %v581 = vpop.permute.xlu0 %580
  %s583 = scalar_lea.vmem %s52, 20
  %584 = vst.msk [vmem:[%s583] sm:$0xf] %vm246, %v581
  %s585 = scalar_lea.vmem %s0, 12
  %v586 = vld [vmem:[%s585] sm:$0xf]
  %v587 = vunpack.c.l.bf16 %v586
  %588 = vrot.lane.b32.xlu0 %v567, 80
  %v589 = vpop.permute.xlu0 %588
  %v591 = vsel %vm84, %v589, 0
  %593 = vmatprep.subr.bf16.mxu0 0
  %594 = vmatpush1.bf16.msra.mxu0 0
  %595 = vmatprep.subr.bf16.mxu0 0
  %596 = vmatpush1.bf16.msra.mxu0 0
  %597 = vmatprep.subr.bf16.mxu0 0
  %598 = vmatpush1.bf16.msra.mxu0 0
  %599 = vmatprep.subr.bf16.mxu0 0
  %600 = vmatpush1.bf16.msra.mxu0 0
  %601 = vmatprep.subr.bf16.mxu0 0
  %602 = vmatpush1.bf16.msra.mxu0 0
  %603 = vmatprep.subr.bf16.mxu0 0
  %604 = vmatpush1.bf16.msra.mxu0 0
  %605 = vmatprep.subr.bf16.mxu0 0
  %606 = vmatpush1.bf16.msra.mxu0 0
  %607 = vmatprep.subr.bf16.mxu0 0
  %608 = vmatpush1.bf16.msra.mxu0 %v82
  %609 = vmatprep.subr.bf16.mxu0 0
  %610 = vmatpush2.bf16.msra.mxu0 0
  %611 = vmatprep.subr.bf16.mxu0 0
  %612 = vmatpush2.bf16.msra.mxu0 0
  %613 = vmatprep.subr.bf16.mxu0 0
  %614 = vmatpush2.bf16.msra.mxu0 0
  %615 = vmatprep.subr.bf16.mxu0 0
  %616 = vmatpush2.bf16.msra.mxu0 0
  %617 = vmatprep.subr.bf16.mxu0 0
  %618 = vmatpush2.bf16.msra.mxu0 0
  %619 = vmatprep.subr.bf16.mxu0 0
  %620 = vmatpush2.bf16.msra.mxu0 0
  %621 = vmatprep.subr.bf16.mxu0 0
  %622 = vmatpush2.bf16.msra.mxu0 0
  %623 = vmatprep.subr.bf16.mxu0 0
  %624 = vmatpush2.bf16.msra.mxu0 0
  %625 = vmatprep.mubr.bf16.mxu0 0
  %626 = vmatmul.mubr.bf16.gmra.mxu0 %v591
  %v627 = vpop.f32.mrf.mxu0
  %v628 = vadd.f32 0.0, %v627
  %v629 = vpop.f32.mrf.mxu0
  %v630 = vpop.f32.mrf.mxu0
  %v631 = vpop.f32.mrf.mxu0
  %632 = vdwg.mxu0
  %v633 = vadd.f32 %v587, %v628
  %s634 = scalar_lea.vmem %s44, 16
  %v635 = vld [vmem:[%s634] sm:$0xf]
  %v636 = vunpack.c.l.bf16 %v635
  %637 = vrot.lane.b32.xlu0 %v576, 80
  %v638 = vpop.permute.xlu0 %637
  %v640 = vsel %vm84, %v638, 0
  %642 = vmatprep.subr.bf16.mxu0 0
  %643 = vmatpush1.bf16.msra.mxu0 0
  %644 = vmatprep.subr.bf16.mxu0 0
  %645 = vmatpush1.bf16.msra.mxu0 0
  %646 = vmatprep.subr.bf16.mxu0 0
  %647 = vmatpush1.bf16.msra.mxu0 0
  %648 = vmatprep.subr.bf16.mxu0 0
  %649 = vmatpush1.bf16.msra.mxu0 0
  %650 = vmatprep.subr.bf16.mxu0 0
  %651 = vmatpush1.bf16.msra.mxu0 0
  %652 = vmatprep.subr.bf16.mxu0 0
  %653 = vmatpush1.bf16.msra.mxu0 0
  %654 = vmatprep.subr.bf16.mxu0 0
  %655 = vmatpush1.bf16.msra.mxu0 0
  %656 = vmatprep.subr.bf16.mxu0 0
  %657 = vmatpush1.bf16.msra.mxu0 %v137
  %658 = vmatprep.subr.bf16.mxu0 0
  %659 = vmatpush2.bf16.msra.mxu0 0
  %660 = vmatprep.subr.bf16.mxu0 0
  %661 = vmatpush2.bf16.msra.mxu0 0
  %662 = vmatprep.subr.bf16.mxu0 0
  %663 = vmatpush2.bf16.msra.mxu0 0
  %664 = vmatprep.subr.bf16.mxu0 0
  %665 = vmatpush2.bf16.msra.mxu0 0
  %666 = vmatprep.subr.bf16.mxu0 0
  %667 = vmatpush2.bf16.msra.mxu0 0
  %668 = vmatprep.subr.bf16.mxu0 0
  %669 = vmatpush2.bf16.msra.mxu0 0
  %670 = vmatprep.subr.bf16.mxu0 0
  %671 = vmatpush2.bf16.msra.mxu0 0
  %672 = vmatprep.subr.bf16.mxu0 0
  %673 = vmatpush2.bf16.msra.mxu0 0
  %674 = vmatprep.mubr.bf16.mxu0 0
  %675 = vmatmul.mubr.bf16.gmra.mxu0 %v640
  %v676 = vpop.f32.mrf.mxu0
  %v677 = vadd.f32 0.0, %v676
  %v678 = vpop.f32.mrf.mxu0
  %v679 = vpop.f32.mrf.mxu0
  %v680 = vpop.f32.mrf.mxu0
  %681 = vdwg.mxu0
  %v682 = vadd.f32 %v636, %v677
  %v683 = vxor.u32 %v633, 2147483648
  %v684 = vmul.f32 %v683, 1.442695
  %v685 = vpow.pop %v684
  %v686 = vadd.f32 %v685, 1.0
  %v687 = vrcp.pop %v686
  %v688 = vmul.f32 1.0, %v687
  %v689 = vtanh.pop %v633
  %v690 = vmul.f32 %v688, %v536
  %692 = vrot.lane.b32.xlu0 %v689, 96
  %v693 = vpop.permute.xlu0 %692
  %v695 = vmul.f32 %v688, %v693
  %697 = vrot.lane.b32.xlu0 %v695, 16
  %v698 = vpop.permute.xlu0 %697
  %v700 = vadd.f32 %v690, %v698
  %v701 = vtanh.pop %v700
  %703 = vrot.lane.b32.xlu0 %v701, 32
  %v704 = vpop.permute.xlu0 %703
  %v706 = vmul.f32 %v688, %v704
  %v707 = vxor.u32 %v682, 2147483648
  %v708 = vmul.f32 %v707, 1.442695
  %v709 = vpow.pop %v708
  %v710 = vadd.f32 %v709, 1.0
  %v711 = vrcp.pop %v710
  %v712 = vmul.f32 1.0, %v711
  %v713 = vtanh.pop %v682
  %v714 = vmul.f32 %v712, %v560
  %716 = vrot.lane.b32.xlu0 %v713, 96
  %v717 = vpop.permute.xlu0 %716
  %v719 = vmul.f32 %v712, %v717
  %721 = vrot.lane.b32.xlu0 %v719, 16
  %v722 = vpop.permute.xlu0 %721
  %v724 = vadd.f32 %v714, %v722
  %v725 = vtanh.pop %v724
  %727 = vrot.lane.b32.xlu0 %v725, 32
  %v728 = vpop.permute.xlu0 %727
  %v730 = vmul.f32 %v712, %v728
  %v731 = vpack.c.bf16 %v706, %v706
  %v733 = vunpack.c.l.b16 %v731
  %v734 = vpack.c.b16 %v733, %v733
  %735 = vrot.lane.b32.xlu0 %v734, 80
  %v736 = vpop.permute.xlu0 %735
  %s738 = scalar_lea.vmem %s4, 12
  %739 = vst.msk [vmem:[%s738] sm:$0xf] %vm246, %v736
  %v740 = vpack.c.bf16 %v730, %v730
  %v742 = vunpack.c.l.b16 %v740
  %v743 = vpack.c.b16 %v742, %v742
  %744 = vrot.lane.b32.xlu0 %v743, 80
  %v745 = vpop.permute.xlu0 %744
  %s747 = scalar_lea.vmem %s52, 16
  %748 = vst.msk [vmem:[%s747] sm:$0xf] %vm246, %v745
  %s749 = scalar_lea.vmem %s0, 16
  %v750 = vld [vmem:[%s749] sm:$0xf]
  %v751 = vunpack.c.l.bf16 %v750
  %752 = vrot.lane.b32.xlu0 %v731, 80
  %v753 = vpop.permute.xlu0 %752
  %v755 = vsel %vm84, %v753, 0
  %757 = vmatprep.subr.bf16.mxu0 0
  %758 = vmatpush1.bf16.msra.mxu0 0
  %759 = vmatprep.subr.bf16.mxu0 0
  %760 = vmatpush1.bf16.msra.mxu0 0
  %761 = vmatprep.subr.bf16.mxu0 0
  %762 = vmatpush1.bf16.msra.mxu0 0
  %763 = vmatprep.subr.bf16.mxu0 0
  %764 = vmatpush1.bf16.msra.mxu0 0
  %765 = vmatprep.subr.bf16.mxu0 0
  %766 = vmatpush1.bf16.msra.mxu0 0
  %767 = vmatprep.subr.bf16.mxu0 0
  %768 = vmatpush1.bf16.msra.mxu0 0
  %769 = vmatprep.subr.bf16.mxu0 0
  %770 = vmatpush1.bf16.msra.mxu0 0
  %771 = vmatprep.subr.bf16.mxu0 0
  %772 = vmatpush1.bf16.msra.mxu0 %v82
  %773 = vmatprep.subr.bf16.mxu0 0
  %774 = vmatpush2.bf16.msra.mxu0 0
  %775 = vmatprep.subr.bf16.mxu0 0
  %776 = vmatpush2.bf16.msra.mxu0 0
  %777 = vmatprep.subr.bf16.mxu0 0
  %778 = vmatpush2.bf16.msra.mxu0 0
  %779 = vmatprep.subr.bf16.mxu0 0
  %780 = vmatpush2.bf16.msra.mxu0 0
  %781 = vmatprep.subr.bf16.mxu0 0
  %782 = vmatpush2.bf16.msra.mxu0 0
  %783 = vmatprep.subr.bf16.mxu0 0
  %784 = vmatpush2.bf16.msra.mxu0 0
  %785 = vmatprep.subr.bf16.mxu0 0
  %786 = vmatpush2.bf16.msra.mxu0 0
  %787 = vmatprep.subr.bf16.mxu0 0
  %788 = vmatpush2.bf16.msra.mxu0 0
  %789 = vmatprep.mubr.bf16.mxu0 0
  %790 = vmatmul.mubr.bf16.gmra.mxu0 %v755
  %v791 = vpop.f32.mrf.mxu0
  %v792 = vadd.f32 0.0, %v791
  %v793 = vpop.f32.mrf.mxu0
  %v794 = vpop.f32.mrf.mxu0
  %v795 = vpop.f32.mrf.mxu0
  %796 = vdwg.mxu0
  %v797 = vadd.f32 %v751, %v792
  %s798 = scalar_lea.vmem %s44, 12
  %v799 = vld [vmem:[%s798] sm:$0xf]
  %v800 = vunpack.c.l.bf16 %v799
  %801 = vrot.lane.b32.xlu0 %v740, 80
  %v802 = vpop.permute.xlu0 %801
  %v804 = vsel %vm84, %v802, 0
  %806 = vmatprep.subr.bf16.mxu0 0
  %807 = vmatpush1.bf16.msra.mxu0 0
  %808 = vmatprep.subr.bf16.mxu0 0
  %809 = vmatpush1.bf16.msra.mxu0 0
  %810 = vmatprep.subr.bf16.mxu0 0
  %811 = vmatpush1.bf16.msra.mxu0 0
  %812 = vmatprep.subr.bf16.mxu0 0
  %813 = vmatpush1.bf16.msra.mxu0 0
  %814 = vmatprep.subr.bf16.mxu0 0
  %815 = vmatpush1.bf16.msra.mxu0 0
  %816 = vmatprep.subr.bf16.mxu0 0
  %817 = vmatpush1.bf16.msra.mxu0 0
  %818 = vmatprep.subr.bf16.mxu0 0
  %819 = vmatpush1.bf16.msra.mxu0 0
  %820 = vmatprep.subr.bf16.mxu0 0
  %821 = vmatpush1.bf16.msra.mxu0 %v137
  %822 = vmatprep.subr.bf16.mxu0 0
  %823 = vmatpush2.bf16.msra.mxu0 0
  %824 = vmatprep.subr.bf16.mxu0 0
  %825 = vmatpush2.bf16.msra.mxu0 0
  %826 = vmatprep.subr.bf16.mxu0 0
  %827 = vmatpush2.bf16.msra.mxu0 0
  %828 = vmatprep.subr.bf16.mxu0 0
  %829 = vmatpush2.bf16.msra.mxu0 0
  %830 = vmatprep.subr.bf16.mxu0 0
  %831 = vmatpush2.bf16.msra.mxu0 0
  %832 = vmatprep.subr.bf16.mxu0 0
  %833 = vmatpush2.bf16.msra.mxu0 0
  %834 = vmatprep.subr.bf16.mxu0 0
  %835 = vmatpush2.bf16.msra.mxu0 0
  %836 = vmatprep.subr.bf16.mxu0 0
  %837 = vmatpush2.bf16.msra.mxu0 0
  %838 = vmatprep.mubr.bf16.mxu0 0
  %839 = vmatmul.mubr.bf16.gmra.mxu0 %v804
  %v840 = vpop.f32.mrf.mxu0
  %v841 = vadd.f32 0.0, %v840
  %v842 = vpop.f32.mrf.mxu0
  %v843 = vpop.f32.mrf.mxu0
  %v844 = vpop.f32.mrf.mxu0
  %845 = vdwg.mxu0
  %v846 = vadd.f32 %v800, %v841
  %v847 = vxor.u32 %v797, 2147483648
  %v848 = vmul.f32 %v847, 1.442695
  %v849 = vpow.pop %v848
  %v850 = vadd.f32 %v849, 1.0
  %v851 = vrcp.pop %v850
  %v852 = vmul.f32 1.0, %v851
  %v853 = vtanh.pop %v797
  %v854 = vmul.f32 %v852, %v700
  %856 = vrot.lane.b32.xlu0 %v853, 96
  %v857 = vpop.permute.xlu0 %856
  %v859 = vmul.f32 %v852, %v857
  %861 = vrot.lane.b32.xlu0 %v859, 16
  %v862 = vpop.permute.xlu0 %861
  %v864 = vadd.f32 %v854, %v862
  %v865 = vtanh.pop %v864
  %867 = vrot.lane.b32.xlu0 %v865, 32
  %v868 = vpop.permute.xlu0 %867
  %v870 = vmul.f32 %v852, %v868
  %v871 = vxor.u32 %v846, 2147483648
  %v872 = vmul.f32 %v871, 1.442695
  %v873 = vpow.pop %v872
  %v874 = vadd.f32 %v873, 1.0
  %v875 = vrcp.pop %v874
  %v876 = vmul.f32 1.0, %v875
  %v877 = vtanh.pop %v846
  %v878 = vmul.f32 %v876, %v724
  %880 = vrot.lane.b32.xlu0 %v877, 96
  %v881 = vpop.permute.xlu0 %880
  %v883 = vmul.f32 %v876, %v881
  %885 = vrot.lane.b32.xlu0 %v883, 16
  %v886 = vpop.permute.xlu0 %885
  %v888 = vadd.f32 %v878, %v886
  %v889 = vtanh.pop %v888
  %891 = vrot.lane.b32.xlu0 %v889, 32
  %v892 = vpop.permute.xlu0 %891
  %v894 = vmul.f32 %v876, %v892
  %v895 = vpack.c.bf16 %v870, %v870
  %v897 = vunpack.c.l.b16 %v895
  %v898 = vpack.c.b16 %v897, %v897
  %899 = vrot.lane.b32.xlu0 %v898, 80
  %v900 = vpop.permute.xlu0 %899
  %s902 = scalar_lea.vmem %s4, 16
  %903 = vst.msk [vmem:[%s902] sm:$0xf] %vm246, %v900
  %v904 = vpack.c.bf16 %v894, %v894
  %v906 = vunpack.c.l.b16 %v904
  %v907 = vpack.c.b16 %v906, %v906
  %908 = vrot.lane.b32.xlu0 %v907, 80
  %v909 = vpop.permute.xlu0 %908
  %s911 = scalar_lea.vmem %s52, 12
  %912 = vst.msk [vmem:[%s911] sm:$0xf] %vm246, %v909
  %s913 = scalar_lea.vmem %s0, 20
  %v914 = vld [vmem:[%s913] sm:$0xf]
  %v915 = vunpack.c.l.bf16 %v914
  %916 = vrot.lane.b32.xlu0 %v895, 80
  %v917 = vpop.permute.xlu0 %916
  %v919 = vsel %vm84, %v917, 0
  %921 = vmatprep.subr.bf16.mxu0 0
  %922 = vmatpush1.bf16.msra.mxu0 0
  %923 = vmatprep.subr.bf16.mxu0 0
  %924 = vmatpush1.bf16.msra.mxu0 0
  %925 = vmatprep.subr.bf16.mxu0 0
  %926 = vmatpush1.bf16.msra.mxu0 0
  %927 = vmatprep.subr.bf16.mxu0 0
  %928 = vmatpush1.bf16.msra.mxu0 0
  %929 = vmatprep.subr.bf16.mxu0 0
  %930 = vmatpush1.bf16.msra.mxu0 0
  %931 = vmatprep.subr.bf16.mxu0 0
  %932 = vmatpush1.bf16.msra.mxu0 0
  %933 = vmatprep.subr.bf16.mxu0 0
  %934 = vmatpush1.bf16.msra.mxu0 0
  %935 = vmatprep.subr.bf16.mxu0 0
  %936 = vmatpush1.bf16.msra.mxu0 %v82
  %937 = vmatprep.subr.bf16.mxu0 0
  %938 = vmatpush2.bf16.msra.mxu0 0
  %939 = vmatprep.subr.bf16.mxu0 0
  %940 = vmatpush2.bf16.msra.mxu0 0
  %941 = vmatprep.subr.bf16.mxu0 0
  %942 = vmatpush2.bf16.msra.mxu0 0
  %943 = vmatprep.subr.bf16.mxu0 0
  %944 = vmatpush2.bf16.msra.mxu0 0
  %945 = vmatprep.subr.bf16.mxu0 0
  %946 = vmatpush2.bf16.msra.mxu0 0
  %947 = vmatprep.subr.bf16.mxu0 0
  %948 = vmatpush2.bf16.msra.mxu0 0
  %949 = vmatprep.subr.bf16.mxu0 0
  %950 = vmatpush2.bf16.msra.mxu0 0
  %951 = vmatprep.subr.bf16.mxu0 0
  %952 = vmatpush2.bf16.msra.mxu0 0
  %953 = vmatprep.mubr.bf16.mxu0 0
  %954 = vmatmul.mubr.bf16.gmra.mxu0 %v919
  %v955 = vpop.f32.mrf.mxu0
  %v956 = vadd.f32 0.0, %v955
  %v957 = vpop.f32.mrf.mxu0
  %v958 = vpop.f32.mrf.mxu0
  %v959 = vpop.f32.mrf.mxu0
  %960 = vdwg.mxu0
  %v961 = vadd.f32 %v915, %v956
  %s962 = scalar_lea.vmem %s44, 8
  %v963 = vld [vmem:[%s962] sm:$0xf]
  %v964 = vunpack.c.l.bf16 %v963
  %965 = vrot.lane.b32.xlu0 %v904, 80
  %v966 = vpop.permute.xlu0 %965
  %v968 = vsel %vm84, %v966, 0
  %970 = vmatprep.subr.bf16.mxu0 0
  %971 = vmatpush1.bf16.msra.mxu0 0
  %972 = vmatprep.subr.bf16.mxu0 0
  %973 = vmatpush1.bf16.msra.mxu0 0
  %974 = vmatprep.subr.bf16.mxu0 0
  %975 = vmatpush1.bf16.msra.mxu0 0
  %976 = vmatprep.subr.bf16.mxu0 0
  %977 = vmatpush1.bf16.msra.mxu0 0
  %978 = vmatprep.subr.bf16.mxu0 0
  %979 = vmatpush1.bf16.msra.mxu0 0
  %980 = vmatprep.subr.bf16.mxu0 0
  %981 = vmatpush1.bf16.msra.mxu0 0
  %982 = vmatprep.subr.bf16.mxu0 0
  %983 = vmatpush1.bf16.msra.mxu0 0
  %984 = vmatprep.subr.bf16.mxu0 0
  %985 = vmatpush1.bf16.msra.mxu0 %v137
  %986 = vmatprep.subr.bf16.mxu0 0
  %987 = vmatpush2.bf16.msra.mxu0 0
  %988 = vmatprep.subr.bf16.mxu0 0
  %989 = vmatpush2.bf16.msra.mxu0 0
  %990 = vmatprep.subr.bf16.mxu0 0
  %991 = vmatpush2.bf16.msra.mxu0 0
  %992 = vmatprep.subr.bf16.mxu0 0
  %993 = vmatpush2.bf16.msra.mxu0 0
  %994 = vmatprep.subr.bf16.mxu0 0
  %995 = vmatpush2.bf16.msra.mxu0 0
  %996 = vmatprep.subr.bf16.mxu0 0
  %997 = vmatpush2.bf16.msra.mxu0 0
  %998 = vmatprep.subr.bf16.mxu0 0
  %999 = vmatpush2.bf16.msra.mxu0 0
  %1000 = vmatprep.subr.bf16.mxu0 0
  %1001 = vmatpush2.bf16.msra.mxu0 0
  %1002 = vmatprep.mubr.bf16.mxu0 0
  %1003 = vmatmul.mubr.bf16.gmra.mxu0 %v968
  %v1004 = vpop.f32.mrf.mxu0
  %v1005 = vadd.f32 0.0, %v1004
  %v1006 = vpop.f32.mrf.mxu0
  %v1007 = vpop.f32.mrf.mxu0
  %v1008 = vpop.f32.mrf.mxu0
  %1009 = vdwg.mxu0
  %v1010 = vadd.f32 %v964, %v1005
  %v1011 = vxor.u32 %v961, 2147483648
  %v1012 = vmul.f32 %v1011, 1.442695
  %v1013 = vpow.pop %v1012
  %v1014 = vadd.f32 %v1013, 1.0
  %v1015 = vrcp.pop %v1014
  %v1016 = vmul.f32 1.0, %v1015
  %v1017 = vtanh.pop %v961
  %v1018 = vmul.f32 %v1016, %v864
  %1020 = vrot.lane.b32.xlu0 %v1017, 96
  %v1021 = vpop.permute.xlu0 %1020
  %v1023 = vmul.f32 %v1016, %v1021
  %1025 = vrot.lane.b32.xlu0 %v1023, 16
  %v1026 = vpop.permute.xlu0 %1025
  %v1028 = vadd.f32 %v1018, %v1026
  %v1029 = vtanh.pop %v1028
  %1031 = vrot.lane.b32.xlu0 %v1029, 32
  %v1032 = vpop.permute.xlu0 %1031
  %v1034 = vmul.f32 %v1016, %v1032
  %v1035 = vxor.u32 %v1010, 2147483648
  %v1036 = vmul.f32 %v1035, 1.442695
  %v1037 = vpow.pop %v1036
  %v1038 = vadd.f32 %v1037, 1.0
  %v1039 = vrcp.pop %v1038
  %v1040 = vmul.f32 1.0, %v1039
  %v1041 = vtanh.pop %v1010
  %v1042 = vmul.f32 %v1040, %v888
  %1044 = vrot.lane.b32.xlu0 %v1041, 96
  %v1045 = vpop.permute.xlu0 %1044
  %v1047 = vmul.f32 %v1040, %v1045
  %1049 = vrot.lane.b32.xlu0 %v1047, 16
  %v1050 = vpop.permute.xlu0 %1049
  %v1052 = vadd.f32 %v1042, %v1050
  %v1053 = vtanh.pop %v1052
  %1055 = vrot.lane.b32.xlu0 %v1053, 32
  %v1056 = vpop.permute.xlu0 %1055
  %v1058 = vmul.f32 %v1040, %v1056
  %v1059 = vpack.c.bf16 %v1034, %v1034
  %v1061 = vunpack.c.l.b16 %v1059
  %v1062 = vpack.c.b16 %v1061, %v1061
  %1063 = vrot.lane.b32.xlu0 %v1062, 80
  %v1064 = vpop.permute.xlu0 %1063
  %s1066 = scalar_lea.vmem %s4, 20
  %1067 = vst.msk [vmem:[%s1066] sm:$0xf] %vm246, %v1064
  %v1068 = vpack.c.bf16 %v1058, %v1058
  %v1070 = vunpack.c.l.b16 %v1068
  %v1071 = vpack.c.b16 %v1070, %v1070
  %1072 = vrot.lane.b32.xlu0 %v1071, 80
  %v1073 = vpop.permute.xlu0 %1072
  %s1075 = scalar_lea.vmem %s52, 8
  %1076 = vst.msk [vmem:[%s1075] sm:$0xf] %vm246, %v1073
  %s1077 = scalar_lea.vmem %s0, 24
  %v1078 = vld [vmem:[%s1077] sm:$0xf]
  %v1079 = vunpack.c.l.bf16 %v1078
  %1080 = vrot.lane.b32.xlu0 %v1059, 80
  %v1081 = vpop.permute.xlu0 %1080
  %v1083 = vsel %vm84, %v1081, 0
  %1085 = vmatprep.subr.bf16.mxu0 0
  %1086 = vmatpush1.bf16.msra.mxu0 0
  %1087 = vmatprep.subr.bf16.mxu0 0
  %1088 = vmatpush1.bf16.msra.mxu0 0
  %1089 = vmatprep.subr.bf16.mxu0 0
  %1090 = vmatpush1.bf16.msra.mxu0 0
  %1091 = vmatprep.subr.bf16.mxu0 0
  %1092 = vmatpush1.bf16.msra.mxu0 0
  %1093 = vmatprep.subr.bf16.mxu0 0
  %1094 = vmatpush1.bf16.msra.mxu0 0
  %1095 = vmatprep.subr.bf16.mxu0 0
  %1096 = vmatpush1.bf16.msra.mxu0 0
  %1097 = vmatprep.subr.bf16.mxu0 0
  %1098 = vmatpush1.bf16.msra.mxu0 0
  %1099 = vmatprep.subr.bf16.mxu0 0
  %1100 = vmatpush1.bf16.msra.mxu0 %v82
  %1101 = vmatprep.subr.bf16.mxu0 0
  %1102 = vmatpush2.bf16.msra.mxu0 0
  %1103 = vmatprep.subr.bf16.mxu0 0
  %1104 = vmatpush2.bf16.msra.mxu0 0
  %1105 = vmatprep.subr.bf16.mxu0 0
  %1106 = vmatpush2.bf16.msra.mxu0 0
  %1107 = vmatprep.subr.bf16.mxu0 0
  %1108 = vmatpush2.bf16.msra.mxu0 0
  %1109 = vmatprep.subr.bf16.mxu0 0
  %1110 = vmatpush2.bf16.msra.mxu0 0
  %1111 = vmatprep.subr.bf16.mxu0 0
  %1112 = vmatpush2.bf16.msra.mxu0 0
  %1113 = vmatprep.subr.bf16.mxu0 0
  %1114 = vmatpush2.bf16.msra.mxu0 0
  %1115 = vmatprep.subr.bf16.mxu0 0
  %1116 = vmatpush2.bf16.msra.mxu0 0
  %1117 = vmatprep.mubr.bf16.mxu0 0
  %1118 = vmatmul.mubr.bf16.gmra.mxu0 %v1083
  %v1119 = vpop.f32.mrf.mxu0
  %v1120 = vadd.f32 0.0, %v1119
  %v1121 = vpop.f32.mrf.mxu0
  %v1122 = vpop.f32.mrf.mxu0
  %v1123 = vpop.f32.mrf.mxu0
  %1124 = vdwg.mxu0
  %v1125 = vadd.f32 %v1079, %v1120
  %s1126 = scalar_lea.vmem %s44, 4
  %v1127 = vld [vmem:[%s1126] sm:$0xf]
  %v1128 = vunpack.c.l.bf16 %v1127
  %1129 = vrot.lane.b32.xlu0 %v1068, 80
  %v1130 = vpop.permute.xlu0 %1129
  %v1132 = vsel %vm84, %v1130, 0
  %1134 = vmatprep.subr.bf16.mxu0 0
  %1135 = vmatpush1.bf16.msra.mxu0 0
  %1136 = vmatprep.subr.bf16.mxu0 0
  %1137 = vmatpush1.bf16.msra.mxu0 0
  %1138 = vmatprep.subr.bf16.mxu0 0
  %1139 = vmatpush1.bf16.msra.mxu0 0
  %1140 = vmatprep.subr.bf16.mxu0 0
  %1141 = vmatpush1.bf16.msra.mxu0 0
  %1142 = vmatprep.subr.bf16.mxu0 0
  %1143 = vmatpush1.bf16.msra.mxu0 0
  %1144 = vmatprep.subr.bf16.mxu0 0
  %1145 = vmatpush1.bf16.msra.mxu0 0
  %1146 = vmatprep.subr.bf16.mxu0 0
  %1147 = vmatpush1.bf16.msra.mxu0 0
  %1148 = vmatprep.subr.bf16.mxu0 0
  %1149 = vmatpush1.bf16.msra.mxu0 %v137
  %1150 = vmatprep.subr.bf16.mxu0 0
  %1151 = vmatpush2.bf16.msra.mxu0 0
  %1152 = vmatprep.subr.bf16.mxu0 0
  %1153 = vmatpush2.bf16.msra.mxu0 0
  %1154 = vmatprep.subr.bf16.mxu0 0
  %1155 = vmatpush2.bf16.msra.mxu0 0
  %1156 = vmatprep.subr.bf16.mxu0 0
  %1157 = vmatpush2.bf16.msra.mxu0 0
  %1158 = vmatprep.subr.bf16.mxu0 0
  %1159 = vmatpush2.bf16.msra.mxu0 0
  %1160 = vmatprep.subr.bf16.mxu0 0
  %1161 = vmatpush2.bf16.msra.mxu0 0
  %1162 = vmatprep.subr.bf16.mxu0 0
  %1163 = vmatpush2.bf16.msra.mxu0 0
  %1164 = vmatprep.subr.bf16.mxu0 0
  %1165 = vmatpush2.bf16.msra.mxu0 0
  %1166 = vmatprep.mubr.bf16.mxu0 0
  %1167 = vmatmul.mubr.bf16.gmra.mxu0 %v1132
  %v1168 = vpop.f32.mrf.mxu0
  %v1169 = vadd.f32 0.0, %v1168
  %v1170 = vpop.f32.mrf.mxu0
  %v1171 = vpop.f32.mrf.mxu0
  %v1172 = vpop.f32.mrf.mxu0
  %1173 = vdwg.mxu0
  %v1174 = vadd.f32 %v1128, %v1169
  %v1175 = vxor.u32 %v1125, 2147483648
  %v1176 = vmul.f32 %v1175, 1.442695
  %v1177 = vpow.pop %v1176
  %v1178 = vadd.f32 %v1177, 1.0
  %v1179 = vrcp.pop %v1178
  %v1180 = vmul.f32 1.0, %v1179
  %v1181 = vtanh.pop %v1125
  %v1182 = vmul.f32 %v1180, %v1028
  %1184 = vrot.lane.b32.xlu0 %v1181, 96
  %v1185 = vpop.permute.xlu0 %1184
  %v1187 = vmul.f32 %v1180, %v1185
  %1189 = vrot.lane.b32.xlu0 %v1187, 16
  %v1190 = vpop.permute.xlu0 %1189
  %v1192 = vadd.f32 %v1182, %v1190
  %v1193 = vtanh.pop %v1192
  %1195 = vrot.lane.b32.xlu0 %v1193, 32
  %v1196 = vpop.permute.xlu0 %1195
  %v1198 = vmul.f32 %v1180, %v1196
  %v1199 = vxor.u32 %v1174, 2147483648
  %v1200 = vmul.f32 %v1199, 1.442695
  %v1201 = vpow.pop %v1200
  %v1202 = vadd.f32 %v1201, 1.0
  %v1203 = vrcp.pop %v1202
  %v1204 = vmul.f32 1.0, %v1203
  %v1205 = vtanh.pop %v1174
  %v1206 = vmul.f32 %v1204, %v1052
  %1208 = vrot.lane.b32.xlu0 %v1205, 96
  %v1209 = vpop.permute.xlu0 %1208
  %v1211 = vmul.f32 %v1204, %v1209
  %1213 = vrot.lane.b32.xlu0 %v1211, 16
  %v1214 = vpop.permute.xlu0 %1213
  %v1216 = vadd.f32 %v1206, %v1214
  %v1217 = vtanh.pop %v1216
  %1219 = vrot.lane.b32.xlu0 %v1217, 32
  %v1220 = vpop.permute.xlu0 %1219
  %v1222 = vmul.f32 %v1204, %v1220
  %v1223 = vpack.c.bf16 %v1198, %v1198
  %v1225 = vunpack.c.l.b16 %v1223
  %v1226 = vpack.c.b16 %v1225, %v1225
  %1227 = vrot.lane.b32.xlu0 %v1226, 80
  %v1228 = vpop.permute.xlu0 %1227
  %s1230 = scalar_lea.vmem %s4, 24
  %1231 = vst.msk [vmem:[%s1230] sm:$0xf] %vm246, %v1228
  %v1232 = vpack.c.bf16 %v1222, %v1222
  %v1234 = vunpack.c.l.b16 %v1232
  %v1235 = vpack.c.b16 %v1234, %v1234
  %1236 = vrot.lane.b32.xlu0 %v1235, 80
  %v1237 = vpop.permute.xlu0 %1236
  %s1239 = scalar_lea.vmem %s52, 4
  %1240 = vst.msk [vmem:[%s1239] sm:$0xf] %vm246, %v1237
  %s1241 = scalar_lea.vmem %s0, 28
  %v1242 = vld [vmem:[%s1241] sm:$0xf]
  %v1243 = vunpack.c.l.bf16 %v1242
  %1244 = vrot.lane.b32.xlu0 %v1223, 80
  %v1245 = vpop.permute.xlu0 %1244
  %v1247 = vsel %vm84, %v1245, 0
  %1249 = vmatprep.subr.bf16.mxu0 0
  %1250 = vmatpush1.bf16.msra.mxu0 0
  %1251 = vmatprep.subr.bf16.mxu0 0
  %1252 = vmatpush1.bf16.msra.mxu0 0
  %1253 = vmatprep.subr.bf16.mxu0 0
  %1254 = vmatpush1.bf16.msra.mxu0 0
  %1255 = vmatprep.subr.bf16.mxu0 0
  %1256 = vmatpush1.bf16.msra.mxu0 0
  %1257 = vmatprep.subr.bf16.mxu0 0
  %1258 = vmatpush1.bf16.msra.mxu0 0
  %1259 = vmatprep.subr.bf16.mxu0 0
  %1260 = vmatpush1.bf16.msra.mxu0 0
  %1261 = vmatprep.subr.bf16.mxu0 0
  %1262 = vmatpush1.bf16.msra.mxu0 0
  %1263 = vmatprep.subr.bf16.mxu0 0
  %1264 = vmatpush1.bf16.msra.mxu0 %v82
  %1265 = vmatprep.subr.bf16.mxu0 0
  %1266 = vmatpush2.bf16.msra.mxu0 0
  %1267 = vmatprep.subr.bf16.mxu0 0
  %1268 = vmatpush2.bf16.msra.mxu0 0
  %1269 = vmatprep.subr.bf16.mxu0 0
  %1270 = vmatpush2.bf16.msra.mxu0 0
  %1271 = vmatprep.subr.bf16.mxu0 0
  %1272 = vmatpush2.bf16.msra.mxu0 0
  %1273 = vmatprep.subr.bf16.mxu0 0
  %1274 = vmatpush2.bf16.msra.mxu0 0
  %1275 = vmatprep.subr.bf16.mxu0 0
  %1276 = vmatpush2.bf16.msra.mxu0 0
  %1277 = vmatprep.subr.bf16.mxu0 0
  %1278 = vmatpush2.bf16.msra.mxu0 0
  %1279 = vmatprep.subr.bf16.mxu0 0
  %1280 = vmatpush2.bf16.msra.mxu0 0
  %1281 = vmatprep.mubr.bf16.mxu0 0
  %1282 = vmatmul.mubr.bf16.gmra.mxu0 %v1247
  %v1283 = vpop.f32.mrf.mxu0
  %v1284 = vadd.f32 0.0, %v1283
  %v1285 = vpop.f32.mrf.mxu0
  %v1286 = vpop.f32.mrf.mxu0
  %v1287 = vpop.f32.mrf.mxu0
  %1288 = vdwg.mxu0
  %v1289 = vadd.f32 %v1243, %v1284
  %v1290 = vld [vmem:[%s44] sm:$0xf]
  %v1291 = vunpack.c.l.bf16 %v1290
  %1292 = vrot.lane.b32.xlu0 %v1232, 80
  %v1293 = vpop.permute.xlu0 %1292
  %v1295 = vsel %vm84, %v1293, 0
  %1297 = vmatprep.subr.bf16.mxu0 0
  %1298 = vmatpush1.bf16.msra.mxu0 0
  %1299 = vmatprep.subr.bf16.mxu0 0
  %1300 = vmatpush1.bf16.msra.mxu0 0
  %1301 = vmatprep.subr.bf16.mxu0 0
  %1302 = vmatpush1.bf16.msra.mxu0 0
  %1303 = vmatprep.subr.bf16.mxu0 0
  %1304 = vmatpush1.bf16.msra.mxu0 0
  %1305 = vmatprep.subr.bf16.mxu0 0
  %1306 = vmatpush1.bf16.msra.mxu0 0
  %1307 = vmatprep.subr.bf16.mxu0 0
  %1308 = vmatpush1.bf16.msra.mxu0 0
  %1309 = vmatprep.subr.bf16.mxu0 0
  %1310 = vmatpush1.bf16.msra.mxu0 0
  %1311 = vmatprep.subr.bf16.mxu0 0
  %1312 = vmatpush1.bf16.msra.mxu0 %v137
  %1313 = vmatprep.subr.bf16.mxu0 0
  %1314 = vmatpush2.bf16.msra.mxu0 0
  %1315 = vmatprep.subr.bf16.mxu0 0
  %1316 = vmatpush2.bf16.msra.mxu0 0
  %1317 = vmatprep.subr.bf16.mxu0 0
  %1318 = vmatpush2.bf16.msra.mxu0 0
  %1319 = vmatprep.subr.bf16.mxu0 0
  %1320 = vmatpush2.bf16.msra.mxu0 0
  %1321 = vmatprep.subr.bf16.mxu0 0
  %1322 = vmatpush2.bf16.msra.mxu0 0
  %1323 = vmatprep.subr.bf16.mxu0 0
  %1324 = vmatpush2.bf16.msra.mxu0 0
  %1325 = vmatprep.subr.bf16.mxu0 0
  %1326 = vmatpush2.bf16.msra.mxu0 0
  %1327 = vmatprep.subr.bf16.mxu0 0
  %1328 = vmatpush2.bf16.msra.mxu0 0
  %1329 = vmatprep.mubr.bf16.mxu0 0
  %1330 = vmatmul.mubr.bf16.gmra.mxu0 %v1295
  %v1331 = vpop.f32.mrf.mxu0
  %v1332 = vadd.f32 0.0, %v1331
  %v1333 = vpop.f32.mrf.mxu0
  %v1334 = vpop.f32.mrf.mxu0
  %v1335 = vpop.f32.mrf.mxu0
  %1336 = vdwg.mxu0
  %v1337 = vadd.f32 %v1291, %v1332
  %v1338 = vxor.u32 %v1289, 2147483648
  %v1339 = vmul.f32 %v1338, 1.442695
  %v1340 = vpow.pop %v1339
  %v1341 = vadd.f32 %v1340, 1.0
  %v1342 = vrcp.pop %v1341
  %v1343 = vmul.f32 1.0, %v1342
  %v1344 = vtanh.pop %v1289
  %v1345 = vmul.f32 %v1343, %v1192
  %1347 = vrot.lane.b32.xlu0 %v1344, 96
  %v1348 = vpop.permute.xlu0 %1347
  %v1350 = vmul.f32 %v1343, %v1348
  %1352 = vrot.lane.b32.xlu0 %v1350, 16
  %v1353 = vpop.permute.xlu0 %1352
  %v1355 = vadd.f32 %v1345, %v1353
  %v1356 = vtanh.pop %v1355
  %1358 = vrot.lane.b32.xlu0 %v1356, 32
  %v1359 = vpop.permute.xlu0 %1358
  %v1361 = vmul.f32 %v1343, %v1359
  %v1362 = vxor.u32 %v1337, 2147483648
  %v1363 = vmul.f32 %v1362, 1.442695
  %v1364 = vpow.pop %v1363
  %v1365 = vadd.f32 %v1364, 1.0
  %v1366 = vrcp.pop %v1365
  %v1367 = vmul.f32 1.0, %v1366
  %v1368 = vtanh.pop %v1337
  %v1369 = vmul.f32 %v1367, %v1216
  %1371 = vrot.lane.b32.xlu0 %v1368, 96
  %v1372 = vpop.permute.xlu0 %1371
  %v1374 = vmul.f32 %v1367, %v1372
  %1376 = vrot.lane.b32.xlu0 %v1374, 16
  %v1377 = vpop.permute.xlu0 %1376
  %v1379 = vadd.f32 %v1369, %v1377
  %v1380 = vtanh.pop %v1379
  %1382 = vrot.lane.b32.xlu0 %v1380, 32
  %v1383 = vpop.permute.xlu0 %1382
  %v1385 = vmul.f32 %v1367, %v1383
  %v1386 = vpack.c.bf16 %v1361, %v1361
  %v1388 = vunpack.c.l.b16 %v1386
  %v1389 = vpack.c.b16 %v1388, %v1388
  %1390 = vrot.lane.b32.xlu0 %v1389, 80
  %v1391 = vpop.permute.xlu0 %1390
  %s1393 = scalar_lea.vmem %s4, 28
  %1394 = vst.msk [vmem:[%s1393] sm:$0xf] %vm246, %v1391
  %v1395 = vpack.c.bf16 %v1385, %v1385
  %v1397 = vunpack.c.l.b16 %v1395
  %v1398 = vpack.c.b16 %v1397, %v1397
  %1399 = vrot.lane.b32.xlu0 %v1398, 80
  %v1400 = vpop.permute.xlu0 %1399
  %1402 = vst.msk [vmem:[%s52] sm:$0xf] %vm246, %v1400
  %1404 = vrot.lane.b32.xlu0 %v1361, 80
  %v1405 = vpop.permute.xlu0 %1404
  %1407 = vst.msk [vmem:[#allocation2] sm:$0xff] %vm84, %v1405
  %1409 = vrot.lane.b32.xlu0 %v1355, 112
  %v1410 = vpop.permute.xlu0 %1409
  %1412 = vst.msk [vmem:[#allocation3] sm:$0xff] %vm84, %v1410
  %1414 = vrot.lane.b32.xlu0 %v1385, 80
  %v1415 = vpop.permute.xlu0 %1414
  %1417 = vst.msk [vmem:[%s71] sm:$0xff] %vm84, %v1415
  %1419 = vrot.lane.b32.xlu0 %v1379, 112
  %v1420 = vpop.permute.xlu0 %1419
  %1422 = vst.msk [vmem:[%s73] sm:$0xff] %vm84, %v1420
  %s1423 = ssub.s32 0, 0
  %s1424 = smul.u32 8, %s1423
  %p1425 = scmp.lt.s32.totalorder %s1424, 7
  %s1426 = scalar_select %p1425, %s1424, 7
  %s1427 = smul.addr %s1426, 4
  %s1428 = scalar_lea.vmem %s5, %s1427
  // Predicated region
  $region22: #{sentence_tagger_forward.10} parent=0 // pred_check
    _
  $region23: #{sentence_tagger_forward.10} parent=0 // pred_check_branch
    %1430 = sbr.rel (0) target = $region25
  $region24: #{sentence_tagger_forward.10} parent=0 // pred_region
    _
  $region25: #{sentence_tagger_forward.10} parent=0 // pred_fallthru
    _
  // Predicated region
  $region26: #{sentence_tagger_forward.10} parent=0 // pred_check
    _
  $region27: #{sentence_tagger_forward.10} parent=0 // pred_check_branch
    %1432 = sbr.rel (0) target = $region29
  $region28: #{sentence_tagger_forward.10} parent=0 // pred_region
    %s1433 = ssub.s32 0, 0
    %s1434 = smul.u32 8, %s1433
  $region29: #{sentence_tagger_forward.10} parent=0 // pred_fallthru
    _
  // Predicated region
  $region30: #{sentence_tagger_forward.10} parent=0 // pred_check
    _
  $region31: #{sentence_tagger_forward.10} parent=0 // pred_check_branch
    %1436 = sbr.rel (0) target = $region33
  $region32: #{sentence_tagger_forward.10} parent=0 // pred_region
    _
  $region33: #{sentence_tagger_forward.10} parent=0 // pred_fallthru
    _
  // Predicated region
  $region34: #{sentence_tagger_forward.10} parent=0 // pred_check
    _
  $region35: #{sentence_tagger_forward.10} parent=0 // pred_check_branch
    %1438 = sbr.rel (0) target = $region37
  $region36: #{sentence_tagger_forward.10} parent=0 // pred_region
    %s1439 = ssub.s32 0, 0
    %s1440 = smul.u32 8, %s1439
    %p1441 = scmp.lt.s32.totalorder %s1440, 7
    %s1442 = scalar_select %p1441, %s1440, 7
    %s1443 = smul.addr %s1442, 4
    %s1444 = scalar_lea.vmem %s5, %s1443
  $region37: #{sentence_tagger_forward.10} parent=0 // pred_fallthru
    _

// kernel: sentence_tagger_forward.13
$region0: #{sentence_tagger_forward.13}
  #allocation0 [shape = 'u32[]', space=smem, size = 0x4, offset = 0x4, fixed_abs, tag = 'smem constant byte address 0x4 - core index']
  #allocation1 [shape = 'u32[144,128]{1,0:T(1,128)}', space=vmem, size = 0x12000, scoped, tag = 'internal scratch']
  %s0 = inlined_call_operand.vmem [shape: f32[8,32], index: 0, kind: input, shape index: {}]
  %s1 = inlined_call_operand.vmem [shape: bf16[32,64], index: 1, kind: input, shape index: {}]
  %s2 = inlined_call_operand.vmem [shape: bf16[32,64], index: 2, kind: input, shape index: {}]
  %s3 = inlined_call_operand.vmem [shape: f32[1,64], index: 3, kind: input, shape index: {}]
  %s4 = inlined_call_operand.vmem [shape: f32[1,64], index: 4, kind: input, shape index: {}]
  %s5 = inlined_call_operand.vmem [shape: bf16[8,64], index: 5, kind: output, shape index: {0}]
  %s6 = inlined_call_operand.vmem [shape: bf16[8,64], index: 6, kind: output, shape index: {1}]
  %7 = xla_tuple %s5, %s6
  %s8 = sld [smem:[#allocation0]]
  $region38: #{sentence_tagger_forward.13} parent=0
    _
  %s10 = ssub.s32 1, %s8
  %s11 = scalar_select 0, %s10, %s8
  // Predicated region
  $region2: #{sentence_tagger_forward.13} parent=0 // pred_check
    _
  $region3: #{sentence_tagger_forward.13} parent=0 // pred_check_branch
    %13 = sbr.rel (0) target = $region5
  $region4: #{sentence_tagger_forward.13} parent=0 // pred_region
    _
  $region5: #{sentence_tagger_forward.13} parent=0 // pred_fallthru
    _
  // Predicated region
  $region6: #{sentence_tagger_forward.13} parent=0 // pred_check
    _
  $region7: #{sentence_tagger_forward.13} parent=0 // pred_check_branch
    %15 = sbr.rel (0) target = $region9
  $region8: #{sentence_tagger_forward.13} parent=0 // pred_region
    _
  $region9: #{sentence_tagger_forward.13} parent=0 // pred_fallthru
    _
  // Predicated region
  $region10: #{sentence_tagger_forward.13} parent=0 // pred_check
    _
  $region11: #{sentence_tagger_forward.13} parent=0 // pred_check_branch
    %17 = sbr.rel (0) target = $region13
  $region12: #{sentence_tagger_forward.13} parent=0 // pred_region
    _
  $region13: #{sentence_tagger_forward.13} parent=0 // pred_fallthru
    _
  // Predicated region
  $region14: #{sentence_tagger_forward.13} parent=0 // pred_check
    _
  $region15: #{sentence_tagger_forward.13} parent=0 // pred_check_branch
    %19 = sbr.rel (0) target = $region17
  $region16: #{sentence_tagger_forward.13} parent=0 // pred_region
    _
  $region17: #{sentence_tagger_forward.13} parent=0 // pred_fallthru
    _
  // Predicated region
  $region18: #{sentence_tagger_forward.13} parent=0 // pred_check
    _
  $region19: #{sentence_tagger_forward.13} parent=0 // pred_check_branch
    %21 = sbr.rel (0) target = $region21
  $region20: #{sentence_tagger_forward.13} parent=0 // pred_region
    _
  $region21: #{sentence_tagger_forward.13} parent=0 // pred_fallthru
    _
  %v23 = vld [vmem:[%s0] sm:$0xff]
  %v24 = vpack.c.bf16 %v23, %v23
  %v25 = vld [vmem:[%s1] sm:$0xf]
  %v26 = vld [vmem:[%s1 + $0x4] sm:$0xf]
  %v27 = vld [vmem:[%s1 + $0x8] sm:$0xf]
  %v28 = vld [vmem:[%s1 + $0xc] sm:$0xf]
  %v29 = vld [vmem:[%s3] sm:$0x1]
  %v31 = vlaneseq
  %v32 = vshrl.u32 %v31, 7
  %v33 = vsub.s32 0, %v32
  %v34 = vrot.slane %v29, %v33
  %v40 = vunpack.c.l.b16 %v25
  %v41 = vunpack.c.l.b16 %v26
  %v42 = vunpack.c.l.b16 %v27
  %v43 = vunpack.c.l.b16 %v28
  %v44 = vpack.c.b16 %v41, %v40
  %v45 = vpack.c.b16 %v43, %v42
  %vm48 = vcmask 261120
  %v50 = vsel %vm48, %v24, 0
  %52 = vmatprep.subr.bf16.mxu0 0
  %53 = vmatpush1.bf16.msra.mxu0 0
  %54 = vmatprep.subr.bf16.mxu0 0
  %55 = vmatpush1.bf16.msra.mxu0 0
  %56 = vmatprep.subr.bf16.mxu0 0
  %57 = vmatpush1.bf16.msra.mxu0 0
  %58 = vmatprep.subr.bf16.mxu0 0
  %59 = vmatpush1.bf16.msra.mxu0 0
  %60 = vmatprep.subr.bf16.mxu0 0
  %61 = vmatpush1.bf16.msra.mxu0 0
  %62 = vmatprep.subr.bf16.mxu0 0
  %63 = vmatpush1.bf16.msra.mxu0 0
  %64 = vmatprep.subr.bf16.mxu0 0
  %65 = vmatpush1.bf16.msra.mxu0 %v45
  %66 = vmatprep.subr.bf16.mxu0 0
  %67 = vmatpush1.bf16.msra.mxu0 %v44
  %68 = vmatprep.subr.bf16.mxu0 0
  %69 = vmatpush2.bf16.msra.mxu0 0
  %70 = vmatprep.subr.bf16.mxu0 0
  %71 = vmatpush2.bf16.msra.mxu0 0
  %72 = vmatprep.subr.bf16.mxu0 0
  %73 = vmatpush2.bf16.msra.mxu0 0
  %74 = vmatprep.subr.bf16.mxu0 0
  %75 = vmatpush2.bf16.msra.mxu0 0
  %76 = vmatprep.subr.bf16.mxu0 0
  %77 = vmatpush2.bf16.msra.mxu0 0
  %78 = vmatprep.subr.bf16.mxu0 0
  %79 = vmatpush2.bf16.msra.mxu0 0
  %80 = vmatprep.subr.bf16.mxu0 0
  %81 = vmatpush2.bf16.msra.mxu0 0
  %82 = vmatprep.subr.bf16.mxu0 0
  %83 = vmatpush2.bf16.msra.mxu0 0
  %84 = vmatprep.mubr.bf16.mxu0 0
  %85 = vmatmul.mubr.bf16.gmra.mxu0 %v50
  %v86 = vpop.f32.mrf.mxu0
  %v87 = vadd.f32 %v34, %v86
  %v88 = vpop.f32.mrf.mxu0
  %v89 = vpop.f32.mrf.mxu0
  %v90 = vpop.f32.mrf.mxu0
  %91 = vdwg.mxu0
  %v92 = vld [vmem:[%s2] sm:$0xf]
  %v93 = vld [vmem:[%s2 + $0x4] sm:$0xf]
  %v94 = vld [vmem:[%s2 + $0x8] sm:$0xf]
  %v95 = vld [vmem:[%s2 + $0xc] sm:$0xf]
  %v96 = vld [vmem:[%s4] sm:$0x1]
  %v98 = vlaneseq
  %v99 = vshrl.u32 %v98, 7
  %v100 = vsub.s32 0, %v99
  %v101 = vrot.slane %v96, %v100
  %v107 = vunpack.c.l.b16 %v92
  %v108 = vunpack.c.l.b16 %v93
  %v109 = vunpack.c.l.b16 %v94
  %v110 = vunpack.c.l.b16 %v95
  %v111 = vpack.c.b16 %v108, %v107
  %v112 = vpack.c.b16 %v110, %v109
  %115 = vmatprep.subr.bf16.mxu0 0
  %116 = vmatpush1.bf16.msra.mxu0 0
  %117 = vmatprep.subr.bf16.mxu0 0
  %118 = vmatpush1.bf16.msra.mxu0 0
  %119 = vmatprep.subr.bf16.mxu0 0
  %120 = vmatpush1.bf16.msra.mxu0 0
  %121 = vmatprep.subr.bf16.mxu0 0
  %122 = vmatpush1.bf16.msra.mxu0 0
  %123 = vmatprep.subr.bf16.mxu0 0
  %124 = vmatpush1.bf16.msra.mxu0 0
  %125 = vmatprep.subr.bf16.mxu0 0
  %126 = vmatpush1.bf16.msra.mxu0 0
  %127 = vmatprep.subr.bf16.mxu0 0
  %128 = vmatpush1.bf16.msra.mxu0 %v112
  %129 = vmatprep.subr.bf16.mxu0 0
  %130 = vmatpush1.bf16.msra.mxu0 %v111
  %131 = vmatprep.subr.bf16.mxu0 0
  %132 = vmatpush2.bf16.msra.mxu0 0
  %133 = vmatprep.subr.bf16.mxu0 0
  %134 = vmatpush2.bf16.msra.mxu0 0
  %135 = vmatprep.subr.bf16.mxu0 0
  %136 = vmatpush2.bf16.msra.mxu0 0
  %137 = vmatprep.subr.bf16.mxu0 0
  %138 = vmatpush2.bf16.msra.mxu0 0
  %139 = vmatprep.subr.bf16.mxu0 0
  %140 = vmatpush2.bf16.msra.mxu0 0
  %141 = vmatprep.subr.bf16.mxu0 0
  %142 = vmatpush2.bf16.msra.mxu0 0
  %143 = vmatprep.subr.bf16.mxu0 0
  %144 = vmatpush2.bf16.msra.mxu0 0
  %145 = vmatprep.subr.bf16.mxu0 0
  %146 = vmatpush2.bf16.msra.mxu0 0
  %147 = vmatprep.mubr.bf16.mxu0 0
  %148 = vmatmul.mubr.bf16.gmra.mxu0 %v50
  %v149 = vpop.f32.mrf.mxu0
  %v150 = vadd.f32 %v101, %v149
  %v151 = vpop.f32.mrf.mxu0
  %v152 = vpop.f32.mrf.mxu0
  %v153 = vpop.f32.mrf.mxu0
  %154 = vdwg.mxu0
  %v155 = vpack.c.bf16 %v87, %v87
  %vm156 = vcmask 519168
  %157 = vst.msk [vmem:[%s5] sm:$0xf] %vm156, %v155
  %v158 = vpack.c.bf16 %v150, %v150
  %159 = vst.msk [vmem:[%s6] sm:$0xf] %vm156, %v158
  // Predicated region
  $region22: #{sentence_tagger_forward.13} parent=0 // pred_check
    _
  $region23: #{sentence_tagger_forward.13} parent=0 // pred_check_branch
    %161 = sbr.rel (0) target = $region25
  $region24: #{sentence_tagger_forward.13} parent=0 // pred_region
    _
  $region25: #{sentence_tagger_forward.13} parent=0 // pred_fallthru
    _
  // Predicated region
  $region26: #{sentence_tagger_forward.13} parent=0 // pred_check
    _
  $region27: #{sentence_tagger_forward.13} parent=0 // pred_check_branch
    %163 = sbr.rel (0) target = $region29
  $region28: #{sentence_tagger_forward.13} parent=0 // pred_region
    _
  $region29: #{sentence_tagger_forward.13} parent=0 // pred_fallthru
    _
  // Predicated region
  $region30: #{sentence_tagger_forward.13} parent=0 // pred_check
    _
  $region31: #{sentence_tagger_forward.13} parent=0 // pred_check_branch
    %165 = sbr.rel (0) target = $region33
  $region32: #{sentence_tagger_forward.13} parent=0 // pred_region
    _
  $region33: #{sentence_tagger_forward.13} parent=0 // pred_fallthru
    _
  // Predicated region
  $region34: #{sentence_tagger_forward.13} parent=0 // pred_check
    _
  $region35: #{sentence_tagger_forward.13} parent=0 // pred_check_branch
    %167 = sbr.rel (0) target = $region37
  $region36: #{sentence_tagger_forward.13} parent=0 // pred_region
    _
  $region37: #{sentence_tagger_forward.13} parent=0 // pred_fallthru
    _

// kernel: sentence_tagger_forward.12
$region0: #{sentence_tagger_forward.12}
  #allocation0 [shape = 'u32[]', space=smem, size = 0x4, offset = 0x4, fixed_abs, tag = 'smem constant byte address 0x4 - core index']
  #allocation1 [shape = 'u32[144,128]{1,0:T(1,128)}', space=vmem, size = 0x12000, scoped, tag = 'internal scratch']
  #allocation2 [shape = 'f32[2,8,16]{2,1,0:T(8,128)}', space=vmem, size = 0x2000, scoped, tag = 'scratch operand']
  #allocation3 [shape = 'f32[2,8,16]{2,1,0:T(8,128)}', space=vmem, size = 0x2000, scoped, tag = 'scratch operand']
  #allocation4 [shape = 'f32[2,8,16]{2,1,0:T(8,128)}', space=vmem, size = 0x2000, scoped, tag = 'scratch operand']
  %s0 = inlined_call_operand.vmem [shape: bf16[8,8,64], index: 0, kind: input, shape index: {}]
  %s1 = inlined_call_operand.vmem [shape: bf16[8,8,64], index: 1, kind: input, shape index: {}]
  %s2 = inlined_call_operand.vmem [shape: bf16[16,64], index: 2, kind: input, shape index: {}]
  %s3 = inlined_call_operand.vmem [shape: bf16[16,64], index: 3, kind: input, shape index: {}]
  %s4 = inlined_call_operand.vmem [shape: f32[8,32], index: 4, kind: output, shape index: {}]
  %s5 = sld [smem:[#allocation0]]
  $region34: #{sentence_tagger_forward.12} parent=0
    _
  %s7 = ssub.s32 1, %s5
  %s8 = scalar_select 0, %s7, %s5
  // Predicated region
  $region2: #{sentence_tagger_forward.12} parent=0 // pred_check
    _
  $region3: #{sentence_tagger_forward.12} parent=0 // pred_check_branch
    %10 = sbr.rel (0) target = $region5
  $region4: #{sentence_tagger_forward.12} parent=0 // pred_region
    _
  $region5: #{sentence_tagger_forward.12} parent=0 // pred_fallthru
    _
  // Predicated region
  $region6: #{sentence_tagger_forward.12} parent=0 // pred_check
    _
  $region7: #{sentence_tagger_forward.12} parent=0 // pred_check_branch
    %12 = sbr.rel (0) target = $region9
  $region8: #{sentence_tagger_forward.12} parent=0 // pred_region
    %s13 = ssub.s32 0, 0
    %s14 = smul.u32 8, %s13
    %p15 = scmp.lt.s32.totalorder %s14, 7
    %s16 = scalar_select %p15, %s14, 7
    %s17 = smul.addr %s16, 4
    %s18 = scalar_lea.vmem %s1, %s17
    %s19 = ssub.s32 0, 0
    %s20 = smul.u32 8, %s19
  $region9: #{sentence_tagger_forward.12} parent=0 // pred_fallthru
    _
  // Predicated region
  $region10: #{sentence_tagger_forward.12} parent=0 // pred_check
    _
  $region11: #{sentence_tagger_forward.12} parent=0 // pred_check_branch
    %22 = sbr.rel (0) target = $region13
  $region12: #{sentence_tagger_forward.12} parent=0 // pred_region
    _
  $region13: #{sentence_tagger_forward.12} parent=0 // pred_fallthru
    _
  // Predicated region
  $region14: #{sentence_tagger_forward.12} parent=0 // pred_check
    _
  $region15: #{sentence_tagger_forward.12} parent=0 // pred_check_branch
    %24 = sbr.rel (0) target = $region17
  $region16: #{sentence_tagger_forward.12} parent=0 // pred_region
    _
  $region17: #{sentence_tagger_forward.12} parent=0 // pred_fallthru
    _
  %s25 = ssub.s32 0, 0
  %s26 = smul.u32 8, %s25
  %p27 = scmp.lt.s32.totalorder %s26, 7
  %s28 = scalar_select %p27, %s26, 7
  %s29 = smul.addr %s28, 4
  %s30 = scalar_lea.vmem %s1, %s29
  %s31 = ssub.s32 0, 0
  %s32 = smul.u32 8, %s31
  %p33 = scmp.lt.s32.totalorder %s32, 7
  %s34 = scalar_select %p33, %s32, 7
  %s35 = smul.addr %s34, 4
  %s36 = scalar_lea.vmem %s1, %s35
  %s37 = ssub.s32 0, 0
  %s38 = smul.u32 8, %s37
  %p40 = scmp.eq.s32.totalorder 0, 0
  // Predicated region
  $region18: #{sentence_tagger_forward.12} parent=0 // pred_check
    %p41 = pneg %p40
  $region19: #{sentence_tagger_forward.12} parent=0 // pred_check_branch
    %43 = sbr.rel (%p41) target = $region21
  $region20: #{sentence_tagger_forward.12} parent=0 // pred_region
    %vm44 = vcmask 130048
    %45 = vst.msk [vmem:[#allocation2] sm:$0xff] %vm44, 0.0
    %46 = vst.msk [vmem:[#allocation2 + $0x8] sm:$0xff] %vm44, 0.0
    %47 = vst.msk [vmem:[#allocation3] sm:$0xff] %vm44, 0.0
    %48 = vst.msk [vmem:[#allocation3 + $0x8] sm:$0xff] %vm44, 0.0
    %49 = vst.msk [vmem:[#allocation4] sm:$0xff] %vm44, 0.0
    %50 = vst.msk [vmem:[#allocation4 + $0x8] sm:$0xff] %vm44, 0.0
  $region21: #{sentence_tagger_forward.12} parent=0 // pred_fallthru
    _
  %v51 = vld [vmem:[%s2] sm:$0xf]
  %v52 = vld [vmem:[%s2 + $0x4] sm:$0xf]
  %v53 = vld [vmem:[%s3] sm:$0xf]
  %v54 = vld [vmem:[%s3 + $0x4] sm:$0xf]
  %v55 = vld [vmem:[#allocation2] sm:$0xff]
  %v56 = vld [vmem:[#allocation3] sm:$0xff]
  %s57 = scalar_lea.vmem [#allocation2], 8
  %v58 = vld [vmem:[%s57] sm:$0xff]
  %s59 = scalar_lea.vmem [#allocation3], 8
  %v60 = vld [vmem:[%s59] sm:$0xff]
  %v61 = vld [vmem:[#allocation4] sm:$0xff]
  %s62 = scalar_lea.vmem [#allocation4], 8
  %v63 = vld [vmem:[%s62] sm:$0xff]
  %v64 = vld [vmem:[%s0] sm:$0xf]
  %v65 = vunpack.c.l.bf16 %v64
  %v66 = vpack.c.bf16 %v55, %v55
  %v69 = vunpack.c.l.b16 %v51
  %v70 = vunpack.c.l.b16 %v52
  %v71 = vpack.c.b16 %v70, %v69
  %vm73 = vcmask 130048
  %v75 = vsel %vm73, %v66, 0
  %77 = vmatprep.subr.bf16.mxu0 0
  %78 = vmatpush1.bf16.msra.mxu0 0
  %79 = vmatprep.subr.bf16.mxu0 0
  %80 = vmatpush1.bf16.msra.mxu0 0
  %81 = vmatprep.subr.bf16.mxu0 0
  %82 = vmatpush1.bf16.msra.mxu0 0
  %83 = vmatprep.subr.bf16.mxu0 0
  %84 = vmatpush1.bf16.msra.mxu0 0
  %85 = vmatprep.subr.bf16.mxu0 0
  %86 = vmatpush1.bf16.msra.mxu0 0
  %87 = vmatprep.subr.bf16.mxu0 0
  %88 = vmatpush1.bf16.msra.mxu0 0
  %89 = vmatprep.subr.bf16.mxu0 0
  %90 = vmatpush1.bf16.msra.mxu0 0
  %91 = vmatprep.subr.bf16.mxu0 0
  %92 = vmatpush1.bf16.msra.mxu0 %v71
  %93 = vmatprep.subr.bf16.mxu0 0
  %94 = vmatpush2.bf16.msra.mxu0 0
  %95 = vmatprep.subr.bf16.mxu0 0
  %96 = vmatpush2.bf16.msra.mxu0 0
  %97 = vmatprep.subr.bf16.mxu0 0
  %98 = vmatpush2.bf16.msra.mxu0 0
  %99 = vmatprep.subr.bf16.mxu0 0
  %100 = vmatpush2.bf16.msra.mxu0 0
  %101 = vmatprep.subr.bf16.mxu0 0
  %102 = vmatpush2.bf16.msra.mxu0 0
  %103 = vmatprep.subr.bf16.mxu0 0
  %104 = vmatpush2.bf16.msra.mxu0 0
  %105 = vmatprep.subr.bf16.mxu0 0
  %106 = vmatpush2.bf16.msra.mxu0 0
  %107 = vmatprep.subr.bf16.mxu0 0
  %108 = vmatpush2.bf16.msra.mxu0 0
  %109 = vmatprep.mubr.bf16.mxu0 0
  %110 = vmatmul.mubr.bf16.gmra.mxu0 %v75
  %v111 = vpop.f32.mrf.mxu0
  %v112 = vadd.f32 0.0, %v111
  %v113 = vpop.f32.mrf.mxu0
  %v114 = vpop.f32.mrf.mxu0
  %v115 = vpop.f32.mrf.mxu0
  %116 = vdwg.mxu0
  %v117 = vadd.f32 %v65, %v112
  %s118 = scalar_lea.vmem %s36, 28
  %v119 = vld [vmem:[%s118] sm:$0xf]
  %v120 = vunpack.c.l.bf16 %v119
  %v121 = vpack.c.bf16 %v58, %v58
  %v124 = vunpack.c.l.b16 %v53
  %v125 = vunpack.c.l.b16 %v54
  %v126 = vpack.c.b16 %v125, %v124
  %v129 = vsel %vm73, %v121, 0
  %131 = vmatprep.subr.bf16.mxu0 0
  %132 = vmatpush1.bf16.msra.mxu0 0
  %133 = vmatprep.subr.bf16.mxu0 0
  %134 = vmatpush1.bf16.msra.mxu0 0
  %135 = vmatprep.subr.bf16.mxu0 0
  %136 = vmatpush1.bf16.msra.mxu0 0
  %137 = vmatprep.subr.bf16.mxu0 0
  %138 = vmatpush1.bf16.msra.mxu0 0
  %139 = vmatprep.subr.bf16.mxu0 0
  %140 = vmatpush1.bf16.msra.mxu0 0
  %141 = vmatprep.subr.bf16.mxu0 0
  %142 = vmatpush1.bf16.msra.mxu0 0
  %143 = vmatprep.subr.bf16.mxu0 0
  %144 = vmatpush1.bf16.msra.mxu0 0
  %145 = vmatprep.subr.bf16.mxu0 0
  %146 = vmatpush1.bf16.msra.mxu0 %v126
  %147 = vmatprep.subr.bf16.mxu0 0
  %148 = vmatpush2.bf16.msra.mxu0 0
  %149 = vmatprep.subr.bf16.mxu0 0
  %150 = vmatpush2.bf16.msra.mxu0 0
  %151 = vmatprep.subr.bf16.mxu0 0
  %152 = vmatpush2.bf16.msra.mxu0 0
  %153 = vmatprep.subr.bf16.mxu0 0
  %154 = vmatpush2.bf16.msra.mxu0 0
  %155 = vmatprep.subr.bf16.mxu0 0
  %156 = vmatpush2.bf16.msra.mxu0 0
  %157 = vmatprep.subr.bf16.mxu0 0
  %158 = vmatpush2.bf16.msra.mxu0 0
  %159 = vmatprep.subr.bf16.mxu0 0
  %160 = vmatpush2.bf16.msra.mxu0 0
  %161 = vmatprep.subr.bf16.mxu0 0
  %162 = vmatpush2.bf16.msra.mxu0 0
  %163 = vmatprep.mubr.bf16.mxu0 0
  %164 = vmatmul.mubr.bf16.gmra.mxu0 %v129
  %v165 = vpop.f32.mrf.mxu0
  %v166 = vadd.f32 0.0, %v165
  %v167 = vpop.f32.mrf.mxu0
  %v168 = vpop.f32.mrf.mxu0
  %v169 = vpop.f32.mrf.mxu0
  %170 = vdwg.mxu0
  %v171 = vadd.f32 %v120, %v166
  %v172 = vxor.u32 %v117, 2147483648
  %v173 = vmul.f32 %v172, 1.442695
  %v174 = vpow.pop %v173
  %v175 = vadd.f32 %v174, 1.0
  %v176 = vrcp.pop %v175
  %v177 = vmul.f32 1.0, %v176
  %v178 = vtanh.pop %v117
  %180 = vrot.lane.b32.xlu0 %v56, 16
  %v181 = vpop.permute.xlu0 %180
  %v183 = vmul.f32 %v177, %v181
  %185 = vrot.lane.b32.xlu0 %v178, 96
  %v186 = vpop.permute.xlu0 %185
  %v188 = vmul.f32 %v177, %v186
  %190 = vrot.lane.b32.xlu0 %v188, 16
  %v191 = vpop.permute.xlu0 %190
  %v193 = vadd.f32 %v183, %v191
  %v194 = vtanh.pop %v193
  %196 = vrot.lane.b32.xlu0 %v194, 32
  %v197 = vpop.permute.xlu0 %196
  %v199 = vmul.f32 %v177, %v197
  %v200 = vxor.u32 %v171, 2147483648
  %v201 = vmul.f32 %v200, 1.442695
  %v202 = vpow.pop %v201
  %v203 = vadd.f32 %v202, 1.0
  %v204 = vrcp.pop %v203
  %v205 = vmul.f32 1.0, %v204
  %v206 = vtanh.pop %v171
  %208 = vrot.lane.b32.xlu0 %v60, 16
  %v209 = vpop.permute.xlu0 %208
  %v211 = vmul.f32 %v205, %v209
  %213 = vrot.lane.b32.xlu0 %v206, 96
  %v214 = vpop.permute.xlu0 %213
  %v216 = vmul.f32 %v205, %v214
  %218 = vrot.lane.b32.xlu0 %v216, 16
  %v219 = vpop.permute.xlu0 %218
  %v221 = vadd.f32 %v211, %v219
  %v222 = vtanh.pop %v221
  %224 = vrot.lane.b32.xlu0 %v222, 32
  %v225 = vpop.permute.xlu0 %224
  %v227 = vmul.f32 %v205, %v225
  %229 = vrot.lane.b32.xlu0 %v199, 80
  %v230 = vpop.permute.xlu0 %229
  %v232 = vadd.f32 %v61, %v230
  %234 = vrot.lane.b32.xlu0 %v227, 80
  %v235 = vpop.permute.xlu0 %234
  %v237 = vadd.f32 %v63, %v235
  %s238 = scalar_lea.vmem %s0, 4
  %v239 = vld [vmem:[%s238] sm:$0xf]
  %v240 = vunpack.c.l.bf16 %v239
  %v241 = vpack.c.bf16 %v199, %v199
  %243 = vrot.lane.b32.xlu0 %v241, 80
  %v244 = vpop.permute.xlu0 %243
  %v246 = vsel %vm73, %v244, 0
  %248 = vmatprep.subr.bf16.mxu0 0
  %249 = vmatpush1.bf16.msra.mxu0 0
  %250 = vmatprep.subr.bf16.mxu0 0
  %251 = vmatpush1.bf16.msra.mxu0 0
  %252 = vmatprep.subr.bf16.mxu0 0
  %253 = vmatpush1.bf16.msra.mxu0 0
  %254 = vmatprep.subr.bf16.mxu0 0
  %255 = vmatpush1.bf16.msra.mxu0 0
  %256 = vmatprep.subr.bf16.mxu0 0
  %257 = vmatpush1.bf16.msra.mxu0 0
  %258 = vmatprep.subr.bf16.mxu0 0
  %259 = vmatpush1.bf16.msra.mxu0 0
  %260 = vmatprep.subr.bf16.mxu0 0
  %261 = vmatpush1.bf16.msra.mxu0 0
  %262 = vmatprep.subr.bf16.mxu0 0
  %263 = vmatpush1.bf16.msra.mxu0 %v71
  %264 = vmatprep.subr.bf16.mxu0 0
  %265 = vmatpush2.bf16.msra.mxu0 0
  %266 = vmatprep.subr.bf16.mxu0 0
  %267 = vmatpush2.bf16.msra.mxu0 0
  %268 = vmatprep.subr.bf16.mxu0 0
  %269 = vmatpush2.bf16.msra.mxu0 0
  %270 = vmatprep.subr.bf16.mxu0 0
  %271 = vmatpush2.bf16.msra.mxu0 0
  %272 = vmatprep.subr.bf16.mxu0 0
  %273 = vmatpush2.bf16.msra.mxu0 0
  %274 = vmatprep.subr.bf16.mxu0 0
  %275 = vmatpush2.bf16.msra.mxu0 0
  %276 = vmatprep.subr.bf16.mxu0 0
  %277 = vmatpush2.bf16.msra.mxu0 0
  %278 = vmatprep.subr.bf16.mxu0 0
  %279 = vmatpush2.bf16.msra.mxu0 0
  %280 = vmatprep.mubr.bf16.mxu0 0
  %281 = vmatmul.mubr.bf16.gmra.mxu0 %v246
  %v282 = vpop.f32.mrf.mxu0
  %v283 = vadd.f32 0.0, %v282
  %v284 = vpop.f32.mrf.mxu0
  %v285 = vpop.f32.mrf.mxu0
  %v286 = vpop.f32.mrf.mxu0
  %287 = vdwg.mxu0
  %v288 = vadd.f32 %v240, %v283
  %s289 = scalar_lea.vmem %s36, 24
  %v290 = vld [vmem:[%s289] sm:$0xf]
  %v291 = vunpack.c.l.bf16 %v290
  %v292 = vpack.c.bf16 %v227, %v227
  %294 = vrot.lane.b32.xlu0 %v292, 80
  %v295 = vpop.permute.xlu0 %294
  %v297 = vsel %vm73, %v295, 0
  %299 = vmatprep.subr.bf16.mxu0 0
  %300 = vmatpush1.bf16.msra.mxu0 0
  %301 = vmatprep.subr.bf16.mxu0 0
  %302 = vmatpush1.bf16.msra.mxu0 0
  %303 = vmatprep.subr.bf16.mxu0 0
  %304 = vmatpush1.bf16.msra.mxu0 0
  %305 = vmatprep.subr.bf16.mxu0 0
  %306 = vmatpush1.bf16.msra.mxu0 0
  %307 = vmatprep.subr.bf16.mxu0 0
  %308 = vmatpush1.bf16.msra.mxu0 0
  %309 = vmatprep.subr.bf16.mxu0 0
  %310 = vmatpush1.bf16.msra.mxu0 0
  %311 = vmatprep.subr.bf16.mxu0 0
  %312 = vmatpush1.bf16.msra.mxu0 0
  %313 = vmatprep.subr.bf16.mxu0 0
  %314 = vmatpush1.bf16.msra.mxu0 %v126
  %315 = vmatprep.subr.bf16.mxu0 0
  %316 = vmatpush2.bf16.msra.mxu0 0
  %317 = vmatprep.subr.bf16.mxu0 0
  %318 = vmatpush2.bf16.msra.mxu0 0
  %319 = vmatprep.subr.bf16.mxu0 0
  %320 = vmatpush2.bf16.msra.mxu0 0
  %321 = vmatprep.subr.bf16.mxu0 0
  %322 = vmatpush2.bf16.msra.mxu0 0
  %323 = vmatprep.subr.bf16.mxu0 0
  %324 = vmatpush2.bf16.msra.mxu0 0
  %325 = vmatprep.subr.bf16.mxu0 0
  %326 = vmatpush2.bf16.msra.mxu0 0
  %327 = vmatprep.subr.bf16.mxu0 0
  %328 = vmatpush2.bf16.msra.mxu0 0
  %329 = vmatprep.subr.bf16.mxu0 0
  %330 = vmatpush2.bf16.msra.mxu0 0
  %331 = vmatprep.mubr.bf16.mxu0 0
  %332 = vmatmul.mubr.bf16.gmra.mxu0 %v297
  %v333 = vpop.f32.mrf.mxu0
  %v334 = vadd.f32 0.0, %v333
  %v335 = vpop.f32.mrf.mxu0
  %v336 = vpop.f32.mrf.mxu0
  %v337 = vpop.f32.mrf.mxu0
  %338 = vdwg.mxu0
  %v339 = vadd.f32 %v291, %v334
  %v340 = vxor.u32 %v288, 2147483648
  %v341 = vmul.f32 %v340, 1.442695
  %v342 = vpow.pop %v341
  %v343 = vadd.f32 %v342, 1.0
  %v344 = vrcp.pop %v343
  %v345 = vmul.f32 1.0, %v344
  %v346 = vtanh.pop %v288
  %v347 = vmul.f32 %v345, %v193
  %349 = vrot.lane.b32.xlu0 %v346, 96
  %v350 = vpop.permute.xlu0 %349
  %v352 = vmul.f32 %v345, %v350
  %354 = vrot.lane.b32.xlu0 %v352, 16
  %v355 = vpop.permute.xlu0 %354
  %v357 = vadd.f32 %v347, %v355
  %v358 = vtanh.pop %v357
  %360 = vrot.lane.b32.xlu0 %v358, 32
  %v361 = vpop.permute.xlu0 %360
  %v363 = vmul.f32 %v345, %v361
  %v364 = vxor.u32 %v339, 2147483648
  %v365 = vmul.f32 %v364, 1.442695
  %v366 = vpow.pop %v365
  %v367 = vadd.f32 %v366, 1.0
  %v368 = vrcp.pop %v367
  %v369 = vmul.f32 1.0, %v368
  %v370 = vtanh.pop %v339
  %v371 = vmul.f32 %v369, %v221
  %373 = vrot.lane.b32.xlu0 %v370, 96
  %v374 = vpop.permute.xlu0 %373
  %v376 = vmul.f32 %v369, %v374
  %378 = vrot.lane.b32.xlu0 %v376, 16
  %v379 = vpop.permute.xlu0 %378
  %v381 = vadd.f32 %v371, %v379
  %v382 = vtanh.pop %v381
  %384 = vrot.lane.b32.xlu0 %v382, 32
  %v385 = vpop.permute.xlu0 %384
  %v387 = vmul.f32 %v369, %v385
  %389 = vrot.lane.b32.xlu0 %v363, 80
  %v390 = vpop.permute.xlu0 %389
  %v392 = vadd.f32 %v232, %v390
  %394 = vrot.lane.b32.xlu0 %v387, 80
  %v395 = vpop.permute.xlu0 %394
  %v397 = vadd.f32 %v237, %v395
  %s398 = scalar_lea.vmem %s0, 8
  %v399 = vld [vmem:[%s398] sm:$0xf]
  %v400 = vunpack.c.l.bf16 %v399
  %v401 = vpack.c.bf16 %v363, %v363
  %403 = vrot.lane.b32.xlu0 %v401, 80
  %v404 = vpop.permute.xlu0 %403
  %v406 = vsel %vm73, %v404, 0
  %408 = vmatprep.subr.bf16.mxu0 0
  %409 = vmatpush1.bf16.msra.mxu0 0
  %410 = vmatprep.subr.bf16.mxu0 0
  %411 = vmatpush1.bf16.msra.mxu0 0
  %412 = vmatprep.subr.bf16.mxu0 0
  %413 = vmatpush1.bf16.msra.mxu0 0
  %414 = vmatprep.subr.bf16.mxu0 0
  %415 = vmatpush1.bf16.msra.mxu0 0
  %416 = vmatprep.subr.bf16.mxu0 0
  %417 = vmatpush1.bf16.msra.mxu0 0
  %418 = vmatprep.subr.bf16.mxu0 0
  %419 = vmatpush1.bf16.msra.mxu0 0
  %420 = vmatprep.subr.bf16.mxu0 0
  %421 = vmatpush1.bf16.msra.mxu0 0
  %422 = vmatprep.subr.bf16.mxu0 0
  %423 = vmatpush1.bf16.msra.mxu0 %v71
  %424 = vmatprep.subr.bf16.mxu0 0
  %425 = vmatpush2.bf16.msra.mxu0 0
  %426 = vmatprep.subr.bf16.mxu0 0
  %427 = vmatpush2.bf16.msra.mxu0 0
  %428 = vmatprep.subr.bf16.mxu0 0
  %429 = vmatpush2.bf16.msra.mxu0 0
  %430 = vmatprep.subr.bf16.mxu0 0
  %431 = vmatpush2.bf16.msra.mxu0 0
  %432 = vmatprep.subr.bf16.mxu0 0
  %433 = vmatpush2.bf16.msra.mxu0 0
  %434 = vmatprep.subr.bf16.mxu0 0
  %435 = vmatpush2.bf16.msra.mxu0 0
  %436 = vmatprep.subr.bf16.mxu0 0
  %437 = vmatpush2.bf16.msra.mxu0 0
  %438 = vmatprep.subr.bf16.mxu0 0
  %439 = vmatpush2.bf16.msra.mxu0 0
  %440 = vmatprep.mubr.bf16.mxu0 0
  %441 = vmatmul.mubr.bf16.gmra.mxu0 %v406
  %v442 = vpop.f32.mrf.mxu0
  %v443 = vadd.f32 0.0, %v442
  %v444 = vpop.f32.mrf.mxu0
  %v445 = vpop.f32.mrf.mxu0
  %v446 = vpop.f32.mrf.mxu0
  %447 = vdwg.mxu0
  %v448 = vadd.f32 %v400, %v443
  %s449 = scalar_lea.vmem %s36, 20
  %v450 = vld [vmem:[%s449] sm:$0xf]
  %v451 = vunpack.c.l.bf16 %v450
  %v452 = vpack.c.bf16 %v387, %v387
  %454 = vrot.lane.b32.xlu0 %v452, 80
  %v455 = vpop.permute.xlu0 %454
  %v457 = vsel %vm73, %v455, 0
  %459 = vmatprep.subr.bf16.mxu0 0
  %460 = vmatpush1.bf16.msra.mxu0 0
  %461 = vmatprep.subr.bf16.mxu0 0
  %462 = vmatpush1.bf16.msra.mxu0 0
  %463 = vmatprep.subr.bf16.mxu0 0
  %464 = vmatpush1.bf16.msra.mxu0 0
  %465 = vmatprep.subr.bf16.mxu0 0
  %466 = vmatpush1.bf16.msra.mxu0 0
  %467 = vmatprep.subr.bf16.mxu0 0
  %468 = vmatpush1.bf16.msra.mxu0 0
  %469 = vmatprep.subr.bf16.mxu0 0
  %470 = vmatpush1.bf16.msra.mxu0 0
  %471 = vmatprep.subr.bf16.mxu0 0
  %472 = vmatpush1.bf16.msra.mxu0 0
  %473 = vmatprep.subr.bf16.mxu0 0
  %474 = vmatpush1.bf16.msra.mxu0 %v126
  %475 = vmatprep.subr.bf16.mxu0 0
  %476 = vmatpush2.bf16.msra.mxu0 0
  %477 = vmatprep.subr.bf16.mxu0 0
  %478 = vmatpush2.bf16.msra.mxu0 0
  %479 = vmatprep.subr.bf16.mxu0 0
  %480 = vmatpush2.bf16.msra.mxu0 0
  %481 = vmatprep.subr.bf16.mxu0 0
  %482 = vmatpush2.bf16.msra.mxu0 0
  %483 = vmatprep.subr.bf16.mxu0 0
  %484 = vmatpush2.bf16.msra.mxu0 0
  %485 = vmatprep.subr.bf16.mxu0 0
  %486 = vmatpush2.bf16.msra.mxu0 0
  %487 = vmatprep.subr.bf16.mxu0 0
  %488 = vmatpush2.bf16.msra.mxu0 0
  %489 = vmatprep.subr.bf16.mxu0 0
  %490 = vmatpush2.bf16.msra.mxu0 0
  %491 = vmatprep.mubr.bf16.mxu0 0
  %492 = vmatmul.mubr.bf16.gmra.mxu0 %v457
  %v493 = vpop.f32.mrf.mxu0
  %v494 = vadd.f32 0.0, %v493
  %v495 = vpop.f32.mrf.mxu0
  %v496 = vpop.f32.mrf.mxu0
  %v497 = vpop.f32.mrf.mxu0
  %498 = vdwg.mxu0
  %v499 = vadd.f32 %v451, %v494
  %v500 = vxor.u32 %v448, 2147483648
  %v501 = vmul.f32 %v500, 1.442695
  %v502 = vpow.pop %v501
  %v503 = vadd.f32 %v502, 1.0
  %v504 = vrcp.pop %v503
  %v505 = vmul.f32 1.0, %v504
  %v506 = vtanh.pop %v448
  %v507 = vmul.f32 %v505, %v357
  %509 = vrot.lane.b32.xlu0 %v506, 96
  %v510 = vpop.permute.xlu0 %509
  %v512 = vmul.f32 %v505, %v510
  %514 = vrot.lane.b32.xlu0 %v512, 16
  %v515 = vpop.permute.xlu0 %514
  %v517 = vadd.f32 %v507, %v515
  %v518 = vtanh.pop %v517
  %520 = vrot.lane.b32.xlu0 %v518, 32
  %v521 = vpop.permute.xlu0 %520
  %v523 = vmul.f32 %v505, %v521
  %v524 = vxor.u32 %v499, 2147483648
  %v525 = vmul.f32 %v524, 1.442695
  %v526 = vpow.pop %v525
  %v527 = vadd.f32 %v526, 1.0
  %v528 = vrcp.pop %v527
  %v529 = vmul.f32 1.0, %v528
  %v530 = vtanh.pop %v499
  %v531 = vmul.f32 %v529, %v381
  %533 = vrot.lane.b32.xlu0 %v530, 96
  %v534 = vpop.permute.xlu0 %533
  %v536 = vmul.f32 %v529, %v534
  %538 = vrot.lane.b32.xlu0 %v536, 16
  %v539 = vpop.permute.xlu0 %538
  %v541 = vadd.f32 %v531, %v539
  %v542 = vtanh.pop %v541
  %544 = vrot.lane.b32.xlu0 %v542, 32
  %v545 = vpop.permute.xlu0 %544
  %v547 = vmul.f32 %v529, %v545
  %549 = vrot.lane.b32.xlu0 %v523, 80
  %v550 = vpop.permute.xlu0 %549
  %v552 = vadd.f32 %v392, %v550
  %554 = vrot.lane.b32.xlu0 %v547, 80
  %v555 = vpop.permute.xlu0 %554
  %v557 = vadd.f32 %v397, %v555
  %s558 = scalar_lea.vmem %s0, 12
  %v559 = vld [vmem:[%s558] sm:$0xf]
  %v560 = vunpack.c.l.bf16 %v559
  %v561 = vpack.c.bf16 %v523, %v523
  %563 = vrot.lane.b32.xlu0 %v561, 80
  %v564 = vpop.permute.xlu0 %563
  %v566 = vsel %vm73, %v564, 0
  %568 = vmatprep.subr.bf16.mxu0 0
  %569 = vmatpush1.bf16.msra.mxu0 0
  %570 = vmatprep.subr.bf16.mxu0 0
  %571 = vmatpush1.bf16.msra.mxu0 0
  %572 = vmatprep.subr.bf16.mxu0 0
  %573 = vmatpush1.bf16.msra.mxu0 0
  %574 = vmatprep.subr.bf16.mxu0 0
  %575 = vmatpush1.bf16.msra.mxu0 0
  %576 = vmatprep.subr.bf16.mxu0 0
  %577 = vmatpush1.bf16.msra.mxu0 0
  %578 = vmatprep.subr.bf16.mxu0 0
  %579 = vmatpush1.bf16.msra.mxu0 0
  %580 = vmatprep.subr.bf16.mxu0 0
  %581 = vmatpush1.bf16.msra.mxu0 0
  %582 = vmatprep.subr.bf16.mxu0 0
  %583 = vmatpush1.bf16.msra.mxu0 %v71
  %584 = vmatprep.subr.bf16.mxu0 0
  %585 = vmatpush2.bf16.msra.mxu0 0
  %586 = vmatprep.subr.bf16.mxu0 0
  %587 = vmatpush2.bf16.msra.mxu0 0
  %588 = vmatprep.subr.bf16.mxu0 0
  %589 = vmatpush2.bf16.msra.mxu0 0
  %590 = vmatprep.subr.bf16.mxu0 0
  %591 = vmatpush2.bf16.msra.mxu0 0
  %592 = vmatprep.subr.bf16.mxu0 0
  %593 = vmatpush2.bf16.msra.mxu0 0
  %594 = vmatprep.subr.bf16.mxu0 0
  %595 = vmatpush2.bf16.msra.mxu0 0
  %596 = vmatprep.subr.bf16.mxu0 0
  %597 = vmatpush2.bf16.msra.mxu0 0
  %598 = vmatprep.subr.bf16.mxu0 0
  %599 = vmatpush2.bf16.msra.mxu0 0
  %600 = vmatprep.mubr.bf16.mxu0 0
  %601 = vmatmul.mubr.bf16.gmra.mxu0 %v566
  %v602 = vpop.f32.mrf.mxu0
  %v603 = vadd.f32 0.0, %v602
  %v604 = vpop.f32.mrf.mxu0
  %v605 = vpop.f32.mrf.mxu0
  %v606 = vpop.f32.mrf.mxu0
  %607 = vdwg.mxu0
  %v608 = vadd.f32 %v560, %v603
  %s609 = scalar_lea.vmem %s36, 16
  %v610 = vld [vmem:[%s609] sm:$0xf]
  %v611 = vunpack.c.l.bf16 %v610
  %v612 = vpack.c.bf16 %v547, %v547
  %614 = vrot.lane.b32.xlu0 %v612, 80
  %v615 = vpop.permute.xlu0 %614
  %v617 = vsel %vm73, %v615, 0
  %619 = vmatprep.subr.bf16.mxu0 0
  %620 = vmatpush1.bf16.msra.mxu0 0
  %621 = vmatprep.subr.bf16.mxu0 0
  %622 = vmatpush1.bf16.msra.mxu0 0
  %623 = vmatprep.subr.bf16.mxu0 0
  %624 = vmatpush1.bf16.msra.mxu0 0
  %625 = vmatprep.subr.bf16.mxu0 0
  %626 = vmatpush1.bf16.msra.mxu0 0
  %627 = vmatprep.subr.bf16.mxu0 0
  %628 = vmatpush1.bf16.msra.mxu0 0
  %629 = vmatprep.subr.bf16.mxu0 0
  %630 = vmatpush1.bf16.msra.mxu0 0
  %631 = vmatprep.subr.bf16.mxu0 0
  %632 = vmatpush1.bf16.msra.mxu0 0
  %633 = vmatprep.subr.bf16.mxu0 0
  %634 = vmatpush1.bf16.msra.mxu0 %v126
  %635 = vmatprep.subr.bf16.mxu0 0
  %636 = vmatpush2.bf16.msra.mxu0 0
  %637 = vmatprep.subr.bf16.mxu0 0
  %638 = vmatpush2.bf16.msra.mxu0 0
  %639 = vmatprep.subr.bf16.mxu0 0
  %640 = vmatpush2.bf16.msra.mxu0 0
  %641 = vmatprep.subr.bf16.mxu0 0
  %642 = vmatpush2.bf16.msra.mxu0 0
  %643 = vmatprep.subr.bf16.mxu0 0
  %644 = vmatpush2.bf16.msra.mxu0 0
  %645 = vmatprep.subr.bf16.mxu0 0
  %646 = vmatpush2.bf16.msra.mxu0 0
  %647 = vmatprep.subr.bf16.mxu0 0
  %648 = vmatpush2.bf16.msra.mxu0 0
  %649 = vmatprep.subr.bf16.mxu0 0
  %650 = vmatpush2.bf16.msra.mxu0 0
  %651 = vmatprep.mubr.bf16.mxu0 0
  %652 = vmatmul.mubr.bf16.gmra.mxu0 %v617
  %v653 = vpop.f32.mrf.mxu0
  %v654 = vadd.f32 0.0, %v653
  %v655 = vpop.f32.mrf.mxu0
  %v656 = vpop.f32.mrf.mxu0
  %v657 = vpop.f32.mrf.mxu0
  %658 = vdwg.mxu0
  %v659 = vadd.f32 %v611, %v654
  %v660 = vxor.u32 %v608, 2147483648
  %v661 = vmul.f32 %v660, 1.442695
  %v662 = vpow.pop %v661
  %v663 = vadd.f32 %v662, 1.0
  %v664 = vrcp.pop %v663
  %v665 = vmul.f32 1.0, %v664
  %v666 = vtanh.pop %v608
  %v667 = vmul.f32 %v665, %v517
  %669 = vrot.lane.b32.xlu0 %v666, 96
  %v670 = vpop.permute.xlu0 %669
  %v672 = vmul.f32 %v665, %v670
  %674 = vrot.lane.b32.xlu0 %v672, 16
  %v675 = vpop.permute.xlu0 %674
  %v677 = vadd.f32 %v667, %v675
  %v678 = vtanh.pop %v677
  %680 = vrot.lane.b32.xlu0 %v678, 32
  %v681 = vpop.permute.xlu0 %680
  %v683 = vmul.f32 %v665, %v681
  %v684 = vxor.u32 %v659, 2147483648
  %v685 = vmul.f32 %v684, 1.442695
  %v686 = vpow.pop %v685
  %v687 = vadd.f32 %v686, 1.0
  %v688 = vrcp.pop %v687
  %v689 = vmul.f32 1.0, %v688
  %v690 = vtanh.pop %v659
  %v691 = vmul.f32 %v689, %v541
  %693 = vrot.lane.b32.xlu0 %v690, 96
  %v694 = vpop.permute.xlu0 %693
  %v696 = vmul.f32 %v689, %v694
  %698 = vrot.lane.b32.xlu0 %v696, 16
  %v699 = vpop.permute.xlu0 %698
  %v701 = vadd.f32 %v691, %v699
  %v702 = vtanh.pop %v701
  %704 = vrot.lane.b32.xlu0 %v702, 32
  %v705 = vpop.permute.xlu0 %704
  %v707 = vmul.f32 %v689, %v705
  %709 = vrot.lane.b32.xlu0 %v683, 80
  %v710 = vpop.permute.xlu0 %709
  %v712 = vadd.f32 %v552, %v710
  %714 = vrot.lane.b32.xlu0 %v707, 80
  %v715 = vpop.permute.xlu0 %714
  %v717 = vadd.f32 %v557, %v715
  %s718 = scalar_lea.vmem %s0, 16
  %v719 = vld [vmem:[%s718] sm:$0xf]
  %v720 = vunpack.c.l.bf16 %v719
  %v721 = vpack.c.bf16 %v683, %v683
  %723 = vrot.lane.b32.xlu0 %v721, 80
  %v724 = vpop.permute.xlu0 %723
  %v726 = vsel %vm73, %v724, 0
  %728 = vmatprep.subr.bf16.mxu0 0
  %729 = vmatpush1.bf16.msra.mxu0 0
  %730 = vmatprep.subr.bf16.mxu0 0
  %731 = vmatpush1.bf16.msra.mxu0 0
  %732 = vmatprep.subr.bf16.mxu0 0
  %733 = vmatpush1.bf16.msra.mxu0 0
  %734 = vmatprep.subr.bf16.mxu0 0
  %735 = vmatpush1.bf16.msra.mxu0 0
  %736 = vmatprep.subr.bf16.mxu0 0
  %737 = vmatpush1.bf16.msra.mxu0 0
  %738 = vmatprep.subr.bf16.mxu0 0
  %739 = vmatpush1.bf16.msra.mxu0 0
  %740 = vmatprep.subr.bf16.mxu0 0
  %741 = vmatpush1.bf16.msra.mxu0 0
  %742 = vmatprep.subr.bf16.mxu0 0
  %743 = vmatpush1.bf16.msra.mxu0 %v71
  %744 = vmatprep.subr.bf16.mxu0 0
  %745 = vmatpush2.bf16.msra.mxu0 0
  %746 = vmatprep.subr.bf16.mxu0 0
  %747 = vmatpush2.bf16.msra.mxu0 0
  %748 = vmatprep.subr.bf16.mxu0 0
  %749 = vmatpush2.bf16.msra.mxu0 0
  %750 = vmatprep.subr.bf16.mxu0 0
  %751 = vmatpush2.bf16.msra.mxu0 0
  %752 = vmatprep.subr.bf16.mxu0 0
  %753 = vmatpush2.bf16.msra.mxu0 0
  %754 = vmatprep.subr.bf16.mxu0 0
  %755 = vmatpush2.bf16.msra.mxu0 0
  %756 = vmatprep.subr.bf16.mxu0 0
  %757 = vmatpush2.bf16.msra.mxu0 0
  %758 = vmatprep.subr.bf16.mxu0 0
  %759 = vmatpush2.bf16.msra.mxu0 0
  %760 = vmatprep.mubr.bf16.mxu0 0
  %761 = vmatmul.mubr.bf16.gmra.mxu0 %v726
  %v762 = vpop.f32.mrf.mxu0
  %v763 = vadd.f32 0.0, %v762
  %v764 = vpop.f32.mrf.mxu0
  %v765 = vpop.f32.mrf.mxu0
  %v766 = vpop.f32.mrf.mxu0
  %767 = vdwg.mxu0
  %v768 = vadd.f32 %v720, %v763
  %s769 = scalar_lea.vmem %s36, 12
  %v770 = vld [vmem:[%s769] sm:$0xf]
  %v771 = vunpack.c.l.bf16 %v770
  %v772 = vpack.c.bf16 %v707, %v707
  %774 = vrot.lane.b32.xlu0 %v772, 80
  %v775 = vpop.permute.xlu0 %774
  %v777 = vsel %vm73, %v775, 0
  %779 = vmatprep.subr.bf16.mxu0 0
  %780 = vmatpush1.bf16.msra.mxu0 0
  %781 = vmatprep.subr.bf16.mxu0 0
  %782 = vmatpush1.bf16.msra.mxu0 0
  %783 = vmatprep.subr.bf16.mxu0 0
  %784 = vmatpush1.bf16.msra.mxu0 0
  %785 = vmatprep.subr.bf16.mxu0 0
  %786 = vmatpush1.bf16.msra.mxu0 0
  %787 = vmatprep.subr.bf16.mxu0 0
  %788 = vmatpush1.bf16.msra.mxu0 0
  %789 = vmatprep.subr.bf16.mxu0 0
  %790 = vmatpush1.bf16.msra.mxu0 0
  %791 = vmatprep.subr.bf16.mxu0 0
  %792 = vmatpush1.bf16.msra.mxu0 0
  %793 = vmatprep.subr.bf16.mxu0 0
  %794 = vmatpush1.bf16.msra.mxu0 %v126
  %795 = vmatprep.subr.bf16.mxu0 0
  %796 = vmatpush2.bf16.msra.mxu0 0
  %797 = vmatprep.subr.bf16.mxu0 0
  %798 = vmatpush2.bf16.msra.mxu0 0
  %799 = vmatprep.subr.bf16.mxu0 0
  %800 = vmatpush2.bf16.msra.mxu0 0
  %801 = vmatprep.subr.bf16.mxu0 0
  %802 = vmatpush2.bf16.msra.mxu0 0
  %803 = vmatprep.subr.bf16.mxu0 0
  %804 = vmatpush2.bf16.msra.mxu0 0
  %805 = vmatprep.subr.bf16.mxu0 0
  %806 = vmatpush2.bf16.msra.mxu0 0
  %807 = vmatprep.subr.bf16.mxu0 0
  %808 = vmatpush2.bf16.msra.mxu0 0
  %809 = vmatprep.subr.bf16.mxu0 0
  %810 = vmatpush2.bf16.msra.mxu0 0
  %811 = vmatprep.mubr.bf16.mxu0 0
  %812 = vmatmul.mubr.bf16.gmra.mxu0 %v777
  %v813 = vpop.f32.mrf.mxu0
  %v814 = vadd.f32 0.0, %v813
  %v815 = vpop.f32.mrf.mxu0
  %v816 = vpop.f32.mrf.mxu0
  %v817 = vpop.f32.mrf.mxu0
  %818 = vdwg.mxu0
  %v819 = vadd.f32 %v771, %v814
  %v820 = vxor.u32 %v768, 2147483648
  %v821 = vmul.f32 %v820, 1.442695
  %v822 = vpow.pop %v821
  %v823 = vadd.f32 %v822, 1.0
  %v824 = vrcp.pop %v823
  %v825 = vmul.f32 1.0, %v824
  %v826 = vtanh.pop %v768
  %v827 = vmul.f32 %v825, %v677
  %829 = vrot.lane.b32.xlu0 %v826, 96
  %v830 = vpop.permute.xlu0 %829
  %v832 = vmul.f32 %v825, %v830
  %834 = vrot.lane.b32.xlu0 %v832, 16
  %v835 = vpop.permute.xlu0 %834
  %v837 = vadd.f32 %v827, %v835
  %v838 = vtanh.pop %v837
  %840 = vrot.lane.b32.xlu0 %v838, 32
  %v841 = vpop.permute.xlu0 %840
  %v843 = vmul.f32 %v825, %v841
  %v844 = vxor.u32 %v819, 2147483648
  %v845 = vmul.f32 %v844, 1.442695
  %v846 = vpow.pop %v845
  %v847 = vadd.f32 %v846, 1.0
  %v848 = vrcp.pop %v847
  %v849 = vmul.f32 1.0, %v848
  %v850 = vtanh.pop %v819
  %v851 = vmul.f32 %v849, %v701
  %853 = vrot.lane.b32.xlu0 %v850, 96
  %v854 = vpop.permute.xlu0 %853
  %v856 = vmul.f32 %v849, %v854
  %858 = vrot.lane.b32.xlu0 %v856, 16
  %v859 = vpop.permute.xlu0 %858
  %v861 = vadd.f32 %v851, %v859
  %v862 = vtanh.pop %v861
  %864 = vrot.lane.b32.xlu0 %v862, 32
  %v865 = vpop.permute.xlu0 %864
  %v867 = vmul.f32 %v849, %v865
  %869 = vrot.lane.b32.xlu0 %v843, 80
  %v870 = vpop.permute.xlu0 %869
  %v872 = vadd.f32 %v712, %v870
  %874 = vrot.lane.b32.xlu0 %v867, 80
  %v875 = vpop.permute.xlu0 %874
  %v877 = vadd.f32 %v717, %v875
  %s878 = scalar_lea.vmem %s0, 20
  %v879 = vld [vmem:[%s878] sm:$0xf]
  %v880 = vunpack.c.l.bf16 %v879
  %v881 = vpack.c.bf16 %v843, %v843
  %883 = vrot.lane.b32.xlu0 %v881, 80
  %v884 = vpop.permute.xlu0 %883
  %v886 = vsel %vm73, %v884, 0
  %888 = vmatprep.subr.bf16.mxu0 0
  %889 = vmatpush1.bf16.msra.mxu0 0
  %890 = vmatprep.subr.bf16.mxu0 0
  %891 = vmatpush1.bf16.msra.mxu0 0
  %892 = vmatprep.subr.bf16.mxu0 0
  %893 = vmatpush1.bf16.msra.mxu0 0
  %894 = vmatprep.subr.bf16.mxu0 0
  %895 = vmatpush1.bf16.msra.mxu0 0
  %896 = vmatprep.subr.bf16.mxu0 0
  %897 = vmatpush1.bf16.msra.mxu0 0
  %898 = vmatprep.subr.bf16.mxu0 0
  %899 = vmatpush1.bf16.msra.mxu0 0
  %900 = vmatprep.subr.bf16.mxu0 0
  %901 = vmatpush1.bf16.msra.mxu0 0
  %902 = vmatprep.subr.bf16.mxu0 0
  %903 = vmatpush1.bf16.msra.mxu0 %v71
  %904 = vmatprep.subr.bf16.mxu0 0
  %905 = vmatpush2.bf16.msra.mxu0 0
  %906 = vmatprep.subr.bf16.mxu0 0
  %907 = vmatpush2.bf16.msra.mxu0 0
  %908 = vmatprep.subr.bf16.mxu0 0
  %909 = vmatpush2.bf16.msra.mxu0 0
  %910 = vmatprep.subr.bf16.mxu0 0
  %911 = vmatpush2.bf16.msra.mxu0 0
  %912 = vmatprep.subr.bf16.mxu0 0
  %913 = vmatpush2.bf16.msra.mxu0 0
  %914 = vmatprep.subr.bf16.mxu0 0
  %915 = vmatpush2.bf16.msra.mxu0 0
  %916 = vmatprep.subr.bf16.mxu0 0
  %917 = vmatpush2.bf16.msra.mxu0 0
  %918 = vmatprep.subr.bf16.mxu0 0
  %919 = vmatpush2.bf16.msra.mxu0 0
  %920 = vmatprep.mubr.bf16.mxu0 0
  %921 = vmatmul.mubr.bf16.gmra.mxu0 %v886
  %v922 = vpop.f32.mrf.mxu0
  %v923 = vadd.f32 0.0, %v922
  %v924 = vpop.f32.mrf.mxu0
  %v925 = vpop.f32.mrf.mxu0
  %v926 = vpop.f32.mrf.mxu0
  %927 = vdwg.mxu0
  %v928 = vadd.f32 %v880, %v923
  %s929 = scalar_lea.vmem %s36, 8
  %v930 = vld [vmem:[%s929] sm:$0xf]
  %v931 = vunpack.c.l.bf16 %v930
  %v932 = vpack.c.bf16 %v867, %v867
  %934 = vrot.lane.b32.xlu0 %v932, 80
  %v935 = vpop.permute.xlu0 %934
  %v937 = vsel %vm73, %v935, 0
  %939 = vmatprep.subr.bf16.mxu0 0
  %940 = vmatpush1.bf16.msra.mxu0 0
  %941 = vmatprep.subr.bf16.mxu0 0
  %942 = vmatpush1.bf16.msra.mxu0 0
  %943 = vmatprep.subr.bf16.mxu0 0
  %944 = vmatpush1.bf16.msra.mxu0 0
  %945 = vmatprep.subr.bf16.mxu0 0
  %946 = vmatpush1.bf16.msra.mxu0 0
  %947 = vmatprep.subr.bf16.mxu0 0
  %948 = vmatpush1.bf16.msra.mxu0 0
  %949 = vmatprep.subr.bf16.mxu0 0
  %950 = vmatpush1.bf16.msra.mxu0 0
  %951 = vmatprep.subr.bf16.mxu0 0
  %952 = vmatpush1.bf16.msra.mxu0 0
  %953 = vmatprep.subr.bf16.mxu0 0
  %954 = vmatpush1.bf16.msra.mxu0 %v126
  %955 = vmatprep.subr.bf16.mxu0 0
  %956 = vmatpush2.bf16.msra.mxu0 0
  %957 = vmatprep.subr.bf16.mxu0 0
  %958 = vmatpush2.bf16.msra.mxu0 0
  %959 = vmatprep.subr.bf16.mxu0 0
  %960 = vmatpush2.bf16.msra.mxu0 0
  %961 = vmatprep.subr.bf16.mxu0 0
  %962 = vmatpush2.bf16.msra.mxu0 0
  %963 = vmatprep.subr.bf16.mxu0 0
  %964 = vmatpush2.bf16.msra.mxu0 0
  %965 = vmatprep.subr.bf16.mxu0 0
  %966 = vmatpush2.bf16.msra.mxu0 0
  %967 = vmatprep.subr.bf16.mxu0 0
  %968 = vmatpush2.bf16.msra.mxu0 0
  %969 = vmatprep.subr.bf16.mxu0 0
  %970 = vmatpush2.bf16.msra.mxu0 0
  %971 = vmatprep.mubr.bf16.mxu0 0
  %972 = vmatmul.mubr.bf16.gmra.mxu0 %v937
  %v973 = vpop.f32.mrf.mxu0
  %v974 = vadd.f32 0.0, %v973
  %v975 = vpop.f32.mrf.mxu0
  %v976 = vpop.f32.mrf.mxu0
  %v977 = vpop.f32.mrf.mxu0
  %978 = vdwg.mxu0
  %v979 = vadd.f32 %v931, %v974
  %v980 = vxor.u32 %v928, 2147483648
  %v981 = vmul.f32 %v980, 1.442695
  %v982 = vpow.pop %v981
  %v983 = vadd.f32 %v982, 1.0
  %v984 = vrcp.pop %v983
  %v985 = vmul.f32 1.0, %v984
  %v986 = vtanh.pop %v928
  %v987 = vmul.f32 %v985, %v837
  %989 = vrot.lane.b32.xlu0 %v986, 96
  %v990 = vpop.permute.xlu0 %989
  %v992 = vmul.f32 %v985, %v990
  %994 = vrot.lane.b32.xlu0 %v992, 16
  %v995 = vpop.permute.xlu0 %994
  %v997 = vadd.f32 %v987, %v995
  %v998 = vtanh.pop %v997
  %1000 = vrot.lane.b32.xlu0 %v998, 32
  %v1001 = vpop.permute.xlu0 %1000
  %v1003 = vmul.f32 %v985, %v1001
  %v1004 = vxor.u32 %v979, 2147483648
  %v1005 = vmul.f32 %v1004, 1.442695
  %v1006 = vpow.pop %v1005
  %v1007 = vadd.f32 %v1006, 1.0
  %v1008 = vrcp.pop %v1007
  %v1009 = vmul.f32 1.0, %v1008
  %v1010 = vtanh.pop %v979
  %v1011 = vmul.f32 %v1009, %v861
  %1013 = vrot.lane.b32.xlu0 %v1010, 96
  %v1014 = vpop.permute.xlu0 %1013
  %v1016 = vmul.f32 %v1009, %v1014
  %1018 = vrot.lane.b32.xlu0 %v1016, 16
  %v1019 = vpop.permute.xlu0 %1018
  %v1021 = vadd.f32 %v1011, %v1019
  %v1022 = vtanh.pop %v1021
  %1024 = vrot.lane.b32.xlu0 %v1022, 32
  %v1025 = vpop.permute.xlu0 %1024
  %v1027 = vmul.f32 %v1009, %v1025
  %1029 = vrot.lane.b32.xlu0 %v1003, 80
  %v1030 = vpop.permute.xlu0 %1029
  %v1032 = vadd.f32 %v872, %v1030
  %1034 = vrot.lane.b32.xlu0 %v1027, 80
  %v1035 = vpop.permute.xlu0 %1034
  %v1037 = vadd.f32 %v877, %v1035
  %s1038 = scalar_lea.vmem %s0, 24
  %v1039 = vld [vmem:[%s1038] sm:$0xf]
  %v1040 = vunpack.c.l.bf16 %v1039
  %v1041 = vpack.c.bf16 %v1003, %v1003
  %1043 = vrot.lane.b32.xlu0 %v1041, 80
  %v1044 = vpop.permute.xlu0 %1043
  %v1046 = vsel %vm73, %v1044, 0
  %1048 = vmatprep.subr.bf16.mxu0 0
  %1049 = vmatpush1.bf16.msra.mxu0 0
  %1050 = vmatprep.subr.bf16.mxu0 0
  %1051 = vmatpush1.bf16.msra.mxu0 0
  %1052 = vmatprep.subr.bf16.mxu0 0
  %1053 = vmatpush1.bf16.msra.mxu0 0
  %1054 = vmatprep.subr.bf16.mxu0 0
  %1055 = vmatpush1.bf16.msra.mxu0 0
  %1056 = vmatprep.subr.bf16.mxu0 0
  %1057 = vmatpush1.bf16.msra.mxu0 0
  %1058 = vmatprep.subr.bf16.mxu0 0
  %1059 = vmatpush1.bf16.msra.mxu0 0
  %1060 = vmatprep.subr.bf16.mxu0 0
  %1061 = vmatpush1.bf16.msra.mxu0 0
  %1062 = vmatprep.subr.bf16.mxu0 0
  %1063 = vmatpush1.bf16.msra.mxu0 %v71
  %1064 = vmatprep.subr.bf16.mxu0 0
  %1065 = vmatpush2.bf16.msra.mxu0 0
  %1066 = vmatprep.subr.bf16.mxu0 0
  %1067 = vmatpush2.bf16.msra.mxu0 0
  %1068 = vmatprep.subr.bf16.mxu0 0
  %1069 = vmatpush2.bf16.msra.mxu0 0
  %1070 = vmatprep.subr.bf16.mxu0 0
  %1071 = vmatpush2.bf16.msra.mxu0 0
  %1072 = vmatprep.subr.bf16.mxu0 0
  %1073 = vmatpush2.bf16.msra.mxu0 0
  %1074 = vmatprep.subr.bf16.mxu0 0
  %1075 = vmatpush2.bf16.msra.mxu0 0
  %1076 = vmatprep.subr.bf16.mxu0 0
  %1077 = vmatpush2.bf16.msra.mxu0 0
  %1078 = vmatprep.subr.bf16.mxu0 0
  %1079 = vmatpush2.bf16.msra.mxu0 0
  %1080 = vmatprep.mubr.bf16.mxu0 0
  %1081 = vmatmul.mubr.bf16.gmra.mxu0 %v1046
  %v1082 = vpop.f32.mrf.mxu0
  %v1083 = vadd.f32 0.0, %v1082
  %v1084 = vpop.f32.mrf.mxu0
  %v1085 = vpop.f32.mrf.mxu0
  %v1086 = vpop.f32.mrf.mxu0
  %1087 = vdwg.mxu0
  %v1088 = vadd.f32 %v1040, %v1083
  %s1089 = scalar_lea.vmem %s36, 4
  %v1090 = vld [vmem:[%s1089] sm:$0xf]
  %v1091 = vunpack.c.l.bf16 %v1090
  %v1092 = vpack.c.bf16 %v1027, %v1027
  %1094 = vrot.lane.b32.xlu0 %v1092, 80
  %v1095 = vpop.permute.xlu0 %1094
  %v1097 = vsel %vm73, %v1095, 0
  %1099 = vmatprep.subr.bf16.mxu0 0
  %1100 = vmatpush1.bf16.msra.mxu0 0
  %1101 = vmatprep.subr.bf16.mxu0 0
  %1102 = vmatpush1.bf16.msra.mxu0 0
  %1103 = vmatprep.subr.bf16.mxu0 0
  %1104 = vmatpush1.bf16.msra.mxu0 0
  %1105 = vmatprep.subr.bf16.mxu0 0
  %1106 = vmatpush1.bf16.msra.mxu0 0
  %1107 = vmatprep.subr.bf16.mxu0 0
  %1108 = vmatpush1.bf16.msra.mxu0 0
  %1109 = vmatprep.subr.bf16.mxu0 0
  %1110 = vmatpush1.bf16.msra.mxu0 0
  %1111 = vmatprep.subr.bf16.mxu0 0
  %1112 = vmatpush1.bf16.msra.mxu0 0
  %1113 = vmatprep.subr.bf16.mxu0 0
  %1114 = vmatpush1.bf16.msra.mxu0 %v126
  %1115 = vmatprep.subr.bf16.mxu0 0
  %1116 = vmatpush2.bf16.msra.mxu0 0
  %1117 = vmatprep.subr.bf16.mxu0 0
  %1118 = vmatpush2.bf16.msra.mxu0 0
  %1119 = vmatprep.subr.bf16.mxu0 0
  %1120 = vmatpush2.bf16.msra.mxu0 0
  %1121 = vmatprep.subr.bf16.mxu0 0
  %1122 = vmatpush2.bf16.msra.mxu0 0
  %1123 = vmatprep.subr.bf16.mxu0 0
  %1124 = vmatpush2.bf16.msra.mxu0 0
  %1125 = vmatprep.subr.bf16.mxu0 0
  %1126 = vmatpush2.bf16.msra.mxu0 0
  %1127 = vmatprep.subr.bf16.mxu0 0
  %1128 = vmatpush2.bf16.msra.mxu0 0
  %1129 = vmatprep.subr.bf16.mxu0 0
  %1130 = vmatpush2.bf16.msra.mxu0 0
  %1131 = vmatprep.mubr.bf16.mxu0 0
  %1132 = vmatmul.mubr.bf16.gmra.mxu0 %v1097
  %v1133 = vpop.f32.mrf.mxu0
  %v1134 = vadd.f32 0.0, %v1133
  %v1135 = vpop.f32.mrf.mxu0
  %v1136 = vpop.f32.mrf.mxu0
  %v1137 = vpop.f32.mrf.mxu0
  %1138 = vdwg.mxu0
  %v1139 = vadd.f32 %v1091, %v1134
  %v1140 = vxor.u32 %v1088, 2147483648
  %v1141 = vmul.f32 %v1140, 1.442695
  %v1142 = vpow.pop %v1141
  %v1143 = vadd.f32 %v1142, 1.0
  %v1144 = vrcp.pop %v1143
  %v1145 = vmul.f32 1.0, %v1144
  %v1146 = vtanh.pop %v1088
  %v1147 = vmul.f32 %v1145, %v997
  %1149 = vrot.lane.b32.xlu0 %v1146, 96
  %v1150 = vpop.permute.xlu0 %1149
  %v1152 = vmul.f32 %v1145, %v1150
  %1154 = vrot.lane.b32.xlu0 %v1152, 16
  %v1155 = vpop.permute.xlu0 %1154
  %v1157 = vadd.f32 %v1147, %v1155
  %v1158 = vtanh.pop %v1157
  %1160 = vrot.lane.b32.xlu0 %v1158, 32
  %v1161 = vpop.permute.xlu0 %1160
  %v1163 = vmul.f32 %v1145, %v1161
  %v1164 = vxor.u32 %v1139, 2147483648
  %v1165 = vmul.f32 %v1164, 1.442695
  %v1166 = vpow.pop %v1165
  %v1167 = vadd.f32 %v1166, 1.0
  %v1168 = vrcp.pop %v1167
  %v1169 = vmul.f32 1.0, %v1168
  %v1170 = vtanh.pop %v1139
  %v1171 = vmul.f32 %v1169, %v1021
  %1173 = vrot.lane.b32.xlu0 %v1170, 96
  %v1174 = vpop.permute.xlu0 %1173
  %v1176 = vmul.f32 %v1169, %v1174
  %1178 = vrot.lane.b32.xlu0 %v1176, 16
  %v1179 = vpop.permute.xlu0 %1178
  %v1181 = vadd.f32 %v1171, %v1179
  %v1182 = vtanh.pop %v1181
  %1184 = vrot.lane.b32.xlu0 %v1182, 32
  %v1185 = vpop.permute.xlu0 %1184
  %v1187 = vmul.f32 %v1169, %v1185
  %1189 = vrot.lane.b32.xlu0 %v1163, 80
  %v1190 = vpop.permute.xlu0 %1189
  %v1192 = vadd.f32 %v1032, %v1190
  %1194 = vrot.lane.b32.xlu0 %v1187, 80
  %v1195 = vpop.permute.xlu0 %1194
  %v1197 = vadd.f32 %v1037, %v1195
  %s1198 = scalar_lea.vmem %s0, 28
  %v1199 = vld [vmem:[%s1198] sm:$0xf]
  %v1200 = vunpack.c.l.bf16 %v1199
  %v1201 = vpack.c.bf16 %v1163, %v1163
  %1203 = vrot.lane.b32.xlu0 %v1201, 80
  %v1204 = vpop.permute.xlu0 %1203
  %v1206 = vsel %vm73, %v1204, 0
  %1208 = vmatprep.subr.bf16.mxu0 0
  %1209 = vmatpush1.bf16.msra.mxu0 0
  %1210 = vmatprep.subr.bf16.mxu0 0
  %1211 = vmatpush1.bf16.msra.mxu0 0
  %1212 = vmatprep.subr.bf16.mxu0 0
  %1213 = vmatpush1.bf16.msra.mxu0 0
  %1214 = vmatprep.subr.bf16.mxu0 0
  %1215 = vmatpush1.bf16.msra.mxu0 0
  %1216 = vmatprep.subr.bf16.mxu0 0
  %1217 = vmatpush1.bf16.msra.mxu0 0
  %1218 = vmatprep.subr.bf16.mxu0 0
  %1219 = vmatpush1.bf16.msra.mxu0 0
  %1220 = vmatprep.subr.bf16.mxu0 0
  %1221 = vmatpush1.bf16.msra.mxu0 0
  %1222 = vmatprep.subr.bf16.mxu0 0
  %1223 = vmatpush1.bf16.msra.mxu0 %v71
  %1224 = vmatprep.subr.bf16.mxu0 0
  %1225 = vmatpush2.bf16.msra.mxu0 0
  %1226 = vmatprep.subr.bf16.mxu0 0
  %1227 = vmatpush2.bf16.msra.mxu0 0
  %1228 = vmatprep.subr.bf16.mxu0 0
  %1229 = vmatpush2.bf16.msra.mxu0 0
  %1230 = vmatprep.subr.bf16.mxu0 0
  %1231 = vmatpush2.bf16.msra.mxu0 0
  %1232 = vmatprep.subr.bf16.mxu0 0
  %1233 = vmatpush2.bf16.msra.mxu0 0
  %1234 = vmatprep.subr.bf16.mxu0 0
  %1235 = vmatpush2.bf16.msra.mxu0 0
  %1236 = vmatprep.subr.bf16.mxu0 0
  %1237 = vmatpush2.bf16.msra.mxu0 0
  %1238 = vmatprep.subr.bf16.mxu0 0
  %1239 = vmatpush2.bf16.msra.mxu0 0
  %1240 = vmatprep.mubr.bf16.mxu0 0
  %1241 = vmatmul.mubr.bf16.gmra.mxu0 %v1206
  %v1242 = vpop.f32.mrf.mxu0
  %v1243 = vadd.f32 0.0, %v1242
  %v1244 = vpop.f32.mrf.mxu0
  %v1245 = vpop.f32.mrf.mxu0
  %v1246 = vpop.f32.mrf.mxu0
  %1247 = vdwg.mxu0
  %v1248 = vadd.f32 %v1200, %v1243
  %v1249 = vld [vmem:[%s36] sm:$0xf]
  %v1250 = vunpack.c.l.bf16 %v1249
  %v1251 = vpack.c.bf16 %v1187, %v1187
  %1253 = vrot.lane.b32.xlu0 %v1251, 80
  %v1254 = vpop.permute.xlu0 %1253
  %v1256 = vsel %vm73, %v1254, 0
  %1258 = vmatprep.subr.bf16.mxu0 0
  %1259 = vmatpush1.bf16.msra.mxu0 0
  %1260 = vmatprep.subr.bf16.mxu0 0
  %1261 = vmatpush1.bf16.msra.mxu0 0
  %1262 = vmatprep.subr.bf16.mxu0 0
  %1263 = vmatpush1.bf16.msra.mxu0 0
  %1264 = vmatprep.subr.bf16.mxu0 0
  %1265 = vmatpush1.bf16.msra.mxu0 0
  %1266 = vmatprep.subr.bf16.mxu0 0
  %1267 = vmatpush1.bf16.msra.mxu0 0
  %1268 = vmatprep.subr.bf16.mxu0 0
  %1269 = vmatpush1.bf16.msra.mxu0 0
  %1270 = vmatprep.subr.bf16.mxu0 0
  %1271 = vmatpush1.bf16.msra.mxu0 0
  %1272 = vmatprep.subr.bf16.mxu0 0
  %1273 = vmatpush1.bf16.msra.mxu0 %v126
  %1274 = vmatprep.subr.bf16.mxu0 0
  %1275 = vmatpush2.bf16.msra.mxu0 0
  %1276 = vmatprep.subr.bf16.mxu0 0
  %1277 = vmatpush2.bf16.msra.mxu0 0
  %1278 = vmatprep.subr.bf16.mxu0 0
  %1279 = vmatpush2.bf16.msra.mxu0 0
  %1280 = vmatprep.subr.bf16.mxu0 0
  %1281 = vmatpush2.bf16.msra.mxu0 0
  %1282 = vmatprep.subr.bf16.mxu0 0
  %1283 = vmatpush2.bf16.msra.mxu0 0
  %1284 = vmatprep.subr.bf16.mxu0 0
  %1285 = vmatpush2.bf16.msra.mxu0 0
  %1286 = vmatprep.subr.bf16.mxu0 0
  %1287 = vmatpush2.bf16.msra.mxu0 0
  %1288 = vmatprep.subr.bf16.mxu0 0
  %1289 = vmatpush2.bf16.msra.mxu0 0
  %1290 = vmatprep.mubr.bf16.mxu0 0
  %1291 = vmatmul.mubr.bf16.gmra.mxu0 %v1256
  %v1292 = vpop.f32.mrf.mxu0
  %v1293 = vadd.f32 0.0, %v1292
  %v1294 = vpop.f32.mrf.mxu0
  %v1295 = vpop.f32.mrf.mxu0
  %v1296 = vpop.f32.mrf.mxu0
  %1297 = vdwg.mxu0
  %v1298 = vadd.f32 %v1250, %v1293
  %v1299 = vxor.u32 %v1248, 2147483648
  %v1300 = vmul.f32 %v1299, 1.442695
  %v1301 = vpow.pop %v1300
  %v1302 = vadd.f32 %v1301, 1.0
  %v1303 = vrcp.pop %v1302
  %v1304 = vmul.f32 1.0, %v1303
  %v1305 = vtanh.pop %v1248
  %v1306 = vmul.f32 %v1304, %v1157
  %1308 = vrot.lane.b32.xlu0 %v1305, 96
  %v1309 = vpop.permute.xlu0 %1308
  %v1311 = vmul.f32 %v1304, %v1309
  %1313 = vrot.lane.b32.xlu0 %v1311, 16
  %v1314 = vpop.permute.xlu0 %1313
  %v1316 = vadd.f32 %v1306, %v1314
  %v1317 = vtanh.pop %v1316
  %1319 = vrot.lane.b32.xlu0 %v1317, 32
  %v1320 = vpop.permute.xlu0 %1319
  %v1322 = vmul.f32 %v1304, %v1320
  %v1323 = vxor.u32 %v1298, 2147483648
  %v1324 = vmul.f32 %v1323, 1.442695
  %v1325 = vpow.pop %v1324
  %v1326 = vadd.f32 %v1325, 1.0
  %v1327 = vrcp.pop %v1326
  %v1328 = vmul.f32 1.0, %v1327
  %v1329 = vtanh.pop %v1298
  %v1330 = vmul.f32 %v1328, %v1181
  %1332 = vrot.lane.b32.xlu0 %v1329, 96
  %v1333 = vpop.permute.xlu0 %1332
  %v1335 = vmul.f32 %v1328, %v1333
  %1337 = vrot.lane.b32.xlu0 %v1335, 16
  %v1338 = vpop.permute.xlu0 %1337
  %v1340 = vadd.f32 %v1330, %v1338
  %v1341 = vtanh.pop %v1340
  %1343 = vrot.lane.b32.xlu0 %v1341, 32
  %v1344 = vpop.permute.xlu0 %1343
  %v1346 = vmul.f32 %v1328, %v1344
  %1348 = vrot.lane.b32.xlu0 %v1322, 80
  %v1349 = vpop.permute.xlu0 %1348
  %v1351 = vadd.f32 %v1192, %v1349
  %1353 = vrot.lane.b32.xlu0 %v1346, 80
  %v1354 = vpop.permute.xlu0 %1353
  %v1356 = vadd.f32 %v1197, %v1354
  %1357 = vst.msk [vmem:[#allocation2] sm:$0xff] %vm73, %v1349
  %1359 = vrot.lane.b32.xlu0 %v1316, 112
  %v1360 = vpop.permute.xlu0 %1359
  %1362 = vst.msk [vmem:[#allocation3] sm:$0xff] %vm73, %v1360
  %1363 = vst.msk [vmem:[%s57] sm:$0xff] %vm73, %v1354
  %1365 = vrot.lane.b32.xlu0 %v1340, 112
  %v1366 = vpop.permute.xlu0 %1365
  %1368 = vst.msk [vmem:[%s59] sm:$0xff] %vm73, %v1366
  %1369 = vst.msk [vmem:[#allocation4] sm:$0xff] %vm73, %v1351
  %1370 = vst.msk [vmem:[%s62] sm:$0xff] %vm73, %v1356
  // Predicated region
  $region22: #{sentence_tagger_forward.12} parent=0 // pred_check
    %p1371 = pneg %p40
  $region23: #{sentence_tagger_forward.12} parent=0 // pred_check_branch
    %1373 = sbr.rel (%p1371) target = $region25
  $region24: #{sentence_tagger_forward.12} parent=0 // pred_region
    %v1374 = vmul.f32 %v1351, 0.125
    %1375 = vst.msk [vmem:[%s4] sm:$0xff] %vm73, %v1374
    %v1376 = vmul.f32 %v1356, 0.125
    %1378 = vrot.lane.b32.xlu0 %v1376, 16
    %v1379 = vpop.permute.xlu0 %1378
    %vm1381 = vcmask 261248
    %1382 = vst.msk [vmem:[%s4] sm:$0xff] %vm1381, %v1379
  $region25: #{sentence_tagger_forward.12} parent=0 // pred_fallthru
    _
  // Predicated region
  $region26: #{sentence_tagger_forward.12} parent=0 // pred_check
    _
  $region27: #{sentence_tagger_forward.12} parent=0 // pred_check_branch
    %1384 = sbr.rel (0) target = $region29
  $region28: #{sentence_tagger_forward.12} parent=0 // pred_region
    _
  $region29: #{sentence_tagger_forward.12} parent=0 // pred_fallthru
    _
  // Predicated region
  $region30: #{sentence_tagger_forward.12} parent=0 // pred_check
    _
  $region31: #{sentence_tagger_forward.12} parent=0 // pred_check_branch
    %1386 = sbr.rel (0) target = $region33
  $region32: #{sentence_tagger_forward.12} parent=0 // pred_region
    _
  $region33: #{sentence_tagger_forward.12} parent=0 // pred_fallthru
    _

// kernel: sentence_tagger_forward.14
$region0: #{sentence_tagger_forward.14}
  #allocation0 [shape = 'u32[]', space=smem, size = 0x4, offset = 0x4, fixed_abs, tag = 'smem constant byte address 0x4 - core index']
  #allocation1 [shape = 'u32[144,128]{1,0:T(1,128)}', space=vmem, size = 0x12000, scoped, tag = 'internal scratch']
  #allocation2 [shape = 'f32[2,2,16]{2,1,0:T(2,128)}', space=vmem, size = 0x800, scoped, tag = 'scratch operand']
  #allocation3 [shape = 'f32[2,2,16]{2,1,0:T(2,128)}', space=vmem, size = 0x800, scoped, tag = 'scratch operand']
  %s0 = inlined_call_operand.vmem [shape: bf16[4,2,64], index: 0, kind: input, shape index: {}]
  %s1 = inlined_call_operand.vmem [shape: bf16[4,2,64], index: 1, kind: input, shape index: {}]
  %s2 = inlined_call_operand.vmem [shape: bf16[16,64], index: 2, kind: input, shape index: {}]
  %s3 = inlined_call_operand.vmem [shape: bf16[16,64], index: 3, kind: input, shape index: {}]
  %s4 = inlined_call_operand.vmem [shape: bf16[4,2,16], index: 4, kind: output, shape index: {0}]
  %s5 = inlined_call_operand.vmem [shape: bf16[4,2,16], index: 5, kind: output, shape index: {1}]
  %6 = xla_tuple %s4, %s5
  %s7 = sld [smem:[#allocation0]]
  $region38: #{sentence_tagger_forward.14} parent=0
    _
  %s9 = ssub.s32 1, %s7
  %s10 = scalar_select 0, %s9, %s7
  // Predicated region
  $region2: #{sentence_tagger_forward.14} parent=0 // pred_check
    _
  $region3: #{sentence_tagger_forward.14} parent=0 // pred_check_branch
    %12 = sbr.rel (0) target = $region5
  $region4: #{sentence_tagger_forward.14} parent=0 // pred_region
    _
  $region5: #{sentence_tagger_forward.14} parent=0 // pred_fallthru
    _
  // Predicated region
  $region6: #{sentence_tagger_forward.14} parent=0 // pred_check
    _
  $region7: #{sentence_tagger_forward.14} parent=0 // pred_check_branch
    %14 = sbr.rel (0) target = $region9
  $region8: #{sentence_tagger_forward.14} parent=0 // pred_region
    %s15 = ssub.s32 0, 0
    %s16 = smul.u32 4, %s15
    %p17 = scmp.lt.s32.totalorder %s16, 3
    %s18 = scalar_select %p17, %s16, 3
    %s19 = scalar_lea.vmem %s1, %s18
    %s20 = ssub.s32 0, 0
    %s21 = smul.u32 4, %s20
  $region9: #{sentence_tagger_forward.14} parent=0 // pred_fallthru
    _
  // Predicated region
  $region10: #{sentence_tagger_forward.14} parent=0 // pred_check
    _
  $region11: #{sentence_tagger_forward.14} parent=0 // pred_check_branch
    %23 = sbr.rel (0) target = $region13
  $region12: #{sentence_tagger_forward.14} parent=0 // pred_region
    _
  $region13: #{sentence_tagger_forward.14} parent=0 // pred_fallthru
    _
  // Predicated region
  $region14: #{sentence_tagger_forward.14} parent=0 // pred_check
    _
  $region15: #{sentence_tagger_forward.14} parent=0 // pred_check_branch
    %25 = sbr.rel (0) target = $region17
  $region16: #{sentence_tagger_forward.14} parent=0 // pred_region
    _
  $region17: #{sentence_tagger_forward.14} parent=0 // pred_fallthru
    _
  %s26 = ssub.s32 0, 0
  %s27 = smul.u32 4, %s26
  %p28 = scmp.lt.s32.totalorder %s27, 3
  %s29 = scalar_select %p28, %s27, 3
  %s30 = scalar_lea.vmem %s1, %s29
  %s31 = ssub.s32 0, 0
  %s32 = smul.u32 4, %s31
  %p33 = scmp.lt.s32.totalorder %s32, 3
  %s34 = scalar_select %p33, %s32, 3
  %s35 = scalar_lea.vmem %s5, %s34
  %s36 = ssub.s32 0, 0
  %s37 = smul.u32 4, %s36
  %p38 = scmp.lt.s32.totalorder %s37, 3
  %s39 = scalar_select %p38, %s37, 3
  %s40 = scalar_lea.vmem %s1, %s39
  %s41 = ssub.s32 0, 0
  %s42 = smul.u32 4, %s41
  %s43 = ssub.s32 0, 0
  %s44 = smul.u32 4, %s43
  %p45 = scmp.lt.s32.totalorder %s44, 3
  %s46 = scalar_select %p45, %s44, 3
  %s47 = scalar_lea.vmem %s5, %s46
  %s48 = ssub.s32 0, 0
  %s49 = smul.u32 4, %s48
  %p51 = scmp.eq.s32.totalorder 0, 0
  // Predicated region
  $region18: #{sentence_tagger_forward.14} parent=0 // pred_check
    %p52 = pneg %p51
  $region19: #{sentence_tagger_forward.14} parent=0 // pred_check_branch
    %54 = sbr.rel (%p52) target = $region21
  $region20: #{sentence_tagger_forward.14} parent=0 // pred_region
    %vm55 = vcmask 123904
    %56 = vst.msk [vmem:[#allocation2] sm:$0x3] %vm55, 0.0
    %57 = vst.msk [vmem:[#allocation2 + $0x2] sm:$0x3] %vm55, 0.0
    %58 = vst.msk [vmem:[#allocation3] sm:$0x3] %vm55, 0.0
    %59 = vst.msk [vmem:[#allocation3 + $0x2] sm:$0x3] %vm55, 0.0
  $region21: #{sentence_tagger_forward.14} parent=0 // pred_fallthru
    _
  %v60 = vld [vmem:[%s2] sm:$0xf]
  %v61 = vld [vmem:[%s2 + $0x4] sm:$0xf]
  %v62 = vld [vmem:[%s3] sm:$0xf]
  %v63 = vld [vmem:[%s3 + $0x4] sm:$0xf]
  %v64 = vld [vmem:[#allocation2] sm:$0x3]
  %v65 = vld [vmem:[#allocation3] sm:$0x3]
  %s66 = scalar_lea.vmem [#allocation2], 2
  %v67 = vld [vmem:[%s66] sm:$0x3]
  %s68 = scalar_lea.vmem [#allocation3], 2
  %v69 = vld [vmem:[%s68] sm:$0x3]
  %v70 = vld [vmem:[%s0] sm:$0x1]
  %v71 = vunpack.c.l.bf16 %v70
  %v72 = vpack.c.bf16 %v64, %v64
  %v75 = vunpack.c.l.b16 %v60
  %v76 = vunpack.c.l.b16 %v61
  %v77 = vpack.c.b16 %v76, %v75
  %vm79 = vcmask 130048
  %v81 = vsel %vm79, %v72, 0
  %83 = vmatprep.subr.bf16.mxu0 0
  %84 = vmatpush1.bf16.msra.mxu0 0
  %85 = vmatprep.subr.bf16.mxu0 0
  %86 = vmatpush1.bf16.msra.mxu0 0
  %87 = vmatprep.subr.bf16.mxu0 0
  %88 = vmatpush1.bf16.msra.mxu0 0
  %89 = vmatprep.subr.bf16.mxu0 0
  %90 = vmatpush1.bf16.msra.mxu0 0
  %91 = vmatprep.subr.bf16.mxu0 0
  %92 = vmatpush1.bf16.msra.mxu0 0
  %93 = vmatprep.subr.bf16.mxu0 0
  %94 = vmatpush1.bf16.msra.mxu0 0
  %95 = vmatprep.subr.bf16.mxu0 0
  %96 = vmatpush1.bf16.msra.mxu0 0
  %97 = vmatprep.subr.bf16.mxu0 0
  %98 = vmatpush1.bf16.msra.mxu0 %v77
  %99 = vmatprep.subr.bf16.mxu0 0
  %100 = vmatpush2.bf16.msra.mxu0 0
  %101 = vmatprep.subr.bf16.mxu0 0
  %102 = vmatpush2.bf16.msra.mxu0 0
  %103 = vmatprep.subr.bf16.mxu0 0
  %104 = vmatpush2.bf16.msra.mxu0 0
  %105 = vmatprep.subr.bf16.mxu0 0
  %106 = vmatpush2.bf16.msra.mxu0 0
  %107 = vmatprep.subr.bf16.mxu0 0
  %108 = vmatpush2.bf16.msra.mxu0 0
  %109 = vmatprep.subr.bf16.mxu0 0
  %110 = vmatpush2.bf16.msra.mxu0 0
  %111 = vmatprep.subr.bf16.mxu0 0
  %112 = vmatpush2.bf16.msra.mxu0 0
  %113 = vmatprep.subr.bf16.mxu0 0
  %114 = vmatpush2.bf16.msra.mxu0 0
  %115 = vmatprep.mubr.bf16.mxu0 0
  %116 = vmatmul.mubr.bf16.gmra.mxu0 %v81
  %v117 = vpop.f32.mrf.mxu0
  %v118 = vadd.f32 0.0, %v117
  %v119 = vpop.f32.mrf.mxu0
  %v120 = vpop.f32.mrf.mxu0
  %v121 = vpop.f32.mrf.mxu0
  %122 = vdwg.mxu0
  %v123 = vadd.f32 %v71, %v118
  %s124 = scalar_lea.vmem %s40, 3
  %v125 = vld [vmem:[%s124] sm:$0x1]
  %v126 = vunpack.c.l.bf16 %v125
  %v127 = vpack.c.bf16 %v67, %v67
  %v130 = vunpack.c.l.b16 %v62
  %v131 = vunpack.c.l.b16 %v63
  %v132 = vpack.c.b16 %v131, %v130
  %v135 = vsel %vm79, %v127, 0
  %137 = vmatprep.subr.bf16.mxu0 0
  %138 = vmatpush1.bf16.msra.mxu0 0
  %139 = vmatprep.subr.bf16.mxu0 0
  %140 = vmatpush1.bf16.msra.mxu0 0
  %141 = vmatprep.subr.bf16.mxu0 0
  %142 = vmatpush1.bf16.msra.mxu0 0
  %143 = vmatprep.subr.bf16.mxu0 0
  %144 = vmatpush1.bf16.msra.mxu0 0
  %145 = vmatprep.subr.bf16.mxu0 0
  %146 = vmatpush1.bf16.msra.mxu0 0
  %147 = vmatprep.subr.bf16.mxu0 0
  %148 = vmatpush1.bf16.msra.mxu0 0
  %149 = vmatprep.subr.bf16.mxu0 0
  %150 = vmatpush1.bf16.msra.mxu0 0
  %151 = vmatprep.subr.bf16.mxu0 0
  %152 = vmatpush1.bf16.msra.mxu0 %v132
  %153 = vmatprep.subr.bf16.mxu0 0
  %154 = vmatpush2.bf16.msra.mxu0 0
  %155 = vmatprep.subr.bf16.mxu0 0
  %156 = vmatpush2.bf16.msra.mxu0 0
  %157 = vmatprep.subr.bf16.mxu0 0
  %158 = vmatpush2.bf16.msra.mxu0 0
  %159 = vmatprep.subr.bf16.mxu0 0
  %160 = vmatpush2.bf16.msra.mxu0 0
  %161 = vmatprep.subr.bf16.mxu0 0
  %162 = vmatpush2.bf16.msra.mxu0 0
  %163 = vmatprep.subr.bf16.mxu0 0
  %164 = vmatpush2.bf16.msra.mxu0 0
  %165 = vmatprep.subr.bf16.mxu0 0
  %166 = vmatpush2.bf16.msra.mxu0 0
  %167 = vmatprep.subr.bf16.mxu0 0
  %168 = vmatpush2.bf16.msra.mxu0 0
  %169 = vmatprep.mubr.bf16.mxu0 0
  %170 = vmatmul.mubr.bf16.gmra.mxu0 %v135
  %v171 = vpop.f32.mrf.mxu0
  %v172 = vadd.f32 0.0, %v171
  %v173 = vpop.f32.mrf.mxu0
  %v174 = vpop.f32.mrf.mxu0
  %v175 = vpop.f32.mrf.mxu0
  %176 = vdwg.mxu0
  %v177 = vadd.f32 %v126, %v172
  %v178 = vxor.u32 %v123, 2147483648
  %v179 = vmul.f32 %v178, 1.442695
  %v180 = vpow.pop %v179
  %v181 = vadd.f32 %v180, 1.0
  %v182 = vrcp.pop %v181
  %v183 = vmul.f32 1.0, %v182
  %v184 = vtanh.pop %v123
  %v187 = vunpack.c.l.s4 1983009808
  %v188 = vunpack.c.0.s8 %v187
  %v189 = vlaneseq
  %v190 = vshrl.u32 %v189, 7
  %v191 = vsub.s32 %v188, %v190
  %v192 = vrot.slane %v65, %v191
  %193 = vrot.lane.b32.xlu0 %v192, 16
  %v194 = vpop.permute.xlu0 %193
  %v196 = vmul.f32 %v183, %v194
  %198 = vrot.lane.b32.xlu0 %v184, 96
  %v199 = vpop.permute.xlu0 %198
  %v201 = vmul.f32 %v183, %v199
  %203 = vrot.lane.b32.xlu0 %v201, 16
  %v204 = vpop.permute.xlu0 %203
  %v206 = vadd.f32 %v196, %v204
  %v207 = vtanh.pop %v206
  %209 = vrot.lane.b32.xlu0 %v207, 32
  %v210 = vpop.permute.xlu0 %209
  %v212 = vmul.f32 %v183, %v210
  %v213 = vxor.u32 %v177, 2147483648
  %v214 = vmul.f32 %v213, 1.442695
  %v215 = vpow.pop %v214
  %v216 = vadd.f32 %v215, 1.0
  %v217 = vrcp.pop %v216
  %v218 = vmul.f32 1.0, %v217
  %v219 = vtanh.pop %v177
  %v222 = vunpack.c.l.s4 1983009808
  %v223 = vunpack.c.0.s8 %v222
  %v224 = vlaneseq
  %v225 = vshrl.u32 %v224, 7
  %v226 = vsub.s32 %v223, %v225
  %v227 = vrot.slane %v69, %v226
  %228 = vrot.lane.b32.xlu0 %v227, 16
  %v229 = vpop.permute.xlu0 %228
  %v231 = vmul.f32 %v218, %v229
  %233 = vrot.lane.b32.xlu0 %v219, 96
  %v234 = vpop.permute.xlu0 %233
  %v236 = vmul.f32 %v218, %v234
  %238 = vrot.lane.b32.xlu0 %v236, 16
  %v239 = vpop.permute.xlu0 %238
  %v241 = vadd.f32 %v231, %v239
  %v242 = vtanh.pop %v241
  %244 = vrot.lane.b32.xlu0 %v242, 32
  %v245 = vpop.permute.xlu0 %244
  %v247 = vmul.f32 %v218, %v245
  %v248 = vpack.c.bf16 %v212, %v212
  %v251 = vunpack.c.l.s4 1966171168
  %v252 = vunpack.c.0.s8 %v251
  %v253 = vlaneseq
  %v254 = vshrl.u32 %v253, 7
  %v255 = vsub.s32 %v252, %v254
  %v256 = vrot.slane %v248, %v255
  %v258 = vunpack.c.l.s4 1966171168
  %v259 = vunpack.c.0.s8 %v258
  %v260 = vlaneseq
  %v261 = vshrl.u32 %v260, 7
  %v262 = vsub.s32 %v259, %v261
  %v263 = vrot.slane %v256, %v262
  %264 = vrot.lane.b32.xlu0 %v263, 80
  %v265 = vpop.permute.xlu0 %264
  %vm267 = vcmask 122880
  %268 = vst.msk [vmem:[%s4] sm:$0x1] %vm267, %v265
  %v269 = vpack.c.bf16 %v247, %v247
  %v272 = vunpack.c.l.s4 1966171168
  %v273 = vunpack.c.0.s8 %v272
  %v274 = vlaneseq
  %v275 = vshrl.u32 %v274, 7
  %v276 = vsub.s32 %v273, %v275
  %v277 = vrot.slane %v269, %v276
  %v279 = vunpack.c.l.s4 1966171168
  %v280 = vunpack.c.0.s8 %v279
  %v281 = vlaneseq
  %v282 = vshrl.u32 %v281, 7
  %v283 = vsub.s32 %v280, %v282
  %v284 = vrot.slane %v277, %v283
  %285 = vrot.lane.b32.xlu0 %v284, 80
  %v286 = vpop.permute.xlu0 %285
  %s288 = scalar_lea.vmem %s47, 3
  %289 = vst.msk [vmem:[%s288] sm:$0x1] %vm267, %v286
  %s290 = scalar_lea.vmem %s0, 1
  %v291 = vld [vmem:[%s290] sm:$0x1]
  %v292 = vunpack.c.l.bf16 %v291
  %293 = vrot.lane.b32.xlu0 %v248, 80
  %v294 = vpop.permute.xlu0 %293
  %v296 = vsel %vm79, %v294, 0
  %298 = vmatprep.subr.bf16.mxu0 0
  %299 = vmatpush1.bf16.msra.mxu0 0
  %300 = vmatprep.subr.bf16.mxu0 0
  %301 = vmatpush1.bf16.msra.mxu0 0
  %302 = vmatprep.subr.bf16.mxu0 0
  %303 = vmatpush1.bf16.msra.mxu0 0
  %304 = vmatprep.subr.bf16.mxu0 0
  %305 = vmatpush1.bf16.msra.mxu0 0
  %306 = vmatprep.subr.bf16.mxu0 0
  %307 = vmatpush1.bf16.msra.mxu0 0
  %308 = vmatprep.subr.bf16.mxu0 0
  %309 = vmatpush1.bf16.msra.mxu0 0
  %310 = vmatprep.subr.bf16.mxu0 0
  %311 = vmatpush1.bf16.msra.mxu0 0
  %312 = vmatprep.subr.bf16.mxu0 0
  %313 = vmatpush1.bf16.msra.mxu0 %v77
  %314 = vmatprep.subr.bf16.mxu0 0
  %315 = vmatpush2.bf16.msra.mxu0 0
  %316 = vmatprep.subr.bf16.mxu0 0
  %317 = vmatpush2.bf16.msra.mxu0 0
  %318 = vmatprep.subr.bf16.mxu0 0
  %319 = vmatpush2.bf16.msra.mxu0 0
  %320 = vmatprep.subr.bf16.mxu0 0
  %321 = vmatpush2.bf16.msra.mxu0 0
  %322 = vmatprep.subr.bf16.mxu0 0
  %323 = vmatpush2.bf16.msra.mxu0 0
  %324 = vmatprep.subr.bf16.mxu0 0
  %325 = vmatpush2.bf16.msra.mxu0 0
  %326 = vmatprep.subr.bf16.mxu0 0
  %327 = vmatpush2.bf16.msra.mxu0 0
  %328 = vmatprep.subr.bf16.mxu0 0
  %329 = vmatpush2.bf16.msra.mxu0 0
  %330 = vmatprep.mubr.bf16.mxu0 0
  %331 = vmatmul.mubr.bf16.gmra.mxu0 %v296
  %v332 = vpop.f32.mrf.mxu0
  %v333 = vadd.f32 0.0, %v332
  %v334 = vpop.f32.mrf.mxu0
  %v335 = vpop.f32.mrf.mxu0
  %v336 = vpop.f32.mrf.mxu0
  %337 = vdwg.mxu0
  %v338 = vadd.f32 %v292, %v333
  %s339 = scalar_lea.vmem %s40, 2
  %v340 = vld [vmem:[%s339] sm:$0x1]
  %v341 = vunpack.c.l.bf16 %v340
  %342 = vrot.lane.b32.xlu0 %v269, 80
  %v343 = vpop.permute.xlu0 %342
  %v345 = vsel %vm79, %v343, 0
  %347 = vmatprep.subr.bf16.mxu0 0
  %348 = vmatpush1.bf16.msra.mxu0 0
  %349 = vmatprep.subr.bf16.mxu0 0
  %350 = vmatpush1.bf16.msra.mxu0 0
  %351 = vmatprep.subr.bf16.mxu0 0
  %352 = vmatpush1.bf16.msra.mxu0 0
  %353 = vmatprep.subr.bf16.mxu0 0
  %354 = vmatpush1.bf16.msra.mxu0 0
  %355 = vmatprep.subr.bf16.mxu0 0
  %356 = vmatpush1.bf16.msra.mxu0 0
  %357 = vmatprep.subr.bf16.mxu0 0
  %358 = vmatpush1.bf16.msra.mxu0 0
  %359 = vmatprep.subr.bf16.mxu0 0
  %360 = vmatpush1.bf16.msra.mxu0 0
  %361 = vmatprep.subr.bf16.mxu0 0
  %362 = vmatpush1.bf16.msra.mxu0 %v132
  %363 = vmatprep.subr.bf16.mxu0 0
  %364 = vmatpush2.bf16.msra.mxu0 0
  %365 = vmatprep.subr.bf16.mxu0 0
  %366 = vmatpush2.bf16.msra.mxu0 0
  %367 = vmatprep.subr.bf16.mxu0 0
  %368 = vmatpush2.bf16.msra.mxu0 0
  %369 = vmatprep.subr.bf16.mxu0 0
  %370 = vmatpush2.bf16.msra.mxu0 0
  %371 = vmatprep.subr.bf16.mxu0 0
  %372 = vmatpush2.bf16.msra.mxu0 0
  %373 = vmatprep.subr.bf16.mxu0 0
  %374 = vmatpush2.bf16.msra.mxu0 0
  %375 = vmatprep.subr.bf16.mxu0 0
  %376 = vmatpush2.bf16.msra.mxu0 0
  %377 = vmatprep.subr.bf16.mxu0 0
  %378 = vmatpush2.bf16.msra.mxu0 0
  %379 = vmatprep.mubr.bf16.mxu0 0
  %380 = vmatmul.mubr.bf16.gmra.mxu0 %v345
  %v381 = vpop.f32.mrf.mxu0
  %v382 = vadd.f32 0.0, %v381
  %v383 = vpop.f32.mrf.mxu0
  %v384 = vpop.f32.mrf.mxu0
  %v385 = vpop.f32.mrf.mxu0
  %386 = vdwg.mxu0
  %v387 = vadd.f32 %v341, %v382
  %v388 = vxor.u32 %v338, 2147483648
  %v389 = vmul.f32 %v388, 1.442695
  %v390 = vpow.pop %v389
  %v391 = vadd.f32 %v390, 1.0
  %v392 = vrcp.pop %v391
  %v393 = vmul.f32 1.0, %v392
  %v394 = vtanh.pop %v338
  %v395 = vmul.f32 %v393, %v206
  %397 = vrot.lane.b32.xlu0 %v394, 96
  %v398 = vpop.permute.xlu0 %397
  %v400 = vmul.f32 %v393, %v398
  %402 = vrot.lane.b32.xlu0 %v400, 16
  %v403 = vpop.permute.xlu0 %402
  %v405 = vadd.f32 %v395, %v403
  %v406 = vtanh.pop %v405
  %408 = vrot.lane.b32.xlu0 %v406, 32
  %v409 = vpop.permute.xlu0 %408
  %v411 = vmul.f32 %v393, %v409
  %v412 = vxor.u32 %v387, 2147483648
  %v413 = vmul.f32 %v412, 1.442695
  %v414 = vpow.pop %v413
  %v415 = vadd.f32 %v414, 1.0
  %v416 = vrcp.pop %v415
  %v417 = vmul.f32 1.0, %v416
  %v418 = vtanh.pop %v387
  %v419 = vmul.f32 %v417, %v241
  %421 = vrot.lane.b32.xlu0 %v418, 96
  %v422 = vpop.permute.xlu0 %421
  %v424 = vmul.f32 %v417, %v422
  %426 = vrot.lane.b32.xlu0 %v424, 16
  %v427 = vpop.permute.xlu0 %426
  %v429 = vadd.f32 %v419, %v427
  %v430 = vtanh.pop %v429
  %432 = vrot.lane.b32.xlu0 %v430, 32
  %v433 = vpop.permute.xlu0 %432
  %v435 = vmul.f32 %v417, %v433
  %v436 = vpack.c.bf16 %v411, %v411
  %v439 = vunpack.c.l.s4 1966171168
  %v440 = vunpack.c.0.s8 %v439
  %v441 = vlaneseq
  %v442 = vshrl.u32 %v441, 7
  %v443 = vsub.s32 %v440, %v442
  %v444 = vrot.slane %v436, %v443
  %v446 = vunpack.c.l.s4 1966171168
  %v447 = vunpack.c.0.s8 %v446
  %v448 = vlaneseq
  %v449 = vshrl.u32 %v448, 7
  %v450 = vsub.s32 %v447, %v449
  %v451 = vrot.slane %v444, %v450
  %452 = vrot.lane.b32.xlu0 %v451, 80
  %v453 = vpop.permute.xlu0 %452
  %s455 = scalar_lea.vmem %s4, 1
  %456 = vst.msk [vmem:[%s455] sm:$0x1] %vm267, %v453
  %v457 = vpack.c.bf16 %v435, %v435
  %v460 = vunpack.c.l.s4 1966171168
  %v461 = vunpack.c.0.s8 %v460
  %v462 = vlaneseq
  %v463 = vshrl.u32 %v462, 7
  %v464 = vsub.s32 %v461, %v463
  %v465 = vrot.slane %v457, %v464
  %v467 = vunpack.c.l.s4 1966171168
  %v468 = vunpack.c.0.s8 %v467
  %v469 = vlaneseq
  %v470 = vshrl.u32 %v469, 7
  %v471 = vsub.s32 %v468, %v470
  %v472 = vrot.slane %v465, %v471
  %473 = vrot.lane.b32.xlu0 %v472, 80
  %v474 = vpop.permute.xlu0 %473
  %s476 = scalar_lea.vmem %s47, 2
  %477 = vst.msk [vmem:[%s476] sm:$0x1] %vm267, %v474
  %s478 = scalar_lea.vmem %s0, 2
  %v479 = vld [vmem:[%s478] sm:$0x1]
  %v480 = vunpack.c.l.bf16 %v479
  %481 = vrot.lane.b32.xlu0 %v436, 80
  %v482 = vpop.permute.xlu0 %481
  %v484 = vsel %vm79, %v482, 0
  %486 = vmatprep.subr.bf16.mxu0 0
  %487 = vmatpush1.bf16.msra.mxu0 0
  %488 = vmatprep.subr.bf16.mxu0 0
  %489 = vmatpush1.bf16.msra.mxu0 0
  %490 = vmatprep.subr.bf16.mxu0 0
  %491 = vmatpush1.bf16.msra.mxu0 0
  %492 = vmatprep.subr.bf16.mxu0 0
  %493 = vmatpush1.bf16.msra.mxu0 0
  %494 = vmatprep.subr.bf16.mxu0 0
  %495 = vmatpush1.bf16.msra.mxu0 0
  %496 = vmatprep.subr.bf16.mxu0 0
  %497 = vmatpush1.bf16.msra.mxu0 0
  %498 = vmatprep.subr.bf16.mxu0 0
  %499 = vmatpush1.bf16.msra.mxu0 0
  %500 = vmatprep.subr.bf16.mxu0 0
  %501 = vmatpush1.bf16.msra.mxu0 %v77
  %502 = vmatprep.subr.bf16.mxu0 0
  %503 = vmatpush2.bf16.msra.mxu0 0
  %504 = vmatprep.subr.bf16.mxu0 0
  %505 = vmatpush2.bf16.msra.mxu0 0
  %506 = vmatprep.subr.bf16.mxu0 0
  %507 = vmatpush2.bf16.msra.mxu0 0
  %508 = vmatprep.subr.bf16.mxu0 0
  %509 = vmatpush2.bf16.msra.mxu0 0
  %510 = vmatprep.subr.bf16.mxu0 0
  %511 = vmatpush2.bf16.msra.mxu0 0
  %512 = vmatprep.subr.bf16.mxu0 0
  %513 = vmatpush2.bf16.msra.mxu0 0
  %514 = vmatprep.subr.bf16.mxu0 0
  %515 = vmatpush2.bf16.msra.mxu0 0
  %516 = vmatprep.subr.bf16.mxu0 0
  %517 = vmatpush2.bf16.msra.mxu0 0
  %518 = vmatprep.mubr.bf16.mxu0 0
  %519 = vmatmul.mubr.bf16.gmra.mxu0 %v484
  %v520 = vpop.f32.mrf.mxu0
  %v521 = vadd.f32 0.0, %v520
  %v522 = vpop.f32.mrf.mxu0
  %v523 = vpop.f32.mrf.mxu0
  %v524 = vpop.f32.mrf.mxu0
  %525 = vdwg.mxu0
  %v526 = vadd.f32 %v480, %v521
  %s527 = scalar_lea.vmem %s40, 1
  %v528 = vld [vmem:[%s527] sm:$0x1]
  %v529 = vunpack.c.l.bf16 %v528
  %530 = vrot.lane.b32.xlu0 %v457, 80
  %v531 = vpop.permute.xlu0 %530
  %v533 = vsel %vm79, %v531, 0
  %535 = vmatprep.subr.bf16.mxu0 0
  %536 = vmatpush1.bf16.msra.mxu0 0
  %537 = vmatprep.subr.bf16.mxu0 0
  %538 = vmatpush1.bf16.msra.mxu0 0
  %539 = vmatprep.subr.bf16.mxu0 0
  %540 = vmatpush1.bf16.msra.mxu0 0
  %541 = vmatprep.subr.bf16.mxu0 0
  %542 = vmatpush1.bf16.msra.mxu0 0
  %543 = vmatprep.subr.bf16.mxu0 0
  %544 = vmatpush1.bf16.msra.mxu0 0
  %545 = vmatprep.subr.bf16.mxu0 0
  %546 = vmatpush1.bf16.msra.mxu0 0
  %547 = vmatprep.subr.bf16.mxu0 0
  %548 = vmatpush1.bf16.msra.mxu0 0
  %549 = vmatprep.subr.bf16.mxu0 0
  %550 = vmatpush1.bf16.msra.mxu0 %v132
  %551 = vmatprep.subr.bf16.mxu0 0
  %552 = vmatpush2.bf16.msra.mxu0 0
  %553 = vmatprep.subr.bf16.mxu0 0
  %554 = vmatpush2.bf16.msra.mxu0 0
  %555 = vmatprep.subr.bf16.mxu0 0
  %556 = vmatpush2.bf16.msra.mxu0 0
  %557 = vmatprep.subr.bf16.mxu0 0
  %558 = vmatpush2.bf16.msra.mxu0 0
  %559 = vmatprep.subr.bf16.mxu0 0
  %560 = vmatpush2.bf16.msra.mxu0 0
  %561 = vmatprep.subr.bf16.mxu0 0
  %562 = vmatpush2.bf16.msra.mxu0 0
  %563 = vmatprep.subr.bf16.mxu0 0
  %564 = vmatpush2.bf16.msra.mxu0 0
  %565 = vmatprep.subr.bf16.mxu0 0
  %566 = vmatpush2.bf16.msra.mxu0 0
  %567 = vmatprep.mubr.bf16.mxu0 0
  %568 = vmatmul.mubr.bf16.gmra.mxu0 %v533
  %v569 = vpop.f32.mrf.mxu0
  %v570 = vadd.f32 0.0, %v569
  %v571 = vpop.f32.mrf.mxu0
  %v572 = vpop.f32.mrf.mxu0
  %v573 = vpop.f32.mrf.mxu0
  %574 = vdwg.mxu0
  %v575 = vadd.f32 %v529, %v570
  %v576 = vxor.u32 %v526, 2147483648
  %v577 = vmul.f32 %v576, 1.442695
  %v578 = vpow.pop %v577
  %v579 = vadd.f32 %v578, 1.0
  %v580 = vrcp.pop %v579
  %v581 = vmul.f32 1.0, %v580
  %v582 = vtanh.pop %v526
  %v583 = vmul.f32 %v581, %v405
  %585 = vrot.lane.b32.xlu0 %v582, 96
  %v586 = vpop.permute.xlu0 %585
  %v588 = vmul.f32 %v581, %v586
  %590 = vrot.lane.b32.xlu0 %v588, 16
  %v591 = vpop.permute.xlu0 %590
  %v593 = vadd.f32 %v583, %v591
  %v594 = vtanh.pop %v593
  %596 = vrot.lane.b32.xlu0 %v594, 32
  %v597 = vpop.permute.xlu0 %596
  %v599 = vmul.f32 %v581, %v597
  %v600 = vxor.u32 %v575, 2147483648
  %v601 = vmul.f32 %v600, 1.442695
  %v602 = vpow.pop %v601
  %v603 = vadd.f32 %v602, 1.0
  %v604 = vrcp.pop %v603
  %v605 = vmul.f32 1.0, %v604
  %v606 = vtanh.pop %v575
  %v607 = vmul.f32 %v605, %v429
  %609 = vrot.lane.b32.xlu0 %v606, 96
  %v610 = vpop.permute.xlu0 %609
  %v612 = vmul.f32 %v605, %v610
  %614 = vrot.lane.b32.xlu0 %v612, 16
  %v615 = vpop.permute.xlu0 %614
  %v617 = vadd.f32 %v607, %v615
  %v618 = vtanh.pop %v617
  %620 = vrot.lane.b32.xlu0 %v618, 32
  %v621 = vpop.permute.xlu0 %620
  %v623 = vmul.f32 %v605, %v621
  %v624 = vpack.c.bf16 %v599, %v599
  %v627 = vunpack.c.l.s4 1966171168
  %v628 = vunpack.c.0.s8 %v627
  %v629 = vlaneseq
  %v630 = vshrl.u32 %v629, 7
  %v631 = vsub.s32 %v628, %v630
  %v632 = vrot.slane %v624, %v631
  %v634 = vunpack.c.l.s4 1966171168
  %v635 = vunpack.c.0.s8 %v634
  %v636 = vlaneseq
  %v637 = vshrl.u32 %v636, 7
  %v638 = vsub.s32 %v635, %v637
  %v639 = vrot.slane %v632, %v638
  %640 = vrot.lane.b32.xlu0 %v639, 80
  %v641 = vpop.permute.xlu0 %640
  %s643 = scalar_lea.vmem %s4, 2
  %644 = vst.msk [vmem:[%s643] sm:$0x1] %vm267, %v641
  %v645 = vpack.c.bf16 %v623, %v623
  %v648 = vunpack.c.l.s4 1966171168
  %v649 = vunpack.c.0.s8 %v648
  %v650 = vlaneseq
  %v651 = vshrl.u32 %v650, 7
  %v652 = vsub.s32 %v649, %v651
  %v653 = vrot.slane %v645, %v652
  %v655 = vunpack.c.l.s4 1966171168
  %v656 = vunpack.c.0.s8 %v655
  %v657 = vlaneseq
  %v658 = vshrl.u32 %v657, 7
  %v659 = vsub.s32 %v656, %v658
  %v660 = vrot.slane %v653, %v659
  %661 = vrot.lane.b32.xlu0 %v660, 80
  %v662 = vpop.permute.xlu0 %661
  %s664 = scalar_lea.vmem %s47, 1
  %665 = vst.msk [vmem:[%s664] sm:$0x1] %vm267, %v662
  %s666 = scalar_lea.vmem %s0, 3
  %v667 = vld [vmem:[%s666] sm:$0x1]
  %v668 = vunpack.c.l.bf16 %v667
  %669 = vrot.lane.b32.xlu0 %v624, 80
  %v670 = vpop.permute.xlu0 %669
  %v672 = vsel %vm79, %v670, 0
  %674 = vmatprep.subr.bf16.mxu0 0
  %675 = vmatpush1.bf16.msra.mxu0 0
  %676 = vmatprep.subr.bf16.mxu0 0
  %677 = vmatpush1.bf16.msra.mxu0 0
  %678 = vmatprep.subr.bf16.mxu0 0
  %679 = vmatpush1.bf16.msra.mxu0 0
  %680 = vmatprep.subr.bf16.mxu0 0
  %681 = vmatpush1.bf16.msra.mxu0 0
  %682 = vmatprep.subr.bf16.mxu0 0
  %683 = vmatpush1.bf16.msra.mxu0 0
  %684 = vmatprep.subr.bf16.mxu0 0
  %685 = vmatpush1.bf16.msra.mxu0 0
  %686 = vmatprep.subr.bf16.mxu0 0
  %687 = vmatpush1.bf16.msra.mxu0 0
  %688 = vmatprep.subr.bf16.mxu0 0
  %689 = vmatpush1.bf16.msra.mxu0 %v77
  %690 = vmatprep.subr.bf16.mxu0 0
  %691 = vmatpush2.bf16.msra.mxu0 0
  %692 = vmatprep.subr.bf16.mxu0 0
  %693 = vmatpush2.bf16.msra.mxu0 0
  %694 = vmatprep.subr.bf16.mxu0 0
  %695 = vmatpush2.bf16.msra.mxu0 0
  %696 = vmatprep.subr.bf16.mxu0 0
  %697 = vmatpush2.bf16.msra.mxu0 0
  %698 = vmatprep.subr.bf16.mxu0 0
  %699 = vmatpush2.bf16.msra.mxu0 0
  %700 = vmatprep.subr.bf16.mxu0 0
  %701 = vmatpush2.bf16.msra.mxu0 0
  %702 = vmatprep.subr.bf16.mxu0 0
  %703 = vmatpush2.bf16.msra.mxu0 0
  %704 = vmatprep.subr.bf16.mxu0 0
  %705 = vmatpush2.bf16.msra.mxu0 0
  %706 = vmatprep.mubr.bf16.mxu0 0
  %707 = vmatmul.mubr.bf16.gmra.mxu0 %v672
  %v708 = vpop.f32.mrf.mxu0
  %v709 = vadd.f32 0.0, %v708
  %v710 = vpop.f32.mrf.mxu0
  %v711 = vpop.f32.mrf.mxu0
  %v712 = vpop.f32.mrf.mxu0
  %713 = vdwg.mxu0
  %v714 = vadd.f32 %v668, %v709
  %v715 = vld [vmem:[%s40] sm:$0x1]
  %v716 = vunpack.c.l.bf16 %v715
  %717 = vrot.lane.b32.xlu0 %v645, 80
  %v718 = vpop.permute.xlu0 %717
  %v720 = vsel %vm79, %v718, 0
  %722 = vmatprep.subr.bf16.mxu0 0
  %723 = vmatpush1.bf16.msra.mxu0 0
  %724 = vmatprep.subr.bf16.mxu0 0
  %725 = vmatpush1.bf16.msra.mxu0 0
  %726 = vmatprep.subr.bf16.mxu0 0
  %727 = vmatpush1.bf16.msra.mxu0 0
  %728 = vmatprep.subr.bf16.mxu0 0
  %729 = vmatpush1.bf16.msra.mxu0 0
  %730 = vmatprep.subr.bf16.mxu0 0
  %731 = vmatpush1.bf16.msra.mxu0 0
  %732 = vmatprep.subr.bf16.mxu0 0
  %733 = vmatpush1.bf16.msra.mxu0 0
  %734 = vmatprep.subr.bf16.mxu0 0
  %735 = vmatpush1.bf16.msra.mxu0 0
  %736 = vmatprep.subr.bf16.mxu0 0
  %737 = vmatpush1.bf16.msra.mxu0 %v132
  %738 = vmatprep.subr.bf16.mxu0 0
  %739 = vmatpush2.bf16.msra.mxu0 0
  %740 = vmatprep.subr.bf16.mxu0 0
  %741 = vmatpush2.bf16.msra.mxu0 0
  %742 = vmatprep.subr.bf16.mxu0 0
  %743 = vmatpush2.bf16.msra.mxu0 0
  %744 = vmatprep.subr.bf16.mxu0 0
  %745 = vmatpush2.bf16.msra.mxu0 0
  %746 = vmatprep.subr.bf16.mxu0 0
  %747 = vmatpush2.bf16.msra.mxu0 0
  %748 = vmatprep.subr.bf16.mxu0 0
  %749 = vmatpush2.bf16.msra.mxu0 0
  %750 = vmatprep.subr.bf16.mxu0 0
  %751 = vmatpush2.bf16.msra.mxu0 0
  %752 = vmatprep.subr.bf16.mxu0 0
  %753 = vmatpush2.bf16.msra.mxu0 0
  %754 = vmatprep.mubr.bf16.mxu0 0
  %755 = vmatmul.mubr.bf16.gmra.mxu0 %v720
  %v756 = vpop.f32.mrf.mxu0
  %v757 = vadd.f32 0.0, %v756
  %v758 = vpop.f32.mrf.mxu0
  %v759 = vpop.f32.mrf.mxu0
  %v760 = vpop.f32.mrf.mxu0
  %761 = vdwg.mxu0
  %v762 = vadd.f32 %v716, %v757
  %v763 = vxor.u32 %v714, 2147483648
  %v764 = vmul.f32 %v763, 1.442695
  %v765 = vpow.pop %v764
  %v766 = vadd.f32 %v765, 1.0
  %v767 = vrcp.pop %v766
  %v768 = vmul.f32 1.0, %v767
  %v769 = vtanh.pop %v714
  %v770 = vmul.f32 %v768, %v593
  %772 = vrot.lane.b32.xlu0 %v769, 96
  %v773 = vpop.permute.xlu0 %772
  %v775 = vmul.f32 %v768, %v773
  %777 = vrot.lane.b32.xlu0 %v775, 16
  %v778 = vpop.permute.xlu0 %777
  %v780 = vadd.f32 %v770, %v778
  %v781 = vtanh.pop %v780
  %783 = vrot.lane.b32.xlu0 %v781, 32
  %v784 = vpop.permute.xlu0 %783
  %v786 = vmul.f32 %v768, %v784
  %v787 = vxor.u32 %v762, 2147483648
  %v788 = vmul.f32 %v787, 1.442695
  %v789 = vpow.pop %v788
  %v790 = vadd.f32 %v789, 1.0
  %v791 = vrcp.pop %v790
  %v792 = vmul.f32 1.0, %v791
  %v793 = vtanh.pop %v762
  %v794 = vmul.f32 %v792, %v617
  %796 = vrot.lane.b32.xlu0 %v793, 96
  %v797 = vpop.permute.xlu0 %796
  %v799 = vmul.f32 %v792, %v797
  %801 = vrot.lane.b32.xlu0 %v799, 16
  %v802 = vpop.permute.xlu0 %801
  %v804 = vadd.f32 %v794, %v802
  %v805 = vtanh.pop %v804
  %807 = vrot.lane.b32.xlu0 %v805, 32
  %v808 = vpop.permute.xlu0 %807
  %v810 = vmul.f32 %v792, %v808
  %v811 = vpack.c.bf16 %v786, %v786
  %v814 = vunpack.c.l.s4 1966171168
  %v815 = vunpack.c.0.s8 %v814
  %v816 = vlaneseq
  %v817 = vshrl.u32 %v816, 7
  %v818 = vsub.s32 %v815, %v817
  %v819 = vrot.slane %v811, %v818
  %v821 = vunpack.c.l.s4 1966171168
  %v822 = vunpack.c.0.s8 %v821
  %v823 = vlaneseq
  %v824 = vshrl.u32 %v823, 7
  %v825 = vsub.s32 %v822, %v824
  %v826 = vrot.slane %v819, %v825
  %827 = vrot.lane.b32.xlu0 %v826, 80
  %v828 = vpop.permute.xlu0 %827
  %s830 = scalar_lea.vmem %s4, 3
  %831 = vst.msk [vmem:[%s830] sm:$0x1] %vm267, %v828
  %v832 = vpack.c.bf16 %v810, %v810
  %v835 = vunpack.c.l.s4 1966171168
  %v836 = vunpack.c.0.s8 %v835
  %v837 = vlaneseq
  %v838 = vshrl.u32 %v837, 7
  %v839 = vsub.s32 %v836, %v838
  %v840 = vrot.slane %v832, %v839
  %v842 = vunpack.c.l.s4 1966171168
  %v843 = vunpack.c.0.s8 %v842
  %v844 = vlaneseq
  %v845 = vshrl.u32 %v844, 7
  %v846 = vsub.s32 %v843, %v845
  %v847 = vrot.slane %v840, %v846
  %848 = vrot.lane.b32.xlu0 %v847, 80
  %v849 = vpop.permute.xlu0 %848
  %851 = vst.msk [vmem:[%s47] sm:$0x1] %vm267, %v849
  %v854 = vunpack.c.l.s4 1983009808
  %v855 = vunpack.c.0.s8 %v854
  %v856 = vlaneseq
  %v857 = vshrl.u32 %v856, 7
  %v858 = vsub.s32 %v855, %v857
  %v859 = vrot.slane %v786, %v858
  %860 = vrot.lane.b32.xlu0 %v859, 80
  %v861 = vpop.permute.xlu0 %860
  %vm863 = vcmask 123904
  %864 = vst.msk [vmem:[#allocation2] sm:$0x3] %vm863, %v861
  %v867 = vunpack.c.l.s4 1983009808
  %v868 = vunpack.c.0.s8 %v867
  %v869 = vlaneseq
  %v870 = vshrl.u32 %v869, 7
  %v871 = vsub.s32 %v868, %v870
  %v872 = vrot.slane %v780, %v871
  %873 = vrot.lane.b32.xlu0 %v872, 112
  %v874 = vpop.permute.xlu0 %873
  %876 = vst.msk [vmem:[#allocation3] sm:$0x3] %vm863, %v874
  %v879 = vunpack.c.l.s4 1983009808
  %v880 = vunpack.c.0.s8 %v879
  %v881 = vlaneseq
  %v882 = vshrl.u32 %v881, 7
  %v883 = vsub.s32 %v880, %v882
  %v884 = vrot.slane %v810, %v883
  %885 = vrot.lane.b32.xlu0 %v884, 80
  %v886 = vpop.permute.xlu0 %885
  %888 = vst.msk [vmem:[%s66] sm:$0x3] %vm863, %v886
  %v891 = vunpack.c.l.s4 1983009808
  %v892 = vunpack.c.0.s8 %v891
  %v893 = vlaneseq
  %v894 = vshrl.u32 %v893, 7
  %v895 = vsub.s32 %v892, %v894
  %v896 = vrot.slane %v804, %v895
  %897 = vrot.lane.b32.xlu0 %v896, 112
  %v898 = vpop.permute.xlu0 %897
  %900 = vst.msk [vmem:[%s68] sm:$0x3] %vm863, %v898
  %s901 = ssub.s32 0, 0
  %s902 = smul.u32 4, %s901
  %p903 = scmp.lt.s32.totalorder %s902, 3
  %s904 = scalar_select %p903, %s902, 3
  %s905 = scalar_lea.vmem %s5, %s904
  // Predicated region
  $region22: #{sentence_tagger_forward.14} parent=0 // pred_check
    _
  $region23: #{sentence_tagger_forward.14} parent=0 // pred_check_branch
    %907 = sbr.rel (0) target = $region25
  $region24: #{sentence_tagger_forward.14} parent=0 // pred_region
    _
  $region25: #{sentence_tagger_forward.14} parent=0 // pred_fallthru
    _
  // Predicated region
  $region26: #{sentence_tagger_forward.14} parent=0 // pred_check
    _
  $region27: #{sentence_tagger_forward.14} parent=0 // pred_check_branch
    %909 = sbr.rel (0) target = $region29
  $region28: #{sentence_tagger_forward.14} parent=0 // pred_region
    %s910 = ssub.s32 0, 0
    %s911 = smul.u32 4, %s910
  $region29: #{sentence_tagger_forward.14} parent=0 // pred_fallthru
    _
  // Predicated region
  $region30: #{sentence_tagger_forward.14} parent=0 // pred_check
    _
  $region31: #{sentence_tagger_forward.14} parent=0 // pred_check_branch
    %913 = sbr.rel (0) target = $region33
  $region32: #{sentence_tagger_forward.14} parent=0 // pred_region
    _
  $region33: #{sentence_tagger_forward.14} parent=0 // pred_fallthru
    _
  // Predicated region
  $region34: #{sentence_tagger_forward.14} parent=0 // pred_check
    _
  $region35: #{sentence_tagger_forward.14} parent=0 // pred_check_branch
    %915 = sbr.rel (0) target = $region37
  $region36: #{sentence_tagger_forward.14} parent=0 // pred_region
    %s916 = ssub.s32 0, 0
    %s917 = smul.u32 4, %s916
    %p918 = scmp.lt.s32.totalorder %s917, 3
    %s919 = scalar_select %p918, %s917, 3
    %s920 = scalar_lea.vmem %s5, %s919
  $region37: #{sentence_tagger_forward.14} parent=0 // pred_fallthru
    _

// kernel: sentence_tagger_forward.15
$region0: #{sentence_tagger_forward.15}
  #allocation0 [shape = 'u32[]', space=smem, size = 0x4, offset = 0x4, fixed_abs, tag = 'smem constant byte address 0x4 - core index']
  #allocation1 [shape = 'u32[144,128]{1,0:T(1,128)}', space=vmem, size = 0x12000, scoped, tag = 'internal scratch']
  %s0 = inlined_call_operand.vmem [shape: bf16[8,16], index: 0, kind: input, shape index: {}]
  %s1 = inlined_call_operand.vmem [shape: bf16[8,16], index: 1, kind: input, shape index: {}]
  %s2 = inlined_call_operand.vmem [shape: bf16[16,64], index: 2, kind: input, shape index: {}]
  %s3 = inlined_call_operand.vmem [shape: bf16[16,64], index: 3, kind: input, shape index: {}]
  %s4 = inlined_call_operand.vmem [shape: bf16[16,64], index: 4, kind: input, shape index: {}]
  %s5 = inlined_call_operand.vmem [shape: bf16[16,64], index: 5, kind: input, shape index: {}]
  %s6 = inlined_call_operand.vmem [shape: f32[1,64], index: 6, kind: input, shape index: {}]
  %s7 = inlined_call_operand.vmem [shape: f32[1,64], index: 7, kind: input, shape index: {}]
  %s8 = inlined_call_operand.vmem [shape: bf16[8,64], index: 8, kind: output, shape index: {0}]
  %s9 = inlined_call_operand.vmem [shape: bf16[8,64], index: 9, kind: output, shape index: {1}]
  %10 = xla_tuple %s8, %s9
  %s11 = sld [smem:[#allocation0]]
  $region50: #{sentence_tagger_forward.15} parent=0
    _
  %s13 = ssub.s32 1, %s11
  %s14 = scalar_select 0, %s13, %s11
  // Predicated region
  $region2: #{sentence_tagger_forward.15} parent=0 // pred_check
    _
  $region3: #{sentence_tagger_forward.15} parent=0 // pred_check_branch
    %16 = sbr.rel (0) target = $region5
  $region4: #{sentence_tagger_forward.15} parent=0 // pred_region
    _
  $region5: #{sentence_tagger_forward.15} parent=0 // pred_fallthru
    _
  // Predicated region
  $region6: #{sentence_tagger_forward.15} parent=0 // pred_check
    _
  $region7: #{sentence_tagger_forward.15} parent=0 // pred_check_branch
    %18 = sbr.rel (0) target = $region9
  $region8: #{sentence_tagger_forward.15} parent=0 // pred_region
    _
  $region9: #{sentence_tagger_forward.15} parent=0 // pred_fallthru
    _
  // Predicated region
  $region10: #{sentence_tagger_forward.15} parent=0 // pred_check
    _
  $region11: #{sentence_tagger_forward.15} parent=0 // pred_check_branch
    %20 = sbr.rel (0) target = $region13
  $region12: #{sentence_tagger_forward.15} parent=0 // pred_region
    _
  $region13: #{sentence_tagger_forward.15} parent=0 // pred_fallthru
    _
  // Predicated region
  $region14: #{sentence_tagger_forward.15} parent=0 // pred_check
    _
  $region15: #{sentence_tagger_forward.15} parent=0 // pred_check_branch
    %22 = sbr.rel (0) target = $region17
  $region16: #{sentence_tagger_forward.15} parent=0 // pred_region
    _
  $region17: #{sentence_tagger_forward.15} parent=0 // pred_fallthru
    _
  // Predicated region
  $region18: #{sentence_tagger_forward.15} parent=0 // pred_check
    _
  $region19: #{sentence_tagger_forward.15} parent=0 // pred_check_branch
    %24 = sbr.rel (0) target = $region21
  $region20: #{sentence_tagger_forward.15} parent=0 // pred_region
    _
  $region21: #{sentence_tagger_forward.15} parent=0 // pred_fallthru
    _
  // Predicated region
  $region22: #{sentence_tagger_forward.15} parent=0 // pred_check
    _
  $region23: #{sentence_tagger_forward.15} parent=0 // pred_check_branch
    %26 = sbr.rel (0) target = $region25
  $region24: #{sentence_tagger_forward.15} parent=0 // pred_region
    _
  $region25: #{sentence_tagger_forward.15} parent=0 // pred_fallthru
    _
  // Predicated region
  $region26: #{sentence_tagger_forward.15} parent=0 // pred_check
    _
  $region27: #{sentence_tagger_forward.15} parent=0 // pred_check_branch
    %28 = sbr.rel (0) target = $region29
  $region28: #{sentence_tagger_forward.15} parent=0 // pred_region
    _
  $region29: #{sentence_tagger_forward.15} parent=0 // pred_fallthru
    _
  // Predicated region
  $region30: #{sentence_tagger_forward.15} parent=0 // pred_check
    _
  $region31: #{sentence_tagger_forward.15} parent=0 // pred_check_branch
    %30 = sbr.rel (0) target = $region33
  $region32: #{sentence_tagger_forward.15} parent=0 // pred_region
    _
  $region33: #{sentence_tagger_forward.15} parent=0 // pred_fallthru
    _
  %v32 = vld [vmem:[%s0] sm:$0xf]
  %v33 = vld [vmem:[%s1] sm:$0xf]
  %v34 = vld [vmem:[%s2] sm:$0xf]
  %v35 = vld [vmem:[%s2 + $0x4] sm:$0xf]
  %v36 = vld [vmem:[%s3] sm:$0xf]
  %v37 = vld [vmem:[%s3 + $0x4] sm:$0xf]
  %v40 = vunpack.c.l.b16 %v36
  %v41 = vunpack.c.l.b16 %v37
  %v42 = vpack.c.b16 %v41, %v40
  %vm44 = vcmask 130048
  %v46 = vsel %vm44, %v33, 0
  %48 = vmatprep.subr.bf16.mxu0 0
  %49 = vmatpush1.bf16.msra.mxu0 0
  %50 = vmatprep.subr.bf16.mxu0 0
  %51 = vmatpush1.bf16.msra.mxu0 0
  %52 = vmatprep.subr.bf16.mxu0 0
  %53 = vmatpush1.bf16.msra.mxu0 0
  %54 = vmatprep.subr.bf16.mxu0 0
  %55 = vmatpush1.bf16.msra.mxu0 0
  %56 = vmatprep.subr.bf16.mxu0 0
  %57 = vmatpush1.bf16.msra.mxu0 0
  %58 = vmatprep.subr.bf16.mxu0 0
  %59 = vmatpush1.bf16.msra.mxu0 0
  %60 = vmatprep.subr.bf16.mxu0 0
  %61 = vmatpush1.bf16.msra.mxu0 0
  %62 = vmatprep.subr.bf16.mxu0 0
  %63 = vmatpush1.bf16.msra.mxu0 %v42
  %64 = vmatprep.subr.bf16.mxu0 0
  %65 = vmatpush2.bf16.msra.mxu0 0
  %66 = vmatprep.subr.bf16.mxu0 0
  %67 = vmatpush2.bf16.msra.mxu0 0
  %68 = vmatprep.subr.bf16.mxu0 0
  %69 = vmatpush2.bf16.msra.mxu0 0
  %70 = vmatprep.subr.bf16.mxu0 0
  %71 = vmatpush2.bf16.msra.mxu0 0
  %72 = vmatprep.subr.bf16.mxu0 0
  %73 = vmatpush2.bf16.msra.mxu0 0
  %74 = vmatprep.subr.bf16.mxu0 0
  %75 = vmatpush2.bf16.msra.mxu0 0
  %76 = vmatprep.subr.bf16.mxu0 0
  %77 = vmatpush2.bf16.msra.mxu0 0
  %78 = vmatprep.subr.bf16.mxu0 0
  %79 = vmatpush2.bf16.msra.mxu0 0
  %80 = vmatprep.mubr.bf16.mxu0 0
  %81 = vmatmul.mubr.bf16.gmra.mxu0 %v46
  %v82 = vpop.f32.mrf.mxu0
  %v83 = vadd.f32 0.0, %v82
  %v84 = vpop.f32.mrf.mxu0
  %v85 = vpop.f32.mrf.mxu0
  %v86 = vpop.f32.mrf.mxu0
  %87 = vdwg.mxu0
  %v90 = vunpack.c.l.b16 %v34
  %v91 = vunpack.c.l.b16 %v35
  %v92 = vpack.c.b16 %v91, %v90
  %v95 = vsel %vm44, %v32, 0
  %97 = vmatprep.subr.bf16.mxu0 0
  %98 = vmatpush1.bf16.msra.mxu0 0
  %99 = vmatprep.subr.bf16.mxu0 0
  %100 = vmatpush1.bf16.msra.mxu0 0
  %101 = vmatprep.subr.bf16.mxu0 0
  %102 = vmatpush1.bf16.msra.mxu0 0
  %103 = vmatprep.subr.bf16.mxu0 0
  %104 = vmatpush1.bf16.msra.mxu0 0
  %105 = vmatprep.subr.bf16.mxu0 0
  %106 = vmatpush1.bf16.msra.mxu0 0
  %107 = vmatprep.subr.bf16.mxu0 0
  %108 = vmatpush1.bf16.msra.mxu0 0
  %109 = vmatprep.subr.bf16.mxu0 0
  %110 = vmatpush1.bf16.msra.mxu0 0
  %111 = vmatprep.subr.bf16.mxu0 0
  %112 = vmatpush1.bf16.msra.mxu0 %v92
  %113 = vmatprep.subr.bf16.mxu0 0
  %114 = vmatpush2.bf16.msra.mxu0 0
  %115 = vmatprep.subr.bf16.mxu0 0
  %116 = vmatpush2.bf16.msra.mxu0 0
  %117 = vmatprep.subr.bf16.mxu0 0
  %118 = vmatpush2.bf16.msra.mxu0 0
  %119 = vmatprep.subr.bf16.mxu0 0
  %120 = vmatpush2.bf16.msra.mxu0 0
  %121 = vmatprep.subr.bf16.mxu0 0
  %122 = vmatpush2.bf16.msra.mxu0 0
  %123 = vmatprep.subr.bf16.mxu0 0
  %124 = vmatpush2.bf16.msra.mxu0 0
  %125 = vmatprep.subr.bf16.mxu0 0
  %126 = vmatpush2.bf16.msra.mxu0 0
  %127 = vmatprep.subr.bf16.mxu0 0
  %128 = vmatpush2.bf16.msra.mxu0 0
  %129 = vmatprep.mubr.bf16.mxu0 0
  %130 = vmatmul.mubr.bf16.gmra.mxu0 %v95
  %v131 = vpop.f32.mrf.mxu0
  %v132 = vadd.f32 %v83, %v131
  %v133 = vpop.f32.mrf.mxu0
  %v134 = vpop.f32.mrf.mxu0
  %v135 = vpop.f32.mrf.mxu0
  %136 = vdwg.mxu0
  %v137 = vld [vmem:[%s6] sm:$0x1]
  %v139 = vlaneseq
  %v140 = vshrl.u32 %v139, 7
  %v141 = vsub.s32 0, %v140
  %v142 = vrot.slane %v137, %v141
  %v144 = vadd.f32 %v132, %v142
  %v145 = vld [vmem:[%s4] sm:$0xf]
  %v146 = vld [vmem:[%s4 + $0x4] sm:$0xf]
  %v147 = vld [vmem:[%s5] sm:$0xf]
  %v148 = vld [vmem:[%s5 + $0x4] sm:$0xf]
  %v151 = vunpack.c.l.b16 %v147
  %v152 = vunpack.c.l.b16 %v148
  %v153 = vpack.c.b16 %v152, %v151
  %155 = vmatprep.subr.bf16.mxu0 0
  %156 = vmatpush1.bf16.msra.mxu0 0
  %157 = vmatprep.subr.bf16.mxu0 0
  %158 = vmatpush1.bf16.msra.mxu0 0
  %159 = vmatprep.subr.bf16.mxu0 0
  %160 = vmatpush1.bf16.msra.mxu0 0
  %161 = vmatprep.subr.bf16.mxu0 0
  %162 = vmatpush1.bf16.msra.mxu0 0
  %163 = vmatprep.subr.bf16.mxu0 0
  %164 = vmatpush1.bf16.msra.mxu0 0
  %165 = vmatprep.subr.bf16.mxu0 0
  %166 = vmatpush1.bf16.msra.mxu0 0
  %167 = vmatprep.subr.bf16.mxu0 0
  %168 = vmatpush1.bf16.msra.mxu0 0
  %169 = vmatprep.subr.bf16.mxu0 0
  %170 = vmatpush1.bf16.msra.mxu0 %v153
  %171 = vmatprep.subr.bf16.mxu0 0
  %172 = vmatpush2.bf16.msra.mxu0 0
  %173 = vmatprep.subr.bf16.mxu0 0
  %174 = vmatpush2.bf16.msra.mxu0 0
  %175 = vmatprep.subr.bf16.mxu0 0
  %176 = vmatpush2.bf16.msra.mxu0 0
  %177 = vmatprep.subr.bf16.mxu0 0
  %178 = vmatpush2.bf16.msra.mxu0 0
  %179 = vmatprep.subr.bf16.mxu0 0
  %180 = vmatpush2.bf16.msra.mxu0 0
  %181 = vmatprep.subr.bf16.mxu0 0
  %182 = vmatpush2.bf16.msra.mxu0 0
  %183 = vmatprep.subr.bf16.mxu0 0
  %184 = vmatpush2.bf16.msra.mxu0 0
  %185 = vmatprep.subr.bf16.mxu0 0
  %186 = vmatpush2.bf16.msra.mxu0 0
  %187 = vmatprep.mubr.bf16.mxu0 0
  %188 = vmatmul.mubr.bf16.gmra.mxu0 %v46
  %v189 = vpop.f32.mrf.mxu0
  %v190 = vadd.f32 0.0, %v189
  %v191 = vpop.f32.mrf.mxu0
  %v192 = vpop.f32.mrf.mxu0
  %v193 = vpop.f32.mrf.mxu0
  %194 = vdwg.mxu0
  %v197 = vunpack.c.l.b16 %v145
  %v198 = vunpack.c.l.b16 %v146
  %v199 = vpack.c.b16 %v198, %v197
  %201 = vmatprep.subr.bf16.mxu0 0
  %202 = vmatpush1.bf16.msra.mxu0 0
  %203 = vmatprep.subr.bf16.mxu0 0
  %204 = vmatpush1.bf16.msra.mxu0 0
  %205 = vmatprep.subr.bf16.mxu0 0
  %206 = vmatpush1.bf16.msra.mxu0 0
  %207 = vmatprep.subr.bf16.mxu0 0
  %208 = vmatpush1.bf16.msra.mxu0 0
  %209 = vmatprep.subr.bf16.mxu0 0
  %210 = vmatpush1.bf16.msra.mxu0 0
  %211 = vmatprep.subr.bf16.mxu0 0
  %212 = vmatpush1.bf16.msra.mxu0 0
  %213 = vmatprep.subr.bf16.mxu0 0
  %214 = vmatpush1.bf16.msra.mxu0 0
  %215 = vmatprep.subr.bf16.mxu0 0
  %216 = vmatpush1.bf16.msra.mxu0 %v199
  %217 = vmatprep.subr.bf16.mxu0 0
  %218 = vmatpush2.bf16.msra.mxu0 0
  %219 = vmatprep.subr.bf16.mxu0 0
  %220 = vmatpush2.bf16.msra.mxu0 0
  %221 = vmatprep.subr.bf16.mxu0 0
  %222 = vmatpush2.bf16.msra.mxu0 0
  %223 = vmatprep.subr.bf16.mxu0 0
  %224 = vmatpush2.bf16.msra.mxu0 0
  %225 = vmatprep.subr.bf16.mxu0 0
  %226 = vmatpush2.bf16.msra.mxu0 0
  %227 = vmatprep.subr.bf16.mxu0 0
  %228 = vmatpush2.bf16.msra.mxu0 0
  %229 = vmatprep.subr.bf16.mxu0 0
  %230 = vmatpush2.bf16.msra.mxu0 0
  %231 = vmatprep.subr.bf16.mxu0 0
  %232 = vmatpush2.bf16.msra.mxu0 0
  %233 = vmatprep.mubr.bf16.mxu0 0
  %234 = vmatmul.mubr.bf16.gmra.mxu0 %v95
  %v235 = vpop.f32.mrf.mxu0
  %v236 = vadd.f32 %v190, %v235
  %v237 = vpop.f32.mrf.mxu0
  %v238 = vpop.f32.mrf.mxu0
  %v239 = vpop.f32.mrf.mxu0
  %240 = vdwg.mxu0
  %v241 = vld [vmem:[%s7] sm:$0x1]
  %v243 = vlaneseq
  %v244 = vshrl.u32 %v243, 7
  %v245 = vsub.s32 0, %v244
  %v246 = vrot.slane %v241, %v245
  %v248 = vadd.f32 %v236, %v246
  %v249 = vpack.c.bf16 %v144, %v144
  %vm250 = vcmask 519168
  %251 = vst.msk [vmem:[%s8] sm:$0xf] %vm250, %v249
  %v252 = vpack.c.bf16 %v248, %v248
  %253 = vst.msk [vmem:[%s9] sm:$0xf] %vm250, %v252
  // Predicated region
  $region34: #{sentence_tagger_forward.15} parent=0 // pred_check
    _
  $region35: #{sentence_tagger_forward.15} parent=0 // pred_check_branch
    %255 = sbr.rel (0) target = $region37
  $region36: #{sentence_tagger_forward.15} parent=0 // pred_region
    _
  $region37: #{sentence_tagger_forward.15} parent=0 // pred_fallthru
    _
  // Predicated region
  $region38: #{sentence_tagger_forward.15} parent=0 // pred_check
    _
  $region39: #{sentence_tagger_forward.15} parent=0 // pred_check_branch
    %257 = sbr.rel (0) target = $region41
  $region40: #{sentence_tagger_forward.15} parent=0 // pred_region
    _
  $region41: #{sentence_tagger_forward.15} parent=0 // pred_fallthru
    _
  // Predicated region
  $region42: #{sentence_tagger_forward.15} parent=0 // pred_check
    _
  $region43: #{sentence_tagger_forward.15} parent=0 // pred_check_branch
    %259 = sbr.rel (0) target = $region45
  $region44: #{sentence_tagger_forward.15} parent=0 // pred_region
    _
  $region45: #{sentence_tagger_forward.15} parent=0 // pred_fallthru
    _
  // Predicated region
  $region46: #{sentence_tagger_forward.15} parent=0 // pred_check
    _
  $region47: #{sentence_tagger_forward.15} parent=0 // pred_check_branch
    %261 = sbr.rel (0) target = $region49
  $region48: #{sentence_tagger_forward.15} parent=0 // pred_region
    _
  $region49: #{sentence_tagger_forward.15} parent=0 // pred_fallthru
    _

// kernel: sentence_tagger_forward.16
$region0: #{sentence_tagger_forward.16}
  #allocation0 [shape = 'u32[]', space=smem, size = 0x4, offset = 0x4, fixed_abs, tag = 'smem constant byte address 0x4 - core index']
  #allocation1 [shape = 'u32[144,128]{1,0:T(1,128)}', space=vmem, size = 0x12000, scoped, tag = 'internal scratch']
  #allocation2 [shape = 'f32[2,2,16]{2,1,0:T(2,128)}', space=vmem, size = 0x800, scoped, tag = 'scratch operand']
  #allocation3 [shape = 'f32[2,2,16]{2,1,0:T(2,128)}', space=vmem, size = 0x800, scoped, tag = 'scratch operand']
  %s0 = inlined_call_operand.vmem [shape: bf16[4,2,64], index: 0, kind: input, shape index: {}]
  %s1 = inlined_call_operand.vmem [shape: bf16[4,2,64], index: 1, kind: input, shape index: {}]
  %s2 = inlined_call_operand.vmem [shape: bf16[16,64], index: 2, kind: input, shape index: {}]
  %s3 = inlined_call_operand.vmem [shape: bf16[16,64], index: 3, kind: input, shape index: {}]
  %s4 = inlined_call_operand.vmem [shape: f32[4,2,16], index: 4, kind: output, shape index: {0}]
  %s5 = inlined_call_operand.vmem [shape: f32[4,2,16], index: 5, kind: output, shape index: {1}]
  %6 = xla_tuple %s4, %s5
  %s7 = sld [smem:[#allocation0]]
  $region38: #{sentence_tagger_forward.16} parent=0
    _
  %s9 = ssub.s32 1, %s7
  %s10 = scalar_select 0, %s9, %s7
  // Predicated region
  $region2: #{sentence_tagger_forward.16} parent=0 // pred_check
    _
  $region3: #{sentence_tagger_forward.16} parent=0 // pred_check_branch
    %12 = sbr.rel (0) target = $region5
  $region4: #{sentence_tagger_forward.16} parent=0 // pred_region
    _
  $region5: #{sentence_tagger_forward.16} parent=0 // pred_fallthru
    _
  // Predicated region
  $region6: #{sentence_tagger_forward.16} parent=0 // pred_check
    _
  $region7: #{sentence_tagger_forward.16} parent=0 // pred_check_branch
    %14 = sbr.rel (0) target = $region9
  $region8: #{sentence_tagger_forward.16} parent=0 // pred_region
    %s15 = ssub.s32 0, 0
    %s16 = smul.u32 4, %s15
    %p17 = scmp.lt.s32.totalorder %s16, 3
    %s18 = scalar_select %p17, %s16, 3
    %s19 = scalar_lea.vmem %s1, %s18
    %s20 = ssub.s32 0, 0
    %s21 = smul.u32 4, %s20
  $region9: #{sentence_tagger_forward.16} parent=0 // pred_fallthru
    _
  // Predicated region
  $region10: #{sentence_tagger_forward.16} parent=0 // pred_check
    _
  $region11: #{sentence_tagger_forward.16} parent=0 // pred_check_branch
    %23 = sbr.rel (0) target = $region13
  $region12: #{sentence_tagger_forward.16} parent=0 // pred_region
    _
  $region13: #{sentence_tagger_forward.16} parent=0 // pred_fallthru
    _
  // Predicated region
  $region14: #{sentence_tagger_forward.16} parent=0 // pred_check
    _
  $region15: #{sentence_tagger_forward.16} parent=0 // pred_check_branch
    %25 = sbr.rel (0) target = $region17
  $region16: #{sentence_tagger_forward.16} parent=0 // pred_region
    _
  $region17: #{sentence_tagger_forward.16} parent=0 // pred_fallthru
    _
  %s26 = ssub.s32 0, 0
  %s27 = smul.u32 4, %s26
  %p28 = scmp.lt.s32.totalorder %s27, 3
  %s29 = scalar_select %p28, %s27, 3
  %s30 = scalar_lea.vmem %s1, %s29
  %s31 = ssub.s32 0, 0
  %s32 = smul.u32 4, %s31
  %p33 = scmp.lt.s32.totalorder %s32, 3
  %s34 = scalar_select %p33, %s32, 3
  %s35 = smul.addr %s34, 2
  %s36 = scalar_lea.vmem %s5, %s35
  %s37 = ssub.s32 0, 0
  %s38 = smul.u32 4, %s37
  %p39 = scmp.lt.s32.totalorder %s38, 3
  %s40 = scalar_select %p39, %s38, 3
  %s41 = scalar_lea.vmem %s1, %s40
  %s42 = ssub.s32 0, 0
  %s43 = smul.u32 4, %s42
  %s44 = ssub.s32 0, 0
  %s45 = smul.u32 4, %s44
  %p46 = scmp.lt.s32.totalorder %s45, 3
  %s47 = scalar_select %p46, %s45, 3
  %s48 = smul.addr %s47, 2
  %s49 = scalar_lea.vmem %s5, %s48
  %s50 = ssub.s32 0, 0
  %s51 = smul.u32 4, %s50
  %p53 = scmp.eq.s32.totalorder 0, 0
  // Predicated region
  $region18: #{sentence_tagger_forward.16} parent=0 // pred_check
    %p54 = pneg %p53
  $region19: #{sentence_tagger_forward.16} parent=0 // pred_check_branch
    %56 = sbr.rel (%p54) target = $region21
  $region20: #{sentence_tagger_forward.16} parent=0 // pred_region
    %vm57 = vcmask 123904
    %58 = vst.msk [vmem:[#allocation2] sm:$0x3] %vm57, 0.0
    %59 = vst.msk [vmem:[#allocation2 + $0x2] sm:$0x3] %vm57, 0.0
    %60 = vst.msk [vmem:[#allocation3] sm:$0x3] %vm57, 0.0
    %61 = vst.msk [vmem:[#allocation3 + $0x2] sm:$0x3] %vm57, 0.0
  $region21: #{sentence_tagger_forward.16} parent=0 // pred_fallthru
    _
  %v62 = vld [vmem:[%s2] sm:$0xf]
  %v63 = vld [vmem:[%s2 + $0x4] sm:$0xf]
  %v64 = vld [vmem:[%s3] sm:$0xf]
  %v65 = vld [vmem:[%s3 + $0x4] sm:$0xf]
  %v66 = vld [vmem:[#allocation2] sm:$0x3]
  %v67 = vld [vmem:[#allocation3] sm:$0x3]
  %s68 = scalar_lea.vmem [#allocation2], 2
  %v69 = vld [vmem:[%s68] sm:$0x3]
  %s70 = scalar_lea.vmem [#allocation3], 2
  %v71 = vld [vmem:[%s70] sm:$0x3]
  %v72 = vld [vmem:[%s0] sm:$0x1]
  %v73 = vunpack.c.l.bf16 %v72
  %v74 = vpack.c.bf16 %v66, %v66
  %v77 = vunpack.c.l.b16 %v62
  %v78 = vunpack.c.l.b16 %v63
  %v79 = vpack.c.b16 %v78, %v77
  %vm81 = vcmask 130048
  %v83 = vsel %vm81, %v74, 0
  %85 = vmatprep.subr.bf16.mxu0 0
  %86 = vmatpush1.bf16.msra.mxu0 0
  %87 = vmatprep.subr.bf16.mxu0 0
  %88 = vmatpush1.bf16.msra.mxu0 0
  %89 = vmatprep.subr.bf16.mxu0 0
  %90 = vmatpush1.bf16.msra.mxu0 0
  %91 = vmatprep.subr.bf16.mxu0 0
  %92 = vmatpush1.bf16.msra.mxu0 0
  %93 = vmatprep.subr.bf16.mxu0 0
  %94 = vmatpush1.bf16.msra.mxu0 0
  %95 = vmatprep.subr.bf16.mxu0 0
  %96 = vmatpush1.bf16.msra.mxu0 0
  %97 = vmatprep.subr.bf16.mxu0 0
  %98 = vmatpush1.bf16.msra.mxu0 0
  %99 = vmatprep.subr.bf16.mxu0 0
  %100 = vmatpush1.bf16.msra.mxu0 %v79
  %101 = vmatprep.subr.bf16.mxu0 0
  %102 = vmatpush2.bf16.msra.mxu0 0
  %103 = vmatprep.subr.bf16.mxu0 0
  %104 = vmatpush2.bf16.msra.mxu0 0
  %105 = vmatprep.subr.bf16.mxu0 0
  %106 = vmatpush2.bf16.msra.mxu0 0
  %107 = vmatprep.subr.bf16.mxu0 0
  %108 = vmatpush2.bf16.msra.mxu0 0
  %109 = vmatprep.subr.bf16.mxu0 0
  %110 = vmatpush2.bf16.msra.mxu0 0
  %111 = vmatprep.subr.bf16.mxu0 0
  %112 = vmatpush2.bf16.msra.mxu0 0
  %113 = vmatprep.subr.bf16.mxu0 0
  %114 = vmatpush2.bf16.msra.mxu0 0
  %115 = vmatprep.subr.bf16.mxu0 0
  %116 = vmatpush2.bf16.msra.mxu0 0
  %117 = vmatprep.mubr.bf16.mxu0 0
  %118 = vmatmul.mubr.bf16.gmra.mxu0 %v83
  %v119 = vpop.f32.mrf.mxu0
  %v120 = vadd.f32 0.0, %v119
  %v121 = vpop.f32.mrf.mxu0
  %v122 = vpop.f32.mrf.mxu0
  %v123 = vpop.f32.mrf.mxu0
  %124 = vdwg.mxu0
  %v125 = vadd.f32 %v73, %v120
  %s126 = scalar_lea.vmem %s41, 3
  %v127 = vld [vmem:[%s126] sm:$0x1]
  %v128 = vunpack.c.l.bf16 %v127
  %v129 = vpack.c.bf16 %v69, %v69
  %v132 = vunpack.c.l.b16 %v64
  %v133 = vunpack.c.l.b16 %v65
  %v134 = vpack.c.b16 %v133, %v132
  %v137 = vsel %vm81, %v129, 0
  %139 = vmatprep.subr.bf16.mxu0 0
  %140 = vmatpush1.bf16.msra.mxu0 0
  %141 = vmatprep.subr.bf16.mxu0 0
  %142 = vmatpush1.bf16.msra.mxu0 0
  %143 = vmatprep.subr.bf16.mxu0 0
  %144 = vmatpush1.bf16.msra.mxu0 0
  %145 = vmatprep.subr.bf16.mxu0 0
  %146 = vmatpush1.bf16.msra.mxu0 0
  %147 = vmatprep.subr.bf16.mxu0 0
  %148 = vmatpush1.bf16.msra.mxu0 0
  %149 = vmatprep.subr.bf16.mxu0 0
  %150 = vmatpush1.bf16.msra.mxu0 0
  %151 = vmatprep.subr.bf16.mxu0 0
  %152 = vmatpush1.bf16.msra.mxu0 0
  %153 = vmatprep.subr.bf16.mxu0 0
  %154 = vmatpush1.bf16.msra.mxu0 %v134
  %155 = vmatprep.subr.bf16.mxu0 0
  %156 = vmatpush2.bf16.msra.mxu0 0
  %157 = vmatprep.subr.bf16.mxu0 0
  %158 = vmatpush2.bf16.msra.mxu0 0
  %159 = vmatprep.subr.bf16.mxu0 0
  %160 = vmatpush2.bf16.msra.mxu0 0
  %161 = vmatprep.subr.bf16.mxu0 0
  %162 = vmatpush2.bf16.msra.mxu0 0
  %163 = vmatprep.subr.bf16.mxu0 0
  %164 = vmatpush2.bf16.msra.mxu0 0
  %165 = vmatprep.subr.bf16.mxu0 0
  %166 = vmatpush2.bf16.msra.mxu0 0
  %167 = vmatprep.subr.bf16.mxu0 0
  %168 = vmatpush2.bf16.msra.mxu0 0
  %169 = vmatprep.subr.bf16.mxu0 0
  %170 = vmatpush2.bf16.msra.mxu0 0
  %171 = vmatprep.mubr.bf16.mxu0 0
  %172 = vmatmul.mubr.bf16.gmra.mxu0 %v137
  %v173 = vpop.f32.mrf.mxu0
  %v174 = vadd.f32 0.0, %v173
  %v175 = vpop.f32.mrf.mxu0
  %v176 = vpop.f32.mrf.mxu0
  %v177 = vpop.f32.mrf.mxu0
  %178 = vdwg.mxu0
  %v179 = vadd.f32 %v128, %v174
  %v180 = vxor.u32 %v125, 2147483648
  %v181 = vmul.f32 %v180, 1.442695
  %v182 = vpow.pop %v181
  %v183 = vadd.f32 %v182, 1.0
  %v184 = vrcp.pop %v183
  %v185 = vmul.f32 1.0, %v184
  %v186 = vtanh.pop %v125
  %v189 = vunpack.c.l.s4 1983009808
  %v190 = vunpack.c.0.s8 %v189
  %v191 = vlaneseq
  %v192 = vshrl.u32 %v191, 7
  %v193 = vsub.s32 %v190, %v192
  %v194 = vrot.slane %v67, %v193
  %195 = vrot.lane.b32.xlu0 %v194, 16
  %v196 = vpop.permute.xlu0 %195
  %v198 = vmul.f32 %v185, %v196
  %200 = vrot.lane.b32.xlu0 %v186, 96
  %v201 = vpop.permute.xlu0 %200
  %v203 = vmul.f32 %v185, %v201
  %205 = vrot.lane.b32.xlu0 %v203, 16
  %v206 = vpop.permute.xlu0 %205
  %v208 = vadd.f32 %v198, %v206
  %v209 = vtanh.pop %v208
  %211 = vrot.lane.b32.xlu0 %v209, 32
  %v212 = vpop.permute.xlu0 %211
  %v214 = vmul.f32 %v185, %v212
  %v215 = vxor.u32 %v179, 2147483648
  %v216 = vmul.f32 %v215, 1.442695
  %v217 = vpow.pop %v216
  %v218 = vadd.f32 %v217, 1.0
  %v219 = vrcp.pop %v218
  %v220 = vmul.f32 1.0, %v219
  %v221 = vtanh.pop %v179
  %v224 = vunpack.c.l.s4 1983009808
  %v225 = vunpack.c.0.s8 %v224
  %v226 = vlaneseq
  %v227 = vshrl.u32 %v226, 7
  %v228 = vsub.s32 %v225, %v227
  %v229 = vrot.slane %v71, %v228
  %230 = vrot.lane.b32.xlu0 %v229, 16
  %v231 = vpop.permute.xlu0 %230
  %v233 = vmul.f32 %v220, %v231
  %235 = vrot.lane.b32.xlu0 %v221, 96
  %v236 = vpop.permute.xlu0 %235
  %v238 = vmul.f32 %v220, %v236
  %240 = vrot.lane.b32.xlu0 %v238, 16
  %v241 = vpop.permute.xlu0 %240
  %v243 = vadd.f32 %v233, %v241
  %v244 = vtanh.pop %v243
  %246 = vrot.lane.b32.xlu0 %v244, 32
  %v247 = vpop.permute.xlu0 %246
  %v249 = vmul.f32 %v220, %v247
  %v252 = vunpack.c.l.s4 1983009808
  %v253 = vunpack.c.0.s8 %v252
  %v254 = vlaneseq
  %v255 = vshrl.u32 %v254, 7
  %v256 = vsub.s32 %v253, %v255
  %v257 = vrot.slane %v214, %v256
  %258 = vrot.lane.b32.xlu0 %v257, 80
  %v259 = vpop.permute.xlu0 %258
  %vm261 = vcmask 123904
  %262 = vst.msk [vmem:[%s4] sm:$0x3] %vm261, %v259
  %v265 = vunpack.c.l.s4 1983009808
  %v266 = vunpack.c.0.s8 %v265
  %v267 = vlaneseq
  %v268 = vshrl.u32 %v267, 7
  %v269 = vsub.s32 %v266, %v268
  %v270 = vrot.slane %v249, %v269
  %271 = vrot.lane.b32.xlu0 %v270, 80
  %v272 = vpop.permute.xlu0 %271
  %s274 = scalar_lea.vmem %s49, 6
  %275 = vst.msk [vmem:[%s274] sm:$0x3] %vm261, %v272
  %s276 = scalar_lea.vmem %s0, 1
  %v277 = vld [vmem:[%s276] sm:$0x1]
  %v278 = vunpack.c.l.bf16 %v277
  %v279 = vpack.c.bf16 %v214, %v214
  %281 = vrot.lane.b32.xlu0 %v279, 80
  %v282 = vpop.permute.xlu0 %281
  %v284 = vsel %vm81, %v282, 0
  %286 = vmatprep.subr.bf16.mxu0 0
  %287 = vmatpush1.bf16.msra.mxu0 0
  %288 = vmatprep.subr.bf16.mxu0 0
  %289 = vmatpush1.bf16.msra.mxu0 0
  %290 = vmatprep.subr.bf16.mxu0 0
  %291 = vmatpush1.bf16.msra.mxu0 0
  %292 = vmatprep.subr.bf16.mxu0 0
  %293 = vmatpush1.bf16.msra.mxu0 0
  %294 = vmatprep.subr.bf16.mxu0 0
  %295 = vmatpush1.bf16.msra.mxu0 0
  %296 = vmatprep.subr.bf16.mxu0 0
  %297 = vmatpush1.bf16.msra.mxu0 0
  %298 = vmatprep.subr.bf16.mxu0 0
  %299 = vmatpush1.bf16.msra.mxu0 0
  %300 = vmatprep.subr.bf16.mxu0 0
  %301 = vmatpush1.bf16.msra.mxu0 %v79
  %302 = vmatprep.subr.bf16.mxu0 0
  %303 = vmatpush2.bf16.msra.mxu0 0
  %304 = vmatprep.subr.bf16.mxu0 0
  %305 = vmatpush2.bf16.msra.mxu0 0
  %306 = vmatprep.subr.bf16.mxu0 0
  %307 = vmatpush2.bf16.msra.mxu0 0
  %308 = vmatprep.subr.bf16.mxu0 0
  %309 = vmatpush2.bf16.msra.mxu0 0
  %310 = vmatprep.subr.bf16.mxu0 0
  %311 = vmatpush2.bf16.msra.mxu0 0
  %312 = vmatprep.subr.bf16.mxu0 0
  %313 = vmatpush2.bf16.msra.mxu0 0
  %314 = vmatprep.subr.bf16.mxu0 0
  %315 = vmatpush2.bf16.msra.mxu0 0
  %316 = vmatprep.subr.bf16.mxu0 0
  %317 = vmatpush2.bf16.msra.mxu0 0
  %318 = vmatprep.mubr.bf16.mxu0 0
  %319 = vmatmul.mubr.bf16.gmra.mxu0 %v284
  %v320 = vpop.f32.mrf.mxu0
  %v321 = vadd.f32 0.0, %v320
  %v322 = vpop.f32.mrf.mxu0
  %v323 = vpop.f32.mrf.mxu0
  %v324 = vpop.f32.mrf.mxu0
  %325 = vdwg.mxu0
  %v326 = vadd.f32 %v278, %v321
  %s327 = scalar_lea.vmem %s41, 2
  %v328 = vld [vmem:[%s327] sm:$0x1]
  %v329 = vunpack.c.l.bf16 %v328
  %v330 = vpack.c.bf16 %v249, %v249
  %332 = vrot.lane.b32.xlu0 %v330, 80
  %v333 = vpop.permute.xlu0 %332
  %v335 = vsel %vm81, %v333, 0
  %337 = vmatprep.subr.bf16.mxu0 0
  %338 = vmatpush1.bf16.msra.mxu0 0
  %339 = vmatprep.subr.bf16.mxu0 0
  %340 = vmatpush1.bf16.msra.mxu0 0
  %341 = vmatprep.subr.bf16.mxu0 0
  %342 = vmatpush1.bf16.msra.mxu0 0
  %343 = vmatprep.subr.bf16.mxu0 0
  %344 = vmatpush1.bf16.msra.mxu0 0
  %345 = vmatprep.subr.bf16.mxu0 0
  %346 = vmatpush1.bf16.msra.mxu0 0
  %347 = vmatprep.subr.bf16.mxu0 0
  %348 = vmatpush1.bf16.msra.mxu0 0
  %349 = vmatprep.subr.bf16.mxu0 0
  %350 = vmatpush1.bf16.msra.mxu0 0
  %351 = vmatprep.subr.bf16.mxu0 0
  %352 = vmatpush1.bf16.msra.mxu0 %v134
  %353 = vmatprep.subr.bf16.mxu0 0
  %354 = vmatpush2.bf16.msra.mxu0 0
  %355 = vmatprep.subr.bf16.mxu0 0
  %356 = vmatpush2.bf16.msra.mxu0 0
  %357 = vmatprep.subr.bf16.mxu0 0
  %358 = vmatpush2.bf16.msra.mxu0 0
  %359 = vmatprep.subr.bf16.mxu0 0
  %360 = vmatpush2.bf16.msra.mxu0 0
  %361 = vmatprep.subr.bf16.mxu0 0
  %362 = vmatpush2.bf16.msra.mxu0 0
  %363 = vmatprep.subr.bf16.mxu0 0
  %364 = vmatpush2.bf16.msra.mxu0 0
  %365 = vmatprep.subr.bf16.mxu0 0
  %366 = vmatpush2.bf16.msra.mxu0 0
  %367 = vmatprep.subr.bf16.mxu0 0
  %368 = vmatpush2.bf16.msra.mxu0 0
  %369 = vmatprep.mubr.bf16.mxu0 0
  %370 = vmatmul.mubr.bf16.gmra.mxu0 %v335
  %v371 = vpop.f32.mrf.mxu0
  %v372 = vadd.f32 0.0, %v371
  %v373 = vpop.f32.mrf.mxu0
  %v374 = vpop.f32.mrf.mxu0
  %v375 = vpop.f32.mrf.mxu0
  %376 = vdwg.mxu0
  %v377 = vadd.f32 %v329, %v372
  %v378 = vxor.u32 %v326, 2147483648
  %v379 = vmul.f32 %v378, 1.442695
  %v380 = vpow.pop %v379
  %v381 = vadd.f32 %v380, 1.0
  %v382 = vrcp.pop %v381
  %v383 = vmul.f32 1.0, %v382
  %v384 = vtanh.pop %v326
  %v385 = vmul.f32 %v383, %v208
  %387 = vrot.lane.b32.xlu0 %v384, 96
  %v388 = vpop.permute.xlu0 %387
  %v390 = vmul.f32 %v383, %v388
  %392 = vrot.lane.b32.xlu0 %v390, 16
  %v393 = vpop.permute.xlu0 %392
  %v395 = vadd.f32 %v385, %v393
  %v396 = vtanh.pop %v395
  %398 = vrot.lane.b32.xlu0 %v396, 32
  %v399 = vpop.permute.xlu0 %398
  %v401 = vmul.f32 %v383, %v399
  %v402 = vxor.u32 %v377, 2147483648
  %v403 = vmul.f32 %v402, 1.442695
  %v404 = vpow.pop %v403
  %v405 = vadd.f32 %v404, 1.0
  %v406 = vrcp.pop %v405
  %v407 = vmul.f32 1.0, %v406
  %v408 = vtanh.pop %v377
  %v409 = vmul.f32 %v407, %v243
  %411 = vrot.lane.b32.xlu0 %v408, 96
  %v412 = vpop.permute.xlu0 %411
  %v414 = vmul.f32 %v407, %v412
  %416 = vrot.lane.b32.xlu0 %v414, 16
  %v417 = vpop.permute.xlu0 %416
  %v419 = vadd.f32 %v409, %v417
  %v420 = vtanh.pop %v419
  %422 = vrot.lane.b32.xlu0 %v420, 32
  %v423 = vpop.permute.xlu0 %422
  %v425 = vmul.f32 %v407, %v423
  %v428 = vunpack.c.l.s4 1983009808
  %v429 = vunpack.c.0.s8 %v428
  %v430 = vlaneseq
  %v431 = vshrl.u32 %v430, 7
  %v432 = vsub.s32 %v429, %v431
  %v433 = vrot.slane %v401, %v432
  %434 = vrot.lane.b32.xlu0 %v433, 80
  %v435 = vpop.permute.xlu0 %434
  %s437 = scalar_lea.vmem %s4, 2
  %438 = vst.msk [vmem:[%s437] sm:$0x3] %vm261, %v435
  %v441 = vunpack.c.l.s4 1983009808
  %v442 = vunpack.c.0.s8 %v441
  %v443 = vlaneseq
  %v444 = vshrl.u32 %v443, 7
  %v445 = vsub.s32 %v442, %v444
  %v446 = vrot.slane %v425, %v445
  %447 = vrot.lane.b32.xlu0 %v446, 80
  %v448 = vpop.permute.xlu0 %447
  %s450 = scalar_lea.vmem %s49, 4
  %451 = vst.msk [vmem:[%s450] sm:$0x3] %vm261, %v448
  %s452 = scalar_lea.vmem %s0, 2
  %v453 = vld [vmem:[%s452] sm:$0x1]
  %v454 = vunpack.c.l.bf16 %v453
  %v455 = vpack.c.bf16 %v401, %v401
  %457 = vrot.lane.b32.xlu0 %v455, 80
  %v458 = vpop.permute.xlu0 %457
  %v460 = vsel %vm81, %v458, 0
  %462 = vmatprep.subr.bf16.mxu0 0
  %463 = vmatpush1.bf16.msra.mxu0 0
  %464 = vmatprep.subr.bf16.mxu0 0
  %465 = vmatpush1.bf16.msra.mxu0 0
  %466 = vmatprep.subr.bf16.mxu0 0
  %467 = vmatpush1.bf16.msra.mxu0 0
  %468 = vmatprep.subr.bf16.mxu0 0
  %469 = vmatpush1.bf16.msra.mxu0 0
  %470 = vmatprep.subr.bf16.mxu0 0
  %471 = vmatpush1.bf16.msra.mxu0 0
  %472 = vmatprep.subr.bf16.mxu0 0
  %473 = vmatpush1.bf16.msra.mxu0 0
  %474 = vmatprep.subr.bf16.mxu0 0
  %475 = vmatpush1.bf16.msra.mxu0 0
  %476 = vmatprep.subr.bf16.mxu0 0
  %477 = vmatpush1.bf16.msra.mxu0 %v79
  %478 = vmatprep.subr.bf16.mxu0 0
  %479 = vmatpush2.bf16.msra.mxu0 0
  %480 = vmatprep.subr.bf16.mxu0 0
  %481 = vmatpush2.bf16.msra.mxu0 0
  %482 = vmatprep.subr.bf16.mxu0 0
  %483 = vmatpush2.bf16.msra.mxu0 0
  %484 = vmatprep.subr.bf16.mxu0 0
  %485 = vmatpush2.bf16.msra.mxu0 0
  %486 = vmatprep.subr.bf16.mxu0 0
  %487 = vmatpush2.bf16.msra.mxu0 0
  %488 = vmatprep.subr.bf16.mxu0 0
  %489 = vmatpush2.bf16.msra.mxu0 0
  %490 = vmatprep.subr.bf16.mxu0 0
  %491 = vmatpush2.bf16.msra.mxu0 0
  %492 = vmatprep.subr.bf16.mxu0 0
  %493 = vmatpush2.bf16.msra.mxu0 0
  %494 = vmatprep.mubr.bf16.mxu0 0
  %495 = vmatmul.mubr.bf16.gmra.mxu0 %v460
  %v496 = vpop.f32.mrf.mxu0
  %v497 = vadd.f32 0.0, %v496
  %v498 = vpop.f32.mrf.mxu0
  %v499 = vpop.f32.mrf.mxu0
  %v500 = vpop.f32.mrf.mxu0
  %501 = vdwg.mxu0
  %v502 = vadd.f32 %v454, %v497
  %s503 = scalar_lea.vmem %s41, 1
  %v504 = vld [vmem:[%s503] sm:$0x1]
  %v505 = vunpack.c.l.bf16 %v504
  %v506 = vpack.c.bf16 %v425, %v425
  %508 = vrot.lane.b32.xlu0 %v506, 80
  %v509 = vpop.permute.xlu0 %508
  %v511 = vsel %vm81, %v509, 0
  %513 = vmatprep.subr.bf16.mxu0 0
  %514 = vmatpush1.bf16.msra.mxu0 0
  %515 = vmatprep.subr.bf16.mxu0 0
  %516 = vmatpush1.bf16.msra.mxu0 0
  %517 = vmatprep.subr.bf16.mxu0 0
  %518 = vmatpush1.bf16.msra.mxu0 0
  %519 = vmatprep.subr.bf16.mxu0 0
  %520 = vmatpush1.bf16.msra.mxu0 0
  %521 = vmatprep.subr.bf16.mxu0 0
  %522 = vmatpush1.bf16.msra.mxu0 0
  %523 = vmatprep.subr.bf16.mxu0 0
  %524 = vmatpush1.bf16.msra.mxu0 0
  %525 = vmatprep.subr.bf16.mxu0 0
  %526 = vmatpush1.bf16.msra.mxu0 0
  %527 = vmatprep.subr.bf16.mxu0 0
  %528 = vmatpush1.bf16.msra.mxu0 %v134
  %529 = vmatprep.subr.bf16.mxu0 0
  %530 = vmatpush2.bf16.msra.mxu0 0
  %531 = vmatprep.subr.bf16.mxu0 0
  %532 = vmatpush2.bf16.msra.mxu0 0
  %533 = vmatprep.subr.bf16.mxu0 0
  %534 = vmatpush2.bf16.msra.mxu0 0
  %535 = vmatprep.subr.bf16.mxu0 0
  %536 = vmatpush2.bf16.msra.mxu0 0
  %537 = vmatprep.subr.bf16.mxu0 0
  %538 = vmatpush2.bf16.msra.mxu0 0
  %539 = vmatprep.subr.bf16.mxu0 0
  %540 = vmatpush2.bf16.msra.mxu0 0
  %541 = vmatprep.subr.bf16.mxu0 0
  %542 = vmatpush2.bf16.msra.mxu0 0
  %543 = vmatprep.subr.bf16.mxu0 0
  %544 = vmatpush2.bf16.msra.mxu0 0
  %545 = vmatprep.mubr.bf16.mxu0 0
  %546 = vmatmul.mubr.bf16.gmra.mxu0 %v511
  %v547 = vpop.f32.mrf.mxu0
  %v548 = vadd.f32 0.0, %v547
  %v549 = vpop.f32.mrf.mxu0
  %v550 = vpop.f32.mrf.mxu0
  %v551 = vpop.f32.mrf.mxu0
  %552 = vdwg.mxu0
  %v553 = vadd.f32 %v505, %v548
  %v554 = vxor.u32 %v502, 2147483648
  %v555 = vmul.f32 %v554, 1.442695
  %v556 = vpow.pop %v555
  %v557 = vadd.f32 %v556, 1.0
  %v558 = vrcp.pop %v557
  %v559 = vmul.f32 1.0, %v558
  %v560 = vtanh.pop %v502
  %v561 = vmul.f32 %v559, %v395
  %563 = vrot.lane.b32.xlu0 %v560, 96
  %v564 = vpop.permute.xlu0 %563
  %v566 = vmul.f32 %v559, %v564
  %568 = vrot.lane.b32.xlu0 %v566, 16
  %v569 = vpop.permute.xlu0 %568
  %v571 = vadd.f32 %v561, %v569
  %v572 = vtanh.pop %v571
  %574 = vrot.lane.b32.xlu0 %v572, 32
  %v575 = vpop.permute.xlu0 %574
  %v577 = vmul.f32 %v559, %v575
  %v578 = vxor.u32 %v553, 2147483648
  %v579 = vmul.f32 %v578, 1.442695
  %v580 = vpow.pop %v579
  %v581 = vadd.f32 %v580, 1.0
  %v582 = vrcp.pop %v581
  %v583 = vmul.f32 1.0, %v582
  %v584 = vtanh.pop %v553
  %v585 = vmul.f32 %v583, %v419
  %587 = vrot.lane.b32.xlu0 %v584, 96
  %v588 = vpop.permute.xlu0 %587
  %v590 = vmul.f32 %v583, %v588
  %592 = vrot.lane.b32.xlu0 %v590, 16
  %v593 = vpop.permute.xlu0 %592
  %v595 = vadd.f32 %v585, %v593
  %v596 = vtanh.pop %v595
  %598 = vrot.lane.b32.xlu0 %v596, 32
  %v599 = vpop.permute.xlu0 %598
  %v601 = vmul.f32 %v583, %v599
  %v604 = vunpack.c.l.s4 1983009808
  %v605 = vunpack.c.0.s8 %v604
  %v606 = vlaneseq
  %v607 = vshrl.u32 %v606, 7
  %v608 = vsub.s32 %v605, %v607
  %v609 = vrot.slane %v577, %v608
  %610 = vrot.lane.b32.xlu0 %v609, 80
  %v611 = vpop.permute.xlu0 %610
  %s613 = scalar_lea.vmem %s4, 4
  %614 = vst.msk [vmem:[%s613] sm:$0x3] %vm261, %v611
  %v617 = vunpack.c.l.s4 1983009808
  %v618 = vunpack.c.0.s8 %v617
  %v619 = vlaneseq
  %v620 = vshrl.u32 %v619, 7
  %v621 = vsub.s32 %v618, %v620
  %v622 = vrot.slane %v601, %v621
  %623 = vrot.lane.b32.xlu0 %v622, 80
  %v624 = vpop.permute.xlu0 %623
  %s626 = scalar_lea.vmem %s49, 2
  %627 = vst.msk [vmem:[%s626] sm:$0x3] %vm261, %v624
  %s628 = scalar_lea.vmem %s0, 3
  %v629 = vld [vmem:[%s628] sm:$0x1]
  %v630 = vunpack.c.l.bf16 %v629
  %v631 = vpack.c.bf16 %v577, %v577
  %633 = vrot.lane.b32.xlu0 %v631, 80
  %v634 = vpop.permute.xlu0 %633
  %v636 = vsel %vm81, %v634, 0
  %638 = vmatprep.subr.bf16.mxu0 0
  %639 = vmatpush1.bf16.msra.mxu0 0
  %640 = vmatprep.subr.bf16.mxu0 0
  %641 = vmatpush1.bf16.msra.mxu0 0
  %642 = vmatprep.subr.bf16.mxu0 0
  %643 = vmatpush1.bf16.msra.mxu0 0
  %644 = vmatprep.subr.bf16.mxu0 0
  %645 = vmatpush1.bf16.msra.mxu0 0
  %646 = vmatprep.subr.bf16.mxu0 0
  %647 = vmatpush1.bf16.msra.mxu0 0
  %648 = vmatprep.subr.bf16.mxu0 0
  %649 = vmatpush1.bf16.msra.mxu0 0
  %650 = vmatprep.subr.bf16.mxu0 0
  %651 = vmatpush1.bf16.msra.mxu0 0
  %652 = vmatprep.subr.bf16.mxu0 0
  %653 = vmatpush1.bf16.msra.mxu0 %v79
  %654 = vmatprep.subr.bf16.mxu0 0
  %655 = vmatpush2.bf16.msra.mxu0 0
  %656 = vmatprep.subr.bf16.mxu0 0
  %657 = vmatpush2.bf16.msra.mxu0 0
  %658 = vmatprep.subr.bf16.mxu0 0
  %659 = vmatpush2.bf16.msra.mxu0 0
  %660 = vmatprep.subr.bf16.mxu0 0
  %661 = vmatpush2.bf16.msra.mxu0 0
  %662 = vmatprep.subr.bf16.mxu0 0
  %663 = vmatpush2.bf16.msra.mxu0 0
  %664 = vmatprep.subr.bf16.mxu0 0
  %665 = vmatpush2.bf16.msra.mxu0 0
  %666 = vmatprep.subr.bf16.mxu0 0
  %667 = vmatpush2.bf16.msra.mxu0 0
  %668 = vmatprep.subr.bf16.mxu0 0
  %669 = vmatpush2.bf16.msra.mxu0 0
  %670 = vmatprep.mubr.bf16.mxu0 0
  %671 = vmatmul.mubr.bf16.gmra.mxu0 %v636
  %v672 = vpop.f32.mrf.mxu0
  %v673 = vadd.f32 0.0, %v672
  %v674 = vpop.f32.mrf.mxu0
  %v675 = vpop.f32.mrf.mxu0
  %v676 = vpop.f32.mrf.mxu0
  %677 = vdwg.mxu0
  %v678 = vadd.f32 %v630, %v673
  %v679 = vld [vmem:[%s41] sm:$0x1]
  %v680 = vunpack.c.l.bf16 %v679
  %v681 = vpack.c.bf16 %v601, %v601
  %683 = vrot.lane.b32.xlu0 %v681, 80
  %v684 = vpop.permute.xlu0 %683
  %v686 = vsel %vm81, %v684, 0
  %688 = vmatprep.subr.bf16.mxu0 0
  %689 = vmatpush1.bf16.msra.mxu0 0
  %690 = vmatprep.subr.bf16.mxu0 0
  %691 = vmatpush1.bf16.msra.mxu0 0
  %692 = vmatprep.subr.bf16.mxu0 0
  %693 = vmatpush1.bf16.msra.mxu0 0
  %694 = vmatprep.subr.bf16.mxu0 0
  %695 = vmatpush1.bf16.msra.mxu0 0
  %696 = vmatprep.subr.bf16.mxu0 0
  %697 = vmatpush1.bf16.msra.mxu0 0
  %698 = vmatprep.subr.bf16.mxu0 0
  %699 = vmatpush1.bf16.msra.mxu0 0
  %700 = vmatprep.subr.bf16.mxu0 0
  %701 = vmatpush1.bf16.msra.mxu0 0
  %702 = vmatprep.subr.bf16.mxu0 0
  %703 = vmatpush1.bf16.msra.mxu0 %v134
  %704 = vmatprep.subr.bf16.mxu0 0
  %705 = vmatpush2.bf16.msra.mxu0 0
  %706 = vmatprep.subr.bf16.mxu0 0
  %707 = vmatpush2.bf16.msra.mxu0 0
  %708 = vmatprep.subr.bf16.mxu0 0
  %709 = vmatpush2.bf16.msra.mxu0 0
  %710 = vmatprep.subr.bf16.mxu0 0
  %711 = vmatpush2.bf16.msra.mxu0 0
  %712 = vmatprep.subr.bf16.mxu0 0
  %713 = vmatpush2.bf16.msra.mxu0 0
  %714 = vmatprep.subr.bf16.mxu0 0
  %715 = vmatpush2.bf16.msra.mxu0 0
  %716 = vmatprep.subr.bf16.mxu0 0
  %717 = vmatpush2.bf16.msra.mxu0 0
  %718 = vmatprep.subr.bf16.mxu0 0
  %719 = vmatpush2.bf16.msra.mxu0 0
  %720 = vmatprep.mubr.bf16.mxu0 0
  %721 = vmatmul.mubr.bf16.gmra.mxu0 %v686
  %v722 = vpop.f32.mrf.mxu0
  %v723 = vadd.f32 0.0, %v722
  %v724 = vpop.f32.mrf.mxu0
  %v725 = vpop.f32.mrf.mxu0
  %v726 = vpop.f32.mrf.mxu0
  %727 = vdwg.mxu0
  %v728 = vadd.f32 %v680, %v723
  %v729 = vxor.u32 %v678, 2147483648
  %v730 = vmul.f32 %v729, 1.442695
  %v731 = vpow.pop %v730
  %v732 = vadd.f32 %v731, 1.0
  %v733 = vrcp.pop %v732
  %v734 = vmul.f32 1.0, %v733
  %v735 = vtanh.pop %v678
  %v736 = vmul.f32 %v734, %v571
  %738 = vrot.lane.b32.xlu0 %v735, 96
  %v739 = vpop.permute.xlu0 %738
  %v741 = vmul.f32 %v734, %v739
  %743 = vrot.lane.b32.xlu0 %v741, 16
  %v744 = vpop.permute.xlu0 %743
  %v746 = vadd.f32 %v736, %v744
  %v747 = vtanh.pop %v746
  %749 = vrot.lane.b32.xlu0 %v747, 32
  %v750 = vpop.permute.xlu0 %749
  %v752 = vmul.f32 %v734, %v750
  %v753 = vxor.u32 %v728, 2147483648
  %v754 = vmul.f32 %v753, 1.442695
  %v755 = vpow.pop %v754
  %v756 = vadd.f32 %v755, 1.0
  %v757 = vrcp.pop %v756
  %v758 = vmul.f32 1.0, %v757
  %v759 = vtanh.pop %v728
  %v760 = vmul.f32 %v758, %v595
  %762 = vrot.lane.b32.xlu0 %v759, 96
  %v763 = vpop.permute.xlu0 %762
  %v765 = vmul.f32 %v758, %v763
  %767 = vrot.lane.b32.xlu0 %v765, 16
  %v768 = vpop.permute.xlu0 %767
  %v770 = vadd.f32 %v760, %v768
  %v771 = vtanh.pop %v770
  %773 = vrot.lane.b32.xlu0 %v771, 32
  %v774 = vpop.permute.xlu0 %773
  %v776 = vmul.f32 %v758, %v774
  %v779 = vunpack.c.l.s4 1983009808
  %v780 = vunpack.c.0.s8 %v779
  %v781 = vlaneseq
  %v782 = vshrl.u32 %v781, 7
  %v783 = vsub.s32 %v780, %v782
  %v784 = vrot.slane %v752, %v783
  %785 = vrot.lane.b32.xlu0 %v784, 80
  %v786 = vpop.permute.xlu0 %785
  %s788 = scalar_lea.vmem %s4, 6
  %789 = vst.msk [vmem:[%s788] sm:$0x3] %vm261, %v786
  %v792 = vunpack.c.l.s4 1983009808
  %v793 = vunpack.c.0.s8 %v792
  %v794 = vlaneseq
  %v795 = vshrl.u32 %v794, 7
  %v796 = vsub.s32 %v793, %v795
  %v797 = vrot.slane %v776, %v796
  %798 = vrot.lane.b32.xlu0 %v797, 80
  %v799 = vpop.permute.xlu0 %798
  %801 = vst.msk [vmem:[%s49] sm:$0x3] %vm261, %v799
  %802 = vst.msk [vmem:[#allocation2] sm:$0x3] %vm261, %v786
  %v805 = vunpack.c.l.s4 1983009808
  %v806 = vunpack.c.0.s8 %v805
  %v807 = vlaneseq
  %v808 = vshrl.u32 %v807, 7
  %v809 = vsub.s32 %v806, %v808
  %v810 = vrot.slane %v746, %v809
  %811 = vrot.lane.b32.xlu0 %v810, 112
  %v812 = vpop.permute.xlu0 %811
  %814 = vst.msk [vmem:[#allocation3] sm:$0x3] %vm261, %v812
  %815 = vst.msk [vmem:[%s68] sm:$0x3] %vm261, %v799
  %v818 = vunpack.c.l.s4 1983009808
  %v819 = vunpack.c.0.s8 %v818
  %v820 = vlaneseq
  %v821 = vshrl.u32 %v820, 7
  %v822 = vsub.s32 %v819, %v821
  %v823 = vrot.slane %v770, %v822
  %824 = vrot.lane.b32.xlu0 %v823, 112
  %v825 = vpop.permute.xlu0 %824
  %827 = vst.msk [vmem:[%s70] sm:$0x3] %vm261, %v825
  %s828 = ssub.s32 0, 0
  %s829 = smul.u32 4, %s828
  %p830 = scmp.lt.s32.totalorder %s829, 3
  %s831 = scalar_select %p830, %s829, 3
  %s832 = smul.addr %s831, 2
  %s833 = scalar_lea.vmem %s5, %s832
  // Predicated region
  $region22: #{sentence_tagger_forward.16} parent=0 // pred_check
    _
  $region23: #{sentence_tagger_forward.16} parent=0 // pred_check_branch
    %835 = sbr.rel (0) target = $region25
  $region24: #{sentence_tagger_forward.16} parent=0 // pred_region
    _
  $region25: #{sentence_tagger_forward.16} parent=0 // pred_fallthru
    _
  // Predicated region
  $region26: #{sentence_tagger_forward.16} parent=0 // pred_check
    _
  $region27: #{sentence_tagger_forward.16} parent=0 // pred_check_branch
    %837 = sbr.rel (0) target = $region29
  $region28: #{sentence_tagger_forward.16} parent=0 // pred_region
    %s838 = ssub.s32 0, 0
    %s839 = smul.u32 4, %s838
  $region29: #{sentence_tagger_forward.16} parent=0 // pred_fallthru
    _
  // Predicated region
  $region30: #{sentence_tagger_forward.16} parent=0 // pred_check
    _
  $region31: #{sentence_tagger_forward.16} parent=0 // pred_check_branch
    %841 = sbr.rel (0) target = $region33
  $region32: #{sentence_tagger_forward.16} parent=0 // pred_region
    _
  $region33: #{sentence_tagger_forward.16} parent=0 // pred_fallthru
    _
  // Predicated region
  $region34: #{sentence_tagger_forward.16} parent=0 // pred_check
    _
  $region35: #{sentence_tagger_forward.16} parent=0 // pred_check_branch
    %843 = sbr.rel (0) target = $region37
  $region36: #{sentence_tagger_forward.16} parent=0 // pred_region
    %s844 = ssub.s32 0, 0
    %s845 = smul.u32 4, %s844
    %p846 = scmp.lt.s32.totalorder %s845, 3
    %s847 = scalar_select %p846, %s845, 3
    %s848 = smul.addr %s847, 2
    %s849 = scalar_lea.vmem %s5, %s848
  $region37: #{sentence_tagger_forward.16} parent=0 // pred_fallthru
    _

// kernel: sentence_tagger_forward.17
$region0: #{sentence_tagger_forward.17}
  #allocation0 [shape = 'u32[]', space=smem, size = 0x4, offset = 0x4, fixed_abs, tag = 'smem constant byte address 0x4 - core index']
  #allocation1 [shape = 'u32[144,128]{1,0:T(1,128)}', space=vmem, size = 0x12000, scoped, tag = 'internal scratch']
  #allocation2 [shape = 'f32[1,1]{1,0:T(1,128)S(1)}', space=vmem, size = 0x200, scoped, tag = 'scoped memory for sentence_tagger_forward.17']
  %s0 = inlined_call_operand.vmem [shape: f32[4,2,32], index: 0, kind: input, shape index: {}]
  %s1 = inlined_call_operand.vmem [shape: f32[32,32], index: 1, kind: input, shape index: {}]
  %s2 = inlined_call_operand.vmem [shape: f32[1,32], index: 2, kind: input, shape index: {}]
  %s3 = inlined_call_operand.vmem [shape: f32[1,32], index: 3, kind: input, shape index: {}]
  %s4 = inlined_call_operand.<no memory space> [shape: f32[1,1], index: 4, kind: input, shape index: {}]
  %s5 = inlined_call_operand.vmem [shape: f32[32,32], index: 5, kind: input, shape index: {}]
  %s6 = inlined_call_operand.vmem [shape: f32[1,32], index: 6, kind: input, shape index: {}]
  %s7 = inlined_call_operand.vmem [shape: f32[32,32], index: 7, kind: input, shape index: {}]
  %s8 = inlined_call_operand.vmem [shape: f32[1,32], index: 8, kind: input, shape index: {}]
  %s9 = inlined_call_operand.vmem [shape: f32[4,2], index: 9, kind: output, shape index: {}]
  %s10 = sld [smem:[#allocation0]]
  $region46: #{sentence_tagger_forward.17} parent=0
    _
  %s12 = ssub.s32 1, %s10
  %s13 = scalar_select 0, %s12, %s10
  %v14 = vstv %s4
  %15 = vst [vmem:[#allocation2] sm:$0x1] %v14
  // Predicated region
  $region2: #{sentence_tagger_forward.17} parent=0 // pred_check
    _
  $region3: #{sentence_tagger_forward.17} parent=0 // pred_check_branch
    %17 = sbr.rel (0) target = $region5
  $region4: #{sentence_tagger_forward.17} parent=0 // pred_region
    _
  $region5: #{sentence_tagger_forward.17} parent=0 // pred_fallthru
    _
  // Predicated region
  $region6: #{sentence_tagger_forward.17} parent=0 // pred_check
    _
  $region7: #{sentence_tagger_forward.17} parent=0 // pred_check_branch
    %19 = sbr.rel (0) target = $region9
  $region8: #{sentence_tagger_forward.17} parent=0 // pred_region
    _
  $region9: #{sentence_tagger_forward.17} parent=0 // pred_fallthru
    _
  // Predicated region
  $region10: #{sentence_tagger_forward.17} parent=0 // pred_check
    _
  $region11: #{sentence_tagger_forward.17} parent=0 // pred_check_branch
    %21 = sbr.rel (0) target = $region13
  $region12: #{sentence_tagger_forward.17} parent=0 // pred_region
    _
  $region13: #{sentence_tagger_forward.17} parent=0 // pred_fallthru
    _
  // Predicated region
  $region14: #{sentence_tagger_forward.17} parent=0 // pred_check
    _
  $region15: #{sentence_tagger_forward.17} parent=0 // pred_check_branch
    %23 = sbr.rel (0) target = $region17
  $region16: #{sentence_tagger_forward.17} parent=0 // pred_region
    _
  $region17: #{sentence_tagger_forward.17} parent=0 // pred_fallthru
    _
  // Predicated region
  $region18: #{sentence_tagger_forward.17} parent=0 // pred_check
    _
  $region19: #{sentence_tagger_forward.17} parent=0 // pred_check_branch
    %25 = sbr.rel (0) target = $region21
  $region20: #{sentence_tagger_forward.17} parent=0 // pred_region
    _
  $region21: #{sentence_tagger_forward.17} parent=0 // pred_fallthru
    _
  // Predicated region
  $region22: #{sentence_tagger_forward.17} parent=0 // pred_check
    _
  $region23: #{sentence_tagger_forward.17} parent=0 // pred_check_branch
    %27 = sbr.rel (0) target = $region25
  $region24: #{sentence_tagger_forward.17} parent=0 // pred_region
    _
  $region25: #{sentence_tagger_forward.17} parent=0 // pred_fallthru
    _
  // Predicated region
  $region26: #{sentence_tagger_forward.17} parent=0 // pred_check
    _
  $region27: #{sentence_tagger_forward.17} parent=0 // pred_check_branch
    %29 = sbr.rel (0) target = $region29
  $region28: #{sentence_tagger_forward.17} parent=0 // pred_region
    _
  $region29: #{sentence_tagger_forward.17} parent=0 // pred_fallthru
    _
  // Predicated region
  $region30: #{sentence_tagger_forward.17} parent=0 // pred_check
    _
  $region31: #{sentence_tagger_forward.17} parent=0 // pred_check_branch
    %31 = sbr.rel (0) target = $region33
  $region32: #{sentence_tagger_forward.17} parent=0 // pred_region
    _
  $region33: #{sentence_tagger_forward.17} parent=0 // pred_fallthru
    _
  // Predicated region
  $region34: #{sentence_tagger_forward.17} parent=0 // pred_check
    _
  $region35: #{sentence_tagger_forward.17} parent=0 // pred_check_branch
    %33 = sbr.rel (0) target = $region37
  $region36: #{sentence_tagger_forward.17} parent=0 // pred_region
    _
  $region37: #{sentence_tagger_forward.17} parent=0 // pred_fallthru
    _
  %v34 = vld [vmem:[%s0] sm:$0x3]
  %v35 = vld [vmem:[%s0 + $0x2] sm:$0x3]
  %v36 = vld [vmem:[%s0 + $0x4] sm:$0x3]
  %v37 = vld [vmem:[%s0 + $0x6] sm:$0x3]
  %vm38 = vcmask 254976
  %v39 = vsel %vm38, %v34, 0.0
  %v40 = vsel %vm38, %v35, 0.0
  %v41 = vadd.f32 %v39, %v40
  %v42 = vsel %vm38, %v36, 0.0
  %v43 = vadd.f32 %v41, %v42
  %v44 = vsel %vm38, %v37, 0.0
  %v45 = vadd.f32 %v43, %v44
  %v46 = vrcp.pop 4.0
  %v47 = vmul.f32 %v45, %v46
  %v48 = vld [vmem:[%s1] sm:$0xff]
  %v49 = vld [vmem:[%s1 + $0x8] sm:$0xff]
  %v50 = vld [vmem:[%s1 + $0x10] sm:$0xff]
  %v51 = vld [vmem:[%s1 + $0x18] sm:$0xff]
  %v52 = vld [vmem:[%s2] sm:$0x1]
  %v54 = vlaneseq
  %v55 = vshrl.u32 %v54, 7
  %v56 = vsub.s32 0, %v55
  %v57 = vrot.slane %v52, %v56
  %vm59 = vcmask 261120
  %v61 = vsel %vm59, %v47, 0
  %63 = vmatprep.subr.mxu0 0.0
  %64 = vmatpush1.msra.mxu0 0.0
  %65 = vmatprep.subr.mxu0 0.0
  %66 = vmatpush1.msra.mxu0 0.0
  %67 = vmatprep.subr.mxu0 0.0
  %68 = vmatpush1.msra.mxu0 0.0
  %69 = vmatprep.subr.mxu0 0.0
  %70 = vmatpush1.msra.mxu0 0.0
  %71 = vmatprep.subr.mxu0 0.0
  %72 = vmatpush1.msra.mxu0 0.0
  %73 = vmatprep.subr.mxu0 0.0
  %74 = vmatpush1.msra.mxu0 0.0
  %75 = vmatprep.subr.mxu0 0.0
  %76 = vmatpush1.msra.mxu0 0.0
  %77 = vmatprep.subr.mxu0 0.0
  %78 = vmatpush1.msra.mxu0 0.0
  %79 = vmatprep.subr.mxu0 0.0
  %80 = vmatpush1.msra.mxu0 0.0
  %81 = vmatprep.subr.mxu0 0.0
  %82 = vmatpush1.msra.mxu0 0.0
  %83 = vmatprep.subr.mxu0 0.0
  %84 = vmatpush1.msra.mxu0 0.0
  %85 = vmatprep.subr.mxu0 0.0
  %86 = vmatpush1.msra.mxu0 0.0
  %87 = vmatprep.subr.mxu0 0.0
  %88 = vmatpush1.msra.mxu0 %v51
  %89 = vmatprep.subr.mxu0 0.0
  %90 = vmatpush1.msra.mxu0 %v50
  %91 = vmatprep.subr.mxu0 0.0
  %92 = vmatpush1.msra.mxu0 %v49
  %93 = vmatprep.subr.mxu0 0.0
  %94 = vmatpush1.msra.mxu0 %v48
  %95 = vmatprep.subr.mxu0 0.0
  %96 = vmatpush2.msra.mxu0 0.0
  %97 = vmatprep.subr.mxu0 0.0
  %98 = vmatpush2.msra.mxu0 0.0
  %99 = vmatprep.subr.mxu0 0.0
  %100 = vmatpush2.msra.mxu0 0.0
  %101 = vmatprep.subr.mxu0 0.0
  %102 = vmatpush2.msra.mxu0 0.0
  %103 = vmatprep.subr.mxu0 0.0
  %104 = vmatpush2.msra.mxu0 0.0
  %105 = vmatprep.subr.mxu0 0.0
  %106 = vmatpush2.msra.mxu0 0.0
  %107 = vmatprep.subr.mxu0 0.0
  %108 = vmatpush2.msra.mxu0 0.0
  %109 = vmatprep.subr.mxu0 0.0
  %110 = vmatpush2.msra.mxu0 0.0
  %111 = vmatprep.subr.mxu0 0.0
  %112 = vmatpush2.msra.mxu0 0.0
  %113 = vmatprep.subr.mxu0 0.0
  %114 = vmatpush2.msra.mxu0 0.0
  %115 = vmatprep.subr.mxu0 0.0
  %116 = vmatpush2.msra.mxu0 0.0
  %117 = vmatprep.subr.mxu0 0.0
  %118 = vmatpush2.msra.mxu0 0.0
  %119 = vmatprep.subr.mxu0 0.0
  %120 = vmatpush2.msra.mxu0 0.0
  %121 = vmatprep.subr.mxu0 0.0
  %122 = vmatpush2.msra.mxu0 0.0
  %123 = vmatprep.subr.mxu0 0.0
  %124 = vmatpush2.msra.mxu0 0.0
  %125 = vmatprep.subr.mxu0 0.0
  %126 = vmatpush2.msra.mxu0 0.0
  %127 = vmatprep.mubr.f32.mxu0 0.0
  %128 = vmatmul.mubr.f32.gmra.mxu0 %v61
  %v129 = vpop.f32.mrf.mxu0
  %v130 = vadd.f32 %v57, %v129
  %v131 = vpop.f32.mrf.mxu0
  %132 = vdwg.mxu0
  %v133 = vtanh.pop %v130
  %v134 = vld [vmem:[%s3] sm:$0x1]
  %v135 = vld [vmem:[#allocation2] sm:$0x1]
  %v137 = vlaneseq
  %v138 = vshrl.u32 %v137, 7
  %v139 = vsub.s32 0, %v138
  %v140 = vrot.slane %v134, %v139
  %v142 = vmul.f32 %v34, %v140
  %v143 = vmul.f32 %v35, %v140
  %v144 = vmul.f32 %v36, %v140
  %v145 = vmul.f32 %v37, %v140
  %v146 = vsel %vm38, %v142, 0.0
  %147 = vadd.xlane.f32.xlu0 %v146
  %v148 = vpop.xlane.xlu0 %147
  %v149 = vsel %vm38, %v143, 0.0
  %150 = vadd.xlane.f32.xlu0 %v149
  %v151 = vpop.xlane.xlu0 %150
  %v152 = vsel %vm38, %v144, 0.0
  %153 = vadd.xlane.f32.xlu0 %v152
  %v154 = vpop.xlane.xlu0 %153
  %v155 = vsel %vm38, %v145, 0.0
  %156 = vadd.xlane.f32.xlu0 %v155
  %v157 = vpop.xlane.xlu0 %156
  %v159 = vlaneseq
  %v160 = vshrl.u32 %v159, 7
  %v161 = vsub.s32 0, %v160
  %v162 = vrot.slane %v135, %v161
  %163 = vset.pattern.permute.xlu0 0
  %164 = vperm.xlu0 %163, %v162
  %v165 = vpop.permute.xlu0 %164
  %v167 = vadd.f32 %v148, %v165
  %v168 = vadd.f32 %v151, %v165
  %v169 = vadd.f32 %v154, %v165
  %v170 = vadd.f32 %v157, %v165
  %v171 = vld [vmem:[%s5] sm:$0xff]
  %v172 = vld [vmem:[%s5 + $0x8] sm:$0xff]
  %v173 = vld [vmem:[%s5 + $0x10] sm:$0xff]
  %v174 = vld [vmem:[%s5 + $0x18] sm:$0xff]
  %v175 = vld [vmem:[%s6] sm:$0x1]
  %v177 = vlaneseq
  %v178 = vshrl.u32 %v177, 7
  %v179 = vsub.s32 0, %v178
  %v180 = vrot.slane %v175, %v179
  %v183 = vsel %vm59, %v133, 0
  %185 = vmatprep.subr.mxu0 0.0
  %186 = vmatpush1.msra.mxu0 0.0
  %187 = vmatprep.subr.mxu0 0.0
  %188 = vmatpush1.msra.mxu0 0.0
  %189 = vmatprep.subr.mxu0 0.0
  %190 = vmatpush1.msra.mxu0 0.0
  %191 = vmatprep.subr.mxu0 0.0
  %192 = vmatpush1.msra.mxu0 0.0
  %193 = vmatprep.subr.mxu0 0.0
  %194 = vmatpush1.msra.mxu0 0.0
  %195 = vmatprep.subr.mxu0 0.0
  %196 = vmatpush1.msra.mxu0 0.0
  %197 = vmatprep.subr.mxu0 0.0
  %198 = vmatpush1.msra.mxu0 0.0
  %199 = vmatprep.subr.mxu0 0.0
  %200 = vmatpush1.msra.mxu0 0.0
  %201 = vmatprep.subr.mxu0 0.0
  %202 = vmatpush1.msra.mxu0 0.0
  %203 = vmatprep.subr.mxu0 0.0
  %204 = vmatpush1.msra.mxu0 0.0
  %205 = vmatprep.subr.mxu0 0.0
  %206 = vmatpush1.msra.mxu0 0.0
  %207 = vmatprep.subr.mxu0 0.0
  %208 = vmatpush1.msra.mxu0 0.0
  %209 = vmatprep.subr.mxu0 0.0
  %210 = vmatpush1.msra.mxu0 %v174
  %211 = vmatprep.subr.mxu0 0.0
  %212 = vmatpush1.msra.mxu0 %v173
  %213 = vmatprep.subr.mxu0 0.0
  %214 = vmatpush1.msra.mxu0 %v172
  %215 = vmatprep.subr.mxu0 0.0
  %216 = vmatpush1.msra.mxu0 %v171
  %217 = vmatprep.subr.mxu0 0.0
  %218 = vmatpush2.msra.mxu0 0.0
  %219 = vmatprep.subr.mxu0 0.0
  %220 = vmatpush2.msra.mxu0 0.0
  %221 = vmatprep.subr.mxu0 0.0
  %222 = vmatpush2.msra.mxu0 0.0
  %223 = vmatprep.subr.mxu0 0.0
  %224 = vmatpush2.msra.mxu0 0.0
  %225 = vmatprep.subr.mxu0 0.0
  %226 = vmatpush2.msra.mxu0 0.0
  %227 = vmatprep.subr.mxu0 0.0
  %228 = vmatpush2.msra.mxu0 0.0
  %229 = vmatprep.subr.mxu0 0.0
  %230 = vmatpush2.msra.mxu0 0.0
  %231 = vmatprep.subr.mxu0 0.0
  %232 = vmatpush2.msra.mxu0 0.0
  %233 = vmatprep.subr.mxu0 0.0
  %234 = vmatpush2.msra.mxu0 0.0
  %235 = vmatprep.subr.mxu0 0.0
  %236 = vmatpush2.msra.mxu0 0.0
  %237 = vmatprep.subr.mxu0 0.0
  %238 = vmatpush2.msra.mxu0 0.0
  %239 = vmatprep.subr.mxu0 0.0
  %240 = vmatpush2.msra.mxu0 0.0
  %241 = vmatprep.subr.mxu0 0.0
  %242 = vmatpush2.msra.mxu0 0.0
  %243 = vmatprep.subr.mxu0 0.0
  %244 = vmatpush2.msra.mxu0 0.0
  %245 = vmatprep.subr.mxu0 0.0
  %246 = vmatpush2.msra.mxu0 0.0
  %247 = vmatprep.subr.mxu0 0.0
  %248 = vmatpush2.msra.mxu0 0.0
  %249 = vmatprep.mubr.f32.mxu0 0.0
  %250 = vmatmul.mubr.f32.gmra.mxu0 %v183
  %v251 = vpop.f32.mrf.mxu0
  %v252 = vadd.f32 %v180, %v251
  %v253 = vpop.f32.mrf.mxu0
  %254 = vdwg.mxu0
  %v255 = vmul.f32 %v34, %v252
  %v256 = vmul.f32 %v35, %v252
  %v257 = vmul.f32 %v36, %v252
  %v258 = vmul.f32 %v37, %v252
  %v259 = vsel %vm38, %v255, 0.0
  %260 = vadd.xlane.f32.xlu0 %v259
  %v261 = vpop.xlane.xlu0 %260
  %v262 = vsel %vm38, %v256, 0.0
  %263 = vadd.xlane.f32.xlu0 %v262
  %v264 = vpop.xlane.xlu0 %263
  %v265 = vsel %vm38, %v257, 0.0
  %266 = vadd.xlane.f32.xlu0 %v265
  %v267 = vpop.xlane.xlu0 %266
  %v268 = vsel %vm38, %v258, 0.0
  %269 = vadd.xlane.f32.xlu0 %v268
  %v270 = vpop.xlane.xlu0 %269
  %v271 = vld [vmem:[%s7] sm:$0xff]
  %v272 = vld [vmem:[%s7 + $0x8] sm:$0xff]
  %v273 = vld [vmem:[%s7 + $0x10] sm:$0xff]
  %v274 = vld [vmem:[%s7 + $0x18] sm:$0xff]
  %v275 = vld [vmem:[%s8] sm:$0x1]
  %v277 = vlaneseq
  %v278 = vshrl.u32 %v277, 7
  %v279 = vsub.s32 0, %v278
  %v280 = vrot.slane %v275, %v279
  %v283 = vsel %vm59, 0.0, 0
  %285 = vmatprep.subr.mxu0 0.0
  %286 = vmatpush1.msra.mxu0 0.0
  %287 = vmatprep.subr.mxu0 0.0
  %288 = vmatpush1.msra.mxu0 0.0
  %289 = vmatprep.subr.mxu0 0.0
  %290 = vmatpush1.msra.mxu0 0.0
  %291 = vmatprep.subr.mxu0 0.0
  %292 = vmatpush1.msra.mxu0 0.0
  %293 = vmatprep.subr.mxu0 0.0
  %294 = vmatpush1.msra.mxu0 0.0
  %295 = vmatprep.subr.mxu0 0.0
  %296 = vmatpush1.msra.mxu0 0.0
  %297 = vmatprep.subr.mxu0 0.0
  %298 = vmatpush1.msra.mxu0 0.0
  %299 = vmatprep.subr.mxu0 0.0
  %300 = vmatpush1.msra.mxu0 0.0
  %301 = vmatprep.subr.mxu0 0.0
  %302 = vmatpush1.msra.mxu0 0.0
  %303 = vmatprep.subr.mxu0 0.0
  %304 = vmatpush1.msra.mxu0 0.0
  %305 = vmatprep.subr.mxu0 0.0
  %306 = vmatpush1.msra.mxu0 0.0
  %307 = vmatprep.subr.mxu0 0.0
  %308 = vmatpush1.msra.mxu0 0.0
  %309 = vmatprep.subr.mxu0 0.0
  %310 = vmatpush1.msra.mxu0 %v274
  %311 = vmatprep.subr.mxu0 0.0
  %312 = vmatpush1.msra.mxu0 %v273
  %313 = vmatprep.subr.mxu0 0.0
  %314 = vmatpush1.msra.mxu0 %v272
  %315 = vmatprep.subr.mxu0 0.0
  %316 = vmatpush1.msra.mxu0 %v271
  %317 = vmatprep.subr.mxu0 0.0
  %318 = vmatpush2.msra.mxu0 0.0
  %319 = vmatprep.subr.mxu0 0.0
  %320 = vmatpush2.msra.mxu0 0.0
  %321 = vmatprep.subr.mxu0 0.0
  %322 = vmatpush2.msra.mxu0 0.0
  %323 = vmatprep.subr.mxu0 0.0
  %324 = vmatpush2.msra.mxu0 0.0
  %325 = vmatprep.subr.mxu0 0.0
  %326 = vmatpush2.msra.mxu0 0.0
  %327 = vmatprep.subr.mxu0 0.0
  %328 = vmatpush2.msra.mxu0 0.0
  %329 = vmatprep.subr.mxu0 0.0
  %330 = vmatpush2.msra.mxu0 0.0
  %331 = vmatprep.subr.mxu0 0.0
  %332 = vmatpush2.msra.mxu0 0.0
  %333 = vmatprep.subr.mxu0 0.0
  %334 = vmatpush2.msra.mxu0 0.0
  %335 = vmatprep.subr.mxu0 0.0
  %336 = vmatpush2.msra.mxu0 0.0
  %337 = vmatprep.subr.mxu0 0.0
  %338 = vmatpush2.msra.mxu0 0.0
  %339 = vmatprep.subr.mxu0 0.0
  %340 = vmatpush2.msra.mxu0 0.0
  %341 = vmatprep.subr.mxu0 0.0
  %342 = vmatpush2.msra.mxu0 0.0
  %343 = vmatprep.subr.mxu0 0.0
  %344 = vmatpush2.msra.mxu0 0.0
  %345 = vmatprep.subr.mxu0 0.0
  %346 = vmatpush2.msra.mxu0 0.0
  %347 = vmatprep.subr.mxu0 0.0
  %348 = vmatpush2.msra.mxu0 0.0
  %349 = vmatprep.mubr.f32.mxu0 0.0
  %350 = vmatmul.mubr.f32.gmra.mxu0 %v283
  %v351 = vpop.f32.mrf.mxu0
  %v352 = vadd.f32 %v280, %v351
  %v353 = vpop.f32.mrf.mxu0
  %354 = vdwg.mxu0
  %v355 = vld [vmem:[%s0] sm:$0x3]
  %v356 = vmul.f32 %v355, %v352
  %v357 = vsel %vm38, %v356, 0.0
  %358 = vadd.xlane.f32.xlu0 %v357
  %v359 = vpop.xlane.xlu0 %358
  %v360 = vmul.f32 %v355, %v140
  %v361 = vsel %vm38, %v360, 0.0
  %362 = vadd.xlane.f32.xlu0 %v361
  %v363 = vpop.xlane.xlu0 %362
  %v365 = vadd.f32 %v363, %v162
  %v366 = vmul.f32 %v355, %v252
  %v367 = vsel %vm38, %v366, 0.0
  %368 = vadd.xlane.f32.xlu0 %v367
  %v369 = vpop.xlane.xlu0 %368
  %v370 = vadd.f32 %v365, %v369
  %v371 = vsub.f32 %v370, %v359
  %v372 = vxor.u32 %v371, 2147483648
  %v373 = vmul.f32 %v372, 1.442695
  %v374 = vpow.pop %v373
  %v375 = vadd.f32 %v374, 1.0
  %v376 = vrcp.pop %v375
  %v377 = vmul.f32 1.0, %v376
  %379 = vset.pattern.permute.xlu0 0
  %380 = vperm.xlu0 %379, %v377
  %v381 = vpop.permute.xlu0 %380
  %v383 = vmul.f32 %v381, %v355
  %v384 = vadd.f32 %v383, 0.0
  %v385 = vtanh.pop %v384
  %v387 = vsel %vm59, %v385, 0
  %389 = vmatprep.subr.mxu0 0.0
  %390 = vmatpush1.msra.mxu0 0.0
  %391 = vmatprep.subr.mxu0 0.0
  %392 = vmatpush1.msra.mxu0 0.0
  %393 = vmatprep.subr.mxu0 0.0
  %394 = vmatpush1.msra.mxu0 0.0
  %395 = vmatprep.subr.mxu0 0.0
  %396 = vmatpush1.msra.mxu0 0.0
  %397 = vmatprep.subr.mxu0 0.0
  %398 = vmatpush1.msra.mxu0 0.0
  %399 = vmatprep.subr.mxu0 0.0
  %400 = vmatpush1.msra.mxu0 0.0
  %401 = vmatprep.subr.mxu0 0.0
  %402 = vmatpush1.msra.mxu0 0.0
  %403 = vmatprep.subr.mxu0 0.0
  %404 = vmatpush1.msra.mxu0 0.0
  %405 = vmatprep.subr.mxu0 0.0
  %406 = vmatpush1.msra.mxu0 0.0
  %407 = vmatprep.subr.mxu0 0.0
  %408 = vmatpush1.msra.mxu0 0.0
  %409 = vmatprep.subr.mxu0 0.0
  %410 = vmatpush1.msra.mxu0 0.0
  %411 = vmatprep.subr.mxu0 0.0
  %412 = vmatpush1.msra.mxu0 0.0
  %413 = vmatprep.subr.mxu0 0.0
  %414 = vmatpush1.msra.mxu0 %v274
  %415 = vmatprep.subr.mxu0 0.0
  %416 = vmatpush1.msra.mxu0 %v273
  %417 = vmatprep.subr.mxu0 0.0
  %418 = vmatpush1.msra.mxu0 %v272
  %419 = vmatprep.subr.mxu0 0.0
  %420 = vmatpush1.msra.mxu0 %v271
  %421 = vmatprep.subr.mxu0 0.0
  %422 = vmatpush2.msra.mxu0 0.0
  %423 = vmatprep.subr.mxu0 0.0
  %424 = vmatpush2.msra.mxu0 0.0
  %425 = vmatprep.subr.mxu0 0.0
  %426 = vmatpush2.msra.mxu0 0.0
  %427 = vmatprep.subr.mxu0 0.0
  %428 = vmatpush2.msra.mxu0 0.0
  %429 = vmatprep.subr.mxu0 0.0
  %430 = vmatpush2.msra.mxu0 0.0
  %431 = vmatprep.subr.mxu0 0.0
  %432 = vmatpush2.msra.mxu0 0.0
  %433 = vmatprep.subr.mxu0 0.0
  %434 = vmatpush2.msra.mxu0 0.0
  %435 = vmatprep.subr.mxu0 0.0
  %436 = vmatpush2.msra.mxu0 0.0
  %437 = vmatprep.subr.mxu0 0.0
  %438 = vmatpush2.msra.mxu0 0.0
  %439 = vmatprep.subr.mxu0 0.0
  %440 = vmatpush2.msra.mxu0 0.0
  %441 = vmatprep.subr.mxu0 0.0
  %442 = vmatpush2.msra.mxu0 0.0
  %443 = vmatprep.subr.mxu0 0.0
  %444 = vmatpush2.msra.mxu0 0.0
  %445 = vmatprep.subr.mxu0 0.0
  %446 = vmatpush2.msra.mxu0 0.0
  %447 = vmatprep.subr.mxu0 0.0
  %448 = vmatpush2.msra.mxu0 0.0
  %449 = vmatprep.subr.mxu0 0.0
  %450 = vmatpush2.msra.mxu0 0.0
  %451 = vmatprep.subr.mxu0 0.0
  %452 = vmatpush2.msra.mxu0 0.0
  %453 = vmatprep.mubr.f32.mxu0 0.0
  %454 = vmatmul.mubr.f32.gmra.mxu0 %v387
  %v455 = vpop.f32.mrf.mxu0
  %v456 = vadd.f32 %v280, %v455
  %v457 = vpop.f32.mrf.mxu0
  %458 = vdwg.mxu0
  %s459 = scalar_lea.vmem %s0, 2
  %v460 = vld [vmem:[%s459] sm:$0x3]
  %v461 = vmul.f32 %v460, %v456
  %v462 = vsel %vm38, %v461, 0.0
  %463 = vadd.xlane.f32.xlu0 %v462
  %v464 = vpop.xlane.xlu0 %463
  %v465 = vmul.f32 %v460, %v140
  %v466 = vsel %vm38, %v465, 0.0
  %467 = vadd.xlane.f32.xlu0 %v466
  %v468 = vpop.xlane.xlu0 %467
  %v469 = vadd.f32 %v468, %v162
  %v470 = vmul.f32 %v460, %v252
  %v471 = vsel %vm38, %v470, 0.0
  %472 = vadd.xlane.f32.xlu0 %v471
  %v473 = vpop.xlane.xlu0 %472
  %v474 = vadd.f32 %v469, %v473
  %v475 = vsub.f32 %v474, %v464
  %v476 = vxor.u32 %v475, 2147483648
  %v477 = vmul.f32 %v476, 1.442695
  %v478 = vpow.pop %v477
  %v479 = vadd.f32 %v478, 1.0
  %v480 = vrcp.pop %v479
  %v481 = vmul.f32 1.0, %v480
  %483 = vset.pattern.permute.xlu0 0
  %484 = vperm.xlu0 %483, %v481
  %v485 = vpop.permute.xlu0 %484
  %v487 = vmul.f32 %v485, %v460
  %v488 = vadd.f32 %v384, %v487
  %v489 = vtanh.pop %v488
  %v491 = vsel %vm59, %v489, 0
  %493 = vmatprep.subr.mxu0 0.0
  %494 = vmatpush1.msra.mxu0 0.0
  %495 = vmatprep.subr.mxu0 0.0
  %496 = vmatpush1.msra.mxu0 0.0
  %497 = vmatprep.subr.mxu0 0.0
  %498 = vmatpush1.msra.mxu0 0.0
  %499 = vmatprep.subr.mxu0 0.0
  %500 = vmatpush1.msra.mxu0 0.0
  %501 = vmatprep.subr.mxu0 0.0
  %502 = vmatpush1.msra.mxu0 0.0
  %503 = vmatprep.subr.mxu0 0.0
  %504 = vmatpush1.msra.mxu0 0.0
  %505 = vmatprep.subr.mxu0 0.0
  %506 = vmatpush1.msra.mxu0 0.0
  %507 = vmatprep.subr.mxu0 0.0
  %508 = vmatpush1.msra.mxu0 0.0
  %509 = vmatprep.subr.mxu0 0.0
  %510 = vmatpush1.msra.mxu0 0.0
  %511 = vmatprep.subr.mxu0 0.0
  %512 = vmatpush1.msra.mxu0 0.0
  %513 = vmatprep.subr.mxu0 0.0
  %514 = vmatpush1.msra.mxu0 0.0
  %515 = vmatprep.subr.mxu0 0.0
  %516 = vmatpush1.msra.mxu0 0.0
  %517 = vmatprep.subr.mxu0 0.0
  %518 = vmatpush1.msra.mxu0 %v274
  %519 = vmatprep.subr.mxu0 0.0
  %520 = vmatpush1.msra.mxu0 %v273
  %521 = vmatprep.subr.mxu0 0.0
  %522 = vmatpush1.msra.mxu0 %v272
  %523 = vmatprep.subr.mxu0 0.0
  %524 = vmatpush1.msra.mxu0 %v271
  %525 = vmatprep.subr.mxu0 0.0
  %526 = vmatpush2.msra.mxu0 0.0
  %527 = vmatprep.subr.mxu0 0.0
  %528 = vmatpush2.msra.mxu0 0.0
  %529 = vmatprep.subr.mxu0 0.0
  %530 = vmatpush2.msra.mxu0 0.0
  %531 = vmatprep.subr.mxu0 0.0
  %532 = vmatpush2.msra.mxu0 0.0
  %533 = vmatprep.subr.mxu0 0.0
  %534 = vmatpush2.msra.mxu0 0.0
  %535 = vmatprep.subr.mxu0 0.0
  %536 = vmatpush2.msra.mxu0 0.0
  %537 = vmatprep.subr.mxu0 0.0
  %538 = vmatpush2.msra.mxu0 0.0
  %539 = vmatprep.subr.mxu0 0.0
  %540 = vmatpush2.msra.mxu0 0.0
  %541 = vmatprep.subr.mxu0 0.0
  %542 = vmatpush2.msra.mxu0 0.0
  %543 = vmatprep.subr.mxu0 0.0
  %544 = vmatpush2.msra.mxu0 0.0
  %545 = vmatprep.subr.mxu0 0.0
  %546 = vmatpush2.msra.mxu0 0.0
  %547 = vmatprep.subr.mxu0 0.0
  %548 = vmatpush2.msra.mxu0 0.0
  %549 = vmatprep.subr.mxu0 0.0
  %550 = vmatpush2.msra.mxu0 0.0
  %551 = vmatprep.subr.mxu0 0.0
  %552 = vmatpush2.msra.mxu0 0.0
  %553 = vmatprep.subr.mxu0 0.0
  %554 = vmatpush2.msra.mxu0 0.0
  %555 = vmatprep.subr.mxu0 0.0
  %556 = vmatpush2.msra.mxu0 0.0
  %557 = vmatprep.mubr.f32.mxu0 0.0
  %558 = vmatmul.mubr.f32.gmra.mxu0 %v491
  %v559 = vpop.f32.mrf.mxu0
  %v560 = vadd.f32 %v280, %v559
  %v561 = vpop.f32.mrf.mxu0
  %562 = vdwg.mxu0
  %s563 = scalar_lea.vmem %s0, 4
  %v564 = vld [vmem:[%s563] sm:$0x3]
  %v565 = vmul.f32 %v564, %v560
  %v566 = vsel %vm38, %v565, 0.0
  %567 = vadd.xlane.f32.xlu0 %v566
  %v568 = vpop.xlane.xlu0 %567
  %v569 = vmul.f32 %v564, %v140
  %v570 = vsel %vm38, %v569, 0.0
  %571 = vadd.xlane.f32.xlu0 %v570
  %v572 = vpop.xlane.xlu0 %571
  %v573 = vadd.f32 %v572, %v162
  %v574 = vmul.f32 %v564, %v252
  %v575 = vsel %vm38, %v574, 0.0
  %576 = vadd.xlane.f32.xlu0 %v575
  %v577 = vpop.xlane.xlu0 %576
  %v578 = vadd.f32 %v573, %v577
  %v579 = vsub.f32 %v578, %v568
  %v580 = vxor.u32 %v579, 2147483648
  %v581 = vmul.f32 %v580, 1.442695
  %v582 = vpow.pop %v581
  %v583 = vadd.f32 %v582, 1.0
  %v584 = vrcp.pop %v583
  %v585 = vmul.f32 1.0, %v584
  %587 = vset.pattern.permute.xlu0 0
  %588 = vperm.xlu0 %587, %v585
  %v589 = vpop.permute.xlu0 %588
  %v591 = vmul.f32 %v589, %v564
  %v592 = vadd.f32 %v488, %v591
  %v593 = vtanh.pop %v592
  %v595 = vsel %vm59, %v593, 0
  %597 = vmatprep.subr.mxu0 0.0
  %598 = vmatpush1.msra.mxu0 0.0
  %599 = vmatprep.subr.mxu0 0.0
  %600 = vmatpush1.msra.mxu0 0.0
  %601 = vmatprep.subr.mxu0 0.0
  %602 = vmatpush1.msra.mxu0 0.0
  %603 = vmatprep.subr.mxu0 0.0
  %604 = vmatpush1.msra.mxu0 0.0
  %605 = vmatprep.subr.mxu0 0.0
  %606 = vmatpush1.msra.mxu0 0.0
  %607 = vmatprep.subr.mxu0 0.0
  %608 = vmatpush1.msra.mxu0 0.0
  %609 = vmatprep.subr.mxu0 0.0
  %610 = vmatpush1.msra.mxu0 0.0
  %611 = vmatprep.subr.mxu0 0.0
  %612 = vmatpush1.msra.mxu0 0.0
  %613 = vmatprep.subr.mxu0 0.0
  %614 = vmatpush1.msra.mxu0 0.0
  %615 = vmatprep.subr.mxu0 0.0
  %616 = vmatpush1.msra.mxu0 0.0
  %617 = vmatprep.subr.mxu0 0.0
  %618 = vmatpush1.msra.mxu0 0.0
  %619 = vmatprep.subr.mxu0 0.0
  %620 = vmatpush1.msra.mxu0 0.0
  %621 = vmatprep.subr.mxu0 0.0
  %622 = vmatpush1.msra.mxu0 %v274
  %623 = vmatprep.subr.mxu0 0.0
  %624 = vmatpush1.msra.mxu0 %v273
  %625 = vmatprep.subr.mxu0 0.0
  %626 = vmatpush1.msra.mxu0 %v272
  %627 = vmatprep.subr.mxu0 0.0
  %628 = vmatpush1.msra.mxu0 %v271
  %629 = vmatprep.subr.mxu0 0.0
  %630 = vmatpush2.msra.mxu0 0.0
  %631 = vmatprep.subr.mxu0 0.0
  %632 = vmatpush2.msra.mxu0 0.0
  %633 = vmatprep.subr.mxu0 0.0
  %634 = vmatpush2.msra.mxu0 0.0
  %635 = vmatprep.subr.mxu0 0.0
  %636 = vmatpush2.msra.mxu0 0.0
  %637 = vmatprep.subr.mxu0 0.0
  %638 = vmatpush2.msra.mxu0 0.0
  %639 = vmatprep.subr.mxu0 0.0
  %640 = vmatpush2.msra.mxu0 0.0
  %641 = vmatprep.subr.mxu0 0.0
  %642 = vmatpush2.msra.mxu0 0.0
  %643 = vmatprep.subr.mxu0 0.0
  %644 = vmatpush2.msra.mxu0 0.0
  %645 = vmatprep.subr.mxu0 0.0
  %646 = vmatpush2.msra.mxu0 0.0
  %647 = vmatprep.subr.mxu0 0.0
  %648 = vmatpush2.msra.mxu0 0.0
  %649 = vmatprep.subr.mxu0 0.0
  %650 = vmatpush2.msra.mxu0 0.0
  %651 = vmatprep.subr.mxu0 0.0
  %652 = vmatpush2.msra.mxu0 0.0
  %653 = vmatprep.subr.mxu0 0.0
  %654 = vmatpush2.msra.mxu0 0.0
  %655 = vmatprep.subr.mxu0 0.0
  %656 = vmatpush2.msra.mxu0 0.0
  %657 = vmatprep.subr.mxu0 0.0
  %658 = vmatpush2.msra.mxu0 0.0
  %659 = vmatprep.subr.mxu0 0.0
  %660 = vmatpush2.msra.mxu0 0.0
  %661 = vmatprep.mubr.f32.mxu0 0.0
  %662 = vmatmul.mubr.f32.gmra.mxu0 %v595
  %v663 = vpop.f32.mrf.mxu0
  %v664 = vadd.f32 %v280, %v663
  %v665 = vpop.f32.mrf.mxu0
  %666 = vdwg.mxu0
  %v667 = vmul.f32 %v34, %v664
  %v668 = vmul.f32 %v35, %v664
  %v669 = vmul.f32 %v36, %v664
  %v670 = vmul.f32 %v37, %v664
  %v671 = vsel %vm38, %v667, 0.0
  %672 = vadd.xlane.f32.xlu0 %v671
  %v673 = vpop.xlane.xlu0 %672
  %v674 = vsel %vm38, %v668, 0.0
  %675 = vadd.xlane.f32.xlu0 %v674
  %v676 = vpop.xlane.xlu0 %675
  %v677 = vsel %vm38, %v669, 0.0
  %678 = vadd.xlane.f32.xlu0 %v677
  %v679 = vpop.xlane.xlu0 %678
  %v680 = vsel %vm38, %v670, 0.0
  %681 = vadd.xlane.f32.xlu0 %v680
  %v682 = vpop.xlane.xlu0 %681
  %v683 = vadd.f32 %v167, %v261
  %v684 = vadd.f32 %v168, %v264
  %v685 = vadd.f32 %v169, %v267
  %v686 = vadd.f32 %v170, %v270
  %v687 = vsub.f32 %v683, %v673
  %v688 = vsub.f32 %v684, %v676
  %v689 = vsub.f32 %v685, %v679
  %v690 = vsub.f32 %v686, %v682
  %v695 = vlaneseq
  %v696 = vand.u32 %v695, 127
  %v697 = vlaneseq
  %v698 = vshrl.u32 %v697, 7
  %v699 = vsub.s32 %v696, %v698
  %v700 = vrot.slane %v687, %v699
  %v701 = vlaneseq
  %v702 = vshrl.u32 %v701, 7
  %v703 = vsub.s32 %v696, %v702
  %v704 = vrot.slane %v688, %v703
  %v705 = vlaneseq
  %v706 = vshrl.u32 %v705, 7
  %v707 = vsub.s32 %v696, %v706
  %v708 = vrot.slane %v689, %v707
  %v709 = vlaneseq
  %v710 = vshrl.u32 %v709, 7
  %v711 = vsub.s32 %v696, %v710
  %v712 = vrot.slane %v690, %v711
  %vm713 = vcmask 1041409
  %v714 = vsel %vm713, %v704, %v700
  %vm715 = vcmask 1042434
  %v716 = vsel %vm715, %v708, %v714
  %vm717 = vcmask 1043459
  %v718 = vsel %vm717, %v712, %v716
  %vm720 = vcmask 11264
  %721 = vst.msk [vmem:[%s9] sm:$0xf] %vm720, %v718
  // Predicated region
  $region38: #{sentence_tagger_forward.17} parent=0 // pred_check
    _
  $region39: #{sentence_tagger_forward.17} parent=0 // pred_check_branch
    %723 = sbr.rel (0) target = $region41
  $region40: #{sentence_tagger_forward.17} parent=0 // pred_region
    _
  $region41: #{sentence_tagger_forward.17} parent=0 // pred_fallthru
    _
  // Predicated region
  $region42: #{sentence_tagger_forward.17} parent=0 // pred_check
    _
  $region43: #{sentence_tagger_forward.17} parent=0 // pred_check_branch
    %725 = sbr.rel (0) target = $region45
  $region44: #{sentence_tagger_forward.17} parent=0 // pred_region
    _
  $region45: #{sentence_tagger_forward.17} parent=0 // pred_fallthru
    _

</llo_original>
